<compile_context>
chip_gen: v7x
topology: tpu7x:2x2x1
jax: 0.10.0
libtpu: 0.0.40
codegen_flags: <defaults>
</compile_context>

<pallas_src>
import math
from functools import partial

import jax
import jax.numpy as jnp
from jax import lax
from jax.experimental import pallas as pl
from jax.experimental.pallas import tpu as pltpu

PAD_ID = 0        # bert-base-uncased pad_token_id
NEG_BIG = -1e9    # finite "minus infinity" (avoids NaN when a whole key row is masked)


# ----------------------------------------------------------------------------
# small helpers
# ----------------------------------------------------------------------------
def _round_up(x, m):
    return ((x + m - 1) // m) * m


def _pick_tile(dim, target, align):
    """Largest tile t <= target with dim % t == 0 and t % align == 0, else the full dim.
    Only used for small activation tensors (LayerNorm), where the full-dim fallback is safe."""
    if dim <= target:
        return dim
    for t in range(target, align - 1, -1):
        if dim % t == 0 and t % align == 0:
            return t
    return dim


def _vmem_capacity_bytes():
    """Per-generation VMEM capacity (v5e/v6e 128 MiB, v7x 64 MiB); conservative fallback."""
    try:
        info = pltpu.get_tpu_info()
        cap = int(getattr(info, "vmem_capacity_bytes", 0) or 0)
        if cap > 0:
            return cap
    except Exception:
        pass
    return 64 << 20   # v7x (smallest) as the safe default


def _scoped_vmem_limit():
    return int(min(0.85 * _vmem_capacity_bytes(), 100 << 20))


def _cparams(dimension_semantics):
    return pltpu.CompilerParams(dimension_semantics=dimension_semantics,
                                vmem_limit_bytes=_scoped_vmem_limit())


def _const_spec(a):
    """Whole-array BlockSpec (weights resident across the batch grid)."""
    zeros = (0,) * a.ndim
    return pl.BlockSpec(a.shape, lambda b: zeros)


def _choose_vocab_tn(D, V, budget_bytes, tm=256):
    """Largest lane-dense vocab tile whose double-buffered footprint fits the budget."""
    v_pad128 = _round_up(V, 128)
    for tn in (4096, 2048, 1024, 512, 256, 128):
        if tn > v_pad128:
            continue
        fp = 2 * (tm * D * 2 + D * tn * 2 + tn * 4 + tm * tn * 4)
        if fp <= budget_bytes:
            return tn
    return 128


def _row_tile(M):
    """Row tile (multiple of 8, <= 256) minimizing padding; prefer >= 2 tiles (v7x dual TC)."""
    M8 = _round_up(M, 8)
    cap = min(256, M8)
    best, best_pad = cap, _round_up(M8, cap) - M8
    for t in range(cap, 7, -8):
        pad = _round_up(M8, t) - M8
        if pad < best_pad:
            best, best_pad = t, pad
        if pad == 0:
            break
    tm = best
    if M8 // tm < 2 and M8 >= 16:
        tm = _round_up((M8 + 1) // 2, 8)
    return tm, _round_up(M8, tm)


# ----------------------------------------------------------------------------
# in-kernel building blocks (pure functions on jnp values)
# ----------------------------------------------------------------------------
def _layernorm(y, gamma, beta, eps=1e-5):
    mu = jnp.mean(y, axis=-1, keepdims=True)
    yc = y - mu
    var = jnp.mean(yc * yc, axis=-1, keepdims=True)      # biased, like torch LayerNorm
    return yc * lax.rsqrt(var + eps) * gamma + beta


def _mha_ln(x, kv, bias, wq, bq, wk, bk, wv, bv, wo, bo, gamma, beta, scale):
    """Multi-head attention + out-projection + residual + LayerNorm.

    x : (Sq, D) f32 query source & residual     kv : (Sk, D) f32
    wq/wk/wv : (H, D, Dh) bf16   bq/bk/bv : (H, 1, Dh) f32
    wo : (H, Dh, D) bf16         bo : (1, D) f32
    bias : None, (1, Sk) or (Sq, Sk) additive f32 bias
    Heads live on a leading batch axis -> no lane-dim slicing or concatenation.
    """
    H = wq.shape[0]
    Sq, D = x.shape
    Sk = kv.shape[0]
    bf16 = jnp.bfloat16

    xq = jnp.broadcast_to(x.astype(bf16)[None], (H, Sq, D))
    xk = jnp.broadcast_to(kv.astype(bf16)[None], (H, Sk, D))

    q = jnp.einsum('hsd,hde->hse', xq, wq, preferred_element_type=jnp.float32) + bq
    k = jnp.einsum('hsd,hde->hse', xk, wk, preferred_element_type=jnp.float32) + bk
    v = jnp.einsum('hsd,hde->hse', xk, wv, preferred_element_type=jnp.float32) + bv

    s = jnp.einsum('hqe,hke->hqk', q.astype(bf16), k.astype(bf16),
                   preferred_element_type=jnp.float32) * scale
    if bias is not None:
        s = s + bias[None]
    s = s - jnp.max(s, axis=-1, keepdims=True)            # f32 softmax statistics
    p = jnp.exp(s)
    p = p / jnp.sum(p, axis=-1, keepdims=True)            # exact division (parity)

    ctx = jnp.einsum('hqk,hke->hqe', p.astype(bf16), v.astype(bf16),
                     preferred_element_type=jnp.float32)
    # Per-head partial out-projections, summed over heads (no lane-dim concat).
    proj = jnp.einsum('hqe,hed->hqd', ctx.astype(bf16), wo,
                      preferred_element_type=jnp.float32)
    y = jnp.sum(proj, axis=0) + bo + x
    return _layernorm(y, gamma, beta)


def _ffn_ln(x, w1, b1, w2, b2, gamma, beta):
    h = jnp.dot(x.astype(jnp.bfloat16), w1, preferred_element_type=jnp.float32) + b1
    h = jnp.maximum(h, 0.0)
    f = jnp.dot(h.astype(jnp.bfloat16), w2, preferred_element_type=jnp.float32) + b2
    return _layernorm(f + x, gamma, beta)


# ----------------------------------------------------------------------------
# Pallas kernels
# ----------------------------------------------------------------------------
def _enc_layer_kernel(*refs, scale):
    """Fused encoder layer for one batch element: self-attn block + FFN block."""
    (x_ref, kbias_ref,
     wq, bq, wk, bk, wv, bv, wo, bo, g1, be1,
     w1, b1, w2, b2, g2, be2,
     o_ref) = refs
    x = x_ref[0].astype(jnp.float32)                       # (S, D)
    h = _mha_ln(x, x, kbias_ref[0],
                wq[...], bq[...], wk[...], bk[...], wv[...], bv[...],
                wo[...], bo[...], g1[...], be1[...], scale)
    z = _ffn_ln(h, w1[...], b1[...], w2[...], b2[...], g2[...], be2[...])
    o_ref[0] = z.astype(o_ref.dtype)


def _dec_layer_kernel(*refs, scale):
    """Fused decoder layer: causal self-attn + cross-attn over memory + FFN."""
    (y_ref, mem_ref, kbias_ref,
     swq, sbq, swk, sbk, swv, sbv, swo, sbo, g1, be1,
     cwq, cbq, cwk, cbk, cwv, cbv, cwo, cbo, g2, be2,
     w1, b1, w2, b2, g3, be3,
     o_ref) = refs
    y = y_ref[0].astype(jnp.float32)                       # (St, D)
    mem = mem_ref[0].astype(jnp.float32)                   # (Ss, D)
    St = y.shape[0]
    row = lax.broadcasted_iota(jnp.int32, (St, St), 0)
    col = lax.broadcasted_iota(jnp.int32, (St, St), 1)
    bias = jnp.where(col > row, NEG_BIG, 0.0).astype(jnp.float32) + kbias_ref[0]

    h = _mha_ln(y, y, bias,
                swq[...], sbq[...], swk[...], sbk[...], swv[...], sbv[...],
                swo[...], sbo[...], g1[...], be1[...], scale)
    # memory_key_padding_mask is None in nn.Transformer.forward -> no mask on cross-attention
    h = _mha_ln(h, mem, None,
                cwq[...], cbq[...], cwk[...], cbk[...], cwv[...], cbv[...],
                cwo[...], cbo[...], g2[...], be2[...], scale)
    z = _ffn_ln(h, w1[...], b1[...], w2[...], b2[...], g3[...], be3[...])
    o_ref[0] = z.astype(o_ref.dtype)


def _ln_kernel(x_ref, g_ref, b_ref, o_ref):
    """Plain LayerNorm (final encoder/decoder norms); bf16 in/out, f32 statistics."""
    x = x_ref[...].astype(jnp.float32)
    o_ref[...] = _layernorm(x, g_ref[...], b_ref[...]).astype(o_ref.dtype)


def _out_proj_kernel(x_ref, w_ref, b_ref, o_ref):
    """Vocab projection tile: single K tile, lane-dense output, no accumulator scratch."""
    o_ref[...] = jnp.dot(x_ref[...], w_ref[...],
                         preferred_element_type=jnp.float32) + b_ref[...]


# ----------------------------------------------------------------------------
# Pallas wrappers
# ----------------------------------------------------------------------------
def encoder_layer(x, kbias, wargs, *, nhead):
    B, S, D = x.shape
    scale = 1.0 / math.sqrt(D // nhead)
    in_specs = [pl.BlockSpec((1, S, D), lambda b: (b, 0, 0)),
                pl.BlockSpec((1, 1, S), lambda b: (b, 0, 0))]
    in_specs += [_const_spec(a) for a in wargs]
    return pl.pallas_call(
        partial(_enc_layer_kernel, scale=scale),
        grid=(B,),
        in_specs=in_specs,
        out_specs=pl.BlockSpec((1, S, D), lambda b: (b, 0, 0)),
        out_shape=jax.ShapeDtypeStruct((B, S, D), jnp.bfloat16),
        compiler_params=_cparams(("parallel",)),
    )(x, kbias, *wargs)


def decoder_layer(y, memory, kbias, wargs, *, nhead):
    B, St, D = y.shape
    Ss = memory.shape[1]
    scale = 1.0 / math.sqrt(D // nhead)
    in_specs = [pl.BlockSpec((1, St, D), lambda b: (b, 0, 0)),
                pl.BlockSpec((1, Ss, D), lambda b: (b, 0, 0)),
                pl.BlockSpec((1, 1, St), lambda b: (b, 0, 0))]
    in_specs += [_const_spec(a) for a in wargs]
    return pl.pallas_call(
        partial(_dec_layer_kernel, scale=scale),
        grid=(B,),
        in_specs=in_specs,
        out_specs=pl.BlockSpec((1, St, D), lambda b: (b, 0, 0)),
        out_shape=jax.ShapeDtypeStruct((B, St, D), jnp.bfloat16),
        compiler_params=_cparams(("parallel",)),
    )(y, memory, kbias, *wargs)


def layer_norm(x, gamma, beta):
    B, S, D = x.shape
    M = B * S
    tm = _pick_tile(M, min(512, max(8, M // 2)), 8)
    out = pl.pallas_call(
        _ln_kernel,
        grid=(M // tm,),
        in_specs=[pl.BlockSpec((tm, D), lambda i: (i, 0)),
                  pl.BlockSpec((1, D), lambda i: (0, 0)),
                  pl.BlockSpec((1, D), lambda i: (0, 0))],
        out_specs=pl.BlockSpec((tm, D), lambda i: (i, 0)),
        out_shape=jax.ShapeDtypeStruct((M, D), jnp.bfloat16),
        compiler_params=_cparams(("parallel",)),
    )(x.reshape(M, D), gamma, beta)
    return out.reshape(B, S, D)


def out_projection(x, wT_pad, b_pad, *, vocab, tn):
    """Tiled y @ W^T + b.  wT_pad / b_pad are pre-transposed, bf16, padded to a multiple of tn.
    Rows are padded to the tile size; the result is sliced back to (B, S, vocab)."""
    B, S, D = x.shape
    M = B * S
    V_pad = wT_pad.shape[1]
    tm, M_pad = _row_tile(M)
    x2 = x.reshape(M, D).astype(jnp.bfloat16)
    if M_pad != M:
        x2 = jnp.pad(x2, ((0, M_pad - M), (0, 0)))
    out = pl.pallas_call(
        _out_proj_kernel,
        grid=(M_pad // tm, V_pad // tn),
        in_specs=[pl.BlockSpec((tm, D), lambda i, j: (i, 0)),
                  pl.BlockSpec((D, tn), lambda i, j: (0, j)),
                  pl.BlockSpec((1, tn), lambda i, j: (0, j))],
        out_specs=pl.BlockSpec((tm, tn), lambda i, j: (i, j)),
        out_shape=jax.ShapeDtypeStruct((M_pad, V_pad), jnp.float32),
        compiler_params=_cparams(("parallel", "parallel")),
    )(x2, wT_pad, b_pad)
    return out[:M, :vocab].reshape(B, S, vocab)


# ----------------------------------------------------------------------------
# One-time parameter preprocessing (transpose / bf16-cast / head-split hoisted out of forward)
# ----------------------------------------------------------------------------
def preprocess_params(params, *, nhead, pad_id=PAD_ID):
    D = params["embedding"].shape[1]
    Dh = D // nhead
    f32, bf16 = jnp.float32, jnp.bfloat16

    def row(v):
        return v.reshape(1, -1).astype(f32)

    def prep_attn(ap):
        in_w, in_b = ap["in_w"], ap["in_b"]

        def split(w_rows, b_rows):
            # PyTorch in_proj rows applied as x @ W^T; split output columns per head.
            w = jnp.transpose(w_rows).reshape(D, nhead, Dh).transpose(1, 0, 2).astype(bf16)
            b = b_rows.reshape(nhead, 1, Dh).astype(f32)
            return w, b

        wq, bq = split(in_w[:D], in_b[:D])
        wk, bk = split(in_w[D:2 * D], in_b[D:2 * D])
        wv, bv = split(in_w[2 * D:], in_b[2 * D:])
        wo = jnp.transpose(ap["out_w"]).reshape(nhead, Dh, D).astype(bf16)   # (H, Dh, D)
        bo = row(ap["out_b"])
        return [wq, bq, wk, bk, wv, bv, wo, bo]

    def prep_ffn(lp):
        return [jnp.transpose(lp["w1"]).astype(bf16), row(lp["b1"]),
                jnp.transpose(lp["w2"]).astype(bf16), row(lp["b2"])]

    enc_layers = []
    for lp in params["enc_layers"]:
        enc_layers.append(prep_attn(lp["self_attn"])
                          + [row(lp["norm1_g"]), row(lp["norm1_b"])]
                          + prep_ffn(lp)
                          + [row(lp["norm2_g"]), row(lp["norm2_b"])])

    dec_layers = []
    for lp in params["dec_layers"]:
        dec_layers.append(prep_attn(lp["self_attn"])
                          + [row(lp["norm1_g"]), row(lp["norm1_b"])]
                          + prep_attn(lp["cross_attn"])
                          + [row(lp["norm2_g"]), row(lp["norm2_b"])]
                          + prep_ffn(lp)
                          + [row(lp["norm3_g"]), row(lp["norm3_b"])])

    # Vocab projection: choose tn from the per-generation VMEM budget, pad V to a tile multiple.
    V = params["out_w"].shape[0]
    tn = _choose_vocab_tn(D, V, int(0.55 * _vmem_capacity_bytes()))
    V_pad = _round_up(V, tn)
    out_wT = jnp.pad(jnp.transpose(params["out_w"]).astype(bf16), ((0, 0), (0, V_pad - V)))
    out_b = jnp.pad(params["out_b"].astype(f32), (0, V_pad - V)).reshape(1, V_pad)

    pp = dict(
        embedding=params["embedding"].astype(f32),
        pe=params["pe"].astype(f32),
        enc_layers=enc_layers,
        dec_layers=dec_layers,
        enc_norm_g=row(params["enc_norm_g"]), enc_norm_b=row(params["enc_norm_b"]),
        dec_norm_g=row(params["dec_norm_g"]), dec_norm_b=row(params["dec_norm_b"]),
        out_wT=out_wT, out_b=out_b,
    )
    cfg = dict(nhead=nhead, pad_id=pad_id, vocab=V, out_tn=tn, d_model=D)
    return pp, cfg


# ----------------------------------------------------------------------------
# Model forward (plain-JAX glue around the Pallas kernels)
# ----------------------------------------------------------------------------
def sinusoidal_pe(max_len, d_model):
    position = jnp.arange(max_len, dtype=jnp.float32)[:, None]
    div_term = jnp.exp(jnp.arange(0, d_model, 2, dtype=jnp.float32)
                       * (-math.log(10000.0) / d_model))
    pe = jnp.zeros((max_len, d_model), jnp.float32)
    pe = pe.at[:, 0::2].set(jnp.sin(position * div_term))
    pe = pe.at[:, 1::2].set(jnp.cos(position * div_term))
    return pe


def transformer_chatbot_forward(pp, src, tgt, *, cfg):
    nhead, pad_id = cfg["nhead"], cfg["pad_id"]
    emb, pe = pp["embedding"], pp["pe"]
    Ss, St = src.shape[1], tgt.shape[1]

    # embedding + positional encoding (dropout: eval-mode identity); bf16 activation stream
    src_e = (emb[src] + pe[:Ss][None]).astype(jnp.bfloat16)
    tgt_e = (emb[tgt] + pe[:St][None]).astype(jnp.bfloat16)

    # tiny (B, 1, S) additive key-padding biases; per-head expansion happens in-kernel
    src_kbias = jnp.where(src == pad_id, NEG_BIG, 0.0).astype(jnp.float32)[:, None, :]
    tgt_kbias = jnp.where(tgt == pad_id, NEG_BIG, 0.0).astype(jnp.float32)[:, None, :]

    # ----- encoder -----
    x = src_e
    for wargs in pp["enc_layers"]:
        x = encoder_layer(x, src_kbias, wargs, nhead=nhead)
    memory = layer_norm(x, pp["enc_norm_g"], pp["enc_norm_b"])

    # ----- decoder -----
    y = tgt_e
    for wargs in pp["dec_layers"]:
        y = decoder_layer(y, memory, tgt_kbias, wargs, nhead=nhead)
    y = layer_norm(y, pp["dec_norm_g"], pp["dec_norm_b"])

    return out_projection(y, pp["out_wT"], pp["out_b"],
                          vocab=cfg["vocab"], tn=cfg["out_tn"])     # (B, St, vocab) f32


# ----------------------------------------------------------------------------
# Deterministic parameter init (synthetic; shapes follow the PyTorch module)
# ----------------------------------------------------------------------------
class KeyGen:
    def __init__(self, key):
        self.key = key

    def __call__(self):
        self.key, sub = jax.random.split(self.key)
        return sub


def init_attn(kg, d):
    return dict(
        in_w=0.02 * jax.random.normal(kg(), (3 * d, d), jnp.float32),
        in_b=jnp.zeros((3 * d,), jnp.float32),
        out_w=0.02 * jax.random.normal(kg(), (d, d), jnp.float32),
        out_b=jnp.zeros((d,), jnp.float32),
    )


def init_layer(kg, d, d_ff, decoder):
    p = dict(
        self_attn=init_attn(kg, d),
        w1=0.02 * jax.random.normal(kg(), (d_ff, d), jnp.float32),
        b1=jnp.zeros((d_ff,), jnp.float32),
        w2=0.02 * jax.random.normal(kg(), (d, d_ff), jnp.float32),
        b2=jnp.zeros((d,), jnp.float32),
        norm1_g=jnp.ones((d,), jnp.float32), norm1_b=jnp.zeros((d,), jnp.float32),
        norm2_g=jnp.ones((d,), jnp.float32), norm2_b=jnp.zeros((d,), jnp.float32),
    )
    if decoder:
        p["cross_attn"] = init_attn(kg, d)
        p["norm3_g"] = jnp.ones((d,), jnp.float32)
        p["norm3_b"] = jnp.zeros((d,), jnp.float32)
    return p


def init_params(key, vocab, d_model, n_enc, n_dec, d_ff, max_len=100):
    kg = KeyGen(key)
    return dict(
        embedding=0.02 * jax.random.normal(kg(), (vocab, d_model), jnp.float32),
        pe=sinusoidal_pe(max_len, d_model),
        enc_layers=[init_layer(kg, d_model, d_ff, decoder=False) for _ in range(n_enc)],
        dec_layers=[init_layer(kg, d_model, d_ff, decoder=True) for _ in range(n_dec)],
        enc_norm_g=jnp.ones((d_model,), jnp.float32),
        enc_norm_b=jnp.zeros((d_model,), jnp.float32),
        dec_norm_g=jnp.ones((d_model,), jnp.float32),
        dec_norm_b=jnp.zeros((d_model,), jnp.float32),
        out_w=0.02 * jax.random.normal(kg(), (vocab, d_model), jnp.float32),
        out_b=jnp.zeros((vocab,), jnp.float32),
    )


# ----------------------------------------------------------------------------
if __name__ == "__main__":
    VOCAB = 64
    D_MODEL = 32
    NHEAD = 4
    N_ENC = 2
    N_DEC = 2
    D_FF = 64
    B, S = 2, 8

    key = jax.random.PRNGKey(0)
    kp, ks, kt = jax.random.split(key, 3)

    raw_params = init_params(kp, VOCAB, D_MODEL, N_ENC, N_DEC, D_FF)
    pp, cfg = preprocess_params(raw_params, nhead=NHEAD, pad_id=PAD_ID)

    src = jax.random.randint(ks, (B, S), 1, VOCAB, dtype=jnp.int32)
    tgt = jax.random.randint(kt, (B, S), 1, VOCAB, dtype=jnp.int32)
    # pad the tail of one sequence to exercise key_padding_mask handling
    src = src.at[1, -2:].set(PAD_ID)
    tgt = tgt.at[1, -1:].set(PAD_ID)

    fwd = jax.jit(partial(transformer_chatbot_forward, cfg=cfg))
    logits = fwd(pp, src, tgt)
    jax.block_until_ready(logits)

    assert logits.shape == (B, S, VOCAB), logits.shape
    assert bool(jnp.all(jnp.isfinite(logits)))
    print("KERNEL_OK")
</pallas_src>

<mosaic_0001>
module attributes {stable_mosaic.version = 11 : i64} {
  func.func @_ln_kernel(%arg0: i32, %arg1: memref<8x32xbf16, #tpu.memory_space<vmem>>, %arg2: memref<1x32xf32, #tpu.memory_space<vmem>>, %arg3: memref<1x32xf32, #tpu.memory_space<vmem>>, %arg4: memref<8x32xbf16, #tpu.memory_space<vmem>>) attributes {dimension_semantics = [#tpu.dimension_semantics<parallel>], iteration_bounds = array<i64: 2>, scalar_prefetch = 0 : i64, scratch_operands = 0 : i64, tpu.core_type = #tpu.core_type<tc>, window_params = [{transform_indices = @transform_0, window_bounds = array<i64: 8, 32>}, {pipeline_mode = #tpu.pipeline_mode<synchronous>, transform_indices = @transform_1, window_bounds = array<i64: 1, 32>}, {pipeline_mode = #tpu.pipeline_mode<synchronous>, transform_indices = @transform_2, window_bounds = array<i64: 1, 32>}, {transform_indices = @transform_3, window_bounds = array<i64: 8, 32>}]} {
    %c0 = arith.constant 0 : index
    %c0_0 = arith.constant 0 : index
    %0 = vector.load %arg1[%c0, %c0_0] : memref<8x32xbf16, #tpu.memory_space<vmem>>, vector<8x32xbf16>
    %1 = arith.extf %0 : vector<8x32xbf16> to vector<8x32xf32>
    %c0_1 = arith.constant 0 : index
    %c0_2 = arith.constant 0 : index
    %2 = vector.load %arg2[%c0_1, %c0_2] : memref<1x32xf32, #tpu.memory_space<vmem>>, vector<1x32xf32>
    %c0_3 = arith.constant 0 : index
    %c0_4 = arith.constant 0 : index
    %3 = vector.load %arg3[%c0_3, %c0_4] : memref<1x32xf32, #tpu.memory_space<vmem>>, vector<1x32xf32>
    %cst = arith.constant dense<0.000000e+00> : vector<8xf32>
    %4 = vector.multi_reduction <add>, %1, %cst [1] : vector<8x32xf32> to vector<8xf32>
    %5 = vector.shape_cast %4 : vector<8xf32> to vector<8x1xf32>
    %cst_5 = arith.constant 3.200000e+01 : f32
    %6 = vector.broadcast %cst_5 : f32 to vector<8x1xf32>
    %7 = arith.divf %5, %6 : vector<8x1xf32>
    %8 = vector.broadcast %7 : vector<8x1xf32> to vector<8x32xf32>
    %9 = arith.subf %1, %8 : vector<8x32xf32>
    %10 = arith.mulf %9, %9 : vector<8x32xf32>
    %cst_6 = arith.constant dense<0.000000e+00> : vector<8xf32>
    %11 = vector.multi_reduction <add>, %10, %cst_6 [1] : vector<8x32xf32> to vector<8xf32>
    %12 = vector.shape_cast %11 : vector<8xf32> to vector<8x1xf32>
    %cst_7 = arith.constant 3.200000e+01 : f32
    %13 = vector.broadcast %cst_7 : f32 to vector<8x1xf32>
    %14 = arith.divf %12, %13 : vector<8x1xf32>
    %cst_8 = arith.constant 9.99999974E-6 : f32
    %15 = vector.broadcast %cst_8 : f32 to vector<8x1xf32>
    %16 = arith.addf %14, %15 : vector<8x1xf32>
    %17 = math.rsqrt %16 : vector<8x1xf32>
    %18 = vector.broadcast %17 : vector<8x1xf32> to vector<8x32xf32>
    %19 = arith.mulf %9, %18 : vector<8x32xf32>
    %20 = vector.broadcast %2 : vector<1x32xf32> to vector<8x32xf32>
    %21 = arith.mulf %19, %20 : vector<8x32xf32>
    %22 = vector.broadcast %3 : vector<1x32xf32> to vector<8x32xf32>
    %23 = arith.addf %21, %22 : vector<8x32xf32>
    %24 = arith.truncf %23 : vector<8x32xf32> to vector<8x32xbf16>
    %c0_9 = arith.constant 0 : index
    %c0_10 = arith.constant 0 : index
    %25 = vector.load %arg4[%c0_9, %c0_10] : memref<8x32xbf16, #tpu.memory_space<vmem>>, vector<8x32xbf16>
    tpu.vector_store %arg4[%c0_9, %c0_10], %24 {strides = array<i32>} : memref<8x32xbf16, #tpu.memory_space<vmem>>, vector<8x32xbf16>,
    return
  }
  func.func @transform_0(%arg0: i32) -> (i32, i32) {
    %c0_i32 = arith.constant 0 : i32
    %c0_i32_0 = arith.constant 0 : i32
    return %arg0, %c0_i32 : i32, i32
  }
  func.func @transform_1(%arg0: i32) -> (i32, i32) {
    %c0_i32 = arith.constant 0 : i32
    %c0_i32_0 = arith.constant 0 : i32
    %c0_i32_1 = arith.constant 0 : i32
    return %c0_i32, %c0_i32_0 : i32, i32
  }
  func.func @transform_2(%arg0: i32) -> (i32, i32) {
    %c0_i32 = arith.constant 0 : i32
    %c0_i32_0 = arith.constant 0 : i32
    %c0_i32_1 = arith.constant 0 : i32
    return %c0_i32, %c0_i32_0 : i32, i32
  }
  func.func @transform_3(%arg0: i32) -> (i32, i32) {
    %c0_i32 = arith.constant 0 : i32
    %c0_i32_0 = arith.constant 0 : i32
    return %arg0, %c0_i32 : i32, i32
  }
}

module attributes {stable_mosaic.version = 11 : i64} {
  func.func @_enc_layer_kernel(%arg0: i32, %arg1: memref<1x8x32xbf16, #tpu.memory_space<vmem>>, %arg2: memref<1x1x8xf32, #tpu.memory_space<vmem>>, %arg3: memref<4x32x8xbf16, #tpu.memory_space<vmem>>, %arg4: memref<4x1x8xf32, #tpu.memory_space<vmem>>, %arg5: memref<4x32x8xbf16, #tpu.memory_space<vmem>>, %arg6: memref<4x1x8xf32, #tpu.memory_space<vmem>>, %arg7: memref<4x32x8xbf16, #tpu.memory_space<vmem>>, %arg8: memref<4x1x8xf32, #tpu.memory_space<vmem>>, %arg9: memref<4x8x32xbf16, #tpu.memory_space<vmem>>, %arg10: memref<1x32xf32, #tpu.memory_space<vmem>>, %arg11: memref<1x32xf32, #tpu.memory_space<vmem>>, %arg12: memref<1x32xf32, #tpu.memory_space<vmem>>, %arg13: memref<32x64xbf16, #tpu.memory_space<vmem>>, %arg14: memref<1x64xf32, #tpu.memory_space<vmem>>, %arg15: memref<64x32xbf16, #tpu.memory_space<vmem>>, %arg16: memref<1x32xf32, #tpu.memory_space<vmem>>, %arg17: memref<1x32xf32, #tpu.memory_space<vmem>>, %arg18: memref<1x32xf32, #tpu.memory_space<vmem>>, %arg19: memref<1x8x32xbf16, #tpu.memory_space<vmem>>) attributes {dimension_semantics = [#tpu.dimension_semantics<parallel>], iteration_bounds = array<i64: 2>, scalar_prefetch = 0 : i64, scratch_operands = 0 : i64, tpu.core_type = #tpu.core_type<tc>, window_params = [{transform_indices = @transform_0, window_bounds = array<i64: 1, 8, 32>}, {transform_indices = @transform_1, window_bounds = array<i64: 1, 1, 8>}, {pipeline_mode = #tpu.pipeline_mode<synchronous>, transform_indices = @transform_2, window_bounds = array<i64: 4, 32, 8>}, {pipeline_mode = #tpu.pipeline_mode<synchronous>, transform_indices = @transform_3, window_bounds = array<i64: 4, 1, 8>}, {pipeline_mode = #tpu.pipeline_mode<synchronous>, transform_indices = @transform_4, window_bounds = array<i64: 4, 32, 8>}, {pipeline_mode = #tpu.pipeline_mode<synchronous>, transform_indices = @transform_5, window_bounds = array<i64: 4, 1, 8>}, {pipeline_mode = #tpu.pipeline_mode<synchronous>, transform_indices = @transform_6, window_bounds = array<i64: 4, 32, 8>}, {pipeline_mode = #tpu.pipeline_mode<synchronous>, transform_indices = @transform_7, window_bounds = array<i64: 4, 1, 8>}, {pipeline_mode = #tpu.pipeline_mode<synchronous>, transform_indices = @transform_8, window_bounds = array<i64: 4, 8, 32>}, {pipeline_mode = #tpu.pipeline_mode<synchronous>, transform_indices = @transform_9, window_bounds = array<i64: 1, 32>}, {pipeline_mode = #tpu.pipeline_mode<synchronous>, transform_indices = @transform_10, window_bounds = array<i64: 1, 32>}, {pipeline_mode = #tpu.pipeline_mode<synchronous>, transform_indices = @transform_11, window_bounds = array<i64: 1, 32>}, {pipeline_mode = #tpu.pipeline_mode<synchronous>, transform_indices = @transform_12, window_bounds = array<i64: 32, 64>}, {pipeline_mode = #tpu.pipeline_mode<synchronous>, transform_indices = @transform_13, window_bounds = array<i64: 1, 64>}, {pipeline_mode = #tpu.pipeline_mode<synchronous>, transform_indices = @transform_14, window_bounds = array<i64: 64, 32>}, {pipeline_mode = #tpu.pipeline_mode<synchronous>, transform_indices = @transform_15, window_bounds = array<i64: 1, 32>}, {pipeline_mode = #tpu.pipeline_mode<synchronous>, transform_indices = @transform_16, window_bounds = array<i64: 1, 32>}, {pipeline_mode = #tpu.pipeline_mode<synchronous>, transform_indices = @transform_17, window_bounds = array<i64: 1, 32>}, {transform_indices = @transform_18, window_bounds = array<i64: 1, 8, 32>}]} {
    %c0 = arith.constant 0 : index
    %c0_0 = arith.constant 0 : index
    %c0_1 = arith.constant 0 : index
    %0 = vector.load %arg1[%c0, %c0_0, %c0_1] : memref<1x8x32xbf16, #tpu.memory_space<vmem>>, vector<1x8x32xbf16>
    %1 = vector.shape_cast %0 : vector<1x8x32xbf16> to vector<8x32xbf16>
    %2 = arith.extf %1 : vector<8x32xbf16> to vector<8x32xf32>
    %c0_2 = arith.constant 0 : index
    %c0_3 = arith.constant 0 : index
    %c0_4 = arith.constant 0 : index
    %3 = vector.load %arg2[%c0_2, %c0_3, %c0_4] : memref<1x1x8xf32, #tpu.memory_space<vmem>>, vector<1x1x8xf32>
    %4 = vector.shape_cast %3 : vector<1x1x8xf32> to vector<1x8xf32>
    %c0_5 = arith.constant 0 : index
    %c0_6 = arith.constant 0 : index
    %c0_7 = arith.constant 0 : index
    %5 = vector.load %arg3[%c0_5, %c0_6, %c0_7] : memref<4x32x8xbf16, #tpu.memory_space<vmem>>, vector<4x32x8xbf16>
    %c0_8 = arith.constant 0 : index
    %c0_9 = arith.constant 0 : index
    %c0_10 = arith.constant 0 : index
    %6 = vector.load %arg4[%c0_8, %c0_9, %c0_10] : memref<4x1x8xf32, #tpu.memory_space<vmem>>, vector<4x1x8xf32>
    %c0_11 = arith.constant 0 : index
    %c0_12 = arith.constant 0 : index
    %c0_13 = arith.constant 0 : index
    %7 = vector.load %arg5[%c0_11, %c0_12, %c0_13] : memref<4x32x8xbf16, #tpu.memory_space<vmem>>, vector<4x32x8xbf16>
    %c0_14 = arith.constant 0 : index
    %c0_15 = arith.constant 0 : index
    %c0_16 = arith.constant 0 : index
    %8 = vector.load %arg6[%c0_14, %c0_15, %c0_16] : memref<4x1x8xf32, #tpu.memory_space<vmem>>, vector<4x1x8xf32>
    %c0_17 = arith.constant 0 : index
    %c0_18 = arith.constant 0 : index
    %c0_19 = arith.constant 0 : index
    %9 = vector.load %arg7[%c0_17, %c0_18, %c0_19] : memref<4x32x8xbf16, #tpu.memory_space<vmem>>, vector<4x32x8xbf16>
    %c0_20 = arith.constant 0 : index
    %c0_21 = arith.constant 0 : index
    %c0_22 = arith.constant 0 : index
    %10 = vector.load %arg8[%c0_20, %c0_21, %c0_22] : memref<4x1x8xf32, #tpu.memory_space<vmem>>, vector<4x1x8xf32>
    %c0_23 = arith.constant 0 : index
    %c0_24 = arith.constant 0 : index
    %c0_25 = arith.constant 0 : index
    %11 = vector.load %arg9[%c0_23, %c0_24, %c0_25] : memref<4x8x32xbf16, #tpu.memory_space<vmem>>, vector<4x8x32xbf16>
    %c0_26 = arith.constant 0 : index
    %c0_27 = arith.constant 0 : index
    %12 = vector.load %arg10[%c0_26, %c0_27] : memref<1x32xf32, #tpu.memory_space<vmem>>, vector<1x32xf32>
    %c0_28 = arith.constant 0 : index
    %c0_29 = arith.constant 0 : index
    %13 = vector.load %arg11[%c0_28, %c0_29] : memref<1x32xf32, #tpu.memory_space<vmem>>, vector<1x32xf32>
    %c0_30 = arith.constant 0 : index
    %c0_31 = arith.constant 0 : index
    %14 = vector.load %arg12[%c0_30, %c0_31] : memref<1x32xf32, #tpu.memory_space<vmem>>, vector<1x32xf32>
    %15 = arith.truncf %2 : vector<8x32xf32> to vector<8x32xbf16>
    %16 = vector.shape_cast %15 : vector<8x32xbf16> to vector<1x8x32xbf16>
    %17 = vector.shape_cast %16 : vector<1x8x32xbf16> to vector<1x8x32xbf16>
    %18 = vector.broadcast %17 : vector<1x8x32xbf16> to vector<4x8x32xbf16>
    %19 = arith.truncf %2 : vector<8x32xf32> to vector<8x32xbf16>
    %20 = vector.shape_cast %19 : vector<8x32xbf16> to vector<1x8x32xbf16>
    %21 = vector.shape_cast %20 : vector<1x8x32xbf16> to vector<1x8x32xbf16>
    %22 = vector.broadcast %21 : vector<1x8x32xbf16> to vector<4x8x32xbf16>
    "tpu.trace_start"() <{level = 10 : i32, message = "hsd,hde->hse"}> : () -> ()
    %cst = arith.constant dense<0.000000e+00> : vector<4x8x8xf32>
    %23 = tpu.matmul %18, %5, %cst {dimension_numbers = #tpu.dot_dimension_numbers<[2], [1], [1], [2], [0, 0, 0, 1, 1, 2], [0], [0]>} : vector<4x8x32xbf16>, vector<4x32x8xbf16>, vector<4x8x8xf32> -> vector<4x8x8xf32>
    "tpu.trace_stop"() : () -> ()
    %24 = vector.broadcast %6 : vector<4x1x8xf32> to vector<4x8x8xf32>
    %25 = arith.addf %23, %24 : vector<4x8x8xf32>
    "tpu.trace_start"() <{level = 10 : i32, message = "hsd,hde->hse"}> : () -> ()
    %cst_32 = arith.constant dense<0.000000e+00> : vector<4x8x8xf32>
    %26 = tpu.matmul %22, %7, %cst_32 {dimension_numbers = #tpu.dot_dimension_numbers<[2], [1], [1], [2], [0, 0, 0, 1, 1, 2], [0], [0]>} : vector<4x8x32xbf16>, vector<4x32x8xbf16>, vector<4x8x8xf32> -> vector<4x8x8xf32>
    "tpu.trace_stop"() : () -> ()
    %27 = vector.broadcast %8 : vector<4x1x8xf32> to vector<4x8x8xf32>
    %28 = arith.addf %26, %27 : vector<4x8x8xf32>
    "tpu.trace_start"() <{level = 10 : i32, message = "hsd,hde->hse"}> : () -> ()
    %cst_33 = arith.constant dense<0.000000e+00> : vector<4x8x8xf32>
    %29 = tpu.matmul %22, %9, %cst_33 {dimension_numbers = #tpu.dot_dimension_numbers<[2], [1], [1], [2], [0, 0, 0, 1, 1, 2], [0], [0]>} : vector<4x8x32xbf16>, vector<4x32x8xbf16>, vector<4x8x8xf32> -> vector<4x8x8xf32>
    "tpu.trace_stop"() : () -> ()
    %30 = vector.broadcast %10 : vector<4x1x8xf32> to vector<4x8x8xf32>
    %31 = arith.addf %29, %30 : vector<4x8x8xf32>
    %32 = arith.truncf %25 : vector<4x8x8xf32> to vector<4x8x8xbf16>
    %33 = arith.truncf %28 : vector<4x8x8xf32> to vector<4x8x8xbf16>
    "tpu.trace_start"() <{level = 10 : i32, message = "hqe,hke->hqk"}> : () -> ()
    %cst_34 = arith.constant dense<0.000000e+00> : vector<4x8x8xf32>
    %34 = tpu.matmul %32, %33, %cst_34 {dimension_numbers = #tpu.dot_dimension_numbers<[2], [2], [1], [1], [0, 0, 0, 1, 1, 1], [0], [0]>} : vector<4x8x8xbf16>, vector<4x8x8xbf16>, vector<4x8x8xf32> -> vector<4x8x8xf32>
    "tpu.trace_stop"() : () -> ()
    %cst_35 = arith.constant 0.353553385 : f32
    %35 = vector.broadcast %cst_35 : f32 to vector<4x8x8xf32>
    %36 = arith.mulf %34, %35 : vector<4x8x8xf32>
    %37 = vector.shape_cast %4 : vector<1x8xf32> to vector<1x1x8xf32>
    %38 = vector.broadcast %37 : vector<1x1x8xf32> to vector<4x8x8xf32>
    %39 = arith.addf %36, %38 : vector<4x8x8xf32>
    %cst_36 = arith.constant dense<0xFF800000> : vector<4x8xf32>
    %40 = vector.multi_reduction <maximumf>, %39, %cst_36 [2] : vector<4x8x8xf32> to vector<4x8xf32>
    %41 = vector.shape_cast %40 : vector<4x8xf32> to vector<4x8x1xf32>
    %42 = vector.broadcast %41 : vector<4x8x1xf32> to vector<4x8x8xf32>
    %43 = arith.subf %39, %42 : vector<4x8x8xf32>
    %44 = math.exp %43 : vector<4x8x8xf32>
    %cst_37 = arith.constant dense<0.000000e+00> : vector<4x8xf32>
    %45 = vector.multi_reduction <add>, %44, %cst_37 [2] : vector<4x8x8xf32> to vector<4x8xf32>
    %46 = vector.shape_cast %45 : vector<4x8xf32> to vector<4x8x1xf32>
    %47 = vector.broadcast %46 : vector<4x8x1xf32> to vector<4x8x8xf32>
    %48 = arith.divf %44, %47 : vector<4x8x8xf32>
    %49 = arith.truncf %48 : vector<4x8x8xf32> to vector<4x8x8xbf16>
    %50 = arith.truncf %31 : vector<4x8x8xf32> to vector<4x8x8xbf16>
    "tpu.trace_start"() <{level = 10 : i32, message = "hqk,hke->hqe"}> : () -> ()
    %cst_38 = arith.constant dense<0.000000e+00> : vector<4x8x8xf32>
    %51 = tpu.matmul %49, %50, %cst_38 {dimension_numbers = #tpu.dot_dimension_numbers<[2], [1], [1], [2], [0, 0, 0, 1, 1, 2], [0], [0]>} : vector<4x8x8xbf16>, vector<4x8x8xbf16>, vector<4x8x8xf32> -> vector<4x8x8xf32>
    "tpu.trace_stop"() : () -> ()
    %52 = arith.truncf %51 : vector<4x8x8xf32> to vector<4x8x8xbf16>
    "tpu.trace_start"() <{level = 10 : i32, message = "hqe,hed->hqd"}> : () -> ()
    %cst_39 = arith.constant dense<0.000000e+00> : vector<4x8x32xf32>
    %53 = tpu.matmul %52, %11, %cst_39 {dimension_numbers = #tpu.dot_dimension_numbers<[2], [1], [1], [2], [0, 0, 0, 1, 1, 2], [0], [0]>} : vector<4x8x8xbf16>, vector<4x8x32xbf16>, vector<4x8x32xf32> -> vector<4x8x32xf32>
    "tpu.trace_stop"() : () -> ()
    %cst_40 = arith.constant dense<0.000000e+00> : vector<8x32xf32>
    %54 = vector.multi_reduction <add>, %53, %cst_40 [0] : vector<4x8x32xf32> to vector<8x32xf32>
    %55 = vector.broadcast %12 : vector<1x32xf32> to vector<8x32xf32>
    %56 = arith.addf %54, %55 : vector<8x32xf32>
    %57 = arith.addf %56, %2 : vector<8x32xf32>
    %cst_41 = arith.constant dense<0.000000e+00> : vector<8xf32>
    %58 = vector.multi_reduction <add>, %57, %cst_41 [1] : vector<8x32xf32> to vector<8xf32>
    %59 = vector.shape_cast %58 : vector<8xf32> to vector<8x1xf32>
    %cst_42 = arith.constant 3.200000e+01 : f32
    %60 = vector.broadcast %cst_42 : f32 to vector<8x1xf32>
    %61 = arith.divf %59, %60 : vector<8x1xf32>
    %62 = vector.broadcast %61 : vector<8x1xf32> to vector<8x32xf32>
    %63 = arith.subf %57, %62 : vector<8x32xf32>
    %64 = arith.mulf %63, %63 : vector<8x32xf32>
    %cst_43 = arith.constant dense<0.000000e+00> : vector<8xf32>
    %65 = vector.multi_reduction <add>, %64, %cst_43 [1] : vector<8x32xf32> to vector<8xf32>
    %66 = vector.shape_cast %65 : vector<8xf32> to vector<8x1xf32>
    %cst_44 = arith.constant 3.200000e+01 : f32
    %67 = vector.broadcast %cst_44 : f32 to vector<8x1xf32>
    %68 = arith.divf %66, %67 : vector<8x1xf32>
    %cst_45 = arith.constant 9.99999974E-6 : f32
    %69 = vector.broadcast %cst_45 : f32 to vector<8x1xf32>
    %70 = arith.addf %68, %69 : vector<8x1xf32>
    %71 = math.rsqrt %70 : vector<8x1xf32>
    %72 = vector.broadcast %71 : vector<8x1xf32> to vector<8x32xf32>
    %73 = arith.mulf %63, %72 : vector<8x32xf32>
    %74 = vector.broadcast %13 : vector<1x32xf32> to vector<8x32xf32>
    %75 = arith.mulf %73, %74 : vector<8x32xf32>
    %76 = vector.broadcast %14 : vector<1x32xf32> to vector<8x32xf32>
    %77 = arith.addf %75, %76 : vector<8x32xf32>
    %c0_46 = arith.constant 0 : index
    %c0_47 = arith.constant 0 : index
    %78 = vector.load %arg13[%c0_46, %c0_47] : memref<32x64xbf16, #tpu.memory_space<vmem>>, vector<32x64xbf16>
    %c0_48 = arith.constant 0 : index
    %c0_49 = arith.constant 0 : index
    %79 = vector.load %arg14[%c0_48, %c0_49] : memref<1x64xf32, #tpu.memory_space<vmem>>, vector<1x64xf32>
    %c0_50 = arith.constant 0 : index
    %c0_51 = arith.constant 0 : index
    %80 = vector.load %arg15[%c0_50, %c0_51] : memref<64x32xbf16, #tpu.memory_space<vmem>>, vector<64x32xbf16>
    %c0_52 = arith.constant 0 : index
    %c0_53 = arith.constant 0 : index
    %81 = vector.load %arg16[%c0_52, %c0_53] : memref<1x32xf32, #tpu.memory_space<vmem>>, vector<1x32xf32>
    %c0_54 = arith.constant 0 : index
    %c0_55 = arith.constant 0 : index
    %82 = vector.load %arg17[%c0_54, %c0_55] : memref<1x32xf32, #tpu.memory_space<vmem>>, vector<1x32xf32>
    %c0_56 = arith.constant 0 : index
    %c0_57 = arith.constant 0 : index
    %83 = vector.load %arg18[%c0_56, %c0_57] : memref<1x32xf32, #tpu.memory_space<vmem>>, vector<1x32xf32>
    %84 = arith.truncf %77 : vector<8x32xf32> to vector<8x32xbf16>
    %cst_58 = arith.constant dense<0.000000e+00> : vector<8x64xf32>
    %85 = tpu.matmul %84, %78, %cst_58 {dimension_numbers = #tpu.dot_dimension_numbers<[1], [0], [0], [1], [0, 0, 1, 1], [], []>} : vector<8x32xbf16>, vector<32x64xbf16>, vector<8x64xf32> -> vector<8x64xf32>
    %86 = vector.broadcast %79 : vector<1x64xf32> to vector<8x64xf32>
    %87 = arith.addf %85, %86 : vector<8x64xf32>
    %cst_59 = arith.constant 0.000000e+00 : f32
    %88 = vector.broadcast %cst_59 : f32 to vector<8x64xf32>
    %89 = arith.maximumf %87, %88 : vector<8x64xf32>
    %90 = arith.truncf %89 : vector<8x64xf32> to vector<8x64xbf16>
    %cst_60 = arith.constant dense<0.000000e+00> : vector<8x32xf32>
    %91 = tpu.matmul %90, %80, %cst_60 {dimension_numbers = #tpu.dot_dimension_numbers<[1], [0], [0], [1], [0, 0, 1, 1], [], []>} : vector<8x64xbf16>, vector<64x32xbf16>, vector<8x32xf32> -> vector<8x32xf32>
    %92 = vector.broadcast %81 : vector<1x32xf32> to vector<8x32xf32>
    %93 = arith.addf %91, %92 : vector<8x32xf32>
    %94 = arith.addf %93, %77 : vector<8x32xf32>
    %cst_61 = arith.constant dense<0.000000e+00> : vector<8xf32>
    %95 = vector.multi_reduction <add>, %94, %cst_61 [1] : vector<8x32xf32> to vector<8xf32>
    %96 = vector.shape_cast %95 : vector<8xf32> to vector<8x1xf32>
    %cst_62 = arith.constant 3.200000e+01 : f32
    %97 = vector.broadcast %cst_62 : f32 to vector<8x1xf32>
    %98 = arith.divf %96, %97 : vector<8x1xf32>
    %99 = vector.broadcast %98 : vector<8x1xf32> to vector<8x32xf32>
    %100 = arith.subf %94, %99 : vector<8x32xf32>
    %101 = arith.mulf %100, %100 : vector<8x32xf32>
    %cst_63 = arith.constant dense<0.000000e+00> : vector<8xf32>
    %102 = vector.multi_reduction <add>, %101, %cst_63 [1] : vector<8x32xf32> to vector<8xf32>
    %103 = vector.shape_cast %102 : vector<8xf32> to vector<8x1xf32>
    %cst_64 = arith.constant 3.200000e+01 : f32
    %104 = vector.broadcast %cst_64 : f32 to vector<8x1xf32>
    %105 = arith.divf %103, %104 : vector<8x1xf32>
    %cst_65 = arith.constant 9.99999974E-6 : f32
    %106 = vector.broadcast %cst_65 : f32 to vector<8x1xf32>
    %107 = arith.addf %105, %106 : vector<8x1xf32>
    %108 = math.rsqrt %107 : vector<8x1xf32>
    %109 = vector.broadcast %108 : vector<8x1xf32> to vector<8x32xf32>
    %110 = arith.mulf %100, %109 : vector<8x32xf32>
    %111 = vector.broadcast %82 : vector<1x32xf32> to vector<8x32xf32>
    %112 = arith.mulf %110, %111 : vector<8x32xf32>
    %113 = vector.broadcast %83 : vector<1x32xf32> to vector<8x32xf32>
    %114 = arith.addf %112, %113 : vector<8x32xf32>
    %115 = arith.truncf %114 : vector<8x32xf32> to vector<8x32xbf16>
    %c0_66 = arith.constant 0 : index
    %c0_67 = arith.constant 0 : index
    %c0_68 = arith.constant 0 : index
    %116 = vector.load %arg19[%c0_66, %c0_67, %c0_68] : memref<1x8x32xbf16, #tpu.memory_space<vmem>>, vector<1x8x32xbf16>
    %117 = vector.shape_cast %116 : vector<1x8x32xbf16> to vector<8x32xbf16>
    %118 = vector.shape_cast %115 : vector<8x32xbf16> to vector<1x8x32xbf16>
    tpu.vector_store %arg19[%c0_66, %c0_67, %c0_68], %118 {strides = array<i32>} : memref<1x8x32xbf16, #tpu.memory_space<vmem>>, vector<1x8x32xbf16>,
    return
  }
  func.func @transform_0(%arg0: i32) -> (i32, i32, i32) {
    %c0_i32 = arith.constant 0 : i32
    %c0_i32_0 = arith.constant 0 : i32
    %c0_i32_1 = arith.constant 0 : i32
    return %arg0, %c0_i32, %c0_i32_0 : i32, i32, i32
  }
  func.func @transform_1(%arg0: i32) -> (i32, i32, i32) {
    %c0_i32 = arith.constant 0 : i32
    %c0_i32_0 = arith.constant 0 : i32
    %c0_i32_1 = arith.constant 0 : i32
    return %arg0, %c0_i32, %c0_i32_0 : i32, i32, i32
  }
  func.func @transform_2(%arg0: i32) -> (i32, i32, i32) {
    %c0_i32 = arith.constant 0 : i32
    %c0_i32_0 = arith.constant 0 : i32
    %c0_i32_1 = arith.constant 0 : i32
    %c0_i32_2 = arith.constant 0 : i32
    return %c0_i32, %c0_i32_0, %c0_i32_1 : i32, i32, i32
  }
  func.func @transform_3(%arg0: i32) -> (i32, i32, i32) {
    %c0_i32 = arith.constant 0 : i32
    %c0_i32_0 = arith.constant 0 : i32
    %c0_i32_1 = arith.constant 0 : i32
    %c0_i32_2 = arith.constant 0 : i32
    return %c0_i32, %c0_i32_0, %c0_i32_1 : i32, i32, i32
  }
  func.func @transform_4(%arg0: i32) -> (i32, i32, i32) {
    %c0_i32 = arith.constant 0 : i32
    %c0_i32_0 = arith.constant 0 : i32
    %c0_i32_1 = arith.constant 0 : i32
    %c0_i32_2 = arith.constant 0 : i32
    return %c0_i32, %c0_i32_0, %c0_i32_1 : i32, i32, i32
  }
  func.func @transform_5(%arg0: i32) -> (i32, i32, i32) {
    %c0_i32 = arith.constant 0 : i32
    %c0_i32_0 = arith.constant 0 : i32
    %c0_i32_1 = arith.constant 0 : i32
    %c0_i32_2 = arith.constant 0 : i32
    return %c0_i32, %c0_i32_0, %c0_i32_1 : i32, i32, i32
  }
  func.func @transform_6(%arg0: i32) -> (i32, i32, i32) {
    %c0_i32 = arith.constant 0 : i32
    %c0_i32_0 = arith.constant 0 : i32
    %c0_i32_1 = arith.constant 0 : i32
    %c0_i32_2 = arith.constant 0 : i32
    return %c0_i32, %c0_i32_0, %c0_i32_1 : i32, i32, i32
  }
  func.func @transform_7(%arg0: i32) -> (i32, i32, i32) {
    %c0_i32 = arith.constant 0 : i32
    %c0_i32_0 = arith.constant 0 : i32
    %c0_i32_1 = arith.constant 0 : i32
    %c0_i32_2 = arith.constant 0 : i32
    return %c0_i32, %c0_i32_0, %c0_i32_1 : i32, i32, i32
  }
  func.func @transform_8(%arg0: i32) -> (i32, i32, i32) {
    %c0_i32 = arith.constant 0 : i32
    %c0_i32_0 = arith.constant 0 : i32
    %c0_i32_1 = arith.constant 0 : i32
    %c0_i32_2 = arith.constant 0 : i32
    return %c0_i32, %c0_i32_0, %c0_i32_1 : i32, i32, i32
  }
  func.func @transform_9(%arg0: i32) -> (i32, i32) {
    %c0_i32 = arith.constant 0 : i32
    %c0_i32_0 = arith.constant 0 : i32
    %c0_i32_1 = arith.constant 0 : i32
    return %c0_i32, %c0_i32_0 : i32, i32
  }
  func.func @transform_10(%arg0: i32) -> (i32, i32) {
    %c0_i32 = arith.constant 0 : i32
    %c0_i32_0 = arith.constant 0 : i32
    %c0_i32_1 = arith.constant 0 : i32
    return %c0_i32, %c0_i32_0 : i32, i32
  }
  func.func @transform_11(%arg0: i32) -> (i32, i32) {
    %c0_i32 = arith.constant 0 : i32
    %c0_i32_0 = arith.constant 0 : i32
    %c0_i32_1 = arith.constant 0 : i32
    return %c0_i32, %c0_i32_0 : i32, i32
  }
  func.func @transform_12(%arg0: i32) -> (i32, i32) {
    %c0_i32 = arith.constant 0 : i32
    %c0_i32_0 = arith.constant 0 : i32
    %c0_i32_1 = arith.constant 0 : i32
    return %c0_i32, %c0_i32_0 : i32, i32
  }
  func.func @transform_13(%arg0: i32) -> (i32, i32) {
    %c0_i32 = arith.constant 0 : i32
    %c0_i32_0 = arith.constant 0 : i32
    %c0_i32_1 = arith.constant 0 : i32
    return %c0_i32, %c0_i32_0 : i32, i32
  }
  func.func @transform_14(%arg0: i32) -> (i32, i32) {
    %c0_i32 = arith.constant 0 : i32
    %c0_i32_0 = arith.constant 0 : i32
    %c0_i32_1 = arith.constant 0 : i32
    return %c0_i32, %c0_i32_0 : i32, i32
  }
  func.func @transform_15(%arg0: i32) -> (i32, i32) {
    %c0_i32 = arith.constant 0 : i32
    %c0_i32_0 = arith.constant 0 : i32
    %c0_i32_1 = arith.constant 0 : i32
    return %c0_i32, %c0_i32_0 : i32, i32
  }
  func.func @transform_16(%arg0: i32) -> (i32, i32) {
    %c0_i32 = arith.constant 0 : i32
    %c0_i32_0 = arith.constant 0 : i32
    %c0_i32_1 = arith.constant 0 : i32
    return %c0_i32, %c0_i32_0 : i32, i32
  }
  func.func @transform_17(%arg0: i32) -> (i32, i32) {
    %c0_i32 = arith.constant 0 : i32
    %c0_i32_0 = arith.constant 0 : i32
    %c0_i32_1 = arith.constant 0 : i32
    return %c0_i32, %c0_i32_0 : i32, i32
  }
  func.func @transform_18(%arg0: i32) -> (i32, i32, i32) {
    %c0_i32 = arith.constant 0 : i32
    %c0_i32_0 = arith.constant 0 : i32
    %c0_i32_1 = arith.constant 0 : i32
    return %arg0, %c0_i32, %c0_i32_0 : i32, i32, i32
  }
}

module attributes {stable_mosaic.version = 11 : i64} {
  func.func @_out_proj_kernel(%arg0: i32, %arg1: i32, %arg2: memref<8x32xbf16, #tpu.memory_space<vmem>>, %arg3: memref<32x128xbf16, #tpu.memory_space<vmem>>, %arg4: memref<1x128xf32, #tpu.memory_space<vmem>>, %arg5: memref<8x128xf32, #tpu.memory_space<vmem>>) attributes {dimension_semantics = [#tpu.dimension_semantics<parallel>, #tpu.dimension_semantics<parallel>], iteration_bounds = array<i64: 2, 1>, scalar_prefetch = 0 : i64, scratch_operands = 0 : i64, tpu.core_type = #tpu.core_type<tc>, window_params = [{transform_indices = @transform_0, window_bounds = array<i64: 8, 32>}, {transform_indices = @transform_1, window_bounds = array<i64: 32, 128>}, {transform_indices = @transform_2, window_bounds = array<i64: 1, 128>}, {transform_indices = @transform_3, window_bounds = array<i64: 8, 128>}]} {
    %c0 = arith.constant 0 : index
    %c0_0 = arith.constant 0 : index
    %0 = vector.load %arg2[%c0, %c0_0] : memref<8x32xbf16, #tpu.memory_space<vmem>>, vector<8x32xbf16>
    %c0_1 = arith.constant 0 : index
    %c0_2 = arith.constant 0 : index
    %1 = vector.load %arg3[%c0_1, %c0_2] : memref<32x128xbf16, #tpu.memory_space<vmem>>, vector<32x128xbf16>
    %cst = arith.constant dense<0.000000e+00> : vector<8x128xf32>
    %2 = tpu.matmul %0, %1, %cst {dimension_numbers = #tpu.dot_dimension_numbers<[1], [0], [0], [1], [0, 0, 1, 1], [], []>} : vector<8x32xbf16>, vector<32x128xbf16>, vector<8x128xf32> -> vector<8x128xf32>
    %c0_3 = arith.constant 0 : index
    %c0_4 = arith.constant 0 : index
    %3 = vector.load %arg4[%c0_3, %c0_4] : memref<1x128xf32, #tpu.memory_space<vmem>>, vector<1x128xf32>
    %4 = vector.broadcast %3 : vector<1x128xf32> to vector<8x128xf32>
    %5 = arith.addf %2, %4 : vector<8x128xf32>
    %c0_5 = arith.constant 0 : index
    %c0_6 = arith.constant 0 : index
    %6 = vector.load %arg5[%c0_5, %c0_6] : memref<8x128xf32, #tpu.memory_space<vmem>>, vector<8x128xf32>
    tpu.vector_store %arg5[%c0_5, %c0_6], %5 {strides = array<i32>} : memref<8x128xf32, #tpu.memory_space<vmem>>, vector<8x128xf32>,
    return
  }
  func.func @transform_0(%arg0: i32, %arg1: i32) -> (i32, i32) {
    %c0_i32 = arith.constant 0 : i32
    %c0_i32_0 = arith.constant 0 : i32
    return %arg0, %c0_i32 : i32, i32
  }
  func.func @transform_1(%arg0: i32, %arg1: i32) -> (i32, i32) {
    %c0_i32 = arith.constant 0 : i32
    %c0_i32_0 = arith.constant 0 : i32
    return %c0_i32, %arg1 : i32, i32
  }
  func.func @transform_2(%arg0: i32, %arg1: i32) -> (i32, i32) {
    %c0_i32 = arith.constant 0 : i32
    %c0_i32_0 = arith.constant 0 : i32
    return %c0_i32, %arg1 : i32, i32
  }
  func.func @transform_3(%arg0: i32, %arg1: i32) -> (i32, i32) {
    %c0_i32 = arith.constant 0 : i32
    return %arg0, %arg1 : i32, i32
  }
}

module attributes {stable_mosaic.version = 11 : i64} {
  func.func @_dec_layer_kernel(%arg0: i32, %arg1: memref<1x8x32xbf16, #tpu.memory_space<vmem>>, %arg2: memref<1x8x32xbf16, #tpu.memory_space<vmem>>, %arg3: memref<1x1x8xf32, #tpu.memory_space<vmem>>, %arg4: memref<4x32x8xbf16, #tpu.memory_space<vmem>>, %arg5: memref<4x1x8xf32, #tpu.memory_space<vmem>>, %arg6: memref<4x32x8xbf16, #tpu.memory_space<vmem>>, %arg7: memref<4x1x8xf32, #tpu.memory_space<vmem>>, %arg8: memref<4x32x8xbf16, #tpu.memory_space<vmem>>, %arg9: memref<4x1x8xf32, #tpu.memory_space<vmem>>, %arg10: memref<4x8x32xbf16, #tpu.memory_space<vmem>>, %arg11: memref<1x32xf32, #tpu.memory_space<vmem>>, %arg12: memref<1x32xf32, #tpu.memory_space<vmem>>, %arg13: memref<1x32xf32, #tpu.memory_space<vmem>>, %arg14: memref<4x32x8xbf16, #tpu.memory_space<vmem>>, %arg15: memref<4x1x8xf32, #tpu.memory_space<vmem>>, %arg16: memref<4x32x8xbf16, #tpu.memory_space<vmem>>, %arg17: memref<4x1x8xf32, #tpu.memory_space<vmem>>, %arg18: memref<4x32x8xbf16, #tpu.memory_space<vmem>>, %arg19: memref<4x1x8xf32, #tpu.memory_space<vmem>>, %arg20: memref<4x8x32xbf16, #tpu.memory_space<vmem>>, %arg21: memref<1x32xf32, #tpu.memory_space<vmem>>, %arg22: memref<1x32xf32, #tpu.memory_space<vmem>>, %arg23: memref<1x32xf32, #tpu.memory_space<vmem>>, %arg24: memref<32x64xbf16, #tpu.memory_space<vmem>>, %arg25: memref<1x64xf32, #tpu.memory_space<vmem>>, %arg26: memref<64x32xbf16, #tpu.memory_space<vmem>>, %arg27: memref<1x32xf32, #tpu.memory_space<vmem>>, %arg28: memref<1x32xf32, #tpu.memory_space<vmem>>, %arg29: memref<1x32xf32, #tpu.memory_space<vmem>>, %arg30: memref<1x8x32xbf16, #tpu.memory_space<vmem>>) attributes {dimension_semantics = [#tpu.dimension_semantics<parallel>], iteration_bounds = array<i64: 2>, scalar_prefetch = 0 : i64, scratch_operands = 0 : i64, tpu.core_type = #tpu.core_type<tc>, window_params = [{transform_indices = @transform_0, window_bounds = array<i64: 1, 8, 32>}, {transform_indices = @transform_1, window_bounds = array<i64: 1, 8, 32>}, {transform_indices = @transform_2, window_bounds = array<i64: 1, 1, 8>}, {pipeline_mode = #tpu.pipeline_mode<synchronous>, transform_indices = @transform_3, window_bounds = array<i64: 4, 32, 8>}, {pipeline_mode = #tpu.pipeline_mode<synchronous>, transform_indices = @transform_4, window_bounds = array<i64: 4, 1, 8>}, {pipeline_mode = #tpu.pipeline_mode<synchronous>, transform_indices = @transform_5, window_bounds = array<i64: 4, 32, 8>}, {pipeline_mode = #tpu.pipeline_mode<synchronous>, transform_indices = @transform_6, window_bounds = array<i64: 4, 1, 8>}, {pipeline_mode = #tpu.pipeline_mode<synchronous>, transform_indices = @transform_7, window_bounds = array<i64: 4, 32, 8>}, {pipeline_mode = #tpu.pipeline_mode<synchronous>, transform_indices = @transform_8, window_bounds = array<i64: 4, 1, 8>}, {pipeline_mode = #tpu.pipeline_mode<synchronous>, transform_indices = @transform_9, window_bounds = array<i64: 4, 8, 32>}, {pipeline_mode = #tpu.pipeline_mode<synchronous>, transform_indices = @transform_10, window_bounds = array<i64: 1, 32>}, {pipeline_mode = #tpu.pipeline_mode<synchronous>, transform_indices = @transform_11, window_bounds = array<i64: 1, 32>}, {pipeline_mode = #tpu.pipeline_mode<synchronous>, transform_indices = @transform_12, window_bounds = array<i64: 1, 32>}, {pipeline_mode = #tpu.pipeline_mode<synchronous>, transform_indices = @transform_13, window_bounds = array<i64: 4, 32, 8>}, {pipeline_mode = #tpu.pipeline_mode<synchronous>, transform_indices = @transform_14, window_bounds = array<i64: 4, 1, 8>}, {pipeline_mode = #tpu.pipeline_mode<synchronous>, transform_indices = @transform_15, window_bounds = array<i64: 4, 32, 8>}, {pipeline_mode = #tpu.pipeline_mode<synchronous>, transform_indices = @transform_16, window_bounds = array<i64: 4, 1, 8>}, {pipeline_mode = #tpu.pipeline_mode<synchronous>, transform_indices = @transform_17, window_bounds = array<i64: 4, 32, 8>}, {pipeline_mode = #tpu.pipeline_mode<synchronous>, transform_indices = @transform_18, window_bounds = array<i64: 4, 1, 8>}, {pipeline_mode = #tpu.pipeline_mode<synchronous>, transform_indices = @transform_19, window_bounds = array<i64: 4, 8, 32>}, {pipeline_mode = #tpu.pipeline_mode<synchronous>, transform_indices = @transform_20, window_bounds = array<i64: 1, 32>}, {pipeline_mode = #tpu.pipeline_mode<synchronous>, transform_indices = @transform_21, window_bounds = array<i64: 1, 32>}, {pipeline_mode = #tpu.pipeline_mode<synchronous>, transform_indices = @transform_22, window_bounds = array<i64: 1, 32>}, {pipeline_mode = #tpu.pipeline_mode<synchronous>, transform_indices = @transform_23, window_bounds = array<i64: 32, 64>}, {pipeline_mode = #tpu.pipeline_mode<synchronous>, transform_indices = @transform_24, window_bounds = array<i64: 1, 64>}, {pipeline_mode = #tpu.pipeline_mode<synchronous>, transform_indices = @transform_25, window_bounds = array<i64: 64, 32>}, {pipeline_mode = #tpu.pipeline_mode<synchronous>, transform_indices = @transform_26, window_bounds = array<i64: 1, 32>}, {pipeline_mode = #tpu.pipeline_mode<synchronous>, transform_indices = @transform_27, window_bounds = array<i64: 1, 32>}, {pipeline_mode = #tpu.pipeline_mode<synchronous>, transform_indices = @transform_28, window_bounds = array<i64: 1, 32>}, {transform_indices = @transform_29, window_bounds = array<i64: 1, 8, 32>}]} {
    %c0 = arith.constant 0 : index
    %c0_0 = arith.constant 0 : index
    %c0_1 = arith.constant 0 : index
    %0 = vector.load %arg1[%c0, %c0_0, %c0_1] : memref<1x8x32xbf16, #tpu.memory_space<vmem>>, vector<1x8x32xbf16>
    %1 = vector.shape_cast %0 : vector<1x8x32xbf16> to vector<8x32xbf16>
    %2 = arith.extf %1 : vector<8x32xbf16> to vector<8x32xf32>
    %c0_2 = arith.constant 0 : index
    %c0_3 = arith.constant 0 : index
    %c0_4 = arith.constant 0 : index
    %3 = vector.load %arg2[%c0_2, %c0_3, %c0_4] : memref<1x8x32xbf16, #tpu.memory_space<vmem>>, vector<1x8x32xbf16>
    %4 = vector.shape_cast %3 : vector<1x8x32xbf16> to vector<8x32xbf16>
    %5 = arith.extf %4 : vector<8x32xbf16> to vector<8x32xf32>
    %6 = tpu.iota {dimensions = array<i32: 0>} : vector<8x8xi32>
    %7 = tpu.iota {dimensions = array<i32: 1>} : vector<8x8xi32>
    %8 = arith.cmpi sgt, %7, %6 : vector<8x8xi32>
    %cst = arith.constant -1.000000e+09 : f32
    %cst_5 = arith.constant 0.000000e+00 : f32
    %9 = vector.broadcast %cst : f32 to vector<8x8xf32>
    %10 = vector.broadcast %cst_5 : f32 to vector<8x8xf32>
    %11 = arith.select %8, %9, %10 : vector<8x8xi1>, vector<8x8xf32>
    %c0_6 = arith.constant 0 : index
    %c0_7 = arith.constant 0 : index
    %c0_8 = arith.constant 0 : index
    %12 = vector.load %arg3[%c0_6, %c0_7, %c0_8] : memref<1x1x8xf32, #tpu.memory_space<vmem>>, vector<1x1x8xf32>
    %13 = vector.shape_cast %12 : vector<1x1x8xf32> to vector<1x8xf32>
    %14 = vector.broadcast %13 : vector<1x8xf32> to vector<8x8xf32>
    %15 = arith.addf %11, %14 : vector<8x8xf32>
    %c0_9 = arith.constant 0 : index
    %c0_10 = arith.constant 0 : index
    %c0_11 = arith.constant 0 : index
    %16 = vector.load %arg4[%c0_9, %c0_10, %c0_11] : memref<4x32x8xbf16, #tpu.memory_space<vmem>>, vector<4x32x8xbf16>
    %c0_12 = arith.constant 0 : index
    %c0_13 = arith.constant 0 : index
    %c0_14 = arith.constant 0 : index
    %17 = vector.load %arg5[%c0_12, %c0_13, %c0_14] : memref<4x1x8xf32, #tpu.memory_space<vmem>>, vector<4x1x8xf32>
    %c0_15 = arith.constant 0 : index
    %c0_16 = arith.constant 0 : index
    %c0_17 = arith.constant 0 : index
    %18 = vector.load %arg6[%c0_15, %c0_16, %c0_17] : memref<4x32x8xbf16, #tpu.memory_space<vmem>>, vector<4x32x8xbf16>
    %c0_18 = arith.constant 0 : index
    %c0_19 = arith.constant 0 : index
    %c0_20 = arith.constant 0 : index
    %19 = vector.load %arg7[%c0_18, %c0_19, %c0_20] : memref<4x1x8xf32, #tpu.memory_space<vmem>>, vector<4x1x8xf32>
    %c0_21 = arith.constant 0 : index
    %c0_22 = arith.constant 0 : index
    %c0_23 = arith.constant 0 : index
    %20 = vector.load %arg8[%c0_21, %c0_22, %c0_23] : memref<4x32x8xbf16, #tpu.memory_space<vmem>>, vector<4x32x8xbf16>
    %c0_24 = arith.constant 0 : index
    %c0_25 = arith.constant 0 : index
    %c0_26 = arith.constant 0 : index
    %21 = vector.load %arg9[%c0_24, %c0_25, %c0_26] : memref<4x1x8xf32, #tpu.memory_space<vmem>>, vector<4x1x8xf32>
    %c0_27 = arith.constant 0 : index
    %c0_28 = arith.constant 0 : index
    %c0_29 = arith.constant 0 : index
    %22 = vector.load %arg10[%c0_27, %c0_28, %c0_29] : memref<4x8x32xbf16, #tpu.memory_space<vmem>>, vector<4x8x32xbf16>
    %c0_30 = arith.constant 0 : index
    %c0_31 = arith.constant 0 : index
    %23 = vector.load %arg11[%c0_30, %c0_31] : memref<1x32xf32, #tpu.memory_space<vmem>>, vector<1x32xf32>
    %c0_32 = arith.constant 0 : index
    %c0_33 = arith.constant 0 : index
    %24 = vector.load %arg12[%c0_32, %c0_33] : memref<1x32xf32, #tpu.memory_space<vmem>>, vector<1x32xf32>
    %c0_34 = arith.constant 0 : index
    %c0_35 = arith.constant 0 : index
    %25 = vector.load %arg13[%c0_34, %c0_35] : memref<1x32xf32, #tpu.memory_space<vmem>>, vector<1x32xf32>
    %26 = arith.truncf %2 : vector<8x32xf32> to vector<8x32xbf16>
    %27 = vector.shape_cast %26 : vector<8x32xbf16> to vector<1x8x32xbf16>
    %28 = vector.shape_cast %27 : vector<1x8x32xbf16> to vector<1x8x32xbf16>
    %29 = vector.broadcast %28 : vector<1x8x32xbf16> to vector<4x8x32xbf16>
    %30 = arith.truncf %2 : vector<8x32xf32> to vector<8x32xbf16>
    %31 = vector.shape_cast %30 : vector<8x32xbf16> to vector<1x8x32xbf16>
    %32 = vector.shape_cast %31 : vector<1x8x32xbf16> to vector<1x8x32xbf16>
    %33 = vector.broadcast %32 : vector<1x8x32xbf16> to vector<4x8x32xbf16>
    "tpu.trace_start"() <{level = 10 : i32, message = "hsd,hde->hse"}> : () -> ()
    %cst_36 = arith.constant dense<0.000000e+00> : vector<4x8x8xf32>
    %34 = tpu.matmul %29, %16, %cst_36 {dimension_numbers = #tpu.dot_dimension_numbers<[2], [1], [1], [2], [0, 0, 0, 1, 1, 2], [0], [0]>} : vector<4x8x32xbf16>, vector<4x32x8xbf16>, vector<4x8x8xf32> -> vector<4x8x8xf32>
    "tpu.trace_stop"() : () -> ()
    %35 = vector.broadcast %17 : vector<4x1x8xf32> to vector<4x8x8xf32>
    %36 = arith.addf %34, %35 : vector<4x8x8xf32>
    "tpu.trace_start"() <{level = 10 : i32, message = "hsd,hde->hse"}> : () -> ()
    %cst_37 = arith.constant dense<0.000000e+00> : vector<4x8x8xf32>
    %37 = tpu.matmul %33, %18, %cst_37 {dimension_numbers = #tpu.dot_dimension_numbers<[2], [1], [1], [2], [0, 0, 0, 1, 1, 2], [0], [0]>} : vector<4x8x32xbf16>, vector<4x32x8xbf16>, vector<4x8x8xf32> -> vector<4x8x8xf32>
    "tpu.trace_stop"() : () -> ()
    %38 = vector.broadcast %19 : vector<4x1x8xf32> to vector<4x8x8xf32>
    %39 = arith.addf %37, %38 : vector<4x8x8xf32>
    "tpu.trace_start"() <{level = 10 : i32, message = "hsd,hde->hse"}> : () -> ()
    %cst_38 = arith.constant dense<0.000000e+00> : vector<4x8x8xf32>
    %40 = tpu.matmul %33, %20, %cst_38 {dimension_numbers = #tpu.dot_dimension_numbers<[2], [1], [1], [2], [0, 0, 0, 1, 1, 2], [0], [0]>} : vector<4x8x32xbf16>, vector<4x32x8xbf16>, vector<4x8x8xf32> -> vector<4x8x8xf32>
    "tpu.trace_stop"() : () -> ()
    %41 = vector.broadcast %21 : vector<4x1x8xf32> to vector<4x8x8xf32>
    %42 = arith.addf %40, %41 : vector<4x8x8xf32>
    %43 = arith.truncf %36 : vector<4x8x8xf32> to vector<4x8x8xbf16>
    %44 = arith.truncf %39 : vector<4x8x8xf32> to vector<4x8x8xbf16>
    "tpu.trace_start"() <{level = 10 : i32, message = "hqe,hke->hqk"}> : () -> ()
    %cst_39 = arith.constant dense<0.000000e+00> : vector<4x8x8xf32>
    %45 = tpu.matmul %43, %44, %cst_39 {dimension_numbers = #tpu.dot_dimension_numbers<[2], [2], [1], [1], [0, 0, 0, 1, 1, 1], [0], [0]>} : vector<4x8x8xbf16>, vector<4x8x8xbf16>, vector<4x8x8xf32> -> vector<4x8x8xf32>
    "tpu.trace_stop"() : () -> ()
    %cst_40 = arith.constant 0.353553385 : f32
    %46 = vector.broadcast %cst_40 : f32 to vector<4x8x8xf32>
    %47 = arith.mulf %45, %46 : vector<4x8x8xf32>
    %48 = vector.shape_cast %15 : vector<8x8xf32> to vector<1x8x8xf32>
    %49 = vector.broadcast %48 : vector<1x8x8xf32> to vector<4x8x8xf32>
    %50 = arith.addf %47, %49 : vector<4x8x8xf32>
    %cst_41 = arith.constant dense<0xFF800000> : vector<4x8xf32>
    %51 = vector.multi_reduction <maximumf>, %50, %cst_41 [2] : vector<4x8x8xf32> to vector<4x8xf32>
    %52 = vector.shape_cast %51 : vector<4x8xf32> to vector<4x8x1xf32>
    %53 = vector.broadcast %52 : vector<4x8x1xf32> to vector<4x8x8xf32>
    %54 = arith.subf %50, %53 : vector<4x8x8xf32>
    %55 = math.exp %54 : vector<4x8x8xf32>
    %cst_42 = arith.constant dense<0.000000e+00> : vector<4x8xf32>
    %56 = vector.multi_reduction <add>, %55, %cst_42 [2] : vector<4x8x8xf32> to vector<4x8xf32>
    %57 = vector.shape_cast %56 : vector<4x8xf32> to vector<4x8x1xf32>
    %58 = vector.broadcast %57 : vector<4x8x1xf32> to vector<4x8x8xf32>
    %59 = arith.divf %55, %58 : vector<4x8x8xf32>
    %60 = arith.truncf %59 : vector<4x8x8xf32> to vector<4x8x8xbf16>
    %61 = arith.truncf %42 : vector<4x8x8xf32> to vector<4x8x8xbf16>
    "tpu.trace_start"() <{level = 10 : i32, message = "hqk,hke->hqe"}> : () -> ()
    %cst_43 = arith.constant dense<0.000000e+00> : vector<4x8x8xf32>
    %62 = tpu.matmul %60, %61, %cst_43 {dimension_numbers = #tpu.dot_dimension_numbers<[2], [1], [1], [2], [0, 0, 0, 1, 1, 2], [0], [0]>} : vector<4x8x8xbf16>, vector<4x8x8xbf16>, vector<4x8x8xf32> -> vector<4x8x8xf32>
    "tpu.trace_stop"() : () -> ()
    %63 = arith.truncf %62 : vector<4x8x8xf32> to vector<4x8x8xbf16>
    "tpu.trace_start"() <{level = 10 : i32, message = "hqe,hed->hqd"}> : () -> ()
    %cst_44 = arith.constant dense<0.000000e+00> : vector<4x8x32xf32>
    %64 = tpu.matmul %63, %22, %cst_44 {dimension_numbers = #tpu.dot_dimension_numbers<[2], [1], [1], [2], [0, 0, 0, 1, 1, 2], [0], [0]>} : vector<4x8x8xbf16>, vector<4x8x32xbf16>, vector<4x8x32xf32> -> vector<4x8x32xf32>
    "tpu.trace_stop"() : () -> ()
    %cst_45 = arith.constant dense<0.000000e+00> : vector<8x32xf32>
    %65 = vector.multi_reduction <add>, %64, %cst_45 [0] : vector<4x8x32xf32> to vector<8x32xf32>
    %66 = vector.broadcast %23 : vector<1x32xf32> to vector<8x32xf32>
    %67 = arith.addf %65, %66 : vector<8x32xf32>
    %68 = arith.addf %67, %2 : vector<8x32xf32>
    %cst_46 = arith.constant dense<0.000000e+00> : vector<8xf32>
    %69 = vector.multi_reduction <add>, %68, %cst_46 [1] : vector<8x32xf32> to vector<8xf32>
    %70 = vector.shape_cast %69 : vector<8xf32> to vector<8x1xf32>
    %cst_47 = arith.constant 3.200000e+01 : f32
    %71 = vector.broadcast %cst_47 : f32 to vector<8x1xf32>
    %72 = arith.divf %70, %71 : vector<8x1xf32>
    %73 = vector.broadcast %72 : vector<8x1xf32> to vector<8x32xf32>
    %74 = arith.subf %68, %73 : vector<8x32xf32>
    %75 = arith.mulf %74, %74 : vector<8x32xf32>
    %cst_48 = arith.constant dense<0.000000e+00> : vector<8xf32>
    %76 = vector.multi_reduction <add>, %75, %cst_48 [1] : vector<8x32xf32> to vector<8xf32>
    %77 = vector.shape_cast %76 : vector<8xf32> to vector<8x1xf32>
    %cst_49 = arith.constant 3.200000e+01 : f32
    %78 = vector.broadcast %cst_49 : f32 to vector<8x1xf32>
    %79 = arith.divf %77, %78 : vector<8x1xf32>
    %cst_50 = arith.constant 9.99999974E-6 : f32
    %80 = vector.broadcast %cst_50 : f32 to vector<8x1xf32>
    %81 = arith.addf %79, %80 : vector<8x1xf32>
    %82 = math.rsqrt %81 : vector<8x1xf32>
    %83 = vector.broadcast %82 : vector<8x1xf32> to vector<8x32xf32>
    %84 = arith.mulf %74, %83 : vector<8x32xf32>
    %85 = vector.broadcast %24 : vector<1x32xf32> to vector<8x32xf32>
    %86 = arith.mulf %84, %85 : vector<8x32xf32>
    %87 = vector.broadcast %25 : vector<1x32xf32> to vector<8x32xf32>
    %88 = arith.addf %86, %87 : vector<8x32xf32>
    %c0_51 = arith.constant 0 : index
    %c0_52 = arith.constant 0 : index
    %c0_53 = arith.constant 0 : index
    %89 = vector.load %arg14[%c0_51, %c0_52, %c0_53] : memref<4x32x8xbf16, #tpu.memory_space<vmem>>, vector<4x32x8xbf16>
    %c0_54 = arith.constant 0 : index
    %c0_55 = arith.constant 0 : index
    %c0_56 = arith.constant 0 : index
    %90 = vector.load %arg15[%c0_54, %c0_55, %c0_56] : memref<4x1x8xf32, #tpu.memory_space<vmem>>, vector<4x1x8xf32>
    %c0_57 = arith.constant 0 : index
    %c0_58 = arith.constant 0 : index
    %c0_59 = arith.constant 0 : index
    %91 = vector.load %arg16[%c0_57, %c0_58, %c0_59] : memref<4x32x8xbf16, #tpu.memory_space<vmem>>, vector<4x32x8xbf16>
    %c0_60 = arith.constant 0 : index
    %c0_61 = arith.constant 0 : index
    %c0_62 = arith.constant 0 : index
    %92 = vector.load %arg17[%c0_60, %c0_61, %c0_62] : memref<4x1x8xf32, #tpu.memory_space<vmem>>, vector<4x1x8xf32>
    %c0_63 = arith.constant 0 : index
    %c0_64 = arith.constant 0 : index
    %c0_65 = arith.constant 0 : index
    %93 = vector.load %arg18[%c0_63, %c0_64, %c0_65] : memref<4x32x8xbf16, #tpu.memory_space<vmem>>, vector<4x32x8xbf16>
    %c0_66 = arith.constant 0 : index
    %c0_67 = arith.constant 0 : index
    %c0_68 = arith.constant 0 : index
    %94 = vector.load %arg19[%c0_66, %c0_67, %c0_68] : memref<4x1x8xf32, #tpu.memory_space<vmem>>, vector<4x1x8xf32>
    %c0_69 = arith.constant 0 : index
    %c0_70 = arith.constant 0 : index
    %c0_71 = arith.constant 0 : index
    %95 = vector.load %arg20[%c0_69, %c0_70, %c0_71] : memref<4x8x32xbf16, #tpu.memory_space<vmem>>, vector<4x8x32xbf16>
    %c0_72 = arith.constant 0 : index
    %c0_73 = arith.constant 0 : index
    %96 = vector.load %arg21[%c0_72, %c0_73] : memref<1x32xf32, #tpu.memory_space<vmem>>, vector<1x32xf32>
    %c0_74 = arith.constant 0 : index
    %c0_75 = arith.constant 0 : index
    %97 = vector.load %arg22[%c0_74, %c0_75] : memref<1x32xf32, #tpu.memory_space<vmem>>, vector<1x32xf32>
    %c0_76 = arith.constant 0 : index
    %c0_77 = arith.constant 0 : index
    %98 = vector.load %arg23[%c0_76, %c0_77] : memref<1x32xf32, #tpu.memory_space<vmem>>, vector<1x32xf32>
    %99 = arith.truncf %88 : vector<8x32xf32> to vector<8x32xbf16>
    %100 = vector.shape_cast %99 : vector<8x32xbf16> to vector<1x8x32xbf16>
    %101 = vector.shape_cast %100 : vector<1x8x32xbf16> to vector<1x8x32xbf16>
    %102 = vector.broadcast %101 : vector<1x8x32xbf16> to vector<4x8x32xbf16>
    %103 = arith.truncf %5 : vector<8x32xf32> to vector<8x32xbf16>
    %104 = vector.shape_cast %103 : vector<8x32xbf16> to vector<1x8x32xbf16>
    %105 = vector.shape_cast %104 : vector<1x8x32xbf16> to vector<1x8x32xbf16>
    %106 = vector.broadcast %105 : vector<1x8x32xbf16> to vector<4x8x32xbf16>
    "tpu.trace_start"() <{level = 10 : i32, message = "hsd,hde->hse"}> : () -> ()
    %cst_78 = arith.constant dense<0.000000e+00> : vector<4x8x8xf32>
    %107 = tpu.matmul %102, %89, %cst_78 {dimension_numbers = #tpu.dot_dimension_numbers<[2], [1], [1], [2], [0, 0, 0, 1, 1, 2], [0], [0]>} : vector<4x8x32xbf16>, vector<4x32x8xbf16>, vector<4x8x8xf32> -> vector<4x8x8xf32>
    "tpu.trace_stop"() : () -> ()
    %108 = vector.broadcast %90 : vector<4x1x8xf32> to vector<4x8x8xf32>
    %109 = arith.addf %107, %108 : vector<4x8x8xf32>
    "tpu.trace_start"() <{level = 10 : i32, message = "hsd,hde->hse"}> : () -> ()
    %cst_79 = arith.constant dense<0.000000e+00> : vector<4x8x8xf32>
    %110 = tpu.matmul %106, %91, %cst_79 {dimension_numbers = #tpu.dot_dimension_numbers<[2], [1], [1], [2], [0, 0, 0, 1, 1, 2], [0], [0]>} : vector<4x8x32xbf16>, vector<4x32x8xbf16>, vector<4x8x8xf32> -> vector<4x8x8xf32>
    "tpu.trace_stop"() : () -> ()
    %111 = vector.broadcast %92 : vector<4x1x8xf32> to vector<4x8x8xf32>
    %112 = arith.addf %110, %111 : vector<4x8x8xf32>
    "tpu.trace_start"() <{level = 10 : i32, message = "hsd,hde->hse"}> : () -> ()
    %cst_80 = arith.constant dense<0.000000e+00> : vector<4x8x8xf32>
    %113 = tpu.matmul %106, %93, %cst_80 {dimension_numbers = #tpu.dot_dimension_numbers<[2], [1], [1], [2], [0, 0, 0, 1, 1, 2], [0], [0]>} : vector<4x8x32xbf16>, vector<4x32x8xbf16>, vector<4x8x8xf32> -> vector<4x8x8xf32>
    "tpu.trace_stop"() : () -> ()
    %114 = vector.broadcast %94 : vector<4x1x8xf32> to vector<4x8x8xf32>
    %115 = arith.addf %113, %114 : vector<4x8x8xf32>
    %116 = arith.truncf %109 : vector<4x8x8xf32> to vector<4x8x8xbf16>
    %117 = arith.truncf %112 : vector<4x8x8xf32> to vector<4x8x8xbf16>
    "tpu.trace_start"() <{level = 10 : i32, message = "hqe,hke->hqk"}> : () -> ()
    %cst_81 = arith.constant dense<0.000000e+00> : vector<4x8x8xf32>
    %118 = tpu.matmul %116, %117, %cst_81 {dimension_numbers = #tpu.dot_dimension_numbers<[2], [2], [1], [1], [0, 0, 0, 1, 1, 1], [0], [0]>} : vector<4x8x8xbf16>, vector<4x8x8xbf16>, vector<4x8x8xf32> -> vector<4x8x8xf32>
    "tpu.trace_stop"() : () -> ()
    %cst_82 = arith.constant 0.353553385 : f32
    %119 = vector.broadcast %cst_82 : f32 to vector<4x8x8xf32>
    %120 = arith.mulf %118, %119 : vector<4x8x8xf32>
    %cst_83 = arith.constant dense<0xFF800000> : vector<4x8xf32>
    %121 = vector.multi_reduction <maximumf>, %120, %cst_83 [2] : vector<4x8x8xf32> to vector<4x8xf32>
    %122 = vector.shape_cast %121 : vector<4x8xf32> to vector<4x8x1xf32>
    %123 = vector.broadcast %122 : vector<4x8x1xf32> to vector<4x8x8xf32>
    %124 = arith.subf %120, %123 : vector<4x8x8xf32>
    %125 = math.exp %124 : vector<4x8x8xf32>
    %cst_84 = arith.constant dense<0.000000e+00> : vector<4x8xf32>
    %126 = vector.multi_reduction <add>, %125, %cst_84 [2] : vector<4x8x8xf32> to vector<4x8xf32>
    %127 = vector.shape_cast %126 : vector<4x8xf32> to vector<4x8x1xf32>
    %128 = vector.broadcast %127 : vector<4x8x1xf32> to vector<4x8x8xf32>
    %129 = arith.divf %125, %128 : vector<4x8x8xf32>
    %130 = arith.truncf %129 : vector<4x8x8xf32> to vector<4x8x8xbf16>
    %131 = arith.truncf %115 : vector<4x8x8xf32> to vector<4x8x8xbf16>
    "tpu.trace_start"() <{level = 10 : i32, message = "hqk,hke->hqe"}> : () -> ()
    %cst_85 = arith.constant dense<0.000000e+00> : vector<4x8x8xf32>
    %132 = tpu.matmul %130, %131, %cst_85 {dimension_numbers = #tpu.dot_dimension_numbers<[2], [1], [1], [2], [0, 0, 0, 1, 1, 2], [0], [0]>} : vector<4x8x8xbf16>, vector<4x8x8xbf16>, vector<4x8x8xf32> -> vector<4x8x8xf32>
    "tpu.trace_stop"() : () -> ()
    %133 = arith.truncf %132 : vector<4x8x8xf32> to vector<4x8x8xbf16>
    "tpu.trace_start"() <{level = 10 : i32, message = "hqe,hed->hqd"}> : () -> ()
    %cst_86 = arith.constant dense<0.000000e+00> : vector<4x8x32xf32>
    %134 = tpu.matmul %133, %95, %cst_86 {dimension_numbers = #tpu.dot_dimension_numbers<[2], [1], [1], [2], [0, 0, 0, 1, 1, 2], [0], [0]>} : vector<4x8x8xbf16>, vector<4x8x32xbf16>, vector<4x8x32xf32> -> vector<4x8x32xf32>
    "tpu.trace_stop"() : () -> ()
    %cst_87 = arith.constant dense<0.000000e+00> : vector<8x32xf32>
    %135 = vector.multi_reduction <add>, %134, %cst_87 [0] : vector<4x8x32xf32> to vector<8x32xf32>
    %136 = vector.broadcast %96 : vector<1x32xf32> to vector<8x32xf32>
    %137 = arith.addf %135, %136 : vector<8x32xf32>
    %138 = arith.addf %137, %88 : vector<8x32xf32>
    %cst_88 = arith.constant dense<0.000000e+00> : vector<8xf32>
    %139 = vector.multi_reduction <add>, %138, %cst_88 [1] : vector<8x32xf32> to vector<8xf32>
    %140 = vector.shape_cast %139 : vector<8xf32> to vector<8x1xf32>
    %cst_89 = arith.constant 3.200000e+01 : f32
    %141 = vector.broadcast %cst_89 : f32 to vector<8x1xf32>
    %142 = arith.divf %140, %141 : vector<8x1xf32>
    %143 = vector.broadcast %142 : vector<8x1xf32> to vector<8x32xf32>
    %144 = arith.subf %138, %143 : vector<8x32xf32>
    %145 = arith.mulf %144, %144 : vector<8x32xf32>
    %cst_90 = arith.constant dense<0.000000e+00> : vector<8xf32>
    %146 = vector.multi_reduction <add>, %145, %cst_90 [1] : vector<8x32xf32> to vector<8xf32>
    %147 = vector.shape_cast %146 : vector<8xf32> to vector<8x1xf32>
    %cst_91 = arith.constant 3.200000e+01 : f32
    %148 = vector.broadcast %cst_91 : f32 to vector<8x1xf32>
    %149 = arith.divf %147, %148 : vector<8x1xf32>
    %cst_92 = arith.constant 9.99999974E-6 : f32
    %150 = vector.broadcast %cst_92 : f32 to vector<8x1xf32>
    %151 = arith.addf %149, %150 : vector<8x1xf32>
    %152 = math.rsqrt %151 : vector<8x1xf32>
    %153 = vector.broadcast %152 : vector<8x1xf32> to vector<8x32xf32>
    %154 = arith.mulf %144, %153 : vector<8x32xf32>
    %155 = vector.broadcast %97 : vector<1x32xf32> to vector<8x32xf32>
    %156 = arith.mulf %154, %155 : vector<8x32xf32>
    %157 = vector.broadcast %98 : vector<1x32xf32> to vector<8x32xf32>
    %158 = arith.addf %156, %157 : vector<8x32xf32>
    %c0_93 = arith.constant 0 : index
    %c0_94 = arith.constant 0 : index
    %159 = vector.load %arg24[%c0_93, %c0_94] : memref<32x64xbf16, #tpu.memory_space<vmem>>, vector<32x64xbf16>
    %c0_95 = arith.constant 0 : index
    %c0_96 = arith.constant 0 : index
    %160 = vector.load %arg25[%c0_95, %c0_96] : memref<1x64xf32, #tpu.memory_space<vmem>>, vector<1x64xf32>
    %c0_97 = arith.constant 0 : index
    %c0_98 = arith.constant 0 : index
    %161 = vector.load %arg26[%c0_97, %c0_98] : memref<64x32xbf16, #tpu.memory_space<vmem>>, vector<64x32xbf16>
    %c0_99 = arith.constant 0 : index
    %c0_100 = arith.constant 0 : index
    %162 = vector.load %arg27[%c0_99, %c0_100] : memref<1x32xf32, #tpu.memory_space<vmem>>, vector<1x32xf32>
    %c0_101 = arith.constant 0 : index
    %c0_102 = arith.constant 0 : index
    %163 = vector.load %arg28[%c0_101, %c0_102] : memref<1x32xf32, #tpu.memory_space<vmem>>, vector<1x32xf32>
    %c0_103 = arith.constant 0 : index
    %c0_104 = arith.constant 0 : index
    %164 = vector.load %arg29[%c0_103, %c0_104] : memref<1x32xf32, #tpu.memory_space<vmem>>, vector<1x32xf32>
    %165 = arith.truncf %158 : vector<8x32xf32> to vector<8x32xbf16>
    %cst_105 = arith.constant dense<0.000000e+00> : vector<8x64xf32>
    %166 = tpu.matmul %165, %159, %cst_105 {dimension_numbers = #tpu.dot_dimension_numbers<[1], [0], [0], [1], [0, 0, 1, 1], [], []>} : vector<8x32xbf16>, vector<32x64xbf16>, vector<8x64xf32> -> vector<8x64xf32>
    %167 = vector.broadcast %160 : vector<1x64xf32> to vector<8x64xf32>
    %168 = arith.addf %166, %167 : vector<8x64xf32>
    %cst_106 = arith.constant 0.000000e+00 : f32
    %169 = vector.broadcast %cst_106 : f32 to vector<8x64xf32>
    %170 = arith.maximumf %168, %169 : vector<8x64xf32>
    %171 = arith.truncf %170 : vector<8x64xf32> to vector<8x64xbf16>
    %cst_107 = arith.constant dense<0.000000e+00> : vector<8x32xf32>
    %172 = tpu.matmul %171, %161, %cst_107 {dimension_numbers = #tpu.dot_dimension_numbers<[1], [0], [0], [1], [0, 0, 1, 1], [], []>} : vector<8x64xbf16>, vector<64x32xbf16>, vector<8x32xf32> -> vector<8x32xf32>
    %173 = vector.broadcast %162 : vector<1x32xf32> to vector<8x32xf32>
    %174 = arith.addf %172, %173 : vector<8x32xf32>
    %175 = arith.addf %174, %158 : vector<8x32xf32>
    %cst_108 = arith.constant dense<0.000000e+00> : vector<8xf32>
    %176 = vector.multi_reduction <add>, %175, %cst_108 [1] : vector<8x32xf32> to vector<8xf32>
    %177 = vector.shape_cast %176 : vector<8xf32> to vector<8x1xf32>
    %cst_109 = arith.constant 3.200000e+01 : f32
    %178 = vector.broadcast %cst_109 : f32 to vector<8x1xf32>
    %179 = arith.divf %177, %178 : vector<8x1xf32>
    %180 = vector.broadcast %179 : vector<8x1xf32> to vector<8x32xf32>
    %181 = arith.subf %175, %180 : vector<8x32xf32>
    %182 = arith.mulf %181, %181 : vector<8x32xf32>
    %cst_110 = arith.constant dense<0.000000e+00> : vector<8xf32>
    %183 = vector.multi_reduction <add>, %182, %cst_110 [1] : vector<8x32xf32> to vector<8xf32>
    %184 = vector.shape_cast %183 : vector<8xf32> to vector<8x1xf32>
    %cst_111 = arith.constant 3.200000e+01 : f32
    %185 = vector.broadcast %cst_111 : f32 to vector<8x1xf32>
    %186 = arith.divf %184, %185 : vector<8x1xf32>
    %cst_112 = arith.constant 9.99999974E-6 : f32
    %187 = vector.broadcast %cst_112 : f32 to vector<8x1xf32>
    %188 = arith.addf %186, %187 : vector<8x1xf32>
    %189 = math.rsqrt %188 : vector<8x1xf32>
    %190 = vector.broadcast %189 : vector<8x1xf32> to vector<8x32xf32>
    %191 = arith.mulf %181, %190 : vector<8x32xf32>
    %192 = vector.broadcast %163 : vector<1x32xf32> to vector<8x32xf32>
    %193 = arith.mulf %191, %192 : vector<8x32xf32>
    %194 = vector.broadcast %164 : vector<1x32xf32> to vector<8x32xf32>
    %195 = arith.addf %193, %194 : vector<8x32xf32>
    %196 = arith.truncf %195 : vector<8x32xf32> to vector<8x32xbf16>
    %c0_113 = arith.constant 0 : index
    %c0_114 = arith.constant 0 : index
    %c0_115 = arith.constant 0 : index
    %197 = vector.load %arg30[%c0_113, %c0_114, %c0_115] : memref<1x8x32xbf16, #tpu.memory_space<vmem>>, vector<1x8x32xbf16>
    %198 = vector.shape_cast %197 : vector<1x8x32xbf16> to vector<8x32xbf16>
    %199 = vector.shape_cast %196 : vector<8x32xbf16> to vector<1x8x32xbf16>
    tpu.vector_store %arg30[%c0_113, %c0_114, %c0_115], %199 {strides = array<i32>} : memref<1x8x32xbf16, #tpu.memory_space<vmem>>, vector<1x8x32xbf16>,
    return
  }
  func.func @transform_0(%arg0: i32) -> (i32, i32, i32) {
    %c0_i32 = arith.constant 0 : i32
    %c0_i32_0 = arith.constant 0 : i32
    %c0_i32_1 = arith.constant 0 : i32
    return %arg0, %c0_i32, %c0_i32_0 : i32, i32, i32
  }
  func.func @transform_1(%arg0: i32) -> (i32, i32, i32) {
    %c0_i32 = arith.constant 0 : i32
    %c0_i32_0 = arith.constant 0 : i32
    %c0_i32_1 = arith.constant 0 : i32
    return %arg0, %c0_i32, %c0_i32_0 : i32, i32, i32
  }
  func.func @transform_2(%arg0: i32) -> (i32, i32, i32) {
    %c0_i32 = arith.constant 0 : i32
    %c0_i32_0 = arith.constant 0 : i32
    %c0_i32_1 = arith.constant 0 : i32
    return %arg0, %c0_i32, %c0_i32_0 : i32, i32, i32
  }
  func.func @transform_3(%arg0: i32) -> (i32, i32, i32) {
    %c0_i32 = arith.constant 0 : i32
    %c0_i32_0 = arith.constant 0 : i32
    %c0_i32_1 = arith.constant 0 : i32
    %c0_i32_2 = arith.constant 0 : i32
    return %c0_i32, %c0_i32_0, %c0_i32_1 : i32, i32, i32
  }
  func.func @transform_4(%arg0: i32) -> (i32, i32, i32) {
    %c0_i32 = arith.constant 0 : i32
    %c0_i32_0 = arith.constant 0 : i32
    %c0_i32_1 = arith.constant 0 : i32
    %c0_i32_2 = arith.constant 0 : i32
    return %c0_i32, %c0_i32_0, %c0_i32_1 : i32, i32, i32
  }
  func.func @transform_5(%arg0: i32) -> (i32, i32, i32) {
    %c0_i32 = arith.constant 0 : i32
    %c0_i32_0 = arith.constant 0 : i32
    %c0_i32_1 = arith.constant 0 : i32
    %c0_i32_2 = arith.constant 0 : i32
    return %c0_i32, %c0_i32_0, %c0_i32_1 : i32, i32, i32
  }
  func.func @transform_6(%arg0: i32) -> (i32, i32, i32) {
    %c0_i32 = arith.constant 0 : i32
    %c0_i32_0 = arith.constant 0 : i32
    %c0_i32_1 = arith.constant 0 : i32
    %c0_i32_2 = arith.constant 0 : i32
    return %c0_i32, %c0_i32_0, %c0_i32_1 : i32, i32, i32
  }
  func.func @transform_7(%arg0: i32) -> (i32, i32, i32) {
    %c0_i32 = arith.constant 0 : i32
    %c0_i32_0 = arith.constant 0 : i32
    %c0_i32_1 = arith.constant 0 : i32
    %c0_i32_2 = arith.constant 0 : i32
    return %c0_i32, %c0_i32_0, %c0_i32_1 : i32, i32, i32
  }
  func.func @transform_8(%arg0: i32) -> (i32, i32, i32) {
    %c0_i32 = arith.constant 0 : i32
    %c0_i32_0 = arith.constant 0 : i32
    %c0_i32_1 = arith.constant 0 : i32
    %c0_i32_2 = arith.constant 0 : i32
    return %c0_i32, %c0_i32_0, %c0_i32_1 : i32, i32, i32
  }
  func.func @transform_9(%arg0: i32) -> (i32, i32, i32) {
    %c0_i32 = arith.constant 0 : i32
    %c0_i32_0 = arith.constant 0 : i32
    %c0_i32_1 = arith.constant 0 : i32
    %c0_i32_2 = arith.constant 0 : i32
    return %c0_i32, %c0_i32_0, %c0_i32_1 : i32, i32, i32
  }
  func.func @transform_10(%arg0: i32) -> (i32, i32) {
    %c0_i32 = arith.constant 0 : i32
    %c0_i32_0 = arith.constant 0 : i32
    %c0_i32_1 = arith.constant 0 : i32
    return %c0_i32, %c0_i32_0 : i32, i32
  }
  func.func @transform_11(%arg0: i32) -> (i32, i32) {
    %c0_i32 = arith.constant 0 : i32
    %c0_i32_0 = arith.constant 0 : i32
    %c0_i32_1 = arith.constant 0 : i32
    return %c0_i32, %c0_i32_0 : i32, i32
  }
  func.func @transform_12(%arg0: i32) -> (i32, i32) {
    %c0_i32 = arith.constant 0 : i32
    %c0_i32_0 = arith.constant 0 : i32
    %c0_i32_1 = arith.constant 0 : i32
    return %c0_i32, %c0_i32_0 : i32, i32
  }
  func.func @transform_13(%arg0: i32) -> (i32, i32, i32) {
    %c0_i32 = arith.constant 0 : i32
    %c0_i32_0 = arith.constant 0 : i32
    %c0_i32_1 = arith.constant 0 : i32
    %c0_i32_2 = arith.constant 0 : i32
    return %c0_i32, %c0_i32_0, %c0_i32_1 : i32, i32, i32
  }
  func.func @transform_14(%arg0: i32) -> (i32, i32, i32) {
    %c0_i32 = arith.constant 0 : i32
    %c0_i32_0 = arith.constant 0 : i32
    %c0_i32_1 = arith.constant 0 : i32
    %c0_i32_2 = arith.constant 0 : i32
    return %c0_i32, %c0_i32_0, %c0_i32_1 : i32, i32, i32
  }
  func.func @transform_15(%arg0: i32) -> (i32, i32, i32) {
    %c0_i32 = arith.constant 0 : i32
    %c0_i32_0 = arith.constant 0 : i32
    %c0_i32_1 = arith.constant 0 : i32
    %c0_i32_2 = arith.constant 0 : i32
    return %c0_i32, %c0_i32_0, %c0_i32_1 : i32, i32, i32
  }
  func.func @transform_16(%arg0: i32) -> (i32, i32, i32) {
    %c0_i32 = arith.constant 0 : i32
    %c0_i32_0 = arith.constant 0 : i32
    %c0_i32_1 = arith.constant 0 : i32
    %c0_i32_2 = arith.constant 0 : i32
    return %c0_i32, %c0_i32_0, %c0_i32_1 : i32, i32, i32
  }
  func.func @transform_17(%arg0: i32) -> (i32, i32, i32) {
    %c0_i32 = arith.constant 0 : i32
    %c0_i32_0 = arith.constant 0 : i32
    %c0_i32_1 = arith.constant 0 : i32
    %c0_i32_2 = arith.constant 0 : i32
    return %c0_i32, %c0_i32_0, %c0_i32_1 : i32, i32, i32
  }
  func.func @transform_18(%arg0: i32) -> (i32, i32, i32) {
    %c0_i32 = arith.constant 0 : i32
    %c0_i32_0 = arith.constant 0 : i32
    %c0_i32_1 = arith.constant 0 : i32
    %c0_i32_2 = arith.constant 0 : i32
    return %c0_i32, %c0_i32_0, %c0_i32_1 : i32, i32, i32
  }
  func.func @transform_19(%arg0: i32) -> (i32, i32, i32) {
    %c0_i32 = arith.constant 0 : i32
    %c0_i32_0 = arith.constant 0 : i32
    %c0_i32_1 = arith.constant 0 : i32
    %c0_i32_2 = arith.constant 0 : i32
    return %c0_i32, %c0_i32_0, %c0_i32_1 : i32, i32, i32
  }
  func.func @transform_20(%arg0: i32) -> (i32, i32) {
    %c0_i32 = arith.constant 0 : i32
    %c0_i32_0 = arith.constant 0 : i32
    %c0_i32_1 = arith.constant 0 : i32
    return %c0_i32, %c0_i32_0 : i32, i32
  }
  func.func @transform_21(%arg0: i32) -> (i32, i32) {
    %c0_i32 = arith.constant 0 : i32
    %c0_i32_0 = arith.constant 0 : i32
    %c0_i32_1 = arith.constant 0 : i32
    return %c0_i32, %c0_i32_0 : i32, i32
  }
  func.func @transform_22(%arg0: i32) -> (i32, i32) {
    %c0_i32 = arith.constant 0 : i32
    %c0_i32_0 = arith.constant 0 : i32
    %c0_i32_1 = arith.constant 0 : i32
    return %c0_i32, %c0_i32_0 : i32, i32
  }
  func.func @transform_23(%arg0: i32) -> (i32, i32) {
    %c0_i32 = arith.constant 0 : i32
    %c0_i32_0 = arith.constant 0 : i32
    %c0_i32_1 = arith.constant 0 : i32
    return %c0_i32, %c0_i32_0 : i32, i32
  }
  func.func @transform_24(%arg0: i32) -> (i32, i32) {
    %c0_i32 = arith.constant 0 : i32
    %c0_i32_0 = arith.constant 0 : i32
    %c0_i32_1 = arith.constant 0 : i32
    return %c0_i32, %c0_i32_0 : i32, i32
  }
  func.func @transform_25(%arg0: i32) -> (i32, i32) {
    %c0_i32 = arith.constant 0 : i32
    %c0_i32_0 = arith.constant 0 : i32
    %c0_i32_1 = arith.constant 0 : i32
    return %c0_i32, %c0_i32_0 : i32, i32
  }
  func.func @transform_26(%arg0: i32) -> (i32, i32) {
    %c0_i32 = arith.constant 0 : i32
    %c0_i32_0 = arith.constant 0 : i32
    %c0_i32_1 = arith.constant 0 : i32
    return %c0_i32, %c0_i32_0 : i32, i32
  }
  func.func @transform_27(%arg0: i32) -> (i32, i32) {
    %c0_i32 = arith.constant 0 : i32
    %c0_i32_0 = arith.constant 0 : i32
    %c0_i32_1 = arith.constant 0 : i32
    return %c0_i32, %c0_i32_0 : i32, i32
  }
  func.func @transform_28(%arg0: i32) -> (i32, i32) {
    %c0_i32 = arith.constant 0 : i32
    %c0_i32_0 = arith.constant 0 : i32
    %c0_i32_1 = arith.constant 0 : i32
    return %c0_i32, %c0_i32_0 : i32, i32
  }
  func.func @transform_29(%arg0: i32) -> (i32, i32, i32) {
    %c0_i32 = arith.constant 0 : i32
    %c0_i32_0 = arith.constant 0 : i32
    %c0_i32_1 = arith.constant 0 : i32
    return %arg0, %c0_i32, %c0_i32_0 : i32, i32, i32
  }
}

</mosaic_0001>

<llo_original>
// kernel: transformer_chatbot_forward.13
$region0: #{transformer_chatbot_forward.13}
  #allocation0 [shape = 'u32[]', space=smem, size = 0x4, offset = 0x4, fixed_abs, tag = 'smem constant byte address 0x4 - core index']
  #allocation1 [shape = 'u32[144,128]{1,0:T(1,128)}', space=vmem, size = 0x12000, scoped, tag = 'internal scratch']
  %s0 = inlined_call_operand.vmem [shape: bf16[16,32], index: 0, kind: input, shape index: {}]
  %s1 = inlined_call_operand.vmem [shape: bf16[32,128], index: 1, kind: input, shape index: {}]
  %s2 = inlined_call_operand.vmem [shape: f32[1,128], index: 2, kind: input, shape index: {}]
  %s3 = inlined_call_operand.vmem [shape: f32[16,128], index: 3, kind: output, shape index: {}]
  %s4 = sld [smem:[#allocation0]]
  $region45: #{transformer_chatbot_forward.13} parent=0
    _
  %s6 = ssub.s32 1, %s4
  %s7 = scalar_select 0, %s6, %s4
  loop: start=0, step=1, limit=4
  $region2: #{transformer_chatbot_forward.13} parent=0 // loop_pre_header
    _
  $region3: #{transformer_chatbot_forward.13} parent=0 // loop_header
    %s9 = sphi 0, %s13
    %p10 = scmp.ge.s32.totalorder %s9, 4
    %s16 = sphi 0, %s28
    %s17 = sphi 0, %s24
    %s18 = sphi 0, %s16
    %s19 = sphi 0, %s17
    %s20 = sphi 0, %s18
    %s21 = sphi 0, %s19
    %s31 = sphi 0, %s33
    %s34 = sphi 0, %s31
    %s35 = sphi 0, %s34
    %s51 = sphi 0, %s35
    %s57 = sphi 0, %s59
    %s60 = sphi 0, %s57
    %s61 = sphi 0, %s60
    %s77 = sphi 0, %s61
    %s83 = sphi 0, %s85
    %s86 = sphi 0, %s83
    %s87 = sphi 0, %s86
    %s103 = sphi 0, %s87
    %s111 = sphi 0, %s113
    %s114 = sphi 0, %s111
    %s115 = sphi 0, %s114
    %s131 = sphi 0, %s115
  $region4: #{transformer_chatbot_forward.13} parent=0 // loop_header_branch
    %12 = sbr.rel (%p10) target = $region8
  $region5: #{transformer_chatbot_forward.13} parent=0 // loop_body
    %s14 = ssub.s32 %s9, 1
    %s15 = ssub.s32 %s9, 2
    %s22 = sadd.s32 1, %s17
    %p23 = scmp.ge.s32.totalorder %s22, 1
    %s24 = scalar_select %p23, 0, %s22
    %s25 = sadd.s32 1, %s16
    %s26 = scalar_select %p23, %s25, %s16
    %p27 = scmp.ge.s32.totalorder %s26, 2
    %s28 = scalar_select %p27, 0, %s26
    %s29 = ssub.s32 %s16, %s28
    %p30 = scmp.eq.s32.totalorder %s29, 0
    %s32 = sadd.s32 %s31, 1
    %s33 = scalar_select %p30, %s31, %s32
    %p36 = pneg %p30
    %p37 = scmp.eq.s32.totalorder %s9, 1
    %p38 = por %p36, %p37
    %p39 = scmp.ne.s32.totalorder %s31, %s34
    %p40 = scmp.eq.s32.totalorder %s9, 0
    %p41 = por %p39, %p40
    %p42 = scmp.ne.s32.totalorder %s31, %s34
    %p43 = scmp.eq.s32.totalorder %s14, 1
    %p44 = por %p42, %p43
    %p45 = scmp.ne.s32.totalorder %s34, %s35
    %p46 = scmp.eq.s32.totalorder %s14, 0
    %p47 = por %p45, %p46
    %p48 = scmp.ne.s32.totalorder %s34, %s35
    %p49 = scmp.eq.s32.totalorder %s15, 1
    %p50 = por %p48, %p49
    %p52 = scmp.ne.s32.totalorder %s35, %s51
    %p53 = scmp.eq.s32.totalorder %s15, 0
    %p54 = por %p52, %p53
    %s55 = ssub.s32 %s17, %s24
    %p56 = scmp.eq.s32.totalorder %s55, 0
    %s58 = sadd.s32 %s57, 1
    %s59 = scalar_select %p56, %s57, %s58
    %p62 = pneg %p56
    %p63 = scmp.eq.s32.totalorder %s9, 1
    %p64 = por %p62, %p63
    %p65 = scmp.ne.s32.totalorder %s57, %s60
    %p66 = scmp.eq.s32.totalorder %s9, 0
    %p67 = por %p65, %p66
    %p68 = scmp.ne.s32.totalorder %s57, %s60
    %p69 = scmp.eq.s32.totalorder %s14, 1
    %p70 = por %p68, %p69
    %p71 = scmp.ne.s32.totalorder %s60, %s61
    %p72 = scmp.eq.s32.totalorder %s14, 0
    %p73 = por %p71, %p72
    %p74 = scmp.ne.s32.totalorder %s60, %s61
    %p75 = scmp.eq.s32.totalorder %s15, 1
    %p76 = por %p74, %p75
    %p78 = scmp.ne.s32.totalorder %s61, %s77
    %p79 = scmp.eq.s32.totalorder %s15, 0
    %p80 = por %p78, %p79
    %s81 = ssub.s32 %s17, %s24
    %p82 = scmp.eq.s32.totalorder %s81, 0
    %s84 = sadd.s32 %s83, 1
    %s85 = scalar_select %p82, %s83, %s84
    %p88 = pneg %p82
    %p89 = scmp.eq.s32.totalorder %s9, 1
    %p90 = por %p88, %p89
    %p91 = scmp.ne.s32.totalorder %s83, %s86
    %p92 = scmp.eq.s32.totalorder %s9, 0
    %p93 = por %p91, %p92
    %p94 = scmp.ne.s32.totalorder %s83, %s86
    %p95 = scmp.eq.s32.totalorder %s14, 1
    %p96 = por %p94, %p95
    %p97 = scmp.ne.s32.totalorder %s86, %s87
    %p98 = scmp.eq.s32.totalorder %s14, 0
    %p99 = por %p97, %p98
    %p100 = scmp.ne.s32.totalorder %s86, %s87
    %p101 = scmp.eq.s32.totalorder %s15, 1
    %p102 = por %p100, %p101
    %p104 = scmp.ne.s32.totalorder %s87, %s103
    %p105 = scmp.eq.s32.totalorder %s15, 0
    %p106 = por %p104, %p105
    %s107 = ssub.s32 %s16, %s28
    %s108 = ssub.s32 %s17, %s24
    %s109 = sor.u32 %s107, %s108
    %p110 = scmp.eq.s32.totalorder %s109, 0
    %s112 = sadd.s32 %s111, 1
    %s113 = scalar_select %p110, %s111, %s112
    %p116 = pneg %p110
    %p117 = scmp.eq.s32.totalorder %s9, 1
    %p118 = por %p116, %p117
    %p119 = scmp.ne.s32.totalorder %s111, %s114
    %p120 = scmp.eq.s32.totalorder %s9, 0
    %p121 = por %p119, %p120
    %p122 = scmp.ne.s32.totalorder %s111, %s114
    %p123 = scmp.eq.s32.totalorder %s14, 1
    %p124 = por %p122, %p123
    %p125 = scmp.ne.s32.totalorder %s114, %s115
    %p126 = scmp.eq.s32.totalorder %s14, 0
    %p127 = por %p125, %p126
    %p128 = scmp.ne.s32.totalorder %s114, %s115
    %p129 = scmp.eq.s32.totalorder %s15, 1
    %p130 = por %p128, %p129
    %p132 = scmp.ne.s32.totalorder %s115, %s131
    %p133 = scmp.eq.s32.totalorder %s15, 0
    %p134 = por %p132, %p133
    %p135 = scmp.le.s32.totalorder 1, %s9
    %p136 = scmp.lt.s32.totalorder %s9, 3
    %p137 = pnand %p135, %p136
    %p138 = pneg %p137
    // Predicated region
    $region9: #{transformer_chatbot_forward.13} parent=5 // pred_check
      _
    $region10: #{transformer_chatbot_forward.13} parent=5 // pred_check_branch
      %140 = sbr.rel (%p137) target = $region12
    $region11: #{transformer_chatbot_forward.13} parent=5 // pred_region
      %s141 = ssub.s32 %s9, 1
      // Predicated region
      $region13: #{transformer_chatbot_forward.13} parent=11 // pred_check
        %p142 = pneg %p73
      $region14: #{transformer_chatbot_forward.13} parent=11 // pred_check_branch
        %144 = sbr.rel (%p142) target = $region16
      $region15: #{transformer_chatbot_forward.13} parent=11 // pred_region
        %p145 = scmp.lt.s32.totalorder %s19, 0
        %s146 = scalar_select %p145, %s19, 0
        %s147 = smul.addr %s146, 4
        %s148 = scalar_lea.vmem %s1, %s147
      $region16: #{transformer_chatbot_forward.13} parent=11 // pred_fallthru
        _
      // Predicated region
      $region17: #{transformer_chatbot_forward.13} parent=11 // pred_check
        %p149 = pneg %p99
      $region18: #{transformer_chatbot_forward.13} parent=11 // pred_check_branch
        %151 = sbr.rel (%p149) target = $region20
      $region19: #{transformer_chatbot_forward.13} parent=11 // pred_region
        %p152 = scmp.lt.s32.totalorder %s19, 0
        %s153 = scalar_select %p152, %s19, 0
        %s154 = scalar_lea.vmem %s2, %s153
      $region20: #{transformer_chatbot_forward.13} parent=11 // pred_fallthru
        _
    $region12: #{transformer_chatbot_forward.13} parent=5 // pred_fallthru
      _
    %p155 = scmp.lt.s32.totalorder %s9, 2
    // Predicated region
    $region21: #{transformer_chatbot_forward.13} parent=5 // pred_check
      %p156 = pneg %p155
    $region22: #{transformer_chatbot_forward.13} parent=5 // pred_check_branch
      %158 = sbr.rel (%p156) target = $region24
    $region23: #{transformer_chatbot_forward.13} parent=5 // pred_region
      // Predicated region
      $region25: #{transformer_chatbot_forward.13} parent=23 // pred_check
        %p159 = pneg %p41
      $region26: #{transformer_chatbot_forward.13} parent=23 // pred_check_branch
        %161 = sbr.rel (%p159) target = $region28
      $region27: #{transformer_chatbot_forward.13} parent=23 // pred_region
        %p162 = scmp.lt.s32.totalorder %s16, 1
        %s163 = scalar_select %p162, %s16, 1
        %s164 = smul.addr %s163, 4
        %s165 = scalar_lea.vmem %s0, %s164
      $region28: #{transformer_chatbot_forward.13} parent=23 // pred_fallthru
        _
    $region24: #{transformer_chatbot_forward.13} parent=5 // pred_fallthru
      _
    %p166 = scmp.le.s32.totalorder 1, %s9
    %p167 = scmp.lt.s32.totalorder %s9, 3
    %p168 = pnand %p166, %p167
    %p169 = pneg %p168
    // Predicated region
    $region29: #{transformer_chatbot_forward.13} parent=5 // pred_check
      _
    $region30: #{transformer_chatbot_forward.13} parent=5 // pred_check_branch
      %171 = sbr.rel (%p168) target = $region32
    $region31: #{transformer_chatbot_forward.13} parent=5 // pred_region
      %s172 = ssub.s32 %s9, 1
      %p173 = scmp.lt.s32.totalorder %s18, 1
      %s174 = scalar_select %p173, %s18, 1
      %s175 = smul.addr %s174, 4
      %s176 = scalar_lea.vmem %s0, %s175
      %p177 = pneg %p47
      %p178 = pneg %p44
      %p179 = scmp.lt.s32.totalorder %s19, 0
      %s180 = scalar_select %p179, %s19, 0
      %s181 = smul.addr %s180, 4
      %s182 = scalar_lea.vmem %s1, %s181
      %p183 = pneg %p73
      %p184 = pneg %p70
      %p185 = scmp.lt.s32.totalorder %s19, 0
      %s186 = scalar_select %p185, %s19, 0
      %s187 = scalar_lea.vmem %s2, %s186
      %p188 = pneg %p99
      %p189 = pneg %p96
      %p190 = pneg %p127
      %p191 = pneg %p124
      %p192 = scmp.lt.s32.totalorder %s18, 1
      %s193 = scalar_select %p192, %s18, 1
      %p194 = scmp.lt.s32.totalorder %s19, 0
      %s195 = scalar_select %p194, %s19, 0
      %s196 = sadd.s32 %s195, %s193
      %s197 = smul.addr %s196, 8
      %s198 = scalar_lea.vmem %s3, %s197
      %p199 = scmp.lt.s32.totalorder %s18, 1
      %s200 = scalar_select %p199, %s18, 1
      %s201 = smul.addr %s200, 4
      %s202 = scalar_lea.vmem %s0, %s201
      %p203 = scmp.lt.s32.totalorder %s19, 0
      %s204 = scalar_select %p203, %s19, 0
      %s205 = smul.addr %s204, 4
      %s206 = scalar_lea.vmem %s1, %s205
      %p207 = scmp.lt.s32.totalorder %s19, 0
      %s208 = scalar_select %p207, %s19, 0
      %s209 = scalar_lea.vmem %s2, %s208
      %p210 = scmp.lt.s32.totalorder %s18, 1
      %s211 = scalar_select %p210, %s18, 1
      %p212 = scmp.lt.s32.totalorder %s19, 0
      %s213 = scalar_select %p212, %s19, 0
      %s214 = sadd.s32 %s213, %s211
      %s215 = smul.addr %s214, 8
      %s216 = scalar_lea.vmem %s3, %s215
      %v218 = vld [vmem:[%s202] sm:$0xf]
      %v219 = vld [vmem:[%s206] sm:$0xf]
      %v220 = vld [vmem:[%s206 + $0x4] sm:$0xf]
      %v221 = vld [vmem:[%s206 + $0x8] sm:$0xf]
      %v222 = vld [vmem:[%s206 + $0xc] sm:$0xf]
      %v223 = vld [vmem:[%s209] sm:$0x1]
      %v225 = vlaneseq
      %v226 = vshrl.u32 %v225, 7
      %v227 = vsub.s32 0, %v226
      %v228 = vrot.slane %v223, %v227
      %v234 = vunpack.c.l.b16 %v219
      %v235 = vunpack.c.l.b16 %v220
      %v236 = vunpack.c.l.b16 %v221
      %v237 = vunpack.c.l.b16 %v222
      %v238 = vpack.c.b16 %v235, %v234
      %v239 = vpack.c.b16 %v237, %v236
      %vm242 = vcmask 261120
      %v244 = vsel %vm242, %v218, 0
      %246 = vmatprep.subr.bf16.mxu0 0
      %247 = vmatpush1.bf16.msra.mxu0 %v238
      %248 = vmatprep.subr.bf16.mxu0 0
      %249 = vmatpush1.bf16.msra.mxu0 %v239
      %250 = vmatprep.subr.bf16.mxu0 0
      %251 = vmatpush1.bf16.msra.mxu0 0
      %252 = vmatprep.subr.bf16.mxu0 0
      %253 = vmatpush1.bf16.msra.mxu0 0
      %254 = vmatprep.subr.bf16.mxu0 0
      %255 = vmatpush1.bf16.msra.mxu0 0
      %256 = vmatprep.subr.bf16.mxu0 0
      %257 = vmatpush1.bf16.msra.mxu0 0
      %258 = vmatprep.subr.bf16.mxu0 0
      %259 = vmatpush1.bf16.msra.mxu0 0
      %260 = vmatprep.subr.bf16.mxu0 0
      %261 = vmatpush1.bf16.msra.mxu0 0
      %262 = vmatprep.subr.bf16.mxu0 0
      %263 = vmatpush1.bf16.msra.mxu0 0
      %264 = vmatprep.subr.bf16.mxu0 0
      %265 = vmatpush1.bf16.msra.mxu0 0
      %266 = vmatprep.subr.bf16.mxu0 0
      %267 = vmatpush1.bf16.msra.mxu0 0
      %268 = vmatprep.subr.bf16.mxu0 0
      %269 = vmatpush1.bf16.msra.mxu0 0
      %270 = vmatprep.subr.bf16.mxu0 0
      %271 = vmatpush1.bf16.msra.mxu0 0
      %272 = vmatprep.subr.bf16.mxu0 0
      %273 = vmatpush1.bf16.msra.mxu0 0
      %274 = vmatprep.subr.bf16.mxu0 0
      %275 = vmatpush1.bf16.msra.mxu0 0
      %276 = vmatprep.subr.bf16.mxu0 0
      %277 = vmatpush1.bf16.msra.mxu0 0
      %278 = vmatprep.mubr.bf16.mxu0 0
      %279 = vmatmul.mubr.bf16.gmra.mrb[0].mxu0 %v244
      %v280 = vpop.f32.mrb[0].mxu0
      %v281 = vadd.f32 %v228, %v280
      %v282 = vpop.f32.mrb[0].mxu0
      %v283 = vpop.f32.mrb[0].mxu0
      %v284 = vpop.f32.mrb[0].mxu0
      %285 = vdwg.mxu0
      %286 = vst [vmem:[%s216] sm:$0xff] %v281
      %p287 = scmp.lt.s32.totalorder %s18, 1
      %s288 = scalar_select %p287, %s18, 1
      %p289 = scmp.lt.s32.totalorder %s19, 0
      %s290 = scalar_select %p289, %s19, 0
      %s291 = sadd.s32 %s290, %s288
      %s292 = smul.addr %s291, 8
      %s293 = scalar_lea.vmem %s3, %s292
      // Predicated region
      $region33: #{transformer_chatbot_forward.13} parent=31 // pred_check
        %p294 = pneg %p124
      $region34: #{transformer_chatbot_forward.13} parent=31 // pred_check_branch
        %296 = sbr.rel (%p294) target = $region36
      $region35: #{transformer_chatbot_forward.13} parent=31 // pred_region
        _
      $region36: #{transformer_chatbot_forward.13} parent=31 // pred_fallthru
        _
    $region32: #{transformer_chatbot_forward.13} parent=5 // pred_fallthru
      _
    %p297 = scmp.le.s32.totalorder 2, %s9
    // Predicated region
    $region37: #{transformer_chatbot_forward.13} parent=5 // pred_check
      %p298 = pneg %p297
    $region38: #{transformer_chatbot_forward.13} parent=5 // pred_check_branch
      %300 = sbr.rel (%p298) target = $region40
    $region39: #{transformer_chatbot_forward.13} parent=5 // pred_region
      %s301 = ssub.s32 %s9, 2
      // Predicated region
      $region41: #{transformer_chatbot_forward.13} parent=39 // pred_check
        %p302 = pneg %p130
      $region42: #{transformer_chatbot_forward.13} parent=39 // pred_check_branch
        %304 = sbr.rel (%p302) target = $region44
      $region43: #{transformer_chatbot_forward.13} parent=39 // pred_region
        %p305 = scmp.lt.s32.totalorder %s20, 1
        %s306 = scalar_select %p305, %s20, 1
        %p307 = scmp.lt.s32.totalorder %s21, 0
        %s308 = scalar_select %p307, %s21, 0
        %s309 = sadd.s32 %s308, %s306
        %s310 = smul.addr %s309, 8
        %s311 = scalar_lea.vmem %s3, %s310
      $region44: #{transformer_chatbot_forward.13} parent=39 // pred_fallthru
        _
    $region40: #{transformer_chatbot_forward.13} parent=5 // pred_fallthru
      _
  $region6: #{transformer_chatbot_forward.13} parent=0 // loop_footer
    %s13 = sadd.s32 1, %s9
  $region7: #{transformer_chatbot_forward.13} parent=0 // loop_footer_branch
    %8 = sbr.rel target = $region3
  $region8: #{transformer_chatbot_forward.13} parent=0 // loop_exit
    _

// kernel: transformer_chatbot_forward.9
$region0: #{transformer_chatbot_forward.9}
  #allocation0 [shape = 'u32[]', space=smem, size = 0x4, offset = 0x4, fixed_abs, tag = 'smem constant byte address 0x4 - core index']
  #allocation1 [shape = 'u32[144,128]{1,0:T(1,128)}', space=vmem, size = 0x12000, scoped, tag = 'internal scratch']
  %s0 = inlined_call_operand.vmem [shape: bf16[16,32], index: 0, kind: input, shape index: {}]
  %s1 = inlined_call_operand.vmem [shape: f32[1,32], index: 1, kind: input, shape index: {}]
  %s2 = inlined_call_operand.vmem [shape: f32[1,32], index: 2, kind: input, shape index: {}]
  %s3 = inlined_call_operand.vmem [shape: bf16[16,32], index: 3, kind: output, shape index: {}]
  %s4 = sld [smem:[#allocation0]]
  $region45: #{transformer_chatbot_forward.9} parent=0
    _
  %s6 = ssub.s32 1, %s4
  %s7 = scalar_select 0, %s6, %s4
  loop: start=0, step=1, limit=4
  $region2: #{transformer_chatbot_forward.9} parent=0 // loop_pre_header
    _
  $region3: #{transformer_chatbot_forward.9} parent=0 // loop_header
    %s9 = sphi 0, %s13
    %p10 = scmp.ge.s32.totalorder %s9, 4
    %s19 = sphi 0, %s21
    %s22 = sphi 0, %s19
    %s23 = sphi 0, %s22
    %s39 = sphi 0, %s23
    %s43 = sphi 0, %s43
    %s45 = sphi 0, %s43
    %s46 = sphi 0, %s45
    %s60 = sphi 0, %s46
    %s64 = sphi 0, %s64
    %s66 = sphi 0, %s64
    %s67 = sphi 0, %s66
    %s81 = sphi 0, %s67
    %s87 = sphi 0, %s89
    %s90 = sphi 0, %s87
    %s91 = sphi 0, %s90
    %s107 = sphi 0, %s91
  $region4: #{transformer_chatbot_forward.9} parent=0 // loop_header_branch
    %12 = sbr.rel (%p10) target = $region8
  $region5: #{transformer_chatbot_forward.9} parent=0 // loop_body
    %s14 = ssub.s32 %s9, 1
    %s15 = ssub.s32 %s9, 2
    %s16 = sadd.s32 %s9, 1
    %s17 = ssub.s32 %s9, %s16
    %p18 = scmp.eq.s32.totalorder %s17, 0
    %s20 = sadd.s32 %s19, 1
    %s21 = scalar_select %p18, %s19, %s20
    %p24 = pneg %p18
    %p25 = scmp.eq.s32.totalorder %s9, 1
    %p26 = por %p24, %p25
    %p27 = scmp.ne.s32.totalorder %s19, %s22
    %p28 = scmp.eq.s32.totalorder %s9, 0
    %p29 = por %p27, %p28
    %p30 = scmp.ne.s32.totalorder %s19, %s22
    %p31 = scmp.eq.s32.totalorder %s14, 1
    %p32 = por %p30, %p31
    %p33 = scmp.ne.s32.totalorder %s22, %s23
    %p34 = scmp.eq.s32.totalorder %s14, 0
    %p35 = por %p33, %p34
    %p36 = scmp.ne.s32.totalorder %s22, %s23
    %p37 = scmp.eq.s32.totalorder %s15, 1
    %p38 = por %p36, %p37
    %p40 = scmp.ne.s32.totalorder %s23, %s39
    %p41 = scmp.eq.s32.totalorder %s15, 0
    %p42 = por %p40, %p41
    %s44 = sadd.s32 %s43, 1
    %p47 = scmp.eq.s32.totalorder %s9, 1
    %p48 = scmp.ne.s32.totalorder %s43, %s45
    %p49 = scmp.eq.s32.totalorder %s9, 0
    %p50 = por %p48, %p49
    %p51 = scmp.ne.s32.totalorder %s43, %s45
    %p52 = scmp.eq.s32.totalorder %s14, 1
    %p53 = por %p51, %p52
    %p54 = scmp.ne.s32.totalorder %s45, %s46
    %p55 = scmp.eq.s32.totalorder %s14, 0
    %p56 = por %p54, %p55
    %p57 = scmp.ne.s32.totalorder %s45, %s46
    %p58 = scmp.eq.s32.totalorder %s15, 1
    %p59 = por %p57, %p58
    %p61 = scmp.ne.s32.totalorder %s46, %s60
    %p62 = scmp.eq.s32.totalorder %s15, 0
    %p63 = por %p61, %p62
    %s65 = sadd.s32 %s64, 1
    %p68 = scmp.eq.s32.totalorder %s9, 1
    %p69 = scmp.ne.s32.totalorder %s64, %s66
    %p70 = scmp.eq.s32.totalorder %s9, 0
    %p71 = por %p69, %p70
    %p72 = scmp.ne.s32.totalorder %s64, %s66
    %p73 = scmp.eq.s32.totalorder %s14, 1
    %p74 = por %p72, %p73
    %p75 = scmp.ne.s32.totalorder %s66, %s67
    %p76 = scmp.eq.s32.totalorder %s14, 0
    %p77 = por %p75, %p76
    %p78 = scmp.ne.s32.totalorder %s66, %s67
    %p79 = scmp.eq.s32.totalorder %s15, 1
    %p80 = por %p78, %p79
    %p82 = scmp.ne.s32.totalorder %s67, %s81
    %p83 = scmp.eq.s32.totalorder %s15, 0
    %p84 = por %p82, %p83
    %s85 = ssub.s32 %s9, %s16
    %p86 = scmp.eq.s32.totalorder %s85, 0
    %s88 = sadd.s32 %s87, 1
    %s89 = scalar_select %p86, %s87, %s88
    %p92 = pneg %p86
    %p93 = scmp.eq.s32.totalorder %s9, 1
    %p94 = por %p92, %p93
    %p95 = scmp.ne.s32.totalorder %s87, %s90
    %p96 = scmp.eq.s32.totalorder %s9, 0
    %p97 = por %p95, %p96
    %p98 = scmp.ne.s32.totalorder %s87, %s90
    %p99 = scmp.eq.s32.totalorder %s14, 1
    %p100 = por %p98, %p99
    %p101 = scmp.ne.s32.totalorder %s90, %s91
    %p102 = scmp.eq.s32.totalorder %s14, 0
    %p103 = por %p101, %p102
    %p104 = scmp.ne.s32.totalorder %s90, %s91
    %p105 = scmp.eq.s32.totalorder %s15, 1
    %p106 = por %p104, %p105
    %p108 = scmp.ne.s32.totalorder %s91, %s107
    %p109 = scmp.eq.s32.totalorder %s15, 0
    %p110 = por %p108, %p109
    %p111 = scmp.le.s32.totalorder 1, %s9
    %p112 = scmp.lt.s32.totalorder %s9, 3
    %p113 = pnand %p111, %p112
    %p114 = pneg %p113
    // Predicated region
    $region9: #{transformer_chatbot_forward.9} parent=5 // pred_check
      _
    $region10: #{transformer_chatbot_forward.9} parent=5 // pred_check_branch
      %116 = sbr.rel (%p113) target = $region12
    $region11: #{transformer_chatbot_forward.9} parent=5 // pred_region
      %s117 = ssub.s32 %s9, 1
      // Predicated region
      $region13: #{transformer_chatbot_forward.9} parent=11 // pred_check
        %p118 = pneg %p56
      $region14: #{transformer_chatbot_forward.9} parent=11 // pred_check_branch
        %120 = sbr.rel (%p118) target = $region16
      $region15: #{transformer_chatbot_forward.9} parent=11 // pred_region
        _
      $region16: #{transformer_chatbot_forward.9} parent=11 // pred_fallthru
        _
      // Predicated region
      $region17: #{transformer_chatbot_forward.9} parent=11 // pred_check
        %p121 = pneg %p77
      $region18: #{transformer_chatbot_forward.9} parent=11 // pred_check_branch
        %123 = sbr.rel (%p121) target = $region20
      $region19: #{transformer_chatbot_forward.9} parent=11 // pred_region
        _
      $region20: #{transformer_chatbot_forward.9} parent=11 // pred_fallthru
        _
    $region12: #{transformer_chatbot_forward.9} parent=5 // pred_fallthru
      _
    %p124 = scmp.lt.s32.totalorder %s9, 2
    // Predicated region
    $region21: #{transformer_chatbot_forward.9} parent=5 // pred_check
      %p125 = pneg %p124
    $region22: #{transformer_chatbot_forward.9} parent=5 // pred_check_branch
      %127 = sbr.rel (%p125) target = $region24
    $region23: #{transformer_chatbot_forward.9} parent=5 // pred_region
      // Predicated region
      $region25: #{transformer_chatbot_forward.9} parent=23 // pred_check
        %p128 = pneg %p29
      $region26: #{transformer_chatbot_forward.9} parent=23 // pred_check_branch
        %130 = sbr.rel (%p128) target = $region28
      $region27: #{transformer_chatbot_forward.9} parent=23 // pred_region
        %p131 = scmp.lt.s32.totalorder %s9, 1
        %s132 = scalar_select %p131, %s9, 1
        %s133 = smul.addr %s132, 4
        %s134 = scalar_lea.vmem %s0, %s133
      $region28: #{transformer_chatbot_forward.9} parent=23 // pred_fallthru
        _
    $region24: #{transformer_chatbot_forward.9} parent=5 // pred_fallthru
      _
    %p135 = scmp.le.s32.totalorder 1, %s9
    %p136 = scmp.lt.s32.totalorder %s9, 3
    %p137 = pnand %p135, %p136
    %p138 = pneg %p137
    // Predicated region
    $region29: #{transformer_chatbot_forward.9} parent=5 // pred_check
      _
    $region30: #{transformer_chatbot_forward.9} parent=5 // pred_check_branch
      %140 = sbr.rel (%p137) target = $region32
    $region31: #{transformer_chatbot_forward.9} parent=5 // pred_region
      %s141 = ssub.s32 %s9, 1
      %p142 = scmp.lt.s32.totalorder %s14, 1
      %s143 = scalar_select %p142, %s14, 1
      %s144 = smul.addr %s143, 4
      %s145 = scalar_lea.vmem %s0, %s144
      %p146 = pneg %p35
      %p147 = pneg %p32
      %p148 = pneg %p56
      %p149 = pneg %p53
      %p150 = pneg %p77
      %p151 = pneg %p74
      %p152 = pneg %p103
      %p153 = pneg %p100
      %p154 = scmp.lt.s32.totalorder %s14, 1
      %s155 = scalar_select %p154, %s14, 1
      %s156 = smul.addr %s155, 4
      %s157 = scalar_lea.vmem %s3, %s156
      %p158 = scmp.lt.s32.totalorder %s14, 1
      %s159 = scalar_select %p158, %s14, 1
      %s160 = smul.addr %s159, 4
      %s161 = scalar_lea.vmem %s0, %s160
      %p162 = scmp.lt.s32.totalorder %s14, 1
      %s163 = scalar_select %p162, %s14, 1
      %s164 = smul.addr %s163, 4
      %s165 = scalar_lea.vmem %s3, %s164
      %v166 = vld [vmem:[%s161] sm:$0xf]
      %v167 = vunpack.c.l.bf16 %v166
      %v168 = vld [vmem:[%s1] sm:$0x1]
      %v169 = vld [vmem:[%s2] sm:$0x1]
      %vm170 = vcmask 261120
      %v171 = vsel %vm170, %v167, 0.0
      %172 = vadd.xlane.f32.xlu0 %v171
      %v173 = vpop.xlane.xlu0 %172
      %v174 = vrcp.pop 32.0
      %v175 = vmul.f32 %v173, %v174
      %v176 = vsub.f32 %v167, %v175
      %v177 = vmul.f32 %v176, %v176
      %v178 = vsel %vm170, %v177, 0.0
      %179 = vadd.xlane.f32.xlu0 %v178
      %v180 = vpop.xlane.xlu0 %179
      %v181 = vmul.f32 %v180, %v174
      %v182 = vadd.f32 %v181, 1e-05
      %v183 = vrsqrt.pop %v182
      %v184 = vmul.f32 %v176, %v183
      %v186 = vlaneseq
      %v187 = vshrl.u32 %v186, 7
      %v188 = vsub.s32 0, %v187
      %v189 = vrot.slane %v168, %v188
      %v191 = vmul.f32 %v184, %v189
      %v193 = vlaneseq
      %v194 = vshrl.u32 %v193, 7
      %v195 = vsub.s32 0, %v194
      %v196 = vrot.slane %v169, %v195
      %v198 = vadd.f32 %v191, %v196
      %v199 = vpack.c.bf16 %v198, %v198
      %vm200 = vcmask 257024
      %201 = vst.msk [vmem:[%s165] sm:$0xf] %vm200, %v199
      %p202 = scmp.lt.s32.totalorder %s14, 1
      %s203 = scalar_select %p202, %s14, 1
      %s204 = smul.addr %s203, 4
      %s205 = scalar_lea.vmem %s3, %s204
      // Predicated region
      $region33: #{transformer_chatbot_forward.9} parent=31 // pred_check
        %p206 = pneg %p100
      $region34: #{transformer_chatbot_forward.9} parent=31 // pred_check_branch
        %208 = sbr.rel (%p206) target = $region36
      $region35: #{transformer_chatbot_forward.9} parent=31 // pred_region
        _
      $region36: #{transformer_chatbot_forward.9} parent=31 // pred_fallthru
        _
    $region32: #{transformer_chatbot_forward.9} parent=5 // pred_fallthru
      _
    %p209 = scmp.le.s32.totalorder 2, %s9
    // Predicated region
    $region37: #{transformer_chatbot_forward.9} parent=5 // pred_check
      %p210 = pneg %p209
    $region38: #{transformer_chatbot_forward.9} parent=5 // pred_check_branch
      %212 = sbr.rel (%p210) target = $region40
    $region39: #{transformer_chatbot_forward.9} parent=5 // pred_region
      %s213 = ssub.s32 %s9, 2
      // Predicated region
      $region41: #{transformer_chatbot_forward.9} parent=39 // pred_check
        %p214 = pneg %p106
      $region42: #{transformer_chatbot_forward.9} parent=39 // pred_check_branch
        %216 = sbr.rel (%p214) target = $region44
      $region43: #{transformer_chatbot_forward.9} parent=39 // pred_region
        %p217 = scmp.lt.s32.totalorder %s15, 1
        %s218 = scalar_select %p217, %s15, 1
        %s219 = smul.addr %s218, 4
        %s220 = scalar_lea.vmem %s3, %s219
      $region44: #{transformer_chatbot_forward.9} parent=39 // pred_fallthru
        _
    $region40: #{transformer_chatbot_forward.9} parent=5 // pred_fallthru
      _
  $region6: #{transformer_chatbot_forward.9} parent=0 // loop_footer
    %s13 = sadd.s32 1, %s9
  $region7: #{transformer_chatbot_forward.9} parent=0 // loop_footer_branch
    %8 = sbr.rel target = $region3
  $region8: #{transformer_chatbot_forward.9} parent=0 // loop_exit
    _

// kernel: transformer_chatbot_forward.7
$region0: #{transformer_chatbot_forward.7}
  #allocation0 [shape = 'u32[]', space=smem, size = 0x4, offset = 0x4, fixed_abs, tag = 'smem constant byte address 0x4 - core index']
  #allocation1 [shape = 'u32[144,128]{1,0:T(1,128)}', space=vmem, size = 0x12000, scoped, tag = 'internal scratch']
  %s0 = inlined_call_operand.vmem [shape: bf16[2,8,32], index: 0, kind: input, shape index: {}]
  %s1 = inlined_call_operand.vmem [shape: f32[2,1,8], index: 1, kind: input, shape index: {}]
  %s2 = inlined_call_operand.vmem [shape: bf16[4,32,8], index: 2, kind: input, shape index: {}]
  %s3 = inlined_call_operand.vmem [shape: f32[4,1,8], index: 3, kind: input, shape index: {}]
  %s4 = inlined_call_operand.vmem [shape: bf16[4,32,8], index: 4, kind: input, shape index: {}]
  %s5 = inlined_call_operand.vmem [shape: f32[4,1,8], index: 5, kind: input, shape index: {}]
  %s6 = inlined_call_operand.vmem [shape: bf16[4,32,8], index: 6, kind: input, shape index: {}]
  %s7 = inlined_call_operand.vmem [shape: f32[4,1,8], index: 7, kind: input, shape index: {}]
  %s8 = inlined_call_operand.vmem [shape: bf16[4,8,32], index: 8, kind: input, shape index: {}]
  %s9 = inlined_call_operand.vmem [shape: f32[1,32], index: 9, kind: input, shape index: {}]
  %s10 = inlined_call_operand.vmem [shape: f32[1,32], index: 10, kind: input, shape index: {}]
  %s11 = inlined_call_operand.vmem [shape: f32[1,32], index: 11, kind: input, shape index: {}]
  %s12 = inlined_call_operand.vmem [shape: bf16[32,64], index: 12, kind: input, shape index: {}]
  %s13 = inlined_call_operand.vmem [shape: f32[1,64], index: 13, kind: input, shape index: {}]
  %s14 = inlined_call_operand.vmem [shape: bf16[64,32], index: 14, kind: input, shape index: {}]
  %s15 = inlined_call_operand.vmem [shape: f32[1,32], index: 15, kind: input, shape index: {}]
  %s16 = inlined_call_operand.vmem [shape: f32[1,32], index: 16, kind: input, shape index: {}]
  %s17 = inlined_call_operand.vmem [shape: f32[1,32], index: 17, kind: input, shape index: {}]
  %s18 = inlined_call_operand.vmem [shape: bf16[2,8,32], index: 18, kind: output, shape index: {}]
  %s19 = sld [smem:[#allocation0]]
  $region105: #{transformer_chatbot_forward.7} parent=0
    _
  %s21 = ssub.s32 1, %s19
  %s22 = scalar_select 0, %s21, %s19
  loop: start=0, step=1, limit=4
  $region2: #{transformer_chatbot_forward.7} parent=0 // loop_pre_header
    _
  $region3: #{transformer_chatbot_forward.7} parent=0 // loop_header
    %s24 = sphi 0, %s28
    %p25 = scmp.ge.s32.totalorder %s24, 4
    %s34 = sphi 0, %s36
    %s37 = sphi 0, %s34
    %s38 = sphi 0, %s37
    %s54 = sphi 0, %s38
    %s60 = sphi 0, %s62
    %s63 = sphi 0, %s60
    %s64 = sphi 0, %s63
    %s80 = sphi 0, %s64
    %s84 = sphi 0, %s84
    %s86 = sphi 0, %s84
    %s87 = sphi 0, %s86
    %s101 = sphi 0, %s87
    %s105 = sphi 0, %s105
    %s107 = sphi 0, %s105
    %s108 = sphi 0, %s107
    %s122 = sphi 0, %s108
    %s126 = sphi 0, %s126
    %s128 = sphi 0, %s126
    %s129 = sphi 0, %s128
    %s143 = sphi 0, %s129
    %s147 = sphi 0, %s147
    %s149 = sphi 0, %s147
    %s150 = sphi 0, %s149
    %s164 = sphi 0, %s150
    %s168 = sphi 0, %s168
    %s170 = sphi 0, %s168
    %s171 = sphi 0, %s170
    %s185 = sphi 0, %s171
    %s189 = sphi 0, %s189
    %s191 = sphi 0, %s189
    %s192 = sphi 0, %s191
    %s206 = sphi 0, %s192
    %s210 = sphi 0, %s210
    %s212 = sphi 0, %s210
    %s213 = sphi 0, %s212
    %s227 = sphi 0, %s213
    %s231 = sphi 0, %s231
    %s233 = sphi 0, %s231
    %s234 = sphi 0, %s233
    %s248 = sphi 0, %s234
    %s252 = sphi 0, %s252
    %s254 = sphi 0, %s252
    %s255 = sphi 0, %s254
    %s269 = sphi 0, %s255
    %s273 = sphi 0, %s273
    %s275 = sphi 0, %s273
    %s276 = sphi 0, %s275
    %s290 = sphi 0, %s276
    %s294 = sphi 0, %s294
    %s296 = sphi 0, %s294
    %s297 = sphi 0, %s296
    %s311 = sphi 0, %s297
    %s315 = sphi 0, %s315
    %s317 = sphi 0, %s315
    %s318 = sphi 0, %s317
    %s332 = sphi 0, %s318
    %s336 = sphi 0, %s336
    %s338 = sphi 0, %s336
    %s339 = sphi 0, %s338
    %s353 = sphi 0, %s339
    %s357 = sphi 0, %s357
    %s359 = sphi 0, %s357
    %s360 = sphi 0, %s359
    %s374 = sphi 0, %s360
    %s378 = sphi 0, %s378
    %s380 = sphi 0, %s378
    %s381 = sphi 0, %s380
    %s395 = sphi 0, %s381
    %s399 = sphi 0, %s399
    %s401 = sphi 0, %s399
    %s402 = sphi 0, %s401
    %s416 = sphi 0, %s402
    %s422 = sphi 0, %s424
    %s425 = sphi 0, %s422
    %s426 = sphi 0, %s425
    %s442 = sphi 0, %s426
  $region4: #{transformer_chatbot_forward.7} parent=0 // loop_header_branch
    %27 = sbr.rel (%p25) target = $region8
  $region5: #{transformer_chatbot_forward.7} parent=0 // loop_body
    %s29 = ssub.s32 %s24, 1
    %s30 = ssub.s32 %s24, 2
    %s31 = sadd.s32 %s24, 1
    %s32 = ssub.s32 %s24, %s31
    %p33 = scmp.eq.s32.totalorder %s32, 0
    %s35 = sadd.s32 %s34, 1
    %s36 = scalar_select %p33, %s34, %s35
    %p39 = pneg %p33
    %p40 = scmp.eq.s32.totalorder %s24, 1
    %p41 = por %p39, %p40
    %p42 = scmp.ne.s32.totalorder %s34, %s37
    %p43 = scmp.eq.s32.totalorder %s24, 0
    %p44 = por %p42, %p43
    %p45 = scmp.ne.s32.totalorder %s34, %s37
    %p46 = scmp.eq.s32.totalorder %s29, 1
    %p47 = por %p45, %p46
    %p48 = scmp.ne.s32.totalorder %s37, %s38
    %p49 = scmp.eq.s32.totalorder %s29, 0
    %p50 = por %p48, %p49
    %p51 = scmp.ne.s32.totalorder %s37, %s38
    %p52 = scmp.eq.s32.totalorder %s30, 1
    %p53 = por %p51, %p52
    %p55 = scmp.ne.s32.totalorder %s38, %s54
    %p56 = scmp.eq.s32.totalorder %s30, 0
    %p57 = por %p55, %p56
    %s58 = ssub.s32 %s24, %s31
    %p59 = scmp.eq.s32.totalorder %s58, 0
    %s61 = sadd.s32 %s60, 1
    %s62 = scalar_select %p59, %s60, %s61
    %p65 = pneg %p59
    %p66 = scmp.eq.s32.totalorder %s24, 1
    %p67 = por %p65, %p66
    %p68 = scmp.ne.s32.totalorder %s60, %s63
    %p69 = scmp.eq.s32.totalorder %s24, 0
    %p70 = por %p68, %p69
    %p71 = scmp.ne.s32.totalorder %s60, %s63
    %p72 = scmp.eq.s32.totalorder %s29, 1
    %p73 = por %p71, %p72
    %p74 = scmp.ne.s32.totalorder %s63, %s64
    %p75 = scmp.eq.s32.totalorder %s29, 0
    %p76 = por %p74, %p75
    %p77 = scmp.ne.s32.totalorder %s63, %s64
    %p78 = scmp.eq.s32.totalorder %s30, 1
    %p79 = por %p77, %p78
    %p81 = scmp.ne.s32.totalorder %s64, %s80
    %p82 = scmp.eq.s32.totalorder %s30, 0
    %p83 = por %p81, %p82
    %s85 = sadd.s32 %s84, 1
    %p88 = scmp.eq.s32.totalorder %s24, 1
    %p89 = scmp.ne.s32.totalorder %s84, %s86
    %p90 = scmp.eq.s32.totalorder %s24, 0
    %p91 = por %p89, %p90
    %p92 = scmp.ne.s32.totalorder %s84, %s86
    %p93 = scmp.eq.s32.totalorder %s29, 1
    %p94 = por %p92, %p93
    %p95 = scmp.ne.s32.totalorder %s86, %s87
    %p96 = scmp.eq.s32.totalorder %s29, 0
    %p97 = por %p95, %p96
    %p98 = scmp.ne.s32.totalorder %s86, %s87
    %p99 = scmp.eq.s32.totalorder %s30, 1
    %p100 = por %p98, %p99
    %p102 = scmp.ne.s32.totalorder %s87, %s101
    %p103 = scmp.eq.s32.totalorder %s30, 0
    %p104 = por %p102, %p103
    %s106 = sadd.s32 %s105, 1
    %p109 = scmp.eq.s32.totalorder %s24, 1
    %p110 = scmp.ne.s32.totalorder %s105, %s107
    %p111 = scmp.eq.s32.totalorder %s24, 0
    %p112 = por %p110, %p111
    %p113 = scmp.ne.s32.totalorder %s105, %s107
    %p114 = scmp.eq.s32.totalorder %s29, 1
    %p115 = por %p113, %p114
    %p116 = scmp.ne.s32.totalorder %s107, %s108
    %p117 = scmp.eq.s32.totalorder %s29, 0
    %p118 = por %p116, %p117
    %p119 = scmp.ne.s32.totalorder %s107, %s108
    %p120 = scmp.eq.s32.totalorder %s30, 1
    %p121 = por %p119, %p120
    %p123 = scmp.ne.s32.totalorder %s108, %s122
    %p124 = scmp.eq.s32.totalorder %s30, 0
    %p125 = por %p123, %p124
    %s127 = sadd.s32 %s126, 1
    %p130 = scmp.eq.s32.totalorder %s24, 1
    %p131 = scmp.ne.s32.totalorder %s126, %s128
    %p132 = scmp.eq.s32.totalorder %s24, 0
    %p133 = por %p131, %p132
    %p134 = scmp.ne.s32.totalorder %s126, %s128
    %p135 = scmp.eq.s32.totalorder %s29, 1
    %p136 = por %p134, %p135
    %p137 = scmp.ne.s32.totalorder %s128, %s129
    %p138 = scmp.eq.s32.totalorder %s29, 0
    %p139 = por %p137, %p138
    %p140 = scmp.ne.s32.totalorder %s128, %s129
    %p141 = scmp.eq.s32.totalorder %s30, 1
    %p142 = por %p140, %p141
    %p144 = scmp.ne.s32.totalorder %s129, %s143
    %p145 = scmp.eq.s32.totalorder %s30, 0
    %p146 = por %p144, %p145
    %s148 = sadd.s32 %s147, 1
    %p151 = scmp.eq.s32.totalorder %s24, 1
    %p152 = scmp.ne.s32.totalorder %s147, %s149
    %p153 = scmp.eq.s32.totalorder %s24, 0
    %p154 = por %p152, %p153
    %p155 = scmp.ne.s32.totalorder %s147, %s149
    %p156 = scmp.eq.s32.totalorder %s29, 1
    %p157 = por %p155, %p156
    %p158 = scmp.ne.s32.totalorder %s149, %s150
    %p159 = scmp.eq.s32.totalorder %s29, 0
    %p160 = por %p158, %p159
    %p161 = scmp.ne.s32.totalorder %s149, %s150
    %p162 = scmp.eq.s32.totalorder %s30, 1
    %p163 = por %p161, %p162
    %p165 = scmp.ne.s32.totalorder %s150, %s164
    %p166 = scmp.eq.s32.totalorder %s30, 0
    %p167 = por %p165, %p166
    %s169 = sadd.s32 %s168, 1
    %p172 = scmp.eq.s32.totalorder %s24, 1
    %p173 = scmp.ne.s32.totalorder %s168, %s170
    %p174 = scmp.eq.s32.totalorder %s24, 0
    %p175 = por %p173, %p174
    %p176 = scmp.ne.s32.totalorder %s168, %s170
    %p177 = scmp.eq.s32.totalorder %s29, 1
    %p178 = por %p176, %p177
    %p179 = scmp.ne.s32.totalorder %s170, %s171
    %p180 = scmp.eq.s32.totalorder %s29, 0
    %p181 = por %p179, %p180
    %p182 = scmp.ne.s32.totalorder %s170, %s171
    %p183 = scmp.eq.s32.totalorder %s30, 1
    %p184 = por %p182, %p183
    %p186 = scmp.ne.s32.totalorder %s171, %s185
    %p187 = scmp.eq.s32.totalorder %s30, 0
    %p188 = por %p186, %p187
    %s190 = sadd.s32 %s189, 1
    %p193 = scmp.eq.s32.totalorder %s24, 1
    %p194 = scmp.ne.s32.totalorder %s189, %s191
    %p195 = scmp.eq.s32.totalorder %s24, 0
    %p196 = por %p194, %p195
    %p197 = scmp.ne.s32.totalorder %s189, %s191
    %p198 = scmp.eq.s32.totalorder %s29, 1
    %p199 = por %p197, %p198
    %p200 = scmp.ne.s32.totalorder %s191, %s192
    %p201 = scmp.eq.s32.totalorder %s29, 0
    %p202 = por %p200, %p201
    %p203 = scmp.ne.s32.totalorder %s191, %s192
    %p204 = scmp.eq.s32.totalorder %s30, 1
    %p205 = por %p203, %p204
    %p207 = scmp.ne.s32.totalorder %s192, %s206
    %p208 = scmp.eq.s32.totalorder %s30, 0
    %p209 = por %p207, %p208
    %s211 = sadd.s32 %s210, 1
    %p214 = scmp.eq.s32.totalorder %s24, 1
    %p215 = scmp.ne.s32.totalorder %s210, %s212
    %p216 = scmp.eq.s32.totalorder %s24, 0
    %p217 = por %p215, %p216
    %p218 = scmp.ne.s32.totalorder %s210, %s212
    %p219 = scmp.eq.s32.totalorder %s29, 1
    %p220 = por %p218, %p219
    %p221 = scmp.ne.s32.totalorder %s212, %s213
    %p222 = scmp.eq.s32.totalorder %s29, 0
    %p223 = por %p221, %p222
    %p224 = scmp.ne.s32.totalorder %s212, %s213
    %p225 = scmp.eq.s32.totalorder %s30, 1
    %p226 = por %p224, %p225
    %p228 = scmp.ne.s32.totalorder %s213, %s227
    %p229 = scmp.eq.s32.totalorder %s30, 0
    %p230 = por %p228, %p229
    %s232 = sadd.s32 %s231, 1
    %p235 = scmp.eq.s32.totalorder %s24, 1
    %p236 = scmp.ne.s32.totalorder %s231, %s233
    %p237 = scmp.eq.s32.totalorder %s24, 0
    %p238 = por %p236, %p237
    %p239 = scmp.ne.s32.totalorder %s231, %s233
    %p240 = scmp.eq.s32.totalorder %s29, 1
    %p241 = por %p239, %p240
    %p242 = scmp.ne.s32.totalorder %s233, %s234
    %p243 = scmp.eq.s32.totalorder %s29, 0
    %p244 = por %p242, %p243
    %p245 = scmp.ne.s32.totalorder %s233, %s234
    %p246 = scmp.eq.s32.totalorder %s30, 1
    %p247 = por %p245, %p246
    %p249 = scmp.ne.s32.totalorder %s234, %s248
    %p250 = scmp.eq.s32.totalorder %s30, 0
    %p251 = por %p249, %p250
    %s253 = sadd.s32 %s252, 1
    %p256 = scmp.eq.s32.totalorder %s24, 1
    %p257 = scmp.ne.s32.totalorder %s252, %s254
    %p258 = scmp.eq.s32.totalorder %s24, 0
    %p259 = por %p257, %p258
    %p260 = scmp.ne.s32.totalorder %s252, %s254
    %p261 = scmp.eq.s32.totalorder %s29, 1
    %p262 = por %p260, %p261
    %p263 = scmp.ne.s32.totalorder %s254, %s255
    %p264 = scmp.eq.s32.totalorder %s29, 0
    %p265 = por %p263, %p264
    %p266 = scmp.ne.s32.totalorder %s254, %s255
    %p267 = scmp.eq.s32.totalorder %s30, 1
    %p268 = por %p266, %p267
    %p270 = scmp.ne.s32.totalorder %s255, %s269
    %p271 = scmp.eq.s32.totalorder %s30, 0
    %p272 = por %p270, %p271
    %s274 = sadd.s32 %s273, 1
    %p277 = scmp.eq.s32.totalorder %s24, 1
    %p278 = scmp.ne.s32.totalorder %s273, %s275
    %p279 = scmp.eq.s32.totalorder %s24, 0
    %p280 = por %p278, %p279
    %p281 = scmp.ne.s32.totalorder %s273, %s275
    %p282 = scmp.eq.s32.totalorder %s29, 1
    %p283 = por %p281, %p282
    %p284 = scmp.ne.s32.totalorder %s275, %s276
    %p285 = scmp.eq.s32.totalorder %s29, 0
    %p286 = por %p284, %p285
    %p287 = scmp.ne.s32.totalorder %s275, %s276
    %p288 = scmp.eq.s32.totalorder %s30, 1
    %p289 = por %p287, %p288
    %p291 = scmp.ne.s32.totalorder %s276, %s290
    %p292 = scmp.eq.s32.totalorder %s30, 0
    %p293 = por %p291, %p292
    %s295 = sadd.s32 %s294, 1
    %p298 = scmp.eq.s32.totalorder %s24, 1
    %p299 = scmp.ne.s32.totalorder %s294, %s296
    %p300 = scmp.eq.s32.totalorder %s24, 0
    %p301 = por %p299, %p300
    %p302 = scmp.ne.s32.totalorder %s294, %s296
    %p303 = scmp.eq.s32.totalorder %s29, 1
    %p304 = por %p302, %p303
    %p305 = scmp.ne.s32.totalorder %s296, %s297
    %p306 = scmp.eq.s32.totalorder %s29, 0
    %p307 = por %p305, %p306
    %p308 = scmp.ne.s32.totalorder %s296, %s297
    %p309 = scmp.eq.s32.totalorder %s30, 1
    %p310 = por %p308, %p309
    %p312 = scmp.ne.s32.totalorder %s297, %s311
    %p313 = scmp.eq.s32.totalorder %s30, 0
    %p314 = por %p312, %p313
    %s316 = sadd.s32 %s315, 1
    %p319 = scmp.eq.s32.totalorder %s24, 1
    %p320 = scmp.ne.s32.totalorder %s315, %s317
    %p321 = scmp.eq.s32.totalorder %s24, 0
    %p322 = por %p320, %p321
    %p323 = scmp.ne.s32.totalorder %s315, %s317
    %p324 = scmp.eq.s32.totalorder %s29, 1
    %p325 = por %p323, %p324
    %p326 = scmp.ne.s32.totalorder %s317, %s318
    %p327 = scmp.eq.s32.totalorder %s29, 0
    %p328 = por %p326, %p327
    %p329 = scmp.ne.s32.totalorder %s317, %s318
    %p330 = scmp.eq.s32.totalorder %s30, 1
    %p331 = por %p329, %p330
    %p333 = scmp.ne.s32.totalorder %s318, %s332
    %p334 = scmp.eq.s32.totalorder %s30, 0
    %p335 = por %p333, %p334
    %s337 = sadd.s32 %s336, 1
    %p340 = scmp.eq.s32.totalorder %s24, 1
    %p341 = scmp.ne.s32.totalorder %s336, %s338
    %p342 = scmp.eq.s32.totalorder %s24, 0
    %p343 = por %p341, %p342
    %p344 = scmp.ne.s32.totalorder %s336, %s338
    %p345 = scmp.eq.s32.totalorder %s29, 1
    %p346 = por %p344, %p345
    %p347 = scmp.ne.s32.totalorder %s338, %s339
    %p348 = scmp.eq.s32.totalorder %s29, 0
    %p349 = por %p347, %p348
    %p350 = scmp.ne.s32.totalorder %s338, %s339
    %p351 = scmp.eq.s32.totalorder %s30, 1
    %p352 = por %p350, %p351
    %p354 = scmp.ne.s32.totalorder %s339, %s353
    %p355 = scmp.eq.s32.totalorder %s30, 0
    %p356 = por %p354, %p355
    %s358 = sadd.s32 %s357, 1
    %p361 = scmp.eq.s32.totalorder %s24, 1
    %p362 = scmp.ne.s32.totalorder %s357, %s359
    %p363 = scmp.eq.s32.totalorder %s24, 0
    %p364 = por %p362, %p363
    %p365 = scmp.ne.s32.totalorder %s357, %s359
    %p366 = scmp.eq.s32.totalorder %s29, 1
    %p367 = por %p365, %p366
    %p368 = scmp.ne.s32.totalorder %s359, %s360
    %p369 = scmp.eq.s32.totalorder %s29, 0
    %p370 = por %p368, %p369
    %p371 = scmp.ne.s32.totalorder %s359, %s360
    %p372 = scmp.eq.s32.totalorder %s30, 1
    %p373 = por %p371, %p372
    %p375 = scmp.ne.s32.totalorder %s360, %s374
    %p376 = scmp.eq.s32.totalorder %s30, 0
    %p377 = por %p375, %p376
    %s379 = sadd.s32 %s378, 1
    %p382 = scmp.eq.s32.totalorder %s24, 1
    %p383 = scmp.ne.s32.totalorder %s378, %s380
    %p384 = scmp.eq.s32.totalorder %s24, 0
    %p385 = por %p383, %p384
    %p386 = scmp.ne.s32.totalorder %s378, %s380
    %p387 = scmp.eq.s32.totalorder %s29, 1
    %p388 = por %p386, %p387
    %p389 = scmp.ne.s32.totalorder %s380, %s381
    %p390 = scmp.eq.s32.totalorder %s29, 0
    %p391 = por %p389, %p390
    %p392 = scmp.ne.s32.totalorder %s380, %s381
    %p393 = scmp.eq.s32.totalorder %s30, 1
    %p394 = por %p392, %p393
    %p396 = scmp.ne.s32.totalorder %s381, %s395
    %p397 = scmp.eq.s32.totalorder %s30, 0
    %p398 = por %p396, %p397
    %s400 = sadd.s32 %s399, 1
    %p403 = scmp.eq.s32.totalorder %s24, 1
    %p404 = scmp.ne.s32.totalorder %s399, %s401
    %p405 = scmp.eq.s32.totalorder %s24, 0
    %p406 = por %p404, %p405
    %p407 = scmp.ne.s32.totalorder %s399, %s401
    %p408 = scmp.eq.s32.totalorder %s29, 1
    %p409 = por %p407, %p408
    %p410 = scmp.ne.s32.totalorder %s401, %s402
    %p411 = scmp.eq.s32.totalorder %s29, 0
    %p412 = por %p410, %p411
    %p413 = scmp.ne.s32.totalorder %s401, %s402
    %p414 = scmp.eq.s32.totalorder %s30, 1
    %p415 = por %p413, %p414
    %p417 = scmp.ne.s32.totalorder %s402, %s416
    %p418 = scmp.eq.s32.totalorder %s30, 0
    %p419 = por %p417, %p418
    %s420 = ssub.s32 %s24, %s31
    %p421 = scmp.eq.s32.totalorder %s420, 0
    %s423 = sadd.s32 %s422, 1
    %s424 = scalar_select %p421, %s422, %s423
    %p427 = pneg %p421
    %p428 = scmp.eq.s32.totalorder %s24, 1
    %p429 = por %p427, %p428
    %p430 = scmp.ne.s32.totalorder %s422, %s425
    %p431 = scmp.eq.s32.totalorder %s24, 0
    %p432 = por %p430, %p431
    %p433 = scmp.ne.s32.totalorder %s422, %s425
    %p434 = scmp.eq.s32.totalorder %s29, 1
    %p435 = por %p433, %p434
    %p436 = scmp.ne.s32.totalorder %s425, %s426
    %p437 = scmp.eq.s32.totalorder %s29, 0
    %p438 = por %p436, %p437
    %p439 = scmp.ne.s32.totalorder %s425, %s426
    %p440 = scmp.eq.s32.totalorder %s30, 1
    %p441 = por %p439, %p440
    %p443 = scmp.ne.s32.totalorder %s426, %s442
    %p444 = scmp.eq.s32.totalorder %s30, 0
    %p445 = por %p443, %p444
    %p446 = scmp.le.s32.totalorder 1, %s24
    %p447 = scmp.lt.s32.totalorder %s24, 3
    %p448 = pnand %p446, %p447
    %p449 = pneg %p448
    // Predicated region
    $region9: #{transformer_chatbot_forward.7} parent=5 // pred_check
      _
    $region10: #{transformer_chatbot_forward.7} parent=5 // pred_check_branch
      %451 = sbr.rel (%p448) target = $region12
    $region11: #{transformer_chatbot_forward.7} parent=5 // pred_region
      %s452 = ssub.s32 %s24, 1
      // Predicated region
      $region13: #{transformer_chatbot_forward.7} parent=11 // pred_check
        %p453 = pneg %p97
      $region14: #{transformer_chatbot_forward.7} parent=11 // pred_check_branch
        %455 = sbr.rel (%p453) target = $region16
      $region15: #{transformer_chatbot_forward.7} parent=11 // pred_region
        _
      $region16: #{transformer_chatbot_forward.7} parent=11 // pred_fallthru
        _
      // Predicated region
      $region17: #{transformer_chatbot_forward.7} parent=11 // pred_check
        %p456 = pneg %p118
      $region18: #{transformer_chatbot_forward.7} parent=11 // pred_check_branch
        %458 = sbr.rel (%p456) target = $region20
      $region19: #{transformer_chatbot_forward.7} parent=11 // pred_region
        _
      $region20: #{transformer_chatbot_forward.7} parent=11 // pred_fallthru
        _
      // Predicated region
      $region21: #{transformer_chatbot_forward.7} parent=11 // pred_check
        %p459 = pneg %p139
      $region22: #{transformer_chatbot_forward.7} parent=11 // pred_check_branch
        %461 = sbr.rel (%p459) target = $region24
      $region23: #{transformer_chatbot_forward.7} parent=11 // pred_region
        _
      $region24: #{transformer_chatbot_forward.7} parent=11 // pred_fallthru
        _
      // Predicated region
      $region25: #{transformer_chatbot_forward.7} parent=11 // pred_check
        %p462 = pneg %p160
      $region26: #{transformer_chatbot_forward.7} parent=11 // pred_check_branch
        %464 = sbr.rel (%p462) target = $region28
      $region27: #{transformer_chatbot_forward.7} parent=11 // pred_region
        _
      $region28: #{transformer_chatbot_forward.7} parent=11 // pred_fallthru
        _
      // Predicated region
      $region29: #{transformer_chatbot_forward.7} parent=11 // pred_check
        %p465 = pneg %p181
      $region30: #{transformer_chatbot_forward.7} parent=11 // pred_check_branch
        %467 = sbr.rel (%p465) target = $region32
      $region31: #{transformer_chatbot_forward.7} parent=11 // pred_region
        _
      $region32: #{transformer_chatbot_forward.7} parent=11 // pred_fallthru
        _
      // Predicated region
      $region33: #{transformer_chatbot_forward.7} parent=11 // pred_check
        %p468 = pneg %p202
      $region34: #{transformer_chatbot_forward.7} parent=11 // pred_check_branch
        %470 = sbr.rel (%p468) target = $region36
      $region35: #{transformer_chatbot_forward.7} parent=11 // pred_region
        _
      $region36: #{transformer_chatbot_forward.7} parent=11 // pred_fallthru
        _
      // Predicated region
      $region37: #{transformer_chatbot_forward.7} parent=11 // pred_check
        %p471 = pneg %p223
      $region38: #{transformer_chatbot_forward.7} parent=11 // pred_check_branch
        %473 = sbr.rel (%p471) target = $region40
      $region39: #{transformer_chatbot_forward.7} parent=11 // pred_region
        _
      $region40: #{transformer_chatbot_forward.7} parent=11 // pred_fallthru
        _
      // Predicated region
      $region41: #{transformer_chatbot_forward.7} parent=11 // pred_check
        %p474 = pneg %p244
      $region42: #{transformer_chatbot_forward.7} parent=11 // pred_check_branch
        %476 = sbr.rel (%p474) target = $region44
      $region43: #{transformer_chatbot_forward.7} parent=11 // pred_region
        _
      $region44: #{transformer_chatbot_forward.7} parent=11 // pred_fallthru
        _
      // Predicated region
      $region45: #{transformer_chatbot_forward.7} parent=11 // pred_check
        %p477 = pneg %p265
      $region46: #{transformer_chatbot_forward.7} parent=11 // pred_check_branch
        %479 = sbr.rel (%p477) target = $region48
      $region47: #{transformer_chatbot_forward.7} parent=11 // pred_region
        _
      $region48: #{transformer_chatbot_forward.7} parent=11 // pred_fallthru
        _
      // Predicated region
      $region49: #{transformer_chatbot_forward.7} parent=11 // pred_check
        %p480 = pneg %p286
      $region50: #{transformer_chatbot_forward.7} parent=11 // pred_check_branch
        %482 = sbr.rel (%p480) target = $region52
      $region51: #{transformer_chatbot_forward.7} parent=11 // pred_region
        _
      $region52: #{transformer_chatbot_forward.7} parent=11 // pred_fallthru
        _
      // Predicated region
      $region53: #{transformer_chatbot_forward.7} parent=11 // pred_check
        %p483 = pneg %p307
      $region54: #{transformer_chatbot_forward.7} parent=11 // pred_check_branch
        %485 = sbr.rel (%p483) target = $region56
      $region55: #{transformer_chatbot_forward.7} parent=11 // pred_region
        _
      $region56: #{transformer_chatbot_forward.7} parent=11 // pred_fallthru
        _
      // Predicated region
      $region57: #{transformer_chatbot_forward.7} parent=11 // pred_check
        %p486 = pneg %p328
      $region58: #{transformer_chatbot_forward.7} parent=11 // pred_check_branch
        %488 = sbr.rel (%p486) target = $region60
      $region59: #{transformer_chatbot_forward.7} parent=11 // pred_region
        _
      $region60: #{transformer_chatbot_forward.7} parent=11 // pred_fallthru
        _
      // Predicated region
      $region61: #{transformer_chatbot_forward.7} parent=11 // pred_check
        %p489 = pneg %p349
      $region62: #{transformer_chatbot_forward.7} parent=11 // pred_check_branch
        %491 = sbr.rel (%p489) target = $region64
      $region63: #{transformer_chatbot_forward.7} parent=11 // pred_region
        _
      $region64: #{transformer_chatbot_forward.7} parent=11 // pred_fallthru
        _
      // Predicated region
      $region65: #{transformer_chatbot_forward.7} parent=11 // pred_check
        %p492 = pneg %p370
      $region66: #{transformer_chatbot_forward.7} parent=11 // pred_check_branch
        %494 = sbr.rel (%p492) target = $region68
      $region67: #{transformer_chatbot_forward.7} parent=11 // pred_region
        _
      $region68: #{transformer_chatbot_forward.7} parent=11 // pred_fallthru
        _
      // Predicated region
      $region69: #{transformer_chatbot_forward.7} parent=11 // pred_check
        %p495 = pneg %p391
      $region70: #{transformer_chatbot_forward.7} parent=11 // pred_check_branch
        %497 = sbr.rel (%p495) target = $region72
      $region71: #{transformer_chatbot_forward.7} parent=11 // pred_region
        _
      $region72: #{transformer_chatbot_forward.7} parent=11 // pred_fallthru
        _
      // Predicated region
      $region73: #{transformer_chatbot_forward.7} parent=11 // pred_check
        %p498 = pneg %p412
      $region74: #{transformer_chatbot_forward.7} parent=11 // pred_check_branch
        %500 = sbr.rel (%p498) target = $region76
      $region75: #{transformer_chatbot_forward.7} parent=11 // pred_region
        _
      $region76: #{transformer_chatbot_forward.7} parent=11 // pred_fallthru
        _
    $region12: #{transformer_chatbot_forward.7} parent=5 // pred_fallthru
      _
    %p501 = scmp.lt.s32.totalorder %s24, 2
    // Predicated region
    $region77: #{transformer_chatbot_forward.7} parent=5 // pred_check
      %p502 = pneg %p501
    $region78: #{transformer_chatbot_forward.7} parent=5 // pred_check_branch
      %504 = sbr.rel (%p502) target = $region80
    $region79: #{transformer_chatbot_forward.7} parent=5 // pred_region
      // Predicated region
      $region81: #{transformer_chatbot_forward.7} parent=79 // pred_check
        %p505 = pneg %p44
      $region82: #{transformer_chatbot_forward.7} parent=79 // pred_check_branch
        %507 = sbr.rel (%p505) target = $region84
      $region83: #{transformer_chatbot_forward.7} parent=79 // pred_region
        %p508 = scmp.lt.s32.totalorder %s24, 1
        %s509 = scalar_select %p508, %s24, 1
        %s510 = smul.addr %s509, 4
        %s511 = scalar_lea.vmem %s0, %s510
      $region84: #{transformer_chatbot_forward.7} parent=79 // pred_fallthru
        _
      // Predicated region
      $region85: #{transformer_chatbot_forward.7} parent=79 // pred_check
        %p512 = pneg %p70
      $region86: #{transformer_chatbot_forward.7} parent=79 // pred_check_branch
        %514 = sbr.rel (%p512) target = $region88
      $region87: #{transformer_chatbot_forward.7} parent=79 // pred_region
        %p515 = scmp.lt.s32.totalorder %s24, 1
        %s516 = scalar_select %p515, %s24, 1
        %s517 = scalar_lea.vmem %s1, %s516
      $region88: #{transformer_chatbot_forward.7} parent=79 // pred_fallthru
        _
    $region80: #{transformer_chatbot_forward.7} parent=5 // pred_fallthru
      _
    %p518 = scmp.le.s32.totalorder 1, %s24
    %p519 = scmp.lt.s32.totalorder %s24, 3
    %p520 = pnand %p518, %p519
    %p521 = pneg %p520
    // Predicated region
    $region89: #{transformer_chatbot_forward.7} parent=5 // pred_check
      _
    $region90: #{transformer_chatbot_forward.7} parent=5 // pred_check_branch
      %523 = sbr.rel (%p520) target = $region92
    $region91: #{transformer_chatbot_forward.7} parent=5 // pred_region
      %s524 = ssub.s32 %s24, 1
      %p525 = scmp.lt.s32.totalorder %s29, 1
      %s526 = scalar_select %p525, %s29, 1
      %s527 = smul.addr %s526, 4
      %s528 = scalar_lea.vmem %s0, %s527
      %p529 = pneg %p50
      %p530 = pneg %p47
      %p531 = scmp.lt.s32.totalorder %s29, 1
      %s532 = scalar_select %p531, %s29, 1
      %s533 = scalar_lea.vmem %s1, %s532
      %p534 = pneg %p76
      %p535 = pneg %p73
      %p536 = pneg %p97
      %p537 = pneg %p94
      %p538 = pneg %p118
      %p539 = pneg %p115
      %p540 = pneg %p139
      %p541 = pneg %p136
      %p542 = pneg %p160
      %p543 = pneg %p157
      %p544 = pneg %p181
      %p545 = pneg %p178
      %p546 = pneg %p202
      %p547 = pneg %p199
      %p548 = pneg %p223
      %p549 = pneg %p220
      %p550 = pneg %p244
      %p551 = pneg %p241
      %p552 = pneg %p265
      %p553 = pneg %p262
      %p554 = pneg %p286
      %p555 = pneg %p283
      %p556 = pneg %p307
      %p557 = pneg %p304
      %p558 = pneg %p328
      %p559 = pneg %p325
      %p560 = pneg %p349
      %p561 = pneg %p346
      %p562 = pneg %p370
      %p563 = pneg %p367
      %p564 = pneg %p391
      %p565 = pneg %p388
      %p566 = pneg %p412
      %p567 = pneg %p409
      %p568 = pneg %p438
      %p569 = pneg %p435
      %p570 = scmp.lt.s32.totalorder %s29, 1
      %s571 = scalar_select %p570, %s29, 1
      %s572 = smul.addr %s571, 4
      %s573 = scalar_lea.vmem %s18, %s572
      %p574 = scmp.lt.s32.totalorder %s29, 1
      %s575 = scalar_select %p574, %s29, 1
      %s576 = smul.addr %s575, 4
      %s577 = scalar_lea.vmem %s0, %s576
      %p578 = scmp.lt.s32.totalorder %s29, 1
      %s579 = scalar_select %p578, %s29, 1
      %s580 = scalar_lea.vmem %s1, %s579
      %p581 = scmp.lt.s32.totalorder %s29, 1
      %s582 = scalar_select %p581, %s29, 1
      %s583 = smul.addr %s582, 4
      %s584 = scalar_lea.vmem %s18, %s583
      %v586 = vld [vmem:[%s577] sm:$0xf]
      %v587 = vunpack.c.l.bf16 %v586
      %v588 = vld [vmem:[%s580] sm:$0x1]
      %v589 = vld [vmem:[%s2] sm:$0xf]
      %v590 = vld [vmem:[%s2 + $0x4] sm:$0xf]
      %v591 = vld [vmem:[%s2 + $0x8] sm:$0xf]
      %v592 = vld [vmem:[%s2 + $0xc] sm:$0xf]
      %v593 = vld [vmem:[%s2 + $0x10] sm:$0xf]
      %v594 = vld [vmem:[%s2 + $0x14] sm:$0xf]
      %v595 = vld [vmem:[%s2 + $0x18] sm:$0xf]
      %v596 = vld [vmem:[%s2 + $0x1c] sm:$0xf]
      %v597 = vld [vmem:[%s2 + $0x20] sm:$0xf]
      %v598 = vld [vmem:[%s2 + $0x24] sm:$0xf]
      %v599 = vld [vmem:[%s2 + $0x28] sm:$0xf]
      %v600 = vld [vmem:[%s2 + $0x2c] sm:$0xf]
      %v601 = vld [vmem:[%s2 + $0x30] sm:$0xf]
      %v602 = vld [vmem:[%s2 + $0x34] sm:$0xf]
      %v603 = vld [vmem:[%s2 + $0x38] sm:$0xf]
      %v604 = vld [vmem:[%s2 + $0x3c] sm:$0xf]
      %v605 = vld [vmem:[%s3] sm:$0x1]
      %v606 = vld [vmem:[%s3 + $0x1] sm:$0x1]
      %v607 = vld [vmem:[%s3 + $0x2] sm:$0x1]
      %v608 = vld [vmem:[%s3 + $0x3] sm:$0x1]
      %v609 = vld [vmem:[%s4] sm:$0xf]
      %v610 = vld [vmem:[%s4 + $0x4] sm:$0xf]
      %v611 = vld [vmem:[%s4 + $0x8] sm:$0xf]
      %v612 = vld [vmem:[%s4 + $0xc] sm:$0xf]
      %v613 = vld [vmem:[%s4 + $0x10] sm:$0xf]
      %v614 = vld [vmem:[%s4 + $0x14] sm:$0xf]
      %v615 = vld [vmem:[%s4 + $0x18] sm:$0xf]
      %v616 = vld [vmem:[%s4 + $0x1c] sm:$0xf]
      %v617 = vld [vmem:[%s4 + $0x20] sm:$0xf]
      %v618 = vld [vmem:[%s4 + $0x24] sm:$0xf]
      %v619 = vld [vmem:[%s4 + $0x28] sm:$0xf]
      %v620 = vld [vmem:[%s4 + $0x2c] sm:$0xf]
      %v621 = vld [vmem:[%s4 + $0x30] sm:$0xf]
      %v622 = vld [vmem:[%s4 + $0x34] sm:$0xf]
      %v623 = vld [vmem:[%s4 + $0x38] sm:$0xf]
      %v624 = vld [vmem:[%s4 + $0x3c] sm:$0xf]
      %v625 = vld [vmem:[%s5] sm:$0x1]
      %v626 = vld [vmem:[%s5 + $0x1] sm:$0x1]
      %v627 = vld [vmem:[%s5 + $0x2] sm:$0x1]
      %v628 = vld [vmem:[%s5 + $0x3] sm:$0x1]
      %v629 = vld [vmem:[%s6] sm:$0xf]
      %v630 = vld [vmem:[%s6 + $0x4] sm:$0xf]
      %v631 = vld [vmem:[%s6 + $0x8] sm:$0xf]
      %v632 = vld [vmem:[%s6 + $0xc] sm:$0xf]
      %v633 = vld [vmem:[%s6 + $0x10] sm:$0xf]
      %v634 = vld [vmem:[%s6 + $0x14] sm:$0xf]
      %v635 = vld [vmem:[%s6 + $0x18] sm:$0xf]
      %v636 = vld [vmem:[%s6 + $0x1c] sm:$0xf]
      %v637 = vld [vmem:[%s6 + $0x20] sm:$0xf]
      %v638 = vld [vmem:[%s6 + $0x24] sm:$0xf]
      %v639 = vld [vmem:[%s6 + $0x28] sm:$0xf]
      %v640 = vld [vmem:[%s6 + $0x2c] sm:$0xf]
      %v641 = vld [vmem:[%s6 + $0x30] sm:$0xf]
      %v642 = vld [vmem:[%s6 + $0x34] sm:$0xf]
      %v643 = vld [vmem:[%s6 + $0x38] sm:$0xf]
      %v644 = vld [vmem:[%s6 + $0x3c] sm:$0xf]
      %v645 = vld [vmem:[%s7] sm:$0x1]
      %v646 = vld [vmem:[%s7 + $0x1] sm:$0x1]
      %v647 = vld [vmem:[%s7 + $0x2] sm:$0x1]
      %v648 = vld [vmem:[%s7 + $0x3] sm:$0x1]
      %v649 = vld [vmem:[%s8] sm:$0xf]
      %v650 = vld [vmem:[%s8 + $0x4] sm:$0xf]
      %v651 = vld [vmem:[%s8 + $0x8] sm:$0xf]
      %v652 = vld [vmem:[%s8 + $0xc] sm:$0xf]
      %v653 = vld [vmem:[%s9] sm:$0x1]
      %v654 = vld [vmem:[%s10] sm:$0x1]
      %v655 = vld [vmem:[%s11] sm:$0x1]
      %v660 = vlaneseq
      %v661 = vshrl.u32 %v660, 7
      %v662 = vsub.s32 0, %v661
      %v663 = vrot.slane %v605, %v662
      %v664 = vlaneseq
      %v665 = vshrl.u32 %v664, 7
      %v666 = vsub.s32 0, %v665
      %v667 = vrot.slane %v606, %v666
      %v668 = vlaneseq
      %v669 = vshrl.u32 %v668, 7
      %v670 = vsub.s32 0, %v669
      %v671 = vrot.slane %v607, %v670
      %v672 = vlaneseq
      %v673 = vshrl.u32 %v672, 7
      %v674 = vsub.s32 0, %v673
      %v675 = vrot.slane %v608, %v674
      %v684 = vunpack.c.l.b16 %v589
      %v685 = vunpack.c.l.b16 %v590
      %v686 = vunpack.c.l.b16 %v591
      %v687 = vunpack.c.l.b16 %v592
      %v688 = vpack.c.b16 %v685, %v684
      %v689 = vpack.c.b16 %v687, %v686
      %vm692 = vcmask 261120
      %v694 = vsel %vm692, %v586, 0
      %696 = vmatprep.subr.bf16.mxu0 0
      %697 = vmatpush1.bf16.msra.mxu0 %v688
      %698 = vmatprep.subr.bf16.mxu0 0
      %699 = vmatpush1.bf16.msra.mxu0 %v689
      %700 = vmatprep.subr.bf16.mxu0 0
      %701 = vmatpush1.bf16.msra.mxu0 0
      %702 = vmatprep.subr.bf16.mxu0 0
      %703 = vmatpush1.bf16.msra.mxu0 0
      %704 = vmatprep.subr.bf16.mxu0 0
      %705 = vmatpush1.bf16.msra.mxu0 0
      %706 = vmatprep.subr.bf16.mxu0 0
      %707 = vmatpush1.bf16.msra.mxu0 0
      %708 = vmatprep.subr.bf16.mxu0 0
      %709 = vmatpush1.bf16.msra.mxu0 0
      %710 = vmatprep.subr.bf16.mxu0 0
      %711 = vmatpush1.bf16.msra.mxu0 0
      %712 = vmatprep.subr.bf16.mxu0 0
      %713 = vmatpush1.bf16.msra.mxu0 0
      %714 = vmatprep.subr.bf16.mxu0 0
      %715 = vmatpush1.bf16.msra.mxu0 0
      %716 = vmatprep.subr.bf16.mxu0 0
      %717 = vmatpush1.bf16.msra.mxu0 0
      %718 = vmatprep.subr.bf16.mxu0 0
      %719 = vmatpush1.bf16.msra.mxu0 0
      %720 = vmatprep.subr.bf16.mxu0 0
      %721 = vmatpush1.bf16.msra.mxu0 0
      %722 = vmatprep.subr.bf16.mxu0 0
      %723 = vmatpush1.bf16.msra.mxu0 0
      %724 = vmatprep.subr.bf16.mxu0 0
      %725 = vmatpush1.bf16.msra.mxu0 0
      %726 = vmatprep.subr.bf16.mxu0 0
      %727 = vmatpush1.bf16.msra.mxu0 0
      %728 = vmatprep.mubr.bf16.mxu0 0
      %729 = vmatmul.mubr.bf16.gmra.mrb[0].mxu0 %v694
      %v730 = vpop.f32.mrb[0].mxu0
      %v731 = vadd.f32 %v663, %v730
      %v732 = vpop.f32.mrb[0].mxu0
      %v733 = vpop.f32.mrb[0].mxu0
      %v734 = vpop.f32.mrb[0].mxu0
      %735 = vdwg.mxu0
      %v740 = vunpack.c.l.b16 %v593
      %v741 = vunpack.c.l.b16 %v594
      %v742 = vunpack.c.l.b16 %v595
      %v743 = vunpack.c.l.b16 %v596
      %v744 = vpack.c.b16 %v741, %v740
      %v745 = vpack.c.b16 %v743, %v742
      %748 = vmatprep.subr.bf16.mxu0 0
      %749 = vmatpush1.bf16.msra.mxu0 %v744
      %750 = vmatprep.subr.bf16.mxu0 0
      %751 = vmatpush1.bf16.msra.mxu0 %v745
      %752 = vmatprep.subr.bf16.mxu0 0
      %753 = vmatpush1.bf16.msra.mxu0 0
      %754 = vmatprep.subr.bf16.mxu0 0
      %755 = vmatpush1.bf16.msra.mxu0 0
      %756 = vmatprep.subr.bf16.mxu0 0
      %757 = vmatpush1.bf16.msra.mxu0 0
      %758 = vmatprep.subr.bf16.mxu0 0
      %759 = vmatpush1.bf16.msra.mxu0 0
      %760 = vmatprep.subr.bf16.mxu0 0
      %761 = vmatpush1.bf16.msra.mxu0 0
      %762 = vmatprep.subr.bf16.mxu0 0
      %763 = vmatpush1.bf16.msra.mxu0 0
      %764 = vmatprep.subr.bf16.mxu0 0
      %765 = vmatpush1.bf16.msra.mxu0 0
      %766 = vmatprep.subr.bf16.mxu0 0
      %767 = vmatpush1.bf16.msra.mxu0 0
      %768 = vmatprep.subr.bf16.mxu0 0
      %769 = vmatpush1.bf16.msra.mxu0 0
      %770 = vmatprep.subr.bf16.mxu0 0
      %771 = vmatpush1.bf16.msra.mxu0 0
      %772 = vmatprep.subr.bf16.mxu0 0
      %773 = vmatpush1.bf16.msra.mxu0 0
      %774 = vmatprep.subr.bf16.mxu0 0
      %775 = vmatpush1.bf16.msra.mxu0 0
      %776 = vmatprep.subr.bf16.mxu0 0
      %777 = vmatpush1.bf16.msra.mxu0 0
      %778 = vmatprep.subr.bf16.mxu0 0
      %779 = vmatpush1.bf16.msra.mxu0 0
      %780 = vmatprep.mubr.bf16.mxu0 0
      %781 = vmatmul.mubr.bf16.gmra.mrb[0].mxu0 %v694
      %v782 = vpop.f32.mrb[0].mxu0
      %v783 = vadd.f32 %v667, %v782
      %v784 = vpop.f32.mrb[0].mxu0
      %v785 = vpop.f32.mrb[0].mxu0
      %v786 = vpop.f32.mrb[0].mxu0
      %787 = vdwg.mxu0
      %v792 = vunpack.c.l.b16 %v597
      %v793 = vunpack.c.l.b16 %v598
      %v794 = vunpack.c.l.b16 %v599
      %v795 = vunpack.c.l.b16 %v600
      %v796 = vpack.c.b16 %v793, %v792
      %v797 = vpack.c.b16 %v795, %v794
      %800 = vmatprep.subr.bf16.mxu0 0
      %801 = vmatpush1.bf16.msra.mxu0 %v796
      %802 = vmatprep.subr.bf16.mxu0 0
      %803 = vmatpush1.bf16.msra.mxu0 %v797
      %804 = vmatprep.subr.bf16.mxu0 0
      %805 = vmatpush1.bf16.msra.mxu0 0
      %806 = vmatprep.subr.bf16.mxu0 0
      %807 = vmatpush1.bf16.msra.mxu0 0
      %808 = vmatprep.subr.bf16.mxu0 0
      %809 = vmatpush1.bf16.msra.mxu0 0
      %810 = vmatprep.subr.bf16.mxu0 0
      %811 = vmatpush1.bf16.msra.mxu0 0
      %812 = vmatprep.subr.bf16.mxu0 0
      %813 = vmatpush1.bf16.msra.mxu0 0
      %814 = vmatprep.subr.bf16.mxu0 0
      %815 = vmatpush1.bf16.msra.mxu0 0
      %816 = vmatprep.subr.bf16.mxu0 0
      %817 = vmatpush1.bf16.msra.mxu0 0
      %818 = vmatprep.subr.bf16.mxu0 0
      %819 = vmatpush1.bf16.msra.mxu0 0
      %820 = vmatprep.subr.bf16.mxu0 0
      %821 = vmatpush1.bf16.msra.mxu0 0
      %822 = vmatprep.subr.bf16.mxu0 0
      %823 = vmatpush1.bf16.msra.mxu0 0
      %824 = vmatprep.subr.bf16.mxu0 0
      %825 = vmatpush1.bf16.msra.mxu0 0
      %826 = vmatprep.subr.bf16.mxu0 0
      %827 = vmatpush1.bf16.msra.mxu0 0
      %828 = vmatprep.subr.bf16.mxu0 0
      %829 = vmatpush1.bf16.msra.mxu0 0
      %830 = vmatprep.subr.bf16.mxu0 0
      %831 = vmatpush1.bf16.msra.mxu0 0
      %832 = vmatprep.mubr.bf16.mxu0 0
      %833 = vmatmul.mubr.bf16.gmra.mrb[0].mxu0 %v694
      %v834 = vpop.f32.mrb[0].mxu0
      %v835 = vadd.f32 %v671, %v834
      %v836 = vpop.f32.mrb[0].mxu0
      %v837 = vpop.f32.mrb[0].mxu0
      %v838 = vpop.f32.mrb[0].mxu0
      %839 = vdwg.mxu0
      %v844 = vunpack.c.l.b16 %v601
      %v845 = vunpack.c.l.b16 %v602
      %v846 = vunpack.c.l.b16 %v603
      %v847 = vunpack.c.l.b16 %v604
      %v848 = vpack.c.b16 %v845, %v844
      %v849 = vpack.c.b16 %v847, %v846
      %852 = vmatprep.subr.bf16.mxu0 0
      %853 = vmatpush1.bf16.msra.mxu0 %v848
      %854 = vmatprep.subr.bf16.mxu0 0
      %855 = vmatpush1.bf16.msra.mxu0 %v849
      %856 = vmatprep.subr.bf16.mxu0 0
      %857 = vmatpush1.bf16.msra.mxu0 0
      %858 = vmatprep.subr.bf16.mxu0 0
      %859 = vmatpush1.bf16.msra.mxu0 0
      %860 = vmatprep.subr.bf16.mxu0 0
      %861 = vmatpush1.bf16.msra.mxu0 0
      %862 = vmatprep.subr.bf16.mxu0 0
      %863 = vmatpush1.bf16.msra.mxu0 0
      %864 = vmatprep.subr.bf16.mxu0 0
      %865 = vmatpush1.bf16.msra.mxu0 0
      %866 = vmatprep.subr.bf16.mxu0 0
      %867 = vmatpush1.bf16.msra.mxu0 0
      %868 = vmatprep.subr.bf16.mxu0 0
      %869 = vmatpush1.bf16.msra.mxu0 0
      %870 = vmatprep.subr.bf16.mxu0 0
      %871 = vmatpush1.bf16.msra.mxu0 0
      %872 = vmatprep.subr.bf16.mxu0 0
      %873 = vmatpush1.bf16.msra.mxu0 0
      %874 = vmatprep.subr.bf16.mxu0 0
      %875 = vmatpush1.bf16.msra.mxu0 0
      %876 = vmatprep.subr.bf16.mxu0 0
      %877 = vmatpush1.bf16.msra.mxu0 0
      %878 = vmatprep.subr.bf16.mxu0 0
      %879 = vmatpush1.bf16.msra.mxu0 0
      %880 = vmatprep.subr.bf16.mxu0 0
      %881 = vmatpush1.bf16.msra.mxu0 0
      %882 = vmatprep.subr.bf16.mxu0 0
      %883 = vmatpush1.bf16.msra.mxu0 0
      %884 = vmatprep.mubr.bf16.mxu0 0
      %885 = vmatmul.mubr.bf16.gmra.mrb[0].mxu0 %v694
      %v886 = vpop.f32.mrb[0].mxu0
      %v887 = vadd.f32 %v675, %v886
      %v888 = vpop.f32.mrb[0].mxu0
      %v889 = vpop.f32.mrb[0].mxu0
      %v890 = vpop.f32.mrb[0].mxu0
      %891 = vdwg.mxu0
      %v896 = vlaneseq
      %v897 = vshrl.u32 %v896, 7
      %v898 = vsub.s32 0, %v897
      %v899 = vrot.slane %v625, %v898
      %v900 = vlaneseq
      %v901 = vshrl.u32 %v900, 7
      %v902 = vsub.s32 0, %v901
      %v903 = vrot.slane %v626, %v902
      %v904 = vlaneseq
      %v905 = vshrl.u32 %v904, 7
      %v906 = vsub.s32 0, %v905
      %v907 = vrot.slane %v627, %v906
      %v908 = vlaneseq
      %v909 = vshrl.u32 %v908, 7
      %v910 = vsub.s32 0, %v909
      %v911 = vrot.slane %v628, %v910
      %v920 = vunpack.c.l.b16 %v609
      %v921 = vunpack.c.l.b16 %v610
      %v922 = vunpack.c.l.b16 %v611
      %v923 = vunpack.c.l.b16 %v612
      %v924 = vpack.c.b16 %v921, %v920
      %v925 = vpack.c.b16 %v923, %v922
      %928 = vmatprep.subr.bf16.mxu0 0
      %929 = vmatpush1.bf16.msra.mxu0 %v924
      %930 = vmatprep.subr.bf16.mxu0 0
      %931 = vmatpush1.bf16.msra.mxu0 %v925
      %932 = vmatprep.subr.bf16.mxu0 0
      %933 = vmatpush1.bf16.msra.mxu0 0
      %934 = vmatprep.subr.bf16.mxu0 0
      %935 = vmatpush1.bf16.msra.mxu0 0
      %936 = vmatprep.subr.bf16.mxu0 0
      %937 = vmatpush1.bf16.msra.mxu0 0
      %938 = vmatprep.subr.bf16.mxu0 0
      %939 = vmatpush1.bf16.msra.mxu0 0
      %940 = vmatprep.subr.bf16.mxu0 0
      %941 = vmatpush1.bf16.msra.mxu0 0
      %942 = vmatprep.subr.bf16.mxu0 0
      %943 = vmatpush1.bf16.msra.mxu0 0
      %944 = vmatprep.subr.bf16.mxu0 0
      %945 = vmatpush1.bf16.msra.mxu0 0
      %946 = vmatprep.subr.bf16.mxu0 0
      %947 = vmatpush1.bf16.msra.mxu0 0
      %948 = vmatprep.subr.bf16.mxu0 0
      %949 = vmatpush1.bf16.msra.mxu0 0
      %950 = vmatprep.subr.bf16.mxu0 0
      %951 = vmatpush1.bf16.msra.mxu0 0
      %952 = vmatprep.subr.bf16.mxu0 0
      %953 = vmatpush1.bf16.msra.mxu0 0
      %954 = vmatprep.subr.bf16.mxu0 0
      %955 = vmatpush1.bf16.msra.mxu0 0
      %956 = vmatprep.subr.bf16.mxu0 0
      %957 = vmatpush1.bf16.msra.mxu0 0
      %958 = vmatprep.subr.bf16.mxu0 0
      %959 = vmatpush1.bf16.msra.mxu0 0
      %960 = vmatprep.mubr.bf16.mxu0 0
      %961 = vmatmul.mubr.bf16.gmra.mrb[0].mxu0 %v694
      %v962 = vpop.f32.mrb[0].mxu0
      %v963 = vadd.f32 %v899, %v962
      %v964 = vpop.f32.mrb[0].mxu0
      %v965 = vpop.f32.mrb[0].mxu0
      %v966 = vpop.f32.mrb[0].mxu0
      %967 = vdwg.mxu0
      %v972 = vunpack.c.l.b16 %v613
      %v973 = vunpack.c.l.b16 %v614
      %v974 = vunpack.c.l.b16 %v615
      %v975 = vunpack.c.l.b16 %v616
      %v976 = vpack.c.b16 %v973, %v972
      %v977 = vpack.c.b16 %v975, %v974
      %980 = vmatprep.subr.bf16.mxu0 0
      %981 = vmatpush1.bf16.msra.mxu0 %v976
      %982 = vmatprep.subr.bf16.mxu0 0
      %983 = vmatpush1.bf16.msra.mxu0 %v977
      %984 = vmatprep.subr.bf16.mxu0 0
      %985 = vmatpush1.bf16.msra.mxu0 0
      %986 = vmatprep.subr.bf16.mxu0 0
      %987 = vmatpush1.bf16.msra.mxu0 0
      %988 = vmatprep.subr.bf16.mxu0 0
      %989 = vmatpush1.bf16.msra.mxu0 0
      %990 = vmatprep.subr.bf16.mxu0 0
      %991 = vmatpush1.bf16.msra.mxu0 0
      %992 = vmatprep.subr.bf16.mxu0 0
      %993 = vmatpush1.bf16.msra.mxu0 0
      %994 = vmatprep.subr.bf16.mxu0 0
      %995 = vmatpush1.bf16.msra.mxu0 0
      %996 = vmatprep.subr.bf16.mxu0 0
      %997 = vmatpush1.bf16.msra.mxu0 0
      %998 = vmatprep.subr.bf16.mxu0 0
      %999 = vmatpush1.bf16.msra.mxu0 0
      %1000 = vmatprep.subr.bf16.mxu0 0
      %1001 = vmatpush1.bf16.msra.mxu0 0
      %1002 = vmatprep.subr.bf16.mxu0 0
      %1003 = vmatpush1.bf16.msra.mxu0 0
      %1004 = vmatprep.subr.bf16.mxu0 0
      %1005 = vmatpush1.bf16.msra.mxu0 0
      %1006 = vmatprep.subr.bf16.mxu0 0
      %1007 = vmatpush1.bf16.msra.mxu0 0
      %1008 = vmatprep.subr.bf16.mxu0 0
      %1009 = vmatpush1.bf16.msra.mxu0 0
      %1010 = vmatprep.subr.bf16.mxu0 0
      %1011 = vmatpush1.bf16.msra.mxu0 0
      %1012 = vmatprep.mubr.bf16.mxu0 0
      %1013 = vmatmul.mubr.bf16.gmra.mrb[0].mxu0 %v694
      %v1014 = vpop.f32.mrb[0].mxu0
      %v1015 = vadd.f32 %v903, %v1014
      %v1016 = vpop.f32.mrb[0].mxu0
      %v1017 = vpop.f32.mrb[0].mxu0
      %v1018 = vpop.f32.mrb[0].mxu0
      %1019 = vdwg.mxu0
      %v1024 = vunpack.c.l.b16 %v617
      %v1025 = vunpack.c.l.b16 %v618
      %v1026 = vunpack.c.l.b16 %v619
      %v1027 = vunpack.c.l.b16 %v620
      %v1028 = vpack.c.b16 %v1025, %v1024
      %v1029 = vpack.c.b16 %v1027, %v1026
      %1032 = vmatprep.subr.bf16.mxu0 0
      %1033 = vmatpush1.bf16.msra.mxu0 %v1028
      %1034 = vmatprep.subr.bf16.mxu0 0
      %1035 = vmatpush1.bf16.msra.mxu0 %v1029
      %1036 = vmatprep.subr.bf16.mxu0 0
      %1037 = vmatpush1.bf16.msra.mxu0 0
      %1038 = vmatprep.subr.bf16.mxu0 0
      %1039 = vmatpush1.bf16.msra.mxu0 0
      %1040 = vmatprep.subr.bf16.mxu0 0
      %1041 = vmatpush1.bf16.msra.mxu0 0
      %1042 = vmatprep.subr.bf16.mxu0 0
      %1043 = vmatpush1.bf16.msra.mxu0 0
      %1044 = vmatprep.subr.bf16.mxu0 0
      %1045 = vmatpush1.bf16.msra.mxu0 0
      %1046 = vmatprep.subr.bf16.mxu0 0
      %1047 = vmatpush1.bf16.msra.mxu0 0
      %1048 = vmatprep.subr.bf16.mxu0 0
      %1049 = vmatpush1.bf16.msra.mxu0 0
      %1050 = vmatprep.subr.bf16.mxu0 0
      %1051 = vmatpush1.bf16.msra.mxu0 0
      %1052 = vmatprep.subr.bf16.mxu0 0
      %1053 = vmatpush1.bf16.msra.mxu0 0
      %1054 = vmatprep.subr.bf16.mxu0 0
      %1055 = vmatpush1.bf16.msra.mxu0 0
      %1056 = vmatprep.subr.bf16.mxu0 0
      %1057 = vmatpush1.bf16.msra.mxu0 0
      %1058 = vmatprep.subr.bf16.mxu0 0
      %1059 = vmatpush1.bf16.msra.mxu0 0
      %1060 = vmatprep.subr.bf16.mxu0 0
      %1061 = vmatpush1.bf16.msra.mxu0 0
      %1062 = vmatprep.subr.bf16.mxu0 0
      %1063 = vmatpush1.bf16.msra.mxu0 0
      %1064 = vmatprep.mubr.bf16.mxu0 0
      %1065 = vmatmul.mubr.bf16.gmra.mrb[0].mxu0 %v694
      %v1066 = vpop.f32.mrb[0].mxu0
      %v1067 = vadd.f32 %v907, %v1066
      %v1068 = vpop.f32.mrb[0].mxu0
      %v1069 = vpop.f32.mrb[0].mxu0
      %v1070 = vpop.f32.mrb[0].mxu0
      %1071 = vdwg.mxu0
      %v1076 = vunpack.c.l.b16 %v621
      %v1077 = vunpack.c.l.b16 %v622
      %v1078 = vunpack.c.l.b16 %v623
      %v1079 = vunpack.c.l.b16 %v624
      %v1080 = vpack.c.b16 %v1077, %v1076
      %v1081 = vpack.c.b16 %v1079, %v1078
      %1084 = vmatprep.subr.bf16.mxu0 0
      %1085 = vmatpush1.bf16.msra.mxu0 %v1080
      %1086 = vmatprep.subr.bf16.mxu0 0
      %1087 = vmatpush1.bf16.msra.mxu0 %v1081
      %1088 = vmatprep.subr.bf16.mxu0 0
      %1089 = vmatpush1.bf16.msra.mxu0 0
      %1090 = vmatprep.subr.bf16.mxu0 0
      %1091 = vmatpush1.bf16.msra.mxu0 0
      %1092 = vmatprep.subr.bf16.mxu0 0
      %1093 = vmatpush1.bf16.msra.mxu0 0
      %1094 = vmatprep.subr.bf16.mxu0 0
      %1095 = vmatpush1.bf16.msra.mxu0 0
      %1096 = vmatprep.subr.bf16.mxu0 0
      %1097 = vmatpush1.bf16.msra.mxu0 0
      %1098 = vmatprep.subr.bf16.mxu0 0
      %1099 = vmatpush1.bf16.msra.mxu0 0
      %1100 = vmatprep.subr.bf16.mxu0 0
      %1101 = vmatpush1.bf16.msra.mxu0 0
      %1102 = vmatprep.subr.bf16.mxu0 0
      %1103 = vmatpush1.bf16.msra.mxu0 0
      %1104 = vmatprep.subr.bf16.mxu0 0
      %1105 = vmatpush1.bf16.msra.mxu0 0
      %1106 = vmatprep.subr.bf16.mxu0 0
      %1107 = vmatpush1.bf16.msra.mxu0 0
      %1108 = vmatprep.subr.bf16.mxu0 0
      %1109 = vmatpush1.bf16.msra.mxu0 0
      %1110 = vmatprep.subr.bf16.mxu0 0
      %1111 = vmatpush1.bf16.msra.mxu0 0
      %1112 = vmatprep.subr.bf16.mxu0 0
      %1113 = vmatpush1.bf16.msra.mxu0 0
      %1114 = vmatprep.subr.bf16.mxu0 0
      %1115 = vmatpush1.bf16.msra.mxu0 0
      %1116 = vmatprep.mubr.bf16.mxu0 0
      %1117 = vmatmul.mubr.bf16.gmra.mrb[0].mxu0 %v694
      %v1118 = vpop.f32.mrb[0].mxu0
      %v1119 = vadd.f32 %v911, %v1118
      %v1120 = vpop.f32.mrb[0].mxu0
      %v1121 = vpop.f32.mrb[0].mxu0
      %v1122 = vpop.f32.mrb[0].mxu0
      %1123 = vdwg.mxu0
      %v1128 = vlaneseq
      %v1129 = vshrl.u32 %v1128, 7
      %v1130 = vsub.s32 0, %v1129
      %v1131 = vrot.slane %v645, %v1130
      %v1132 = vlaneseq
      %v1133 = vshrl.u32 %v1132, 7
      %v1134 = vsub.s32 0, %v1133
      %v1135 = vrot.slane %v646, %v1134
      %v1136 = vlaneseq
      %v1137 = vshrl.u32 %v1136, 7
      %v1138 = vsub.s32 0, %v1137
      %v1139 = vrot.slane %v647, %v1138
      %v1140 = vlaneseq
      %v1141 = vshrl.u32 %v1140, 7
      %v1142 = vsub.s32 0, %v1141
      %v1143 = vrot.slane %v648, %v1142
      %v1152 = vunpack.c.l.b16 %v629
      %v1153 = vunpack.c.l.b16 %v630
      %v1154 = vunpack.c.l.b16 %v631
      %v1155 = vunpack.c.l.b16 %v632
      %v1156 = vpack.c.b16 %v1153, %v1152
      %v1157 = vpack.c.b16 %v1155, %v1154
      %1160 = vmatprep.subr.bf16.mxu0 0
      %1161 = vmatpush1.bf16.msra.mxu0 %v1156
      %1162 = vmatprep.subr.bf16.mxu0 0
      %1163 = vmatpush1.bf16.msra.mxu0 %v1157
      %1164 = vmatprep.subr.bf16.mxu0 0
      %1165 = vmatpush1.bf16.msra.mxu0 0
      %1166 = vmatprep.subr.bf16.mxu0 0
      %1167 = vmatpush1.bf16.msra.mxu0 0
      %1168 = vmatprep.subr.bf16.mxu0 0
      %1169 = vmatpush1.bf16.msra.mxu0 0
      %1170 = vmatprep.subr.bf16.mxu0 0
      %1171 = vmatpush1.bf16.msra.mxu0 0
      %1172 = vmatprep.subr.bf16.mxu0 0
      %1173 = vmatpush1.bf16.msra.mxu0 0
      %1174 = vmatprep.subr.bf16.mxu0 0
      %1175 = vmatpush1.bf16.msra.mxu0 0
      %1176 = vmatprep.subr.bf16.mxu0 0
      %1177 = vmatpush1.bf16.msra.mxu0 0
      %1178 = vmatprep.subr.bf16.mxu0 0
      %1179 = vmatpush1.bf16.msra.mxu0 0
      %1180 = vmatprep.subr.bf16.mxu0 0
      %1181 = vmatpush1.bf16.msra.mxu0 0
      %1182 = vmatprep.subr.bf16.mxu0 0
      %1183 = vmatpush1.bf16.msra.mxu0 0
      %1184 = vmatprep.subr.bf16.mxu0 0
      %1185 = vmatpush1.bf16.msra.mxu0 0
      %1186 = vmatprep.subr.bf16.mxu0 0
      %1187 = vmatpush1.bf16.msra.mxu0 0
      %1188 = vmatprep.subr.bf16.mxu0 0
      %1189 = vmatpush1.bf16.msra.mxu0 0
      %1190 = vmatprep.subr.bf16.mxu0 0
      %1191 = vmatpush1.bf16.msra.mxu0 0
      %1192 = vmatprep.mubr.bf16.mxu0 0
      %1193 = vmatmul.mubr.bf16.gmra.mrb[0].mxu0 %v694
      %v1194 = vpop.f32.mrb[0].mxu0
      %v1195 = vadd.f32 %v1131, %v1194
      %v1196 = vpop.f32.mrb[0].mxu0
      %v1197 = vpop.f32.mrb[0].mxu0
      %v1198 = vpop.f32.mrb[0].mxu0
      %1199 = vdwg.mxu0
      %v1204 = vunpack.c.l.b16 %v633
      %v1205 = vunpack.c.l.b16 %v634
      %v1206 = vunpack.c.l.b16 %v635
      %v1207 = vunpack.c.l.b16 %v636
      %v1208 = vpack.c.b16 %v1205, %v1204
      %v1209 = vpack.c.b16 %v1207, %v1206
      %1212 = vmatprep.subr.bf16.mxu0 0
      %1213 = vmatpush1.bf16.msra.mxu0 %v1208
      %1214 = vmatprep.subr.bf16.mxu0 0
      %1215 = vmatpush1.bf16.msra.mxu0 %v1209
      %1216 = vmatprep.subr.bf16.mxu0 0
      %1217 = vmatpush1.bf16.msra.mxu0 0
      %1218 = vmatprep.subr.bf16.mxu0 0
      %1219 = vmatpush1.bf16.msra.mxu0 0
      %1220 = vmatprep.subr.bf16.mxu0 0
      %1221 = vmatpush1.bf16.msra.mxu0 0
      %1222 = vmatprep.subr.bf16.mxu0 0
      %1223 = vmatpush1.bf16.msra.mxu0 0
      %1224 = vmatprep.subr.bf16.mxu0 0
      %1225 = vmatpush1.bf16.msra.mxu0 0
      %1226 = vmatprep.subr.bf16.mxu0 0
      %1227 = vmatpush1.bf16.msra.mxu0 0
      %1228 = vmatprep.subr.bf16.mxu0 0
      %1229 = vmatpush1.bf16.msra.mxu0 0
      %1230 = vmatprep.subr.bf16.mxu0 0
      %1231 = vmatpush1.bf16.msra.mxu0 0
      %1232 = vmatprep.subr.bf16.mxu0 0
      %1233 = vmatpush1.bf16.msra.mxu0 0
      %1234 = vmatprep.subr.bf16.mxu0 0
      %1235 = vmatpush1.bf16.msra.mxu0 0
      %1236 = vmatprep.subr.bf16.mxu0 0
      %1237 = vmatpush1.bf16.msra.mxu0 0
      %1238 = vmatprep.subr.bf16.mxu0 0
      %1239 = vmatpush1.bf16.msra.mxu0 0
      %1240 = vmatprep.subr.bf16.mxu0 0
      %1241 = vmatpush1.bf16.msra.mxu0 0
      %1242 = vmatprep.subr.bf16.mxu0 0
      %1243 = vmatpush1.bf16.msra.mxu0 0
      %1244 = vmatprep.mubr.bf16.mxu0 0
      %1245 = vmatmul.mubr.bf16.gmra.mrb[0].mxu0 %v694
      %v1246 = vpop.f32.mrb[0].mxu0
      %v1247 = vadd.f32 %v1135, %v1246
      %v1248 = vpop.f32.mrb[0].mxu0
      %v1249 = vpop.f32.mrb[0].mxu0
      %v1250 = vpop.f32.mrb[0].mxu0
      %1251 = vdwg.mxu0
      %v1256 = vunpack.c.l.b16 %v637
      %v1257 = vunpack.c.l.b16 %v638
      %v1258 = vunpack.c.l.b16 %v639
      %v1259 = vunpack.c.l.b16 %v640
      %v1260 = vpack.c.b16 %v1257, %v1256
      %v1261 = vpack.c.b16 %v1259, %v1258
      %1264 = vmatprep.subr.bf16.mxu0 0
      %1265 = vmatpush1.bf16.msra.mxu0 %v1260
      %1266 = vmatprep.subr.bf16.mxu0 0
      %1267 = vmatpush1.bf16.msra.mxu0 %v1261
      %1268 = vmatprep.subr.bf16.mxu0 0
      %1269 = vmatpush1.bf16.msra.mxu0 0
      %1270 = vmatprep.subr.bf16.mxu0 0
      %1271 = vmatpush1.bf16.msra.mxu0 0
      %1272 = vmatprep.subr.bf16.mxu0 0
      %1273 = vmatpush1.bf16.msra.mxu0 0
      %1274 = vmatprep.subr.bf16.mxu0 0
      %1275 = vmatpush1.bf16.msra.mxu0 0
      %1276 = vmatprep.subr.bf16.mxu0 0
      %1277 = vmatpush1.bf16.msra.mxu0 0
      %1278 = vmatprep.subr.bf16.mxu0 0
      %1279 = vmatpush1.bf16.msra.mxu0 0
      %1280 = vmatprep.subr.bf16.mxu0 0
      %1281 = vmatpush1.bf16.msra.mxu0 0
      %1282 = vmatprep.subr.bf16.mxu0 0
      %1283 = vmatpush1.bf16.msra.mxu0 0
      %1284 = vmatprep.subr.bf16.mxu0 0
      %1285 = vmatpush1.bf16.msra.mxu0 0
      %1286 = vmatprep.subr.bf16.mxu0 0
      %1287 = vmatpush1.bf16.msra.mxu0 0
      %1288 = vmatprep.subr.bf16.mxu0 0
      %1289 = vmatpush1.bf16.msra.mxu0 0
      %1290 = vmatprep.subr.bf16.mxu0 0
      %1291 = vmatpush1.bf16.msra.mxu0 0
      %1292 = vmatprep.subr.bf16.mxu0 0
      %1293 = vmatpush1.bf16.msra.mxu0 0
      %1294 = vmatprep.subr.bf16.mxu0 0
      %1295 = vmatpush1.bf16.msra.mxu0 0
      %1296 = vmatprep.mubr.bf16.mxu0 0
      %1297 = vmatmul.mubr.bf16.gmra.mrb[0].mxu0 %v694
      %v1298 = vpop.f32.mrb[0].mxu0
      %v1299 = vadd.f32 %v1139, %v1298
      %v1300 = vpop.f32.mrb[0].mxu0
      %v1301 = vpop.f32.mrb[0].mxu0
      %v1302 = vpop.f32.mrb[0].mxu0
      %1303 = vdwg.mxu0
      %v1308 = vunpack.c.l.b16 %v641
      %v1309 = vunpack.c.l.b16 %v642
      %v1310 = vunpack.c.l.b16 %v643
      %v1311 = vunpack.c.l.b16 %v644
      %v1312 = vpack.c.b16 %v1309, %v1308
      %v1313 = vpack.c.b16 %v1311, %v1310
      %1316 = vmatprep.subr.bf16.mxu0 0
      %1317 = vmatpush1.bf16.msra.mxu0 %v1312
      %1318 = vmatprep.subr.bf16.mxu0 0
      %1319 = vmatpush1.bf16.msra.mxu0 %v1313
      %1320 = vmatprep.subr.bf16.mxu0 0
      %1321 = vmatpush1.bf16.msra.mxu0 0
      %1322 = vmatprep.subr.bf16.mxu0 0
      %1323 = vmatpush1.bf16.msra.mxu0 0
      %1324 = vmatprep.subr.bf16.mxu0 0
      %1325 = vmatpush1.bf16.msra.mxu0 0
      %1326 = vmatprep.subr.bf16.mxu0 0
      %1327 = vmatpush1.bf16.msra.mxu0 0
      %1328 = vmatprep.subr.bf16.mxu0 0
      %1329 = vmatpush1.bf16.msra.mxu0 0
      %1330 = vmatprep.subr.bf16.mxu0 0
      %1331 = vmatpush1.bf16.msra.mxu0 0
      %1332 = vmatprep.subr.bf16.mxu0 0
      %1333 = vmatpush1.bf16.msra.mxu0 0
      %1334 = vmatprep.subr.bf16.mxu0 0
      %1335 = vmatpush1.bf16.msra.mxu0 0
      %1336 = vmatprep.subr.bf16.mxu0 0
      %1337 = vmatpush1.bf16.msra.mxu0 0
      %1338 = vmatprep.subr.bf16.mxu0 0
      %1339 = vmatpush1.bf16.msra.mxu0 0
      %1340 = vmatprep.subr.bf16.mxu0 0
      %1341 = vmatpush1.bf16.msra.mxu0 0
      %1342 = vmatprep.subr.bf16.mxu0 0
      %1343 = vmatpush1.bf16.msra.mxu0 0
      %1344 = vmatprep.subr.bf16.mxu0 0
      %1345 = vmatpush1.bf16.msra.mxu0 0
      %1346 = vmatprep.subr.bf16.mxu0 0
      %1347 = vmatpush1.bf16.msra.mxu0 0
      %1348 = vmatprep.mubr.bf16.mxu0 0
      %1349 = vmatmul.mubr.bf16.gmra.mrb[0].mxu0 %v694
      %v1350 = vpop.f32.mrb[0].mxu0
      %v1351 = vadd.f32 %v1143, %v1350
      %v1352 = vpop.f32.mrb[0].mxu0
      %v1353 = vpop.f32.mrb[0].mxu0
      %v1354 = vpop.f32.mrb[0].mxu0
      %1355 = vdwg.mxu0
      %v1356 = vpack.c.bf16 %v731, %v731
      %v1357 = vpack.c.bf16 %v783, %v783
      %v1358 = vpack.c.bf16 %v835, %v835
      %v1359 = vpack.c.bf16 %v887, %v887
      %v1360 = vpack.c.bf16 %v963, %v963
      %v1361 = vpack.c.bf16 %v1015, %v1015
      %v1362 = vpack.c.bf16 %v1067, %v1067
      %v1363 = vpack.c.bf16 %v1119, %v1119
      %vm1364 = vcmask 64512
      %v1366 = vsel %vm1364, %v1356, 0
      %v1369 = vsel %vm1364, %v1360, 0
      %1371 = vmatprep.subr.bf16.mxu0 0
      %1372 = vmatpush1.bf16.xpose.msra.mxu0 %v1369
      %1373 = vmatprep.subr.bf16.mxu0 0
      %1374 = vmatpush1.bf16.xpose.msra.mxu0 0
      %1375 = vmatprep.subr.bf16.mxu0 0
      %1376 = vmatpush1.bf16.xpose.msra.mxu0 0
      %1377 = vmatprep.subr.bf16.mxu0 0
      %1378 = vmatpush1.bf16.xpose.msra.mxu0 0
      %1379 = vmatprep.subr.bf16.mxu0 0
      %1380 = vmatpush1.bf16.xpose.msra.mxu0 0
      %1381 = vmatprep.subr.bf16.mxu0 0
      %1382 = vmatpush1.bf16.xpose.msra.mxu0 0
      %1383 = vmatprep.subr.bf16.mxu0 0
      %1384 = vmatpush1.bf16.xpose.msra.mxu0 0
      %1385 = vmatprep.subr.bf16.mxu0 0
      %1386 = vmatpush1.bf16.xpose.msra.mxu0 0
      %1387 = vmatprep.subr.bf16.mxu0 0
      %1388 = vmatpush1.bf16.xpose.msra.mxu0 0
      %1389 = vmatprep.subr.bf16.mxu0 0
      %1390 = vmatpush1.bf16.xpose.msra.mxu0 0
      %1391 = vmatprep.subr.bf16.mxu0 0
      %1392 = vmatpush1.bf16.xpose.msra.mxu0 0
      %1393 = vmatprep.subr.bf16.mxu0 0
      %1394 = vmatpush1.bf16.xpose.msra.mxu0 0
      %1395 = vmatprep.subr.bf16.mxu0 0
      %1396 = vmatpush1.bf16.xpose.msra.mxu0 0
      %1397 = vmatprep.subr.bf16.mxu0 0
      %1398 = vmatpush1.bf16.xpose.msra.mxu0 0
      %1399 = vmatprep.subr.bf16.mxu0 0
      %1400 = vmatpush1.bf16.xpose.msra.mxu0 0
      %1401 = vmatprep.subr.bf16.mxu0 0
      %1402 = vmatpush1.bf16.xpose.msra.mxu0 0
      %1403 = vmatprep.mubr.bf16.mxu0 0
      %1404 = vmatmul.mubr.bf16.gmra.mrb[0].mxu0 %v1366
      %v1405 = vpop.f32.mrb[0].mxu0
      %v1406 = vadd.f32 0.0, %v1405
      %v1407 = vpop.f32.mrb[0].mxu0
      %v1408 = vpop.f32.mrb[0].mxu0
      %v1409 = vpop.f32.mrb[0].mxu0
      %1410 = vdwg.mxu0
      %v1412 = vsel %vm1364, %v1357, 0
      %v1415 = vsel %vm1364, %v1361, 0
      %1417 = vmatprep.subr.bf16.mxu0 0
      %1418 = vmatpush1.bf16.xpose.msra.mxu0 %v1415
      %1419 = vmatprep.subr.bf16.mxu0 0
      %1420 = vmatpush1.bf16.xpose.msra.mxu0 0
      %1421 = vmatprep.subr.bf16.mxu0 0
      %1422 = vmatpush1.bf16.xpose.msra.mxu0 0
      %1423 = vmatprep.subr.bf16.mxu0 0
      %1424 = vmatpush1.bf16.xpose.msra.mxu0 0
      %1425 = vmatprep.subr.bf16.mxu0 0
      %1426 = vmatpush1.bf16.xpose.msra.mxu0 0
      %1427 = vmatprep.subr.bf16.mxu0 0
      %1428 = vmatpush1.bf16.xpose.msra.mxu0 0
      %1429 = vmatprep.subr.bf16.mxu0 0
      %1430 = vmatpush1.bf16.xpose.msra.mxu0 0
      %1431 = vmatprep.subr.bf16.mxu0 0
      %1432 = vmatpush1.bf16.xpose.msra.mxu0 0
      %1433 = vmatprep.subr.bf16.mxu0 0
      %1434 = vmatpush1.bf16.xpose.msra.mxu0 0
      %1435 = vmatprep.subr.bf16.mxu0 0
      %1436 = vmatpush1.bf16.xpose.msra.mxu0 0
      %1437 = vmatprep.subr.bf16.mxu0 0
      %1438 = vmatpush1.bf16.xpose.msra.mxu0 0
      %1439 = vmatprep.subr.bf16.mxu0 0
      %1440 = vmatpush1.bf16.xpose.msra.mxu0 0
      %1441 = vmatprep.subr.bf16.mxu0 0
      %1442 = vmatpush1.bf16.xpose.msra.mxu0 0
      %1443 = vmatprep.subr.bf16.mxu0 0
      %1444 = vmatpush1.bf16.xpose.msra.mxu0 0
      %1445 = vmatprep.subr.bf16.mxu0 0
      %1446 = vmatpush1.bf16.xpose.msra.mxu0 0
      %1447 = vmatprep.subr.bf16.mxu0 0
      %1448 = vmatpush1.bf16.xpose.msra.mxu0 0
      %1449 = vmatprep.mubr.bf16.mxu0 0
      %1450 = vmatmul.mubr.bf16.gmra.mrb[0].mxu0 %v1412
      %v1451 = vpop.f32.mrb[0].mxu0
      %v1452 = vadd.f32 0.0, %v1451
      %v1453 = vpop.f32.mrb[0].mxu0
      %v1454 = vpop.f32.mrb[0].mxu0
      %v1455 = vpop.f32.mrb[0].mxu0
      %1456 = vdwg.mxu0
      %v1458 = vsel %vm1364, %v1358, 0
      %v1461 = vsel %vm1364, %v1362, 0
      %1463 = vmatprep.subr.bf16.mxu0 0
      %1464 = vmatpush1.bf16.xpose.msra.mxu0 %v1461
      %1465 = vmatprep.subr.bf16.mxu0 0
      %1466 = vmatpush1.bf16.xpose.msra.mxu0 0
      %1467 = vmatprep.subr.bf16.mxu0 0
      %1468 = vmatpush1.bf16.xpose.msra.mxu0 0
      %1469 = vmatprep.subr.bf16.mxu0 0
      %1470 = vmatpush1.bf16.xpose.msra.mxu0 0
      %1471 = vmatprep.subr.bf16.mxu0 0
      %1472 = vmatpush1.bf16.xpose.msra.mxu0 0
      %1473 = vmatprep.subr.bf16.mxu0 0
      %1474 = vmatpush1.bf16.xpose.msra.mxu0 0
      %1475 = vmatprep.subr.bf16.mxu0 0
      %1476 = vmatpush1.bf16.xpose.msra.mxu0 0
      %1477 = vmatprep.subr.bf16.mxu0 0
      %1478 = vmatpush1.bf16.xpose.msra.mxu0 0
      %1479 = vmatprep.subr.bf16.mxu0 0
      %1480 = vmatpush1.bf16.xpose.msra.mxu0 0
      %1481 = vmatprep.subr.bf16.mxu0 0
      %1482 = vmatpush1.bf16.xpose.msra.mxu0 0
      %1483 = vmatprep.subr.bf16.mxu0 0
      %1484 = vmatpush1.bf16.xpose.msra.mxu0 0
      %1485 = vmatprep.subr.bf16.mxu0 0
      %1486 = vmatpush1.bf16.xpose.msra.mxu0 0
      %1487 = vmatprep.subr.bf16.mxu0 0
      %1488 = vmatpush1.bf16.xpose.msra.mxu0 0
      %1489 = vmatprep.subr.bf16.mxu0 0
      %1490 = vmatpush1.bf16.xpose.msra.mxu0 0
      %1491 = vmatprep.subr.bf16.mxu0 0
      %1492 = vmatpush1.bf16.xpose.msra.mxu0 0
      %1493 = vmatprep.subr.bf16.mxu0 0
      %1494 = vmatpush1.bf16.xpose.msra.mxu0 0
      %1495 = vmatprep.mubr.bf16.mxu0 0
      %1496 = vmatmul.mubr.bf16.gmra.mrb[0].mxu0 %v1458
      %v1497 = vpop.f32.mrb[0].mxu0
      %v1498 = vadd.f32 0.0, %v1497
      %v1499 = vpop.f32.mrb[0].mxu0
      %v1500 = vpop.f32.mrb[0].mxu0
      %v1501 = vpop.f32.mrb[0].mxu0
      %1502 = vdwg.mxu0
      %v1504 = vsel %vm1364, %v1359, 0
      %v1507 = vsel %vm1364, %v1363, 0
      %1509 = vmatprep.subr.bf16.mxu0 0
      %1510 = vmatpush1.bf16.xpose.msra.mxu0 %v1507
      %1511 = vmatprep.subr.bf16.mxu0 0
      %1512 = vmatpush1.bf16.xpose.msra.mxu0 0
      %1513 = vmatprep.subr.bf16.mxu0 0
      %1514 = vmatpush1.bf16.xpose.msra.mxu0 0
      %1515 = vmatprep.subr.bf16.mxu0 0
      %1516 = vmatpush1.bf16.xpose.msra.mxu0 0
      %1517 = vmatprep.subr.bf16.mxu0 0
      %1518 = vmatpush1.bf16.xpose.msra.mxu0 0
      %1519 = vmatprep.subr.bf16.mxu0 0
      %1520 = vmatpush1.bf16.xpose.msra.mxu0 0
      %1521 = vmatprep.subr.bf16.mxu0 0
      %1522 = vmatpush1.bf16.xpose.msra.mxu0 0
      %1523 = vmatprep.subr.bf16.mxu0 0
      %1524 = vmatpush1.bf16.xpose.msra.mxu0 0
      %1525 = vmatprep.subr.bf16.mxu0 0
      %1526 = vmatpush1.bf16.xpose.msra.mxu0 0
      %1527 = vmatprep.subr.bf16.mxu0 0
      %1528 = vmatpush1.bf16.xpose.msra.mxu0 0
      %1529 = vmatprep.subr.bf16.mxu0 0
      %1530 = vmatpush1.bf16.xpose.msra.mxu0 0
      %1531 = vmatprep.subr.bf16.mxu0 0
      %1532 = vmatpush1.bf16.xpose.msra.mxu0 0
      %1533 = vmatprep.subr.bf16.mxu0 0
      %1534 = vmatpush1.bf16.xpose.msra.mxu0 0
      %1535 = vmatprep.subr.bf16.mxu0 0
      %1536 = vmatpush1.bf16.xpose.msra.mxu0 0
      %1537 = vmatprep.subr.bf16.mxu0 0
      %1538 = vmatpush1.bf16.xpose.msra.mxu0 0
      %1539 = vmatprep.subr.bf16.mxu0 0
      %1540 = vmatpush1.bf16.xpose.msra.mxu0 0
      %1541 = vmatprep.mubr.bf16.mxu0 0
      %1542 = vmatmul.mubr.bf16.gmra.mrb[0].mxu0 %v1504
      %v1543 = vpop.f32.mrb[0].mxu0
      %v1544 = vadd.f32 0.0, %v1543
      %v1545 = vpop.f32.mrb[0].mxu0
      %v1546 = vpop.f32.mrb[0].mxu0
      %v1547 = vpop.f32.mrb[0].mxu0
      %1548 = vdwg.mxu0
      %v1549 = vmul.f32 %v1406, 0.35355338
      %v1550 = vmul.f32 %v1452, 0.35355338
      %v1551 = vmul.f32 %v1498, 0.35355338
      %v1552 = vmul.f32 %v1544, 0.35355338
      %v1554 = vlaneseq
      %v1555 = vshrl.u32 %v1554, 7
      %v1556 = vsub.s32 0, %v1555
      %v1557 = vrot.slane %v588, %v1556
      %v1559 = vadd.f32 %v1549, %v1557
      %v1560 = vadd.f32 %v1550, %v1557
      %v1561 = vadd.f32 %v1551, %v1557
      %v1562 = vadd.f32 %v1552, %v1557
      %v1563 = vsel %vm1364, %v1559, -inf
      %1564 = vmax.xlane.f32.xlu0 %v1563
      %v1565 = vpop.xlane.xlu0 %1564
      %v1566 = vsel %vm1364, %v1560, -inf
      %1567 = vmax.xlane.f32.xlu0 %v1566
      %v1568 = vpop.xlane.xlu0 %1567
      %v1569 = vsel %vm1364, %v1561, -inf
      %1570 = vmax.xlane.f32.xlu0 %v1569
      %v1571 = vpop.xlane.xlu0 %1570
      %v1572 = vsel %vm1364, %v1562, -inf
      %1573 = vmax.xlane.f32.xlu0 %v1572
      %v1574 = vpop.xlane.xlu0 %1573
      %v1575 = vsub.f32 %v1559, %v1565
      %v1576 = vsub.f32 %v1560, %v1568
      %v1577 = vsub.f32 %v1561, %v1571
      %v1578 = vsub.f32 %v1562, %v1574
      %v1579 = vmul.f32 %v1575, 1.442695
      %v1580 = vpow.pop %v1579
      %v1581 = vmul.f32 %v1576, 1.442695
      %v1582 = vpow.pop %v1581
      %v1583 = vmul.f32 %v1577, 1.442695
      %v1584 = vpow.pop %v1583
      %v1585 = vmul.f32 %v1578, 1.442695
      %v1586 = vpow.pop %v1585
      %v1587 = vsel %vm1364, %v1580, 0.0
      %1588 = vadd.xlane.f32.xlu0 %v1587
      %v1589 = vpop.xlane.xlu0 %1588
      %v1590 = vsel %vm1364, %v1582, 0.0
      %1591 = vadd.xlane.f32.xlu0 %v1590
      %v1592 = vpop.xlane.xlu0 %1591
      %v1593 = vsel %vm1364, %v1584, 0.0
      %1594 = vadd.xlane.f32.xlu0 %v1593
      %v1595 = vpop.xlane.xlu0 %1594
      %v1596 = vsel %vm1364, %v1586, 0.0
      %1597 = vadd.xlane.f32.xlu0 %v1596
      %v1598 = vpop.xlane.xlu0 %1597
      %v1599 = vrcp.pop %v1589
      %v1600 = vmul.f32 %v1580, %v1599
      %v1601 = vrcp.pop %v1592
      %v1602 = vmul.f32 %v1582, %v1601
      %v1603 = vrcp.pop %v1595
      %v1604 = vmul.f32 %v1584, %v1603
      %v1605 = vrcp.pop %v1598
      %v1606 = vmul.f32 %v1586, %v1605
      %v1607 = vpack.c.bf16 %v1600, %v1600
      %v1608 = vpack.c.bf16 %v1602, %v1602
      %v1609 = vpack.c.bf16 %v1604, %v1604
      %v1610 = vpack.c.bf16 %v1606, %v1606
      %v1611 = vpack.c.bf16 %v1195, %v1195
      %v1612 = vpack.c.bf16 %v1247, %v1247
      %v1613 = vpack.c.bf16 %v1299, %v1299
      %v1614 = vpack.c.bf16 %v1351, %v1351
      %v1616 = vsel %vm1364, %v1607, 0
      %vm1618 = vcmask 1043456
      %v1620 = vsel %vm1618, %v1611, 0
      %1622 = vmatprep.subr.bf16.mxu0 0
      %1623 = vmatpush1.bf16.msra.mxu0 %v1620
      %1624 = vmatprep.subr.bf16.mxu0 0
      %1625 = vmatpush1.bf16.msra.mxu0 0
      %1626 = vmatprep.subr.bf16.mxu0 0
      %1627 = vmatpush1.bf16.msra.mxu0 0
      %1628 = vmatprep.subr.bf16.mxu0 0
      %1629 = vmatpush1.bf16.msra.mxu0 0
      %1630 = vmatprep.subr.bf16.mxu0 0
      %1631 = vmatpush1.bf16.msra.mxu0 0
      %1632 = vmatprep.subr.bf16.mxu0 0
      %1633 = vmatpush1.bf16.msra.mxu0 0
      %1634 = vmatprep.subr.bf16.mxu0 0
      %1635 = vmatpush1.bf16.msra.mxu0 0
      %1636 = vmatprep.subr.bf16.mxu0 0
      %1637 = vmatpush1.bf16.msra.mxu0 0
      %1638 = vmatprep.subr.bf16.mxu0 0
      %1639 = vmatpush1.bf16.msra.mxu0 0
      %1640 = vmatprep.subr.bf16.mxu0 0
      %1641 = vmatpush1.bf16.msra.mxu0 0
      %1642 = vmatprep.subr.bf16.mxu0 0
      %1643 = vmatpush1.bf16.msra.mxu0 0
      %1644 = vmatprep.subr.bf16.mxu0 0
      %1645 = vmatpush1.bf16.msra.mxu0 0
      %1646 = vmatprep.subr.bf16.mxu0 0
      %1647 = vmatpush1.bf16.msra.mxu0 0
      %1648 = vmatprep.subr.bf16.mxu0 0
      %1649 = vmatpush1.bf16.msra.mxu0 0
      %1650 = vmatprep.subr.bf16.mxu0 0
      %1651 = vmatpush1.bf16.msra.mxu0 0
      %1652 = vmatprep.subr.bf16.mxu0 0
      %1653 = vmatpush1.bf16.msra.mxu0 0
      %1654 = vmatprep.mubr.bf16.mxu0 0
      %1655 = vmatmul.mubr.bf16.gmra.mrb[0].mxu0 %v1616
      %v1656 = vpop.f32.mrb[0].mxu0
      %v1657 = vadd.f32 0.0, %v1656
      %v1658 = vpop.f32.mrb[0].mxu0
      %v1659 = vpop.f32.mrb[0].mxu0
      %v1660 = vpop.f32.mrb[0].mxu0
      %1661 = vdwg.mxu0
      %v1663 = vsel %vm1364, %v1608, 0
      %v1666 = vsel %vm1618, %v1612, 0
      %1668 = vmatprep.subr.bf16.mxu0 0
      %1669 = vmatpush1.bf16.msra.mxu0 %v1666
      %1670 = vmatprep.subr.bf16.mxu0 0
      %1671 = vmatpush1.bf16.msra.mxu0 0
      %1672 = vmatprep.subr.bf16.mxu0 0
      %1673 = vmatpush1.bf16.msra.mxu0 0
      %1674 = vmatprep.subr.bf16.mxu0 0
      %1675 = vmatpush1.bf16.msra.mxu0 0
      %1676 = vmatprep.subr.bf16.mxu0 0
      %1677 = vmatpush1.bf16.msra.mxu0 0
      %1678 = vmatprep.subr.bf16.mxu0 0
      %1679 = vmatpush1.bf16.msra.mxu0 0
      %1680 = vmatprep.subr.bf16.mxu0 0
      %1681 = vmatpush1.bf16.msra.mxu0 0
      %1682 = vmatprep.subr.bf16.mxu0 0
      %1683 = vmatpush1.bf16.msra.mxu0 0
      %1684 = vmatprep.subr.bf16.mxu0 0
      %1685 = vmatpush1.bf16.msra.mxu0 0
      %1686 = vmatprep.subr.bf16.mxu0 0
      %1687 = vmatpush1.bf16.msra.mxu0 0
      %1688 = vmatprep.subr.bf16.mxu0 0
      %1689 = vmatpush1.bf16.msra.mxu0 0
      %1690 = vmatprep.subr.bf16.mxu0 0
      %1691 = vmatpush1.bf16.msra.mxu0 0
      %1692 = vmatprep.subr.bf16.mxu0 0
      %1693 = vmatpush1.bf16.msra.mxu0 0
      %1694 = vmatprep.subr.bf16.mxu0 0
      %1695 = vmatpush1.bf16.msra.mxu0 0
      %1696 = vmatprep.subr.bf16.mxu0 0
      %1697 = vmatpush1.bf16.msra.mxu0 0
      %1698 = vmatprep.subr.bf16.mxu0 0
      %1699 = vmatpush1.bf16.msra.mxu0 0
      %1700 = vmatprep.mubr.bf16.mxu0 0
      %1701 = vmatmul.mubr.bf16.gmra.mrb[0].mxu0 %v1663
      %v1702 = vpop.f32.mrb[0].mxu0
      %v1703 = vadd.f32 0.0, %v1702
      %v1704 = vpop.f32.mrb[0].mxu0
      %v1705 = vpop.f32.mrb[0].mxu0
      %v1706 = vpop.f32.mrb[0].mxu0
      %1707 = vdwg.mxu0
      %v1709 = vsel %vm1364, %v1609, 0
      %v1712 = vsel %vm1618, %v1613, 0
      %1714 = vmatprep.subr.bf16.mxu0 0
      %1715 = vmatpush1.bf16.msra.mxu0 %v1712
      %1716 = vmatprep.subr.bf16.mxu0 0
      %1717 = vmatpush1.bf16.msra.mxu0 0
      %1718 = vmatprep.subr.bf16.mxu0 0
      %1719 = vmatpush1.bf16.msra.mxu0 0
      %1720 = vmatprep.subr.bf16.mxu0 0
      %1721 = vmatpush1.bf16.msra.mxu0 0
      %1722 = vmatprep.subr.bf16.mxu0 0
      %1723 = vmatpush1.bf16.msra.mxu0 0
      %1724 = vmatprep.subr.bf16.mxu0 0
      %1725 = vmatpush1.bf16.msra.mxu0 0
      %1726 = vmatprep.subr.bf16.mxu0 0
      %1727 = vmatpush1.bf16.msra.mxu0 0
      %1728 = vmatprep.subr.bf16.mxu0 0
      %1729 = vmatpush1.bf16.msra.mxu0 0
      %1730 = vmatprep.subr.bf16.mxu0 0
      %1731 = vmatpush1.bf16.msra.mxu0 0
      %1732 = vmatprep.subr.bf16.mxu0 0
      %1733 = vmatpush1.bf16.msra.mxu0 0
      %1734 = vmatprep.subr.bf16.mxu0 0
      %1735 = vmatpush1.bf16.msra.mxu0 0
      %1736 = vmatprep.subr.bf16.mxu0 0
      %1737 = vmatpush1.bf16.msra.mxu0 0
      %1738 = vmatprep.subr.bf16.mxu0 0
      %1739 = vmatpush1.bf16.msra.mxu0 0
      %1740 = vmatprep.subr.bf16.mxu0 0
      %1741 = vmatpush1.bf16.msra.mxu0 0
      %1742 = vmatprep.subr.bf16.mxu0 0
      %1743 = vmatpush1.bf16.msra.mxu0 0
      %1744 = vmatprep.subr.bf16.mxu0 0
      %1745 = vmatpush1.bf16.msra.mxu0 0
      %1746 = vmatprep.mubr.bf16.mxu0 0
      %1747 = vmatmul.mubr.bf16.gmra.mrb[0].mxu0 %v1709
      %v1748 = vpop.f32.mrb[0].mxu0
      %v1749 = vadd.f32 0.0, %v1748
      %v1750 = vpop.f32.mrb[0].mxu0
      %v1751 = vpop.f32.mrb[0].mxu0
      %v1752 = vpop.f32.mrb[0].mxu0
      %1753 = vdwg.mxu0
      %v1755 = vsel %vm1364, %v1610, 0
      %v1758 = vsel %vm1618, %v1614, 0
      %1760 = vmatprep.subr.bf16.mxu0 0
      %1761 = vmatpush1.bf16.msra.mxu0 %v1758
      %1762 = vmatprep.subr.bf16.mxu0 0
      %1763 = vmatpush1.bf16.msra.mxu0 0
      %1764 = vmatprep.subr.bf16.mxu0 0
      %1765 = vmatpush1.bf16.msra.mxu0 0
      %1766 = vmatprep.subr.bf16.mxu0 0
      %1767 = vmatpush1.bf16.msra.mxu0 0
      %1768 = vmatprep.subr.bf16.mxu0 0
      %1769 = vmatpush1.bf16.msra.mxu0 0
      %1770 = vmatprep.subr.bf16.mxu0 0
      %1771 = vmatpush1.bf16.msra.mxu0 0
      %1772 = vmatprep.subr.bf16.mxu0 0
      %1773 = vmatpush1.bf16.msra.mxu0 0
      %1774 = vmatprep.subr.bf16.mxu0 0
      %1775 = vmatpush1.bf16.msra.mxu0 0
      %1776 = vmatprep.subr.bf16.mxu0 0
      %1777 = vmatpush1.bf16.msra.mxu0 0
      %1778 = vmatprep.subr.bf16.mxu0 0
      %1779 = vmatpush1.bf16.msra.mxu0 0
      %1780 = vmatprep.subr.bf16.mxu0 0
      %1781 = vmatpush1.bf16.msra.mxu0 0
      %1782 = vmatprep.subr.bf16.mxu0 0
      %1783 = vmatpush1.bf16.msra.mxu0 0
      %1784 = vmatprep.subr.bf16.mxu0 0
      %1785 = vmatpush1.bf16.msra.mxu0 0
      %1786 = vmatprep.subr.bf16.mxu0 0
      %1787 = vmatpush1.bf16.msra.mxu0 0
      %1788 = vmatprep.subr.bf16.mxu0 0
      %1789 = vmatpush1.bf16.msra.mxu0 0
      %1790 = vmatprep.subr.bf16.mxu0 0
      %1791 = vmatpush1.bf16.msra.mxu0 0
      %1792 = vmatprep.mubr.bf16.mxu0 0
      %1793 = vmatmul.mubr.bf16.gmra.mrb[0].mxu0 %v1755
      %v1794 = vpop.f32.mrb[0].mxu0
      %v1795 = vadd.f32 0.0, %v1794
      %v1796 = vpop.f32.mrb[0].mxu0
      %v1797 = vpop.f32.mrb[0].mxu0
      %v1798 = vpop.f32.mrb[0].mxu0
      %1799 = vdwg.mxu0
      %v1800 = vpack.c.bf16 %v1657, %v1657
      %v1801 = vpack.c.bf16 %v1703, %v1703
      %v1802 = vpack.c.bf16 %v1749, %v1749
      %v1803 = vpack.c.bf16 %v1795, %v1795
      %v1805 = vsel %vm1364, %v1800, 0
      %v1808 = vsel %vm1618, %v649, 0
      %1810 = vmatprep.subr.bf16.mxu0 0
      %1811 = vmatpush1.bf16.msra.mxu0 %v1808
      %1812 = vmatprep.subr.bf16.mxu0 0
      %1813 = vmatpush1.bf16.msra.mxu0 0
      %1814 = vmatprep.subr.bf16.mxu0 0
      %1815 = vmatpush1.bf16.msra.mxu0 0
      %1816 = vmatprep.subr.bf16.mxu0 0
      %1817 = vmatpush1.bf16.msra.mxu0 0
      %1818 = vmatprep.subr.bf16.mxu0 0
      %1819 = vmatpush1.bf16.msra.mxu0 0
      %1820 = vmatprep.subr.bf16.mxu0 0
      %1821 = vmatpush1.bf16.msra.mxu0 0
      %1822 = vmatprep.subr.bf16.mxu0 0
      %1823 = vmatpush1.bf16.msra.mxu0 0
      %1824 = vmatprep.subr.bf16.mxu0 0
      %1825 = vmatpush1.bf16.msra.mxu0 0
      %1826 = vmatprep.subr.bf16.mxu0 0
      %1827 = vmatpush1.bf16.msra.mxu0 0
      %1828 = vmatprep.subr.bf16.mxu0 0
      %1829 = vmatpush1.bf16.msra.mxu0 0
      %1830 = vmatprep.subr.bf16.mxu0 0
      %1831 = vmatpush1.bf16.msra.mxu0 0
      %1832 = vmatprep.subr.bf16.mxu0 0
      %1833 = vmatpush1.bf16.msra.mxu0 0
      %1834 = vmatprep.subr.bf16.mxu0 0
      %1835 = vmatpush1.bf16.msra.mxu0 0
      %1836 = vmatprep.subr.bf16.mxu0 0
      %1837 = vmatpush1.bf16.msra.mxu0 0
      %1838 = vmatprep.subr.bf16.mxu0 0
      %1839 = vmatpush1.bf16.msra.mxu0 0
      %1840 = vmatprep.subr.bf16.mxu0 0
      %1841 = vmatpush1.bf16.msra.mxu0 0
      %1842 = vmatprep.mubr.bf16.mxu0 0
      %1843 = vmatmul.mubr.bf16.gmra.mrb[0].mxu0 %v1805
      %v1844 = vpop.f32.mrb[0].mxu0
      %v1845 = vadd.f32 0.0, %v1844
      %v1846 = vpop.f32.mrb[0].mxu0
      %v1847 = vpop.f32.mrb[0].mxu0
      %v1848 = vpop.f32.mrb[0].mxu0
      %1849 = vdwg.mxu0
      %v1851 = vsel %vm1364, %v1801, 0
      %v1854 = vsel %vm1618, %v650, 0
      %1856 = vmatprep.subr.bf16.mxu0 0
      %1857 = vmatpush1.bf16.msra.mxu0 %v1854
      %1858 = vmatprep.subr.bf16.mxu0 0
      %1859 = vmatpush1.bf16.msra.mxu0 0
      %1860 = vmatprep.subr.bf16.mxu0 0
      %1861 = vmatpush1.bf16.msra.mxu0 0
      %1862 = vmatprep.subr.bf16.mxu0 0
      %1863 = vmatpush1.bf16.msra.mxu0 0
      %1864 = vmatprep.subr.bf16.mxu0 0
      %1865 = vmatpush1.bf16.msra.mxu0 0
      %1866 = vmatprep.subr.bf16.mxu0 0
      %1867 = vmatpush1.bf16.msra.mxu0 0
      %1868 = vmatprep.subr.bf16.mxu0 0
      %1869 = vmatpush1.bf16.msra.mxu0 0
      %1870 = vmatprep.subr.bf16.mxu0 0
      %1871 = vmatpush1.bf16.msra.mxu0 0
      %1872 = vmatprep.subr.bf16.mxu0 0
      %1873 = vmatpush1.bf16.msra.mxu0 0
      %1874 = vmatprep.subr.bf16.mxu0 0
      %1875 = vmatpush1.bf16.msra.mxu0 0
      %1876 = vmatprep.subr.bf16.mxu0 0
      %1877 = vmatpush1.bf16.msra.mxu0 0
      %1878 = vmatprep.subr.bf16.mxu0 0
      %1879 = vmatpush1.bf16.msra.mxu0 0
      %1880 = vmatprep.subr.bf16.mxu0 0
      %1881 = vmatpush1.bf16.msra.mxu0 0
      %1882 = vmatprep.subr.bf16.mxu0 0
      %1883 = vmatpush1.bf16.msra.mxu0 0
      %1884 = vmatprep.subr.bf16.mxu0 0
      %1885 = vmatpush1.bf16.msra.mxu0 0
      %1886 = vmatprep.subr.bf16.mxu0 0
      %1887 = vmatpush1.bf16.msra.mxu0 0
      %1888 = vmatprep.mubr.bf16.mxu0 0
      %1889 = vmatmul.mubr.bf16.gmra.mrb[0].mxu0 %v1851
      %v1890 = vpop.f32.mrb[0].mxu0
      %v1891 = vadd.f32 0.0, %v1890
      %v1892 = vpop.f32.mrb[0].mxu0
      %v1893 = vpop.f32.mrb[0].mxu0
      %v1894 = vpop.f32.mrb[0].mxu0
      %1895 = vdwg.mxu0
      %v1897 = vsel %vm1364, %v1802, 0
      %v1900 = vsel %vm1618, %v651, 0
      %1902 = vmatprep.subr.bf16.mxu0 0
      %1903 = vmatpush1.bf16.msra.mxu0 %v1900
      %1904 = vmatprep.subr.bf16.mxu0 0
      %1905 = vmatpush1.bf16.msra.mxu0 0
      %1906 = vmatprep.subr.bf16.mxu0 0
      %1907 = vmatpush1.bf16.msra.mxu0 0
      %1908 = vmatprep.subr.bf16.mxu0 0
      %1909 = vmatpush1.bf16.msra.mxu0 0
      %1910 = vmatprep.subr.bf16.mxu0 0
      %1911 = vmatpush1.bf16.msra.mxu0 0
      %1912 = vmatprep.subr.bf16.mxu0 0
      %1913 = vmatpush1.bf16.msra.mxu0 0
      %1914 = vmatprep.subr.bf16.mxu0 0
      %1915 = vmatpush1.bf16.msra.mxu0 0
      %1916 = vmatprep.subr.bf16.mxu0 0
      %1917 = vmatpush1.bf16.msra.mxu0 0
      %1918 = vmatprep.subr.bf16.mxu0 0
      %1919 = vmatpush1.bf16.msra.mxu0 0
      %1920 = vmatprep.subr.bf16.mxu0 0
      %1921 = vmatpush1.bf16.msra.mxu0 0
      %1922 = vmatprep.subr.bf16.mxu0 0
      %1923 = vmatpush1.bf16.msra.mxu0 0
      %1924 = vmatprep.subr.bf16.mxu0 0
      %1925 = vmatpush1.bf16.msra.mxu0 0
      %1926 = vmatprep.subr.bf16.mxu0 0
      %1927 = vmatpush1.bf16.msra.mxu0 0
      %1928 = vmatprep.subr.bf16.mxu0 0
      %1929 = vmatpush1.bf16.msra.mxu0 0
      %1930 = vmatprep.subr.bf16.mxu0 0
      %1931 = vmatpush1.bf16.msra.mxu0 0
      %1932 = vmatprep.subr.bf16.mxu0 0
      %1933 = vmatpush1.bf16.msra.mxu0 0
      %1934 = vmatprep.mubr.bf16.mxu0 0
      %1935 = vmatmul.mubr.bf16.gmra.mrb[0].mxu0 %v1897
      %v1936 = vpop.f32.mrb[0].mxu0
      %v1937 = vadd.f32 0.0, %v1936
      %v1938 = vpop.f32.mrb[0].mxu0
      %v1939 = vpop.f32.mrb[0].mxu0
      %v1940 = vpop.f32.mrb[0].mxu0
      %1941 = vdwg.mxu0
      %v1943 = vsel %vm1364, %v1803, 0
      %v1946 = vsel %vm1618, %v652, 0
      %1948 = vmatprep.subr.bf16.mxu0 0
      %1949 = vmatpush1.bf16.msra.mxu0 %v1946
      %1950 = vmatprep.subr.bf16.mxu0 0
      %1951 = vmatpush1.bf16.msra.mxu0 0
      %1952 = vmatprep.subr.bf16.mxu0 0
      %1953 = vmatpush1.bf16.msra.mxu0 0
      %1954 = vmatprep.subr.bf16.mxu0 0
      %1955 = vmatpush1.bf16.msra.mxu0 0
      %1956 = vmatprep.subr.bf16.mxu0 0
      %1957 = vmatpush1.bf16.msra.mxu0 0
      %1958 = vmatprep.subr.bf16.mxu0 0
      %1959 = vmatpush1.bf16.msra.mxu0 0
      %1960 = vmatprep.subr.bf16.mxu0 0
      %1961 = vmatpush1.bf16.msra.mxu0 0
      %1962 = vmatprep.subr.bf16.mxu0 0
      %1963 = vmatpush1.bf16.msra.mxu0 0
      %1964 = vmatprep.subr.bf16.mxu0 0
      %1965 = vmatpush1.bf16.msra.mxu0 0
      %1966 = vmatprep.subr.bf16.mxu0 0
      %1967 = vmatpush1.bf16.msra.mxu0 0
      %1968 = vmatprep.subr.bf16.mxu0 0
      %1969 = vmatpush1.bf16.msra.mxu0 0
      %1970 = vmatprep.subr.bf16.mxu0 0
      %1971 = vmatpush1.bf16.msra.mxu0 0
      %1972 = vmatprep.subr.bf16.mxu0 0
      %1973 = vmatpush1.bf16.msra.mxu0 0
      %1974 = vmatprep.subr.bf16.mxu0 0
      %1975 = vmatpush1.bf16.msra.mxu0 0
      %1976 = vmatprep.subr.bf16.mxu0 0
      %1977 = vmatpush1.bf16.msra.mxu0 0
      %1978 = vmatprep.subr.bf16.mxu0 0
      %1979 = vmatpush1.bf16.msra.mxu0 0
      %1980 = vmatprep.mubr.bf16.mxu0 0
      %1981 = vmatmul.mubr.bf16.gmra.mrb[0].mxu0 %v1943
      %v1982 = vpop.f32.mrb[0].mxu0
      %v1983 = vadd.f32 0.0, %v1982
      %v1984 = vpop.f32.mrb[0].mxu0
      %v1985 = vpop.f32.mrb[0].mxu0
      %v1986 = vpop.f32.mrb[0].mxu0
      %1987 = vdwg.mxu0
      %v1988 = vsel %vm692, %v1845, 0.0
      %v1989 = vsel %vm692, %v1891, 0.0
      %v1990 = vadd.f32 %v1988, %v1989
      %v1991 = vsel %vm692, %v1937, 0.0
      %v1992 = vadd.f32 %v1990, %v1991
      %v1993 = vsel %vm692, %v1983, 0.0
      %v1994 = vadd.f32 %v1992, %v1993
      %v1996 = vlaneseq
      %v1997 = vshrl.u32 %v1996, 7
      %v1998 = vsub.s32 0, %v1997
      %v1999 = vrot.slane %v653, %v1998
      %v2001 = vadd.f32 %v1994, %v1999
      %v2002 = vadd.f32 %v2001, %v587
      %v2003 = vsel %vm692, %v2002, 0.0
      %2004 = vadd.xlane.f32.xlu0 %v2003
      %v2005 = vpop.xlane.xlu0 %2004
      %v2006 = vrcp.pop 32.0
      %v2007 = vmul.f32 %v2005, %v2006
      %v2008 = vsub.f32 %v2002, %v2007
      %v2009 = vmul.f32 %v2008, %v2008
      %v2010 = vsel %vm692, %v2009, 0.0
      %2011 = vadd.xlane.f32.xlu0 %v2010
      %v2012 = vpop.xlane.xlu0 %2011
      %v2013 = vmul.f32 %v2012, %v2006
      %v2014 = vadd.f32 %v2013, 1e-05
      %v2015 = vrsqrt.pop %v2014
      %v2016 = vmul.f32 %v2008, %v2015
      %v2018 = vlaneseq
      %v2019 = vshrl.u32 %v2018, 7
      %v2020 = vsub.s32 0, %v2019
      %v2021 = vrot.slane %v654, %v2020
      %v2023 = vmul.f32 %v2016, %v2021
      %v2025 = vlaneseq
      %v2026 = vshrl.u32 %v2025, 7
      %v2027 = vsub.s32 0, %v2026
      %v2028 = vrot.slane %v655, %v2027
      %v2030 = vadd.f32 %v2023, %v2028
      %v2031 = vld [vmem:[%s12] sm:$0xf]
      %v2032 = vld [vmem:[%s12 + $0x4] sm:$0xf]
      %v2033 = vld [vmem:[%s12 + $0x8] sm:$0xf]
      %v2034 = vld [vmem:[%s12 + $0xc] sm:$0xf]
      %v2035 = vld [vmem:[%s13] sm:$0x1]
      %v2036 = vld [vmem:[%s14] sm:$0xf]
      %v2037 = vld [vmem:[%s14 + $0x4] sm:$0xf]
      %v2038 = vld [vmem:[%s14 + $0x8] sm:$0xf]
      %v2039 = vld [vmem:[%s14 + $0xc] sm:$0xf]
      %v2040 = vld [vmem:[%s14 + $0x10] sm:$0xf]
      %v2041 = vld [vmem:[%s14 + $0x14] sm:$0xf]
      %v2042 = vld [vmem:[%s14 + $0x18] sm:$0xf]
      %v2043 = vld [vmem:[%s14 + $0x1c] sm:$0xf]
      %v2044 = vld [vmem:[%s15] sm:$0x1]
      %v2045 = vld [vmem:[%s16] sm:$0x1]
      %v2046 = vld [vmem:[%s17] sm:$0x1]
      %v2047 = vpack.c.bf16 %v2030, %v2030
      %v2049 = vlaneseq
      %v2050 = vshrl.u32 %v2049, 7
      %v2051 = vsub.s32 0, %v2050
      %v2052 = vrot.slane %v2035, %v2051
      %v2058 = vunpack.c.l.b16 %v2031
      %v2059 = vunpack.c.l.b16 %v2032
      %v2060 = vunpack.c.l.b16 %v2033
      %v2061 = vunpack.c.l.b16 %v2034
      %v2062 = vpack.c.b16 %v2059, %v2058
      %v2063 = vpack.c.b16 %v2061, %v2060
      %v2067 = vsel %vm692, %v2047, 0
      %2069 = vmatprep.subr.bf16.mxu0 0
      %2070 = vmatpush1.bf16.msra.mxu0 %v2062
      %2071 = vmatprep.subr.bf16.mxu0 0
      %2072 = vmatpush1.bf16.msra.mxu0 %v2063
      %2073 = vmatprep.subr.bf16.mxu0 0
      %2074 = vmatpush1.bf16.msra.mxu0 0
      %2075 = vmatprep.subr.bf16.mxu0 0
      %2076 = vmatpush1.bf16.msra.mxu0 0
      %2077 = vmatprep.subr.bf16.mxu0 0
      %2078 = vmatpush1.bf16.msra.mxu0 0
      %2079 = vmatprep.subr.bf16.mxu0 0
      %2080 = vmatpush1.bf16.msra.mxu0 0
      %2081 = vmatprep.subr.bf16.mxu0 0
      %2082 = vmatpush1.bf16.msra.mxu0 0
      %2083 = vmatprep.subr.bf16.mxu0 0
      %2084 = vmatpush1.bf16.msra.mxu0 0
      %2085 = vmatprep.subr.bf16.mxu0 0
      %2086 = vmatpush1.bf16.msra.mxu0 0
      %2087 = vmatprep.subr.bf16.mxu0 0
      %2088 = vmatpush1.bf16.msra.mxu0 0
      %2089 = vmatprep.subr.bf16.mxu0 0
      %2090 = vmatpush1.bf16.msra.mxu0 0
      %2091 = vmatprep.subr.bf16.mxu0 0
      %2092 = vmatpush1.bf16.msra.mxu0 0
      %2093 = vmatprep.subr.bf16.mxu0 0
      %2094 = vmatpush1.bf16.msra.mxu0 0
      %2095 = vmatprep.subr.bf16.mxu0 0
      %2096 = vmatpush1.bf16.msra.mxu0 0
      %2097 = vmatprep.subr.bf16.mxu0 0
      %2098 = vmatpush1.bf16.msra.mxu0 0
      %2099 = vmatprep.subr.bf16.mxu0 0
      %2100 = vmatpush1.bf16.msra.mxu0 0
      %2101 = vmatprep.mubr.bf16.mxu0 0
      %2102 = vmatmul.mubr.bf16.gmra.mrb[0].mxu0 %v2067
      %v2103 = vpop.f32.mrb[0].mxu0
      %v2104 = vadd.f32 %v2052, %v2103
      %v2105 = vpop.f32.mrb[0].mxu0
      %v2106 = vpop.f32.mrb[0].mxu0
      %v2107 = vpop.f32.mrb[0].mxu0
      %2108 = vdwg.mxu0
      %v2109 = vmax.f32 %v2104, 0.0
      %v2110 = vpack.c.bf16 %v2109, %v2109
      %v2112 = vlaneseq
      %v2113 = vshrl.u32 %v2112, 7
      %v2114 = vsub.s32 0, %v2113
      %v2115 = vrot.slane %v2044, %v2114
      %v2125 = vunpack.c.l.b16 %v2036
      %v2126 = vunpack.c.l.b16 %v2037
      %v2127 = vunpack.c.l.b16 %v2038
      %v2128 = vunpack.c.l.b16 %v2039
      %v2129 = vunpack.c.l.b16 %v2040
      %v2130 = vunpack.c.l.b16 %v2041
      %v2131 = vunpack.c.l.b16 %v2042
      %v2132 = vunpack.c.l.b16 %v2043
      %v2133 = vpack.c.b16 %v2126, %v2125
      %v2134 = vpack.c.b16 %v2128, %v2127
      %v2135 = vpack.c.b16 %v2130, %v2129
      %v2136 = vpack.c.b16 %v2132, %v2131
      %vm2141 = vcmask 523264
      %v2143 = vsel %vm2141, %v2110, 0
      %2145 = vmatprep.subr.bf16.mxu0 0
      %2146 = vmatpush1.bf16.msra.mxu0 %v2133
      %2147 = vmatprep.subr.bf16.mxu0 0
      %2148 = vmatpush1.bf16.msra.mxu0 %v2134
      %2149 = vmatprep.subr.bf16.mxu0 0
      %2150 = vmatpush1.bf16.msra.mxu0 %v2135
      %2151 = vmatprep.subr.bf16.mxu0 0
      %2152 = vmatpush1.bf16.msra.mxu0 %v2136
      %2153 = vmatprep.subr.bf16.mxu0 0
      %2154 = vmatpush1.bf16.msra.mxu0 0
      %2155 = vmatprep.subr.bf16.mxu0 0
      %2156 = vmatpush1.bf16.msra.mxu0 0
      %2157 = vmatprep.subr.bf16.mxu0 0
      %2158 = vmatpush1.bf16.msra.mxu0 0
      %2159 = vmatprep.subr.bf16.mxu0 0
      %2160 = vmatpush1.bf16.msra.mxu0 0
      %2161 = vmatprep.subr.bf16.mxu0 0
      %2162 = vmatpush1.bf16.msra.mxu0 0
      %2163 = vmatprep.subr.bf16.mxu0 0
      %2164 = vmatpush1.bf16.msra.mxu0 0
      %2165 = vmatprep.subr.bf16.mxu0 0
      %2166 = vmatpush1.bf16.msra.mxu0 0
      %2167 = vmatprep.subr.bf16.mxu0 0
      %2168 = vmatpush1.bf16.msra.mxu0 0
      %2169 = vmatprep.subr.bf16.mxu0 0
      %2170 = vmatpush1.bf16.msra.mxu0 0
      %2171 = vmatprep.subr.bf16.mxu0 0
      %2172 = vmatpush1.bf16.msra.mxu0 0
      %2173 = vmatprep.subr.bf16.mxu0 0
      %2174 = vmatpush1.bf16.msra.mxu0 0
      %2175 = vmatprep.subr.bf16.mxu0 0
      %2176 = vmatpush1.bf16.msra.mxu0 0
      %2177 = vmatprep.mubr.bf16.mxu0 0
      %2178 = vmatmul.mubr.bf16.gmra.mrb[0].mxu0 %v2143
      %v2179 = vpop.f32.mrb[0].mxu0
      %v2180 = vadd.f32 %v2115, %v2179
      %v2181 = vpop.f32.mrb[0].mxu0
      %v2182 = vpop.f32.mrb[0].mxu0
      %v2183 = vpop.f32.mrb[0].mxu0
      %2184 = vdwg.mxu0
      %v2185 = vadd.f32 %v2180, %v2030
      %v2186 = vsel %vm692, %v2185, 0.0
      %2187 = vadd.xlane.f32.xlu0 %v2186
      %v2188 = vpop.xlane.xlu0 %2187
      %v2189 = vmul.f32 %v2188, %v2006
      %v2190 = vsub.f32 %v2185, %v2189
      %v2191 = vmul.f32 %v2190, %v2190
      %v2192 = vsel %vm692, %v2191, 0.0
      %2193 = vadd.xlane.f32.xlu0 %v2192
      %v2194 = vpop.xlane.xlu0 %2193
      %v2195 = vmul.f32 %v2194, %v2006
      %v2196 = vadd.f32 %v2195, 1e-05
      %v2197 = vrsqrt.pop %v2196
      %v2198 = vmul.f32 %v2190, %v2197
      %v2200 = vlaneseq
      %v2201 = vshrl.u32 %v2200, 7
      %v2202 = vsub.s32 0, %v2201
      %v2203 = vrot.slane %v2045, %v2202
      %v2205 = vmul.f32 %v2198, %v2203
      %v2207 = vlaneseq
      %v2208 = vshrl.u32 %v2207, 7
      %v2209 = vsub.s32 0, %v2208
      %v2210 = vrot.slane %v2046, %v2209
      %v2212 = vadd.f32 %v2205, %v2210
      %v2213 = vpack.c.bf16 %v2212, %v2212
      %vm2214 = vcmask 257024
      %2215 = vst.msk [vmem:[%s584] sm:$0xf] %vm2214, %v2213
      %p2216 = scmp.lt.s32.totalorder %s29, 1
      %s2217 = scalar_select %p2216, %s29, 1
      %s2218 = smul.addr %s2217, 4
      %s2219 = scalar_lea.vmem %s18, %s2218
      // Predicated region
      $region93: #{transformer_chatbot_forward.7} parent=91 // pred_check
        %p2220 = pneg %p435
      $region94: #{transformer_chatbot_forward.7} parent=91 // pred_check_branch
        %2222 = sbr.rel (%p2220) target = $region96
      $region95: #{transformer_chatbot_forward.7} parent=91 // pred_region
        _
      $region96: #{transformer_chatbot_forward.7} parent=91 // pred_fallthru
        _
    $region92: #{transformer_chatbot_forward.7} parent=5 // pred_fallthru
      _
    %p2223 = scmp.le.s32.totalorder 2, %s24
    // Predicated region
    $region97: #{transformer_chatbot_forward.7} parent=5 // pred_check
      %p2224 = pneg %p2223
    $region98: #{transformer_chatbot_forward.7} parent=5 // pred_check_branch
      %2226 = sbr.rel (%p2224) target = $region100
    $region99: #{transformer_chatbot_forward.7} parent=5 // pred_region
      %s2227 = ssub.s32 %s24, 2
      // Predicated region
      $region101: #{transformer_chatbot_forward.7} parent=99 // pred_check
        %p2228 = pneg %p441
      $region102: #{transformer_chatbot_forward.7} parent=99 // pred_check_branch
        %2230 = sbr.rel (%p2228) target = $region104
      $region103: #{transformer_chatbot_forward.7} parent=99 // pred_region
        %p2231 = scmp.lt.s32.totalorder %s30, 1
        %s2232 = scalar_select %p2231, %s30, 1
        %s2233 = smul.addr %s2232, 4
        %s2234 = scalar_lea.vmem %s18, %s2233
      $region104: #{transformer_chatbot_forward.7} parent=99 // pred_fallthru
        _
    $region100: #{transformer_chatbot_forward.7} parent=5 // pred_fallthru
      _
  $region6: #{transformer_chatbot_forward.7} parent=0 // loop_footer
    %s28 = sadd.s32 1, %s24
  $region7: #{transformer_chatbot_forward.7} parent=0 // loop_footer_branch
    %23 = sbr.rel target = $region3
  $region8: #{transformer_chatbot_forward.7} parent=0 // loop_exit
    _

// kernel: transformer_chatbot_forward.10
$region0: #{transformer_chatbot_forward.10}
  #allocation0 [shape = 'u32[]', space=smem, size = 0x4, offset = 0x4, fixed_abs, tag = 'smem constant byte address 0x4 - core index']
  #allocation1 [shape = 'u32[144,128]{1,0:T(1,128)}', space=vmem, size = 0x12000, scoped, tag = 'internal scratch']
  %s0 = inlined_call_operand.smem [shape: u32[30], index: -1, kind: input, shape index: {}]
  %s1 = sld [smem:[%s0]]
  %s2 = scalar_lea.smem %s0, 1
  %s3 = sld [smem:[%s2]]
  %s4 = scalar_lea.smem %s0, 2
  %s5 = sld [smem:[%s4]]
  %s6 = scalar_lea.smem %s0, 3
  %s7 = sld [smem:[%s6]]
  %s8 = scalar_lea.smem %s0, 4
  %s9 = sld [smem:[%s8]]
  %s10 = scalar_lea.smem %s0, 5
  %s11 = sld [smem:[%s10]]
  %s12 = scalar_lea.smem %s0, 6
  %s13 = sld [smem:[%s12]]
  %s14 = scalar_lea.smem %s0, 7
  %s15 = sld [smem:[%s14]]
  %s16 = scalar_lea.smem %s0, 8
  %s17 = sld [smem:[%s16]]
  %s18 = scalar_lea.smem %s0, 9
  %s19 = sld [smem:[%s18]]
  %s20 = scalar_lea.smem %s0, 10
  %s21 = sld [smem:[%s20]]
  %s22 = scalar_lea.smem %s0, 11
  %s23 = sld [smem:[%s22]]
  %s24 = scalar_lea.smem %s0, 12
  %s25 = sld [smem:[%s24]]
  %s26 = scalar_lea.smem %s0, 13
  %s27 = sld [smem:[%s26]]
  %s28 = scalar_lea.smem %s0, 14
  %s29 = sld [smem:[%s28]]
  %s30 = scalar_lea.smem %s0, 15
  %s31 = sld [smem:[%s30]]
  %s32 = scalar_lea.smem %s0, 16
  %s33 = sld [smem:[%s32]]
  %s34 = scalar_lea.smem %s0, 17
  %s35 = sld [smem:[%s34]]
  %s36 = scalar_lea.smem %s0, 18
  %s37 = sld [smem:[%s36]]
  %s38 = scalar_lea.smem %s0, 19
  %s39 = sld [smem:[%s38]]
  %s40 = scalar_lea.smem %s0, 20
  %s41 = sld [smem:[%s40]]
  %s42 = scalar_lea.smem %s0, 21
  %s43 = sld [smem:[%s42]]
  %s44 = scalar_lea.smem %s0, 22
  %s45 = sld [smem:[%s44]]
  %s46 = scalar_lea.smem %s0, 23
  %s47 = sld [smem:[%s46]]
  %s48 = scalar_lea.smem %s0, 24
  %s49 = sld [smem:[%s48]]
  %s50 = scalar_lea.smem %s0, 25
  %s51 = sld [smem:[%s50]]
  %s52 = scalar_lea.smem %s0, 26
  %s53 = sld [smem:[%s52]]
  %s54 = scalar_lea.smem %s0, 27
  %s55 = sld [smem:[%s54]]
  %s56 = scalar_lea.smem %s0, 28
  %s57 = sld [smem:[%s56]]
  %s58 = scalar_lea.smem %s0, 29
  %s59 = sld [smem:[%s58]]
  %s60 = sld [smem:[#allocation0]]
  $region149: #{transformer_chatbot_forward.10} parent=0
    _
  %s62 = ssub.s32 1, %s60
  %s63 = scalar_select 0, %s62, %s60
  loop: start=0, step=1, limit=4
  $region2: #{transformer_chatbot_forward.10} parent=0 // loop_pre_header
    _
  $region3: #{transformer_chatbot_forward.10} parent=0 // loop_header
    %s65 = sphi 0, %s69
    %p66 = scmp.ge.s32.totalorder %s65, 4
    %s75 = sphi 0, %s77
    %s78 = sphi 0, %s75
    %s79 = sphi 0, %s78
    %s95 = sphi 0, %s79
    %s101 = sphi 0, %s103
    %s104 = sphi 0, %s101
    %s105 = sphi 0, %s104
    %s121 = sphi 0, %s105
    %s127 = sphi 0, %s129
    %s130 = sphi 0, %s127
    %s131 = sphi 0, %s130
    %s147 = sphi 0, %s131
    %s151 = sphi 0, %s151
    %s153 = sphi 0, %s151
    %s154 = sphi 0, %s153
    %s168 = sphi 0, %s154
    %s172 = sphi 0, %s172
    %s174 = sphi 0, %s172
    %s175 = sphi 0, %s174
    %s189 = sphi 0, %s175
    %s193 = sphi 0, %s193
    %s195 = sphi 0, %s193
    %s196 = sphi 0, %s195
    %s210 = sphi 0, %s196
    %s214 = sphi 0, %s214
    %s216 = sphi 0, %s214
    %s217 = sphi 0, %s216
    %s231 = sphi 0, %s217
    %s235 = sphi 0, %s235
    %s237 = sphi 0, %s235
    %s238 = sphi 0, %s237
    %s252 = sphi 0, %s238
    %s256 = sphi 0, %s256
    %s258 = sphi 0, %s256
    %s259 = sphi 0, %s258
    %s273 = sphi 0, %s259
    %s277 = sphi 0, %s277
    %s279 = sphi 0, %s277
    %s280 = sphi 0, %s279
    %s294 = sphi 0, %s280
    %s298 = sphi 0, %s298
    %s300 = sphi 0, %s298
    %s301 = sphi 0, %s300
    %s315 = sphi 0, %s301
    %s319 = sphi 0, %s319
    %s321 = sphi 0, %s319
    %s322 = sphi 0, %s321
    %s336 = sphi 0, %s322
    %s340 = sphi 0, %s340
    %s342 = sphi 0, %s340
    %s343 = sphi 0, %s342
    %s357 = sphi 0, %s343
    %s361 = sphi 0, %s361
    %s363 = sphi 0, %s361
    %s364 = sphi 0, %s363
    %s378 = sphi 0, %s364
    %s382 = sphi 0, %s382
    %s384 = sphi 0, %s382
    %s385 = sphi 0, %s384
    %s399 = sphi 0, %s385
    %s403 = sphi 0, %s403
    %s405 = sphi 0, %s403
    %s406 = sphi 0, %s405
    %s420 = sphi 0, %s406
    %s424 = sphi 0, %s424
    %s426 = sphi 0, %s424
    %s427 = sphi 0, %s426
    %s441 = sphi 0, %s427
    %s445 = sphi 0, %s445
    %s447 = sphi 0, %s445
    %s448 = sphi 0, %s447
    %s462 = sphi 0, %s448
    %s466 = sphi 0, %s466
    %s468 = sphi 0, %s466
    %s469 = sphi 0, %s468
    %s483 = sphi 0, %s469
    %s487 = sphi 0, %s487
    %s489 = sphi 0, %s487
    %s490 = sphi 0, %s489
    %s504 = sphi 0, %s490
    %s508 = sphi 0, %s508
    %s510 = sphi 0, %s508
    %s511 = sphi 0, %s510
    %s525 = sphi 0, %s511
    %s529 = sphi 0, %s529
    %s531 = sphi 0, %s529
    %s532 = sphi 0, %s531
    %s546 = sphi 0, %s532
    %s550 = sphi 0, %s550
    %s552 = sphi 0, %s550
    %s553 = sphi 0, %s552
    %s567 = sphi 0, %s553
    %s571 = sphi 0, %s571
    %s573 = sphi 0, %s571
    %s574 = sphi 0, %s573
    %s588 = sphi 0, %s574
    %s592 = sphi 0, %s592
    %s594 = sphi 0, %s592
    %s595 = sphi 0, %s594
    %s609 = sphi 0, %s595
    %s613 = sphi 0, %s613
    %s615 = sphi 0, %s613
    %s616 = sphi 0, %s615
    %s630 = sphi 0, %s616
    %s634 = sphi 0, %s634
    %s636 = sphi 0, %s634
    %s637 = sphi 0, %s636
    %s651 = sphi 0, %s637
    %s655 = sphi 0, %s655
    %s657 = sphi 0, %s655
    %s658 = sphi 0, %s657
    %s672 = sphi 0, %s658
    %s676 = sphi 0, %s676
    %s678 = sphi 0, %s676
    %s679 = sphi 0, %s678
    %s693 = sphi 0, %s679
    %s699 = sphi 0, %s701
    %s702 = sphi 0, %s699
    %s703 = sphi 0, %s702
    %s719 = sphi 0, %s703
  $region4: #{transformer_chatbot_forward.10} parent=0 // loop_header_branch
    %68 = sbr.rel (%p66) target = $region8
  $region5: #{transformer_chatbot_forward.10} parent=0 // loop_body
    %s70 = ssub.s32 %s65, 1
    %s71 = ssub.s32 %s65, 2
    %s72 = sadd.s32 %s65, 1
    %s73 = ssub.s32 %s65, %s72
    %p74 = scmp.eq.s32.totalorder %s73, 0
    %s76 = sadd.s32 %s75, 1
    %s77 = scalar_select %p74, %s75, %s76
    %p80 = pneg %p74
    %p81 = scmp.eq.s32.totalorder %s65, 1
    %p82 = por %p80, %p81
    %p83 = scmp.ne.s32.totalorder %s75, %s78
    %p84 = scmp.eq.s32.totalorder %s65, 0
    %p85 = por %p83, %p84
    %p86 = scmp.ne.s32.totalorder %s75, %s78
    %p87 = scmp.eq.s32.totalorder %s70, 1
    %p88 = por %p86, %p87
    %p89 = scmp.ne.s32.totalorder %s78, %s79
    %p90 = scmp.eq.s32.totalorder %s70, 0
    %p91 = por %p89, %p90
    %p92 = scmp.ne.s32.totalorder %s78, %s79
    %p93 = scmp.eq.s32.totalorder %s71, 1
    %p94 = por %p92, %p93
    %p96 = scmp.ne.s32.totalorder %s79, %s95
    %p97 = scmp.eq.s32.totalorder %s71, 0
    %p98 = por %p96, %p97
    %s99 = ssub.s32 %s65, %s72
    %p100 = scmp.eq.s32.totalorder %s99, 0
    %s102 = sadd.s32 %s101, 1
    %s103 = scalar_select %p100, %s101, %s102
    %p106 = pneg %p100
    %p107 = scmp.eq.s32.totalorder %s65, 1
    %p108 = por %p106, %p107
    %p109 = scmp.ne.s32.totalorder %s101, %s104
    %p110 = scmp.eq.s32.totalorder %s65, 0
    %p111 = por %p109, %p110
    %p112 = scmp.ne.s32.totalorder %s101, %s104
    %p113 = scmp.eq.s32.totalorder %s70, 1
    %p114 = por %p112, %p113
    %p115 = scmp.ne.s32.totalorder %s104, %s105
    %p116 = scmp.eq.s32.totalorder %s70, 0
    %p117 = por %p115, %p116
    %p118 = scmp.ne.s32.totalorder %s104, %s105
    %p119 = scmp.eq.s32.totalorder %s71, 1
    %p120 = por %p118, %p119
    %p122 = scmp.ne.s32.totalorder %s105, %s121
    %p123 = scmp.eq.s32.totalorder %s71, 0
    %p124 = por %p122, %p123
    %s125 = ssub.s32 %s65, %s72
    %p126 = scmp.eq.s32.totalorder %s125, 0
    %s128 = sadd.s32 %s127, 1
    %s129 = scalar_select %p126, %s127, %s128
    %p132 = pneg %p126
    %p133 = scmp.eq.s32.totalorder %s65, 1
    %p134 = por %p132, %p133
    %p135 = scmp.ne.s32.totalorder %s127, %s130
    %p136 = scmp.eq.s32.totalorder %s65, 0
    %p137 = por %p135, %p136
    %p138 = scmp.ne.s32.totalorder %s127, %s130
    %p139 = scmp.eq.s32.totalorder %s70, 1
    %p140 = por %p138, %p139
    %p141 = scmp.ne.s32.totalorder %s130, %s131
    %p142 = scmp.eq.s32.totalorder %s70, 0
    %p143 = por %p141, %p142
    %p144 = scmp.ne.s32.totalorder %s130, %s131
    %p145 = scmp.eq.s32.totalorder %s71, 1
    %p146 = por %p144, %p145
    %p148 = scmp.ne.s32.totalorder %s131, %s147
    %p149 = scmp.eq.s32.totalorder %s71, 0
    %p150 = por %p148, %p149
    %s152 = sadd.s32 %s151, 1
    %p155 = scmp.eq.s32.totalorder %s65, 1
    %p156 = scmp.ne.s32.totalorder %s151, %s153
    %p157 = scmp.eq.s32.totalorder %s65, 0
    %p158 = por %p156, %p157
    %p159 = scmp.ne.s32.totalorder %s151, %s153
    %p160 = scmp.eq.s32.totalorder %s70, 1
    %p161 = por %p159, %p160
    %p162 = scmp.ne.s32.totalorder %s153, %s154
    %p163 = scmp.eq.s32.totalorder %s70, 0
    %p164 = por %p162, %p163
    %p165 = scmp.ne.s32.totalorder %s153, %s154
    %p166 = scmp.eq.s32.totalorder %s71, 1
    %p167 = por %p165, %p166
    %p169 = scmp.ne.s32.totalorder %s154, %s168
    %p170 = scmp.eq.s32.totalorder %s71, 0
    %p171 = por %p169, %p170
    %s173 = sadd.s32 %s172, 1
    %p176 = scmp.eq.s32.totalorder %s65, 1
    %p177 = scmp.ne.s32.totalorder %s172, %s174
    %p178 = scmp.eq.s32.totalorder %s65, 0
    %p179 = por %p177, %p178
    %p180 = scmp.ne.s32.totalorder %s172, %s174
    %p181 = scmp.eq.s32.totalorder %s70, 1
    %p182 = por %p180, %p181
    %p183 = scmp.ne.s32.totalorder %s174, %s175
    %p184 = scmp.eq.s32.totalorder %s70, 0
    %p185 = por %p183, %p184
    %p186 = scmp.ne.s32.totalorder %s174, %s175
    %p187 = scmp.eq.s32.totalorder %s71, 1
    %p188 = por %p186, %p187
    %p190 = scmp.ne.s32.totalorder %s175, %s189
    %p191 = scmp.eq.s32.totalorder %s71, 0
    %p192 = por %p190, %p191
    %s194 = sadd.s32 %s193, 1
    %p197 = scmp.eq.s32.totalorder %s65, 1
    %p198 = scmp.ne.s32.totalorder %s193, %s195
    %p199 = scmp.eq.s32.totalorder %s65, 0
    %p200 = por %p198, %p199
    %p201 = scmp.ne.s32.totalorder %s193, %s195
    %p202 = scmp.eq.s32.totalorder %s70, 1
    %p203 = por %p201, %p202
    %p204 = scmp.ne.s32.totalorder %s195, %s196
    %p205 = scmp.eq.s32.totalorder %s70, 0
    %p206 = por %p204, %p205
    %p207 = scmp.ne.s32.totalorder %s195, %s196
    %p208 = scmp.eq.s32.totalorder %s71, 1
    %p209 = por %p207, %p208
    %p211 = scmp.ne.s32.totalorder %s196, %s210
    %p212 = scmp.eq.s32.totalorder %s71, 0
    %p213 = por %p211, %p212
    %s215 = sadd.s32 %s214, 1
    %p218 = scmp.eq.s32.totalorder %s65, 1
    %p219 = scmp.ne.s32.totalorder %s214, %s216
    %p220 = scmp.eq.s32.totalorder %s65, 0
    %p221 = por %p219, %p220
    %p222 = scmp.ne.s32.totalorder %s214, %s216
    %p223 = scmp.eq.s32.totalorder %s70, 1
    %p224 = por %p222, %p223
    %p225 = scmp.ne.s32.totalorder %s216, %s217
    %p226 = scmp.eq.s32.totalorder %s70, 0
    %p227 = por %p225, %p226
    %p228 = scmp.ne.s32.totalorder %s216, %s217
    %p229 = scmp.eq.s32.totalorder %s71, 1
    %p230 = por %p228, %p229
    %p232 = scmp.ne.s32.totalorder %s217, %s231
    %p233 = scmp.eq.s32.totalorder %s71, 0
    %p234 = por %p232, %p233
    %s236 = sadd.s32 %s235, 1
    %p239 = scmp.eq.s32.totalorder %s65, 1
    %p240 = scmp.ne.s32.totalorder %s235, %s237
    %p241 = scmp.eq.s32.totalorder %s65, 0
    %p242 = por %p240, %p241
    %p243 = scmp.ne.s32.totalorder %s235, %s237
    %p244 = scmp.eq.s32.totalorder %s70, 1
    %p245 = por %p243, %p244
    %p246 = scmp.ne.s32.totalorder %s237, %s238
    %p247 = scmp.eq.s32.totalorder %s70, 0
    %p248 = por %p246, %p247
    %p249 = scmp.ne.s32.totalorder %s237, %s238
    %p250 = scmp.eq.s32.totalorder %s71, 1
    %p251 = por %p249, %p250
    %p253 = scmp.ne.s32.totalorder %s238, %s252
    %p254 = scmp.eq.s32.totalorder %s71, 0
    %p255 = por %p253, %p254
    %s257 = sadd.s32 %s256, 1
    %p260 = scmp.eq.s32.totalorder %s65, 1
    %p261 = scmp.ne.s32.totalorder %s256, %s258
    %p262 = scmp.eq.s32.totalorder %s65, 0
    %p263 = por %p261, %p262
    %p264 = scmp.ne.s32.totalorder %s256, %s258
    %p265 = scmp.eq.s32.totalorder %s70, 1
    %p266 = por %p264, %p265
    %p267 = scmp.ne.s32.totalorder %s258, %s259
    %p268 = scmp.eq.s32.totalorder %s70, 0
    %p269 = por %p267, %p268
    %p270 = scmp.ne.s32.totalorder %s258, %s259
    %p271 = scmp.eq.s32.totalorder %s71, 1
    %p272 = por %p270, %p271
    %p274 = scmp.ne.s32.totalorder %s259, %s273
    %p275 = scmp.eq.s32.totalorder %s71, 0
    %p276 = por %p274, %p275
    %s278 = sadd.s32 %s277, 1
    %p281 = scmp.eq.s32.totalorder %s65, 1
    %p282 = scmp.ne.s32.totalorder %s277, %s279
    %p283 = scmp.eq.s32.totalorder %s65, 0
    %p284 = por %p282, %p283
    %p285 = scmp.ne.s32.totalorder %s277, %s279
    %p286 = scmp.eq.s32.totalorder %s70, 1
    %p287 = por %p285, %p286
    %p288 = scmp.ne.s32.totalorder %s279, %s280
    %p289 = scmp.eq.s32.totalorder %s70, 0
    %p290 = por %p288, %p289
    %p291 = scmp.ne.s32.totalorder %s279, %s280
    %p292 = scmp.eq.s32.totalorder %s71, 1
    %p293 = por %p291, %p292
    %p295 = scmp.ne.s32.totalorder %s280, %s294
    %p296 = scmp.eq.s32.totalorder %s71, 0
    %p297 = por %p295, %p296
    %s299 = sadd.s32 %s298, 1
    %p302 = scmp.eq.s32.totalorder %s65, 1
    %p303 = scmp.ne.s32.totalorder %s298, %s300
    %p304 = scmp.eq.s32.totalorder %s65, 0
    %p305 = por %p303, %p304
    %p306 = scmp.ne.s32.totalorder %s298, %s300
    %p307 = scmp.eq.s32.totalorder %s70, 1
    %p308 = por %p306, %p307
    %p309 = scmp.ne.s32.totalorder %s300, %s301
    %p310 = scmp.eq.s32.totalorder %s70, 0
    %p311 = por %p309, %p310
    %p312 = scmp.ne.s32.totalorder %s300, %s301
    %p313 = scmp.eq.s32.totalorder %s71, 1
    %p314 = por %p312, %p313
    %p316 = scmp.ne.s32.totalorder %s301, %s315
    %p317 = scmp.eq.s32.totalorder %s71, 0
    %p318 = por %p316, %p317
    %s320 = sadd.s32 %s319, 1
    %p323 = scmp.eq.s32.totalorder %s65, 1
    %p324 = scmp.ne.s32.totalorder %s319, %s321
    %p325 = scmp.eq.s32.totalorder %s65, 0
    %p326 = por %p324, %p325
    %p327 = scmp.ne.s32.totalorder %s319, %s321
    %p328 = scmp.eq.s32.totalorder %s70, 1
    %p329 = por %p327, %p328
    %p330 = scmp.ne.s32.totalorder %s321, %s322
    %p331 = scmp.eq.s32.totalorder %s70, 0
    %p332 = por %p330, %p331
    %p333 = scmp.ne.s32.totalorder %s321, %s322
    %p334 = scmp.eq.s32.totalorder %s71, 1
    %p335 = por %p333, %p334
    %p337 = scmp.ne.s32.totalorder %s322, %s336
    %p338 = scmp.eq.s32.totalorder %s71, 0
    %p339 = por %p337, %p338
    %s341 = sadd.s32 %s340, 1
    %p344 = scmp.eq.s32.totalorder %s65, 1
    %p345 = scmp.ne.s32.totalorder %s340, %s342
    %p346 = scmp.eq.s32.totalorder %s65, 0
    %p347 = por %p345, %p346
    %p348 = scmp.ne.s32.totalorder %s340, %s342
    %p349 = scmp.eq.s32.totalorder %s70, 1
    %p350 = por %p348, %p349
    %p351 = scmp.ne.s32.totalorder %s342, %s343
    %p352 = scmp.eq.s32.totalorder %s70, 0
    %p353 = por %p351, %p352
    %p354 = scmp.ne.s32.totalorder %s342, %s343
    %p355 = scmp.eq.s32.totalorder %s71, 1
    %p356 = por %p354, %p355
    %p358 = scmp.ne.s32.totalorder %s343, %s357
    %p359 = scmp.eq.s32.totalorder %s71, 0
    %p360 = por %p358, %p359
    %s362 = sadd.s32 %s361, 1
    %p365 = scmp.eq.s32.totalorder %s65, 1
    %p366 = scmp.ne.s32.totalorder %s361, %s363
    %p367 = scmp.eq.s32.totalorder %s65, 0
    %p368 = por %p366, %p367
    %p369 = scmp.ne.s32.totalorder %s361, %s363
    %p370 = scmp.eq.s32.totalorder %s70, 1
    %p371 = por %p369, %p370
    %p372 = scmp.ne.s32.totalorder %s363, %s364
    %p373 = scmp.eq.s32.totalorder %s70, 0
    %p374 = por %p372, %p373
    %p375 = scmp.ne.s32.totalorder %s363, %s364
    %p376 = scmp.eq.s32.totalorder %s71, 1
    %p377 = por %p375, %p376
    %p379 = scmp.ne.s32.totalorder %s364, %s378
    %p380 = scmp.eq.s32.totalorder %s71, 0
    %p381 = por %p379, %p380
    %s383 = sadd.s32 %s382, 1
    %p386 = scmp.eq.s32.totalorder %s65, 1
    %p387 = scmp.ne.s32.totalorder %s382, %s384
    %p388 = scmp.eq.s32.totalorder %s65, 0
    %p389 = por %p387, %p388
    %p390 = scmp.ne.s32.totalorder %s382, %s384
    %p391 = scmp.eq.s32.totalorder %s70, 1
    %p392 = por %p390, %p391
    %p393 = scmp.ne.s32.totalorder %s384, %s385
    %p394 = scmp.eq.s32.totalorder %s70, 0
    %p395 = por %p393, %p394
    %p396 = scmp.ne.s32.totalorder %s384, %s385
    %p397 = scmp.eq.s32.totalorder %s71, 1
    %p398 = por %p396, %p397
    %p400 = scmp.ne.s32.totalorder %s385, %s399
    %p401 = scmp.eq.s32.totalorder %s71, 0
    %p402 = por %p400, %p401
    %s404 = sadd.s32 %s403, 1
    %p407 = scmp.eq.s32.totalorder %s65, 1
    %p408 = scmp.ne.s32.totalorder %s403, %s405
    %p409 = scmp.eq.s32.totalorder %s65, 0
    %p410 = por %p408, %p409
    %p411 = scmp.ne.s32.totalorder %s403, %s405
    %p412 = scmp.eq.s32.totalorder %s70, 1
    %p413 = por %p411, %p412
    %p414 = scmp.ne.s32.totalorder %s405, %s406
    %p415 = scmp.eq.s32.totalorder %s70, 0
    %p416 = por %p414, %p415
    %p417 = scmp.ne.s32.totalorder %s405, %s406
    %p418 = scmp.eq.s32.totalorder %s71, 1
    %p419 = por %p417, %p418
    %p421 = scmp.ne.s32.totalorder %s406, %s420
    %p422 = scmp.eq.s32.totalorder %s71, 0
    %p423 = por %p421, %p422
    %s425 = sadd.s32 %s424, 1
    %p428 = scmp.eq.s32.totalorder %s65, 1
    %p429 = scmp.ne.s32.totalorder %s424, %s426
    %p430 = scmp.eq.s32.totalorder %s65, 0
    %p431 = por %p429, %p430
    %p432 = scmp.ne.s32.totalorder %s424, %s426
    %p433 = scmp.eq.s32.totalorder %s70, 1
    %p434 = por %p432, %p433
    %p435 = scmp.ne.s32.totalorder %s426, %s427
    %p436 = scmp.eq.s32.totalorder %s70, 0
    %p437 = por %p435, %p436
    %p438 = scmp.ne.s32.totalorder %s426, %s427
    %p439 = scmp.eq.s32.totalorder %s71, 1
    %p440 = por %p438, %p439
    %p442 = scmp.ne.s32.totalorder %s427, %s441
    %p443 = scmp.eq.s32.totalorder %s71, 0
    %p444 = por %p442, %p443
    %s446 = sadd.s32 %s445, 1
    %p449 = scmp.eq.s32.totalorder %s65, 1
    %p450 = scmp.ne.s32.totalorder %s445, %s447
    %p451 = scmp.eq.s32.totalorder %s65, 0
    %p452 = por %p450, %p451
    %p453 = scmp.ne.s32.totalorder %s445, %s447
    %p454 = scmp.eq.s32.totalorder %s70, 1
    %p455 = por %p453, %p454
    %p456 = scmp.ne.s32.totalorder %s447, %s448
    %p457 = scmp.eq.s32.totalorder %s70, 0
    %p458 = por %p456, %p457
    %p459 = scmp.ne.s32.totalorder %s447, %s448
    %p460 = scmp.eq.s32.totalorder %s71, 1
    %p461 = por %p459, %p460
    %p463 = scmp.ne.s32.totalorder %s448, %s462
    %p464 = scmp.eq.s32.totalorder %s71, 0
    %p465 = por %p463, %p464
    %s467 = sadd.s32 %s466, 1
    %p470 = scmp.eq.s32.totalorder %s65, 1
    %p471 = scmp.ne.s32.totalorder %s466, %s468
    %p472 = scmp.eq.s32.totalorder %s65, 0
    %p473 = por %p471, %p472
    %p474 = scmp.ne.s32.totalorder %s466, %s468
    %p475 = scmp.eq.s32.totalorder %s70, 1
    %p476 = por %p474, %p475
    %p477 = scmp.ne.s32.totalorder %s468, %s469
    %p478 = scmp.eq.s32.totalorder %s70, 0
    %p479 = por %p477, %p478
    %p480 = scmp.ne.s32.totalorder %s468, %s469
    %p481 = scmp.eq.s32.totalorder %s71, 1
    %p482 = por %p480, %p481
    %p484 = scmp.ne.s32.totalorder %s469, %s483
    %p485 = scmp.eq.s32.totalorder %s71, 0
    %p486 = por %p484, %p485
    %s488 = sadd.s32 %s487, 1
    %p491 = scmp.eq.s32.totalorder %s65, 1
    %p492 = scmp.ne.s32.totalorder %s487, %s489
    %p493 = scmp.eq.s32.totalorder %s65, 0
    %p494 = por %p492, %p493
    %p495 = scmp.ne.s32.totalorder %s487, %s489
    %p496 = scmp.eq.s32.totalorder %s70, 1
    %p497 = por %p495, %p496
    %p498 = scmp.ne.s32.totalorder %s489, %s490
    %p499 = scmp.eq.s32.totalorder %s70, 0
    %p500 = por %p498, %p499
    %p501 = scmp.ne.s32.totalorder %s489, %s490
    %p502 = scmp.eq.s32.totalorder %s71, 1
    %p503 = por %p501, %p502
    %p505 = scmp.ne.s32.totalorder %s490, %s504
    %p506 = scmp.eq.s32.totalorder %s71, 0
    %p507 = por %p505, %p506
    %s509 = sadd.s32 %s508, 1
    %p512 = scmp.eq.s32.totalorder %s65, 1
    %p513 = scmp.ne.s32.totalorder %s508, %s510
    %p514 = scmp.eq.s32.totalorder %s65, 0
    %p515 = por %p513, %p514
    %p516 = scmp.ne.s32.totalorder %s508, %s510
    %p517 = scmp.eq.s32.totalorder %s70, 1
    %p518 = por %p516, %p517
    %p519 = scmp.ne.s32.totalorder %s510, %s511
    %p520 = scmp.eq.s32.totalorder %s70, 0
    %p521 = por %p519, %p520
    %p522 = scmp.ne.s32.totalorder %s510, %s511
    %p523 = scmp.eq.s32.totalorder %s71, 1
    %p524 = por %p522, %p523
    %p526 = scmp.ne.s32.totalorder %s511, %s525
    %p527 = scmp.eq.s32.totalorder %s71, 0
    %p528 = por %p526, %p527
    %s530 = sadd.s32 %s529, 1
    %p533 = scmp.eq.s32.totalorder %s65, 1
    %p534 = scmp.ne.s32.totalorder %s529, %s531
    %p535 = scmp.eq.s32.totalorder %s65, 0
    %p536 = por %p534, %p535
    %p537 = scmp.ne.s32.totalorder %s529, %s531
    %p538 = scmp.eq.s32.totalorder %s70, 1
    %p539 = por %p537, %p538
    %p540 = scmp.ne.s32.totalorder %s531, %s532
    %p541 = scmp.eq.s32.totalorder %s70, 0
    %p542 = por %p540, %p541
    %p543 = scmp.ne.s32.totalorder %s531, %s532
    %p544 = scmp.eq.s32.totalorder %s71, 1
    %p545 = por %p543, %p544
    %p547 = scmp.ne.s32.totalorder %s532, %s546
    %p548 = scmp.eq.s32.totalorder %s71, 0
    %p549 = por %p547, %p548
    %s551 = sadd.s32 %s550, 1
    %p554 = scmp.eq.s32.totalorder %s65, 1
    %p555 = scmp.ne.s32.totalorder %s550, %s552
    %p556 = scmp.eq.s32.totalorder %s65, 0
    %p557 = por %p555, %p556
    %p558 = scmp.ne.s32.totalorder %s550, %s552
    %p559 = scmp.eq.s32.totalorder %s70, 1
    %p560 = por %p558, %p559
    %p561 = scmp.ne.s32.totalorder %s552, %s553
    %p562 = scmp.eq.s32.totalorder %s70, 0
    %p563 = por %p561, %p562
    %p564 = scmp.ne.s32.totalorder %s552, %s553
    %p565 = scmp.eq.s32.totalorder %s71, 1
    %p566 = por %p564, %p565
    %p568 = scmp.ne.s32.totalorder %s553, %s567
    %p569 = scmp.eq.s32.totalorder %s71, 0
    %p570 = por %p568, %p569
    %s572 = sadd.s32 %s571, 1
    %p575 = scmp.eq.s32.totalorder %s65, 1
    %p576 = scmp.ne.s32.totalorder %s571, %s573
    %p577 = scmp.eq.s32.totalorder %s65, 0
    %p578 = por %p576, %p577
    %p579 = scmp.ne.s32.totalorder %s571, %s573
    %p580 = scmp.eq.s32.totalorder %s70, 1
    %p581 = por %p579, %p580
    %p582 = scmp.ne.s32.totalorder %s573, %s574
    %p583 = scmp.eq.s32.totalorder %s70, 0
    %p584 = por %p582, %p583
    %p585 = scmp.ne.s32.totalorder %s573, %s574
    %p586 = scmp.eq.s32.totalorder %s71, 1
    %p587 = por %p585, %p586
    %p589 = scmp.ne.s32.totalorder %s574, %s588
    %p590 = scmp.eq.s32.totalorder %s71, 0
    %p591 = por %p589, %p590
    %s593 = sadd.s32 %s592, 1
    %p596 = scmp.eq.s32.totalorder %s65, 1
    %p597 = scmp.ne.s32.totalorder %s592, %s594
    %p598 = scmp.eq.s32.totalorder %s65, 0
    %p599 = por %p597, %p598
    %p600 = scmp.ne.s32.totalorder %s592, %s594
    %p601 = scmp.eq.s32.totalorder %s70, 1
    %p602 = por %p600, %p601
    %p603 = scmp.ne.s32.totalorder %s594, %s595
    %p604 = scmp.eq.s32.totalorder %s70, 0
    %p605 = por %p603, %p604
    %p606 = scmp.ne.s32.totalorder %s594, %s595
    %p607 = scmp.eq.s32.totalorder %s71, 1
    %p608 = por %p606, %p607
    %p610 = scmp.ne.s32.totalorder %s595, %s609
    %p611 = scmp.eq.s32.totalorder %s71, 0
    %p612 = por %p610, %p611
    %s614 = sadd.s32 %s613, 1
    %p617 = scmp.eq.s32.totalorder %s65, 1
    %p618 = scmp.ne.s32.totalorder %s613, %s615
    %p619 = scmp.eq.s32.totalorder %s65, 0
    %p620 = por %p618, %p619
    %p621 = scmp.ne.s32.totalorder %s613, %s615
    %p622 = scmp.eq.s32.totalorder %s70, 1
    %p623 = por %p621, %p622
    %p624 = scmp.ne.s32.totalorder %s615, %s616
    %p625 = scmp.eq.s32.totalorder %s70, 0
    %p626 = por %p624, %p625
    %p627 = scmp.ne.s32.totalorder %s615, %s616
    %p628 = scmp.eq.s32.totalorder %s71, 1
    %p629 = por %p627, %p628
    %p631 = scmp.ne.s32.totalorder %s616, %s630
    %p632 = scmp.eq.s32.totalorder %s71, 0
    %p633 = por %p631, %p632
    %s635 = sadd.s32 %s634, 1
    %p638 = scmp.eq.s32.totalorder %s65, 1
    %p639 = scmp.ne.s32.totalorder %s634, %s636
    %p640 = scmp.eq.s32.totalorder %s65, 0
    %p641 = por %p639, %p640
    %p642 = scmp.ne.s32.totalorder %s634, %s636
    %p643 = scmp.eq.s32.totalorder %s70, 1
    %p644 = por %p642, %p643
    %p645 = scmp.ne.s32.totalorder %s636, %s637
    %p646 = scmp.eq.s32.totalorder %s70, 0
    %p647 = por %p645, %p646
    %p648 = scmp.ne.s32.totalorder %s636, %s637
    %p649 = scmp.eq.s32.totalorder %s71, 1
    %p650 = por %p648, %p649
    %p652 = scmp.ne.s32.totalorder %s637, %s651
    %p653 = scmp.eq.s32.totalorder %s71, 0
    %p654 = por %p652, %p653
    %s656 = sadd.s32 %s655, 1
    %p659 = scmp.eq.s32.totalorder %s65, 1
    %p660 = scmp.ne.s32.totalorder %s655, %s657
    %p661 = scmp.eq.s32.totalorder %s65, 0
    %p662 = por %p660, %p661
    %p663 = scmp.ne.s32.totalorder %s655, %s657
    %p664 = scmp.eq.s32.totalorder %s70, 1
    %p665 = por %p663, %p664
    %p666 = scmp.ne.s32.totalorder %s657, %s658
    %p667 = scmp.eq.s32.totalorder %s70, 0
    %p668 = por %p666, %p667
    %p669 = scmp.ne.s32.totalorder %s657, %s658
    %p670 = scmp.eq.s32.totalorder %s71, 1
    %p671 = por %p669, %p670
    %p673 = scmp.ne.s32.totalorder %s658, %s672
    %p674 = scmp.eq.s32.totalorder %s71, 0
    %p675 = por %p673, %p674
    %s677 = sadd.s32 %s676, 1
    %p680 = scmp.eq.s32.totalorder %s65, 1
    %p681 = scmp.ne.s32.totalorder %s676, %s678
    %p682 = scmp.eq.s32.totalorder %s65, 0
    %p683 = por %p681, %p682
    %p684 = scmp.ne.s32.totalorder %s676, %s678
    %p685 = scmp.eq.s32.totalorder %s70, 1
    %p686 = por %p684, %p685
    %p687 = scmp.ne.s32.totalorder %s678, %s679
    %p688 = scmp.eq.s32.totalorder %s70, 0
    %p689 = por %p687, %p688
    %p690 = scmp.ne.s32.totalorder %s678, %s679
    %p691 = scmp.eq.s32.totalorder %s71, 1
    %p692 = por %p690, %p691
    %p694 = scmp.ne.s32.totalorder %s679, %s693
    %p695 = scmp.eq.s32.totalorder %s71, 0
    %p696 = por %p694, %p695
    %s697 = ssub.s32 %s65, %s72
    %p698 = scmp.eq.s32.totalorder %s697, 0
    %s700 = sadd.s32 %s699, 1
    %s701 = scalar_select %p698, %s699, %s700
    %p704 = pneg %p698
    %p705 = scmp.eq.s32.totalorder %s65, 1
    %p706 = por %p704, %p705
    %p707 = scmp.ne.s32.totalorder %s699, %s702
    %p708 = scmp.eq.s32.totalorder %s65, 0
    %p709 = por %p707, %p708
    %p710 = scmp.ne.s32.totalorder %s699, %s702
    %p711 = scmp.eq.s32.totalorder %s70, 1
    %p712 = por %p710, %p711
    %p713 = scmp.ne.s32.totalorder %s702, %s703
    %p714 = scmp.eq.s32.totalorder %s70, 0
    %p715 = por %p713, %p714
    %p716 = scmp.ne.s32.totalorder %s702, %s703
    %p717 = scmp.eq.s32.totalorder %s71, 1
    %p718 = por %p716, %p717
    %p720 = scmp.ne.s32.totalorder %s703, %s719
    %p721 = scmp.eq.s32.totalorder %s71, 0
    %p722 = por %p720, %p721
    %p723 = scmp.le.s32.totalorder 1, %s65
    %p724 = scmp.lt.s32.totalorder %s65, 3
    %p725 = pnand %p723, %p724
    %p726 = pneg %p725
    // Predicated region
    $region9: #{transformer_chatbot_forward.10} parent=5 // pred_check
      _
    $region10: #{transformer_chatbot_forward.10} parent=5 // pred_check_branch
      %728 = sbr.rel (%p725) target = $region12
    $region11: #{transformer_chatbot_forward.10} parent=5 // pred_region
      %s729 = ssub.s32 %s65, 1
      // Predicated region
      $region13: #{transformer_chatbot_forward.10} parent=11 // pred_check
        %p730 = pneg %p164
      $region14: #{transformer_chatbot_forward.10} parent=11 // pred_check_branch
        %732 = sbr.rel (%p730) target = $region16
      $region15: #{transformer_chatbot_forward.10} parent=11 // pred_region
        _
      $region16: #{transformer_chatbot_forward.10} parent=11 // pred_fallthru
        _
      // Predicated region
      $region17: #{transformer_chatbot_forward.10} parent=11 // pred_check
        %p733 = pneg %p185
      $region18: #{transformer_chatbot_forward.10} parent=11 // pred_check_branch
        %735 = sbr.rel (%p733) target = $region20
      $region19: #{transformer_chatbot_forward.10} parent=11 // pred_region
        _
      $region20: #{transformer_chatbot_forward.10} parent=11 // pred_fallthru
        _
      // Predicated region
      $region21: #{transformer_chatbot_forward.10} parent=11 // pred_check
        %p736 = pneg %p206
      $region22: #{transformer_chatbot_forward.10} parent=11 // pred_check_branch
        %738 = sbr.rel (%p736) target = $region24
      $region23: #{transformer_chatbot_forward.10} parent=11 // pred_region
        _
      $region24: #{transformer_chatbot_forward.10} parent=11 // pred_fallthru
        _
      // Predicated region
      $region25: #{transformer_chatbot_forward.10} parent=11 // pred_check
        %p739 = pneg %p227
      $region26: #{transformer_chatbot_forward.10} parent=11 // pred_check_branch
        %741 = sbr.rel (%p739) target = $region28
      $region27: #{transformer_chatbot_forward.10} parent=11 // pred_region
        _
      $region28: #{transformer_chatbot_forward.10} parent=11 // pred_fallthru
        _
      // Predicated region
      $region29: #{transformer_chatbot_forward.10} parent=11 // pred_check
        %p742 = pneg %p248
      $region30: #{transformer_chatbot_forward.10} parent=11 // pred_check_branch
        %744 = sbr.rel (%p742) target = $region32
      $region31: #{transformer_chatbot_forward.10} parent=11 // pred_region
        _
      $region32: #{transformer_chatbot_forward.10} parent=11 // pred_fallthru
        _
      // Predicated region
      $region33: #{transformer_chatbot_forward.10} parent=11 // pred_check
        %p745 = pneg %p269
      $region34: #{transformer_chatbot_forward.10} parent=11 // pred_check_branch
        %747 = sbr.rel (%p745) target = $region36
      $region35: #{transformer_chatbot_forward.10} parent=11 // pred_region
        _
      $region36: #{transformer_chatbot_forward.10} parent=11 // pred_fallthru
        _
      // Predicated region
      $region37: #{transformer_chatbot_forward.10} parent=11 // pred_check
        %p748 = pneg %p290
      $region38: #{transformer_chatbot_forward.10} parent=11 // pred_check_branch
        %750 = sbr.rel (%p748) target = $region40
      $region39: #{transformer_chatbot_forward.10} parent=11 // pred_region
        _
      $region40: #{transformer_chatbot_forward.10} parent=11 // pred_fallthru
        _
      // Predicated region
      $region41: #{transformer_chatbot_forward.10} parent=11 // pred_check
        %p751 = pneg %p311
      $region42: #{transformer_chatbot_forward.10} parent=11 // pred_check_branch
        %753 = sbr.rel (%p751) target = $region44
      $region43: #{transformer_chatbot_forward.10} parent=11 // pred_region
        _
      $region44: #{transformer_chatbot_forward.10} parent=11 // pred_fallthru
        _
      // Predicated region
      $region45: #{transformer_chatbot_forward.10} parent=11 // pred_check
        %p754 = pneg %p332
      $region46: #{transformer_chatbot_forward.10} parent=11 // pred_check_branch
        %756 = sbr.rel (%p754) target = $region48
      $region47: #{transformer_chatbot_forward.10} parent=11 // pred_region
        _
      $region48: #{transformer_chatbot_forward.10} parent=11 // pred_fallthru
        _
      // Predicated region
      $region49: #{transformer_chatbot_forward.10} parent=11 // pred_check
        %p757 = pneg %p353
      $region50: #{transformer_chatbot_forward.10} parent=11 // pred_check_branch
        %759 = sbr.rel (%p757) target = $region52
      $region51: #{transformer_chatbot_forward.10} parent=11 // pred_region
        _
      $region52: #{transformer_chatbot_forward.10} parent=11 // pred_fallthru
        _
      // Predicated region
      $region53: #{transformer_chatbot_forward.10} parent=11 // pred_check
        %p760 = pneg %p374
      $region54: #{transformer_chatbot_forward.10} parent=11 // pred_check_branch
        %762 = sbr.rel (%p760) target = $region56
      $region55: #{transformer_chatbot_forward.10} parent=11 // pred_region
        _
      $region56: #{transformer_chatbot_forward.10} parent=11 // pred_fallthru
        _
      // Predicated region
      $region57: #{transformer_chatbot_forward.10} parent=11 // pred_check
        %p763 = pneg %p395
      $region58: #{transformer_chatbot_forward.10} parent=11 // pred_check_branch
        %765 = sbr.rel (%p763) target = $region60
      $region59: #{transformer_chatbot_forward.10} parent=11 // pred_region
        _
      $region60: #{transformer_chatbot_forward.10} parent=11 // pred_fallthru
        _
      // Predicated region
      $region61: #{transformer_chatbot_forward.10} parent=11 // pred_check
        %p766 = pneg %p416
      $region62: #{transformer_chatbot_forward.10} parent=11 // pred_check_branch
        %768 = sbr.rel (%p766) target = $region64
      $region63: #{transformer_chatbot_forward.10} parent=11 // pred_region
        _
      $region64: #{transformer_chatbot_forward.10} parent=11 // pred_fallthru
        _
      // Predicated region
      $region65: #{transformer_chatbot_forward.10} parent=11 // pred_check
        %p769 = pneg %p437
      $region66: #{transformer_chatbot_forward.10} parent=11 // pred_check_branch
        %771 = sbr.rel (%p769) target = $region68
      $region67: #{transformer_chatbot_forward.10} parent=11 // pred_region
        _
      $region68: #{transformer_chatbot_forward.10} parent=11 // pred_fallthru
        _
      // Predicated region
      $region69: #{transformer_chatbot_forward.10} parent=11 // pred_check
        %p772 = pneg %p458
      $region70: #{transformer_chatbot_forward.10} parent=11 // pred_check_branch
        %774 = sbr.rel (%p772) target = $region72
      $region71: #{transformer_chatbot_forward.10} parent=11 // pred_region
        _
      $region72: #{transformer_chatbot_forward.10} parent=11 // pred_fallthru
        _
      // Predicated region
      $region73: #{transformer_chatbot_forward.10} parent=11 // pred_check
        %p775 = pneg %p479
      $region74: #{transformer_chatbot_forward.10} parent=11 // pred_check_branch
        %777 = sbr.rel (%p775) target = $region76
      $region75: #{transformer_chatbot_forward.10} parent=11 // pred_region
        _
      $region76: #{transformer_chatbot_forward.10} parent=11 // pred_fallthru
        _
      // Predicated region
      $region77: #{transformer_chatbot_forward.10} parent=11 // pred_check
        %p778 = pneg %p500
      $region78: #{transformer_chatbot_forward.10} parent=11 // pred_check_branch
        %780 = sbr.rel (%p778) target = $region80
      $region79: #{transformer_chatbot_forward.10} parent=11 // pred_region
        _
      $region80: #{transformer_chatbot_forward.10} parent=11 // pred_fallthru
        _
      // Predicated region
      $region81: #{transformer_chatbot_forward.10} parent=11 // pred_check
        %p781 = pneg %p521
      $region82: #{transformer_chatbot_forward.10} parent=11 // pred_check_branch
        %783 = sbr.rel (%p781) target = $region84
      $region83: #{transformer_chatbot_forward.10} parent=11 // pred_region
        _
      $region84: #{transformer_chatbot_forward.10} parent=11 // pred_fallthru
        _
      // Predicated region
      $region85: #{transformer_chatbot_forward.10} parent=11 // pred_check
        %p784 = pneg %p542
      $region86: #{transformer_chatbot_forward.10} parent=11 // pred_check_branch
        %786 = sbr.rel (%p784) target = $region88
      $region87: #{transformer_chatbot_forward.10} parent=11 // pred_region
        _
      $region88: #{transformer_chatbot_forward.10} parent=11 // pred_fallthru
        _
      // Predicated region
      $region89: #{transformer_chatbot_forward.10} parent=11 // pred_check
        %p787 = pneg %p563
      $region90: #{transformer_chatbot_forward.10} parent=11 // pred_check_branch
        %789 = sbr.rel (%p787) target = $region92
      $region91: #{transformer_chatbot_forward.10} parent=11 // pred_region
        _
      $region92: #{transformer_chatbot_forward.10} parent=11 // pred_fallthru
        _
      // Predicated region
      $region93: #{transformer_chatbot_forward.10} parent=11 // pred_check
        %p790 = pneg %p584
      $region94: #{transformer_chatbot_forward.10} parent=11 // pred_check_branch
        %792 = sbr.rel (%p790) target = $region96
      $region95: #{transformer_chatbot_forward.10} parent=11 // pred_region
        _
      $region96: #{transformer_chatbot_forward.10} parent=11 // pred_fallthru
        _
      // Predicated region
      $region97: #{transformer_chatbot_forward.10} parent=11 // pred_check
        %p793 = pneg %p605
      $region98: #{transformer_chatbot_forward.10} parent=11 // pred_check_branch
        %795 = sbr.rel (%p793) target = $region100
      $region99: #{transformer_chatbot_forward.10} parent=11 // pred_region
        _
      $region100: #{transformer_chatbot_forward.10} parent=11 // pred_fallthru
        _
      // Predicated region
      $region101: #{transformer_chatbot_forward.10} parent=11 // pred_check
        %p796 = pneg %p626
      $region102: #{transformer_chatbot_forward.10} parent=11 // pred_check_branch
        %798 = sbr.rel (%p796) target = $region104
      $region103: #{transformer_chatbot_forward.10} parent=11 // pred_region
        _
      $region104: #{transformer_chatbot_forward.10} parent=11 // pred_fallthru
        _
      // Predicated region
      $region105: #{transformer_chatbot_forward.10} parent=11 // pred_check
        %p799 = pneg %p647
      $region106: #{transformer_chatbot_forward.10} parent=11 // pred_check_branch
        %801 = sbr.rel (%p799) target = $region108
      $region107: #{transformer_chatbot_forward.10} parent=11 // pred_region
        _
      $region108: #{transformer_chatbot_forward.10} parent=11 // pred_fallthru
        _
      // Predicated region
      $region109: #{transformer_chatbot_forward.10} parent=11 // pred_check
        %p802 = pneg %p668
      $region110: #{transformer_chatbot_forward.10} parent=11 // pred_check_branch
        %804 = sbr.rel (%p802) target = $region112
      $region111: #{transformer_chatbot_forward.10} parent=11 // pred_region
        _
      $region112: #{transformer_chatbot_forward.10} parent=11 // pred_fallthru
        _
      // Predicated region
      $region113: #{transformer_chatbot_forward.10} parent=11 // pred_check
        %p805 = pneg %p689
      $region114: #{transformer_chatbot_forward.10} parent=11 // pred_check_branch
        %807 = sbr.rel (%p805) target = $region116
      $region115: #{transformer_chatbot_forward.10} parent=11 // pred_region
        _
      $region116: #{transformer_chatbot_forward.10} parent=11 // pred_fallthru
        _
    $region12: #{transformer_chatbot_forward.10} parent=5 // pred_fallthru
      _
    %p808 = scmp.lt.s32.totalorder %s65, 2
    // Predicated region
    $region117: #{transformer_chatbot_forward.10} parent=5 // pred_check
      %p809 = pneg %p808
    $region118: #{transformer_chatbot_forward.10} parent=5 // pred_check_branch
      %811 = sbr.rel (%p809) target = $region120
    $region119: #{transformer_chatbot_forward.10} parent=5 // pred_region
      // Predicated region
      $region121: #{transformer_chatbot_forward.10} parent=119 // pred_check
        %p812 = pneg %p85
      $region122: #{transformer_chatbot_forward.10} parent=119 // pred_check_branch
        %814 = sbr.rel (%p812) target = $region124
      $region123: #{transformer_chatbot_forward.10} parent=119 // pred_region
        %p815 = scmp.lt.s32.totalorder %s65, 1
        %s816 = scalar_select %p815, %s65, 1
        %s817 = smul.addr %s816, 4
        %s818 = scalar_lea.vmem %s1, %s817
      $region124: #{transformer_chatbot_forward.10} parent=119 // pred_fallthru
        _
      // Predicated region
      $region125: #{transformer_chatbot_forward.10} parent=119 // pred_check
        %p819 = pneg %p111
      $region126: #{transformer_chatbot_forward.10} parent=119 // pred_check_branch
        %821 = sbr.rel (%p819) target = $region128
      $region127: #{transformer_chatbot_forward.10} parent=119 // pred_region
        %p822 = scmp.lt.s32.totalorder %s65, 1
        %s823 = scalar_select %p822, %s65, 1
        %s824 = smul.addr %s823, 4
        %s825 = scalar_lea.vmem %s3, %s824
      $region128: #{transformer_chatbot_forward.10} parent=119 // pred_fallthru
        _
      // Predicated region
      $region129: #{transformer_chatbot_forward.10} parent=119 // pred_check
        %p826 = pneg %p137
      $region130: #{transformer_chatbot_forward.10} parent=119 // pred_check_branch
        %828 = sbr.rel (%p826) target = $region132
      $region131: #{transformer_chatbot_forward.10} parent=119 // pred_region
        %p829 = scmp.lt.s32.totalorder %s65, 1
        %s830 = scalar_select %p829, %s65, 1
        %s831 = scalar_lea.vmem %s5, %s830
      $region132: #{transformer_chatbot_forward.10} parent=119 // pred_fallthru
        _
    $region120: #{transformer_chatbot_forward.10} parent=5 // pred_fallthru
      _
    %p832 = scmp.le.s32.totalorder 1, %s65
    %p833 = scmp.lt.s32.totalorder %s65, 3
    %p834 = pnand %p832, %p833
    %p835 = pneg %p834
    // Predicated region
    $region133: #{transformer_chatbot_forward.10} parent=5 // pred_check
      _
    $region134: #{transformer_chatbot_forward.10} parent=5 // pred_check_branch
      %837 = sbr.rel (%p834) target = $region136
    $region135: #{transformer_chatbot_forward.10} parent=5 // pred_region
      %s838 = ssub.s32 %s65, 1
      %p839 = scmp.lt.s32.totalorder %s70, 1
      %s840 = scalar_select %p839, %s70, 1
      %s841 = smul.addr %s840, 4
      %s842 = scalar_lea.vmem %s1, %s841
      %p843 = pneg %p91
      %p844 = pneg %p88
      %p845 = scmp.lt.s32.totalorder %s70, 1
      %s846 = scalar_select %p845, %s70, 1
      %s847 = smul.addr %s846, 4
      %s848 = scalar_lea.vmem %s3, %s847
      %p849 = pneg %p117
      %p850 = pneg %p114
      %p851 = scmp.lt.s32.totalorder %s70, 1
      %s852 = scalar_select %p851, %s70, 1
      %s853 = scalar_lea.vmem %s5, %s852
      %p854 = pneg %p143
      %p855 = pneg %p140
      %p856 = pneg %p164
      %p857 = pneg %p161
      %p858 = pneg %p185
      %p859 = pneg %p182
      %p860 = pneg %p206
      %p861 = pneg %p203
      %p862 = pneg %p227
      %p863 = pneg %p224
      %p864 = pneg %p248
      %p865 = pneg %p245
      %p866 = pneg %p269
      %p867 = pneg %p266
      %p868 = pneg %p290
      %p869 = pneg %p287
      %p870 = pneg %p311
      %p871 = pneg %p308
      %p872 = pneg %p332
      %p873 = pneg %p329
      %p874 = pneg %p353
      %p875 = pneg %p350
      %p876 = pneg %p374
      %p877 = pneg %p371
      %p878 = pneg %p395
      %p879 = pneg %p392
      %p880 = pneg %p416
      %p881 = pneg %p413
      %p882 = pneg %p437
      %p883 = pneg %p434
      %p884 = pneg %p458
      %p885 = pneg %p455
      %p886 = pneg %p479
      %p887 = pneg %p476
      %p888 = pneg %p500
      %p889 = pneg %p497
      %p890 = pneg %p521
      %p891 = pneg %p518
      %p892 = pneg %p542
      %p893 = pneg %p539
      %p894 = pneg %p563
      %p895 = pneg %p560
      %p896 = pneg %p584
      %p897 = pneg %p581
      %p898 = pneg %p605
      %p899 = pneg %p602
      %p900 = pneg %p626
      %p901 = pneg %p623
      %p902 = pneg %p647
      %p903 = pneg %p644
      %p904 = pneg %p668
      %p905 = pneg %p665
      %p906 = pneg %p689
      %p907 = pneg %p686
      %p908 = pneg %p715
      %p909 = pneg %p712
      %p910 = scmp.lt.s32.totalorder %s70, 1
      %s911 = scalar_select %p910, %s70, 1
      %s912 = smul.addr %s911, 4
      %s913 = scalar_lea.vmem %s59, %s912
      %p914 = scmp.lt.s32.totalorder %s70, 1
      %s915 = scalar_select %p914, %s70, 1
      %s916 = smul.addr %s915, 4
      %s917 = scalar_lea.vmem %s1, %s916
      %p918 = scmp.lt.s32.totalorder %s70, 1
      %s919 = scalar_select %p918, %s70, 1
      %s920 = smul.addr %s919, 4
      %s921 = scalar_lea.vmem %s3, %s920
      %p922 = scmp.lt.s32.totalorder %s70, 1
      %s923 = scalar_select %p922, %s70, 1
      %s924 = scalar_lea.vmem %s5, %s923
      %p925 = scmp.lt.s32.totalorder %s70, 1
      %s926 = scalar_select %p925, %s70, 1
      %s927 = smul.addr %s926, 4
      %s928 = scalar_lea.vmem %s59, %s927
      %v930 = vld [vmem:[%s917] sm:$0xf]
      %v931 = vunpack.c.l.bf16 %v930
      %v932 = vld [vmem:[%s921] sm:$0xf]
      %v933 = vlaneseq
      %v934 = vshrl.u32 %v933, 7
      %v935 = vlaneseq
      %v936 = vand.u32 %v935, 127
      %vm937 = vcmp.gt.s32.totalorder %v936, %v934
      %v938 = vsel %vm937, -1e+09, 0.0
      %v939 = vld [vmem:[%s924] sm:$0x1]
      %v941 = vlaneseq
      %v942 = vshrl.u32 %v941, 7
      %v943 = vsub.s32 0, %v942
      %v944 = vrot.slane %v939, %v943
      %v946 = vadd.f32 %v938, %v944
      %v947 = vld [vmem:[%s7] sm:$0xf]
      %v948 = vld [vmem:[%s7 + $0x4] sm:$0xf]
      %v949 = vld [vmem:[%s7 + $0x8] sm:$0xf]
      %v950 = vld [vmem:[%s7 + $0xc] sm:$0xf]
      %v951 = vld [vmem:[%s7 + $0x10] sm:$0xf]
      %v952 = vld [vmem:[%s7 + $0x14] sm:$0xf]
      %v953 = vld [vmem:[%s7 + $0x18] sm:$0xf]
      %v954 = vld [vmem:[%s7 + $0x1c] sm:$0xf]
      %v955 = vld [vmem:[%s7 + $0x20] sm:$0xf]
      %v956 = vld [vmem:[%s7 + $0x24] sm:$0xf]
      %v957 = vld [vmem:[%s7 + $0x28] sm:$0xf]
      %v958 = vld [vmem:[%s7 + $0x2c] sm:$0xf]
      %v959 = vld [vmem:[%s7 + $0x30] sm:$0xf]
      %v960 = vld [vmem:[%s7 + $0x34] sm:$0xf]
      %v961 = vld [vmem:[%s7 + $0x38] sm:$0xf]
      %v962 = vld [vmem:[%s7 + $0x3c] sm:$0xf]
      %v963 = vld [vmem:[%s9] sm:$0x1]
      %v964 = vld [vmem:[%s9 + $0x1] sm:$0x1]
      %v965 = vld [vmem:[%s9 + $0x2] sm:$0x1]
      %v966 = vld [vmem:[%s9 + $0x3] sm:$0x1]
      %v967 = vld [vmem:[%s11] sm:$0xf]
      %v968 = vld [vmem:[%s11 + $0x4] sm:$0xf]
      %v969 = vld [vmem:[%s11 + $0x8] sm:$0xf]
      %v970 = vld [vmem:[%s11 + $0xc] sm:$0xf]
      %v971 = vld [vmem:[%s11 + $0x10] sm:$0xf]
      %v972 = vld [vmem:[%s11 + $0x14] sm:$0xf]
      %v973 = vld [vmem:[%s11 + $0x18] sm:$0xf]
      %v974 = vld [vmem:[%s11 + $0x1c] sm:$0xf]
      %v975 = vld [vmem:[%s11 + $0x20] sm:$0xf]
      %v976 = vld [vmem:[%s11 + $0x24] sm:$0xf]
      %v977 = vld [vmem:[%s11 + $0x28] sm:$0xf]
      %v978 = vld [vmem:[%s11 + $0x2c] sm:$0xf]
      %v979 = vld [vmem:[%s11 + $0x30] sm:$0xf]
      %v980 = vld [vmem:[%s11 + $0x34] sm:$0xf]
      %v981 = vld [vmem:[%s11 + $0x38] sm:$0xf]
      %v982 = vld [vmem:[%s11 + $0x3c] sm:$0xf]
      %v983 = vld [vmem:[%s13] sm:$0x1]
      %v984 = vld [vmem:[%s13 + $0x1] sm:$0x1]
      %v985 = vld [vmem:[%s13 + $0x2] sm:$0x1]
      %v986 = vld [vmem:[%s13 + $0x3] sm:$0x1]
      %v987 = vld [vmem:[%s15] sm:$0xf]
      %v988 = vld [vmem:[%s15 + $0x4] sm:$0xf]
      %v989 = vld [vmem:[%s15 + $0x8] sm:$0xf]
      %v990 = vld [vmem:[%s15 + $0xc] sm:$0xf]
      %v991 = vld [vmem:[%s15 + $0x10] sm:$0xf]
      %v992 = vld [vmem:[%s15 + $0x14] sm:$0xf]
      %v993 = vld [vmem:[%s15 + $0x18] sm:$0xf]
      %v994 = vld [vmem:[%s15 + $0x1c] sm:$0xf]
      %v995 = vld [vmem:[%s15 + $0x20] sm:$0xf]
      %v996 = vld [vmem:[%s15 + $0x24] sm:$0xf]
      %v997 = vld [vmem:[%s15 + $0x28] sm:$0xf]
      %v998 = vld [vmem:[%s15 + $0x2c] sm:$0xf]
      %v999 = vld [vmem:[%s15 + $0x30] sm:$0xf]
      %v1000 = vld [vmem:[%s15 + $0x34] sm:$0xf]
      %v1001 = vld [vmem:[%s15 + $0x38] sm:$0xf]
      %v1002 = vld [vmem:[%s15 + $0x3c] sm:$0xf]
      %v1003 = vld [vmem:[%s17] sm:$0x1]
      %v1004 = vld [vmem:[%s17 + $0x1] sm:$0x1]
      %v1005 = vld [vmem:[%s17 + $0x2] sm:$0x1]
      %v1006 = vld [vmem:[%s17 + $0x3] sm:$0x1]
      %v1007 = vld [vmem:[%s19] sm:$0xf]
      %v1008 = vld [vmem:[%s19 + $0x4] sm:$0xf]
      %v1009 = vld [vmem:[%s19 + $0x8] sm:$0xf]
      %v1010 = vld [vmem:[%s19 + $0xc] sm:$0xf]
      %v1011 = vld [vmem:[%s21] sm:$0x1]
      %v1012 = vld [vmem:[%s23] sm:$0x1]
      %v1013 = vld [vmem:[%s25] sm:$0x1]
      %v1018 = vlaneseq
      %v1019 = vshrl.u32 %v1018, 7
      %v1020 = vsub.s32 0, %v1019
      %v1021 = vrot.slane %v963, %v1020
      %v1022 = vlaneseq
      %v1023 = vshrl.u32 %v1022, 7
      %v1024 = vsub.s32 0, %v1023
      %v1025 = vrot.slane %v964, %v1024
      %v1026 = vlaneseq
      %v1027 = vshrl.u32 %v1026, 7
      %v1028 = vsub.s32 0, %v1027
      %v1029 = vrot.slane %v965, %v1028
      %v1030 = vlaneseq
      %v1031 = vshrl.u32 %v1030, 7
      %v1032 = vsub.s32 0, %v1031
      %v1033 = vrot.slane %v966, %v1032
      %v1042 = vunpack.c.l.b16 %v947
      %v1043 = vunpack.c.l.b16 %v948
      %v1044 = vunpack.c.l.b16 %v949
      %v1045 = vunpack.c.l.b16 %v950
      %v1046 = vpack.c.b16 %v1043, %v1042
      %v1047 = vpack.c.b16 %v1045, %v1044
      %vm1050 = vcmask 261120
      %v1052 = vsel %vm1050, %v930, 0
      %1054 = vmatprep.subr.bf16.mxu0 0
      %1055 = vmatpush1.bf16.msra.mxu0 %v1046
      %1056 = vmatprep.subr.bf16.mxu0 0
      %1057 = vmatpush1.bf16.msra.mxu0 %v1047
      %1058 = vmatprep.subr.bf16.mxu0 0
      %1059 = vmatpush1.bf16.msra.mxu0 0
      %1060 = vmatprep.subr.bf16.mxu0 0
      %1061 = vmatpush1.bf16.msra.mxu0 0
      %1062 = vmatprep.subr.bf16.mxu0 0
      %1063 = vmatpush1.bf16.msra.mxu0 0
      %1064 = vmatprep.subr.bf16.mxu0 0
      %1065 = vmatpush1.bf16.msra.mxu0 0
      %1066 = vmatprep.subr.bf16.mxu0 0
      %1067 = vmatpush1.bf16.msra.mxu0 0
      %1068 = vmatprep.subr.bf16.mxu0 0
      %1069 = vmatpush1.bf16.msra.mxu0 0
      %1070 = vmatprep.subr.bf16.mxu0 0
      %1071 = vmatpush1.bf16.msra.mxu0 0
      %1072 = vmatprep.subr.bf16.mxu0 0
      %1073 = vmatpush1.bf16.msra.mxu0 0
      %1074 = vmatprep.subr.bf16.mxu0 0
      %1075 = vmatpush1.bf16.msra.mxu0 0
      %1076 = vmatprep.subr.bf16.mxu0 0
      %1077 = vmatpush1.bf16.msra.mxu0 0
      %1078 = vmatprep.subr.bf16.mxu0 0
      %1079 = vmatpush1.bf16.msra.mxu0 0
      %1080 = vmatprep.subr.bf16.mxu0 0
      %1081 = vmatpush1.bf16.msra.mxu0 0
      %1082 = vmatprep.subr.bf16.mxu0 0
      %1083 = vmatpush1.bf16.msra.mxu0 0
      %1084 = vmatprep.subr.bf16.mxu0 0
      %1085 = vmatpush1.bf16.msra.mxu0 0
      %1086 = vmatprep.mubr.bf16.mxu0 0
      %1087 = vmatmul.mubr.bf16.gmra.mrb[0].mxu0 %v1052
      %v1088 = vpop.f32.mrb[0].mxu0
      %v1089 = vadd.f32 %v1021, %v1088
      %v1090 = vpop.f32.mrb[0].mxu0
      %v1091 = vpop.f32.mrb[0].mxu0
      %v1092 = vpop.f32.mrb[0].mxu0
      %1093 = vdwg.mxu0
      %v1098 = vunpack.c.l.b16 %v951
      %v1099 = vunpack.c.l.b16 %v952
      %v1100 = vunpack.c.l.b16 %v953
      %v1101 = vunpack.c.l.b16 %v954
      %v1102 = vpack.c.b16 %v1099, %v1098
      %v1103 = vpack.c.b16 %v1101, %v1100
      %1106 = vmatprep.subr.bf16.mxu0 0
      %1107 = vmatpush1.bf16.msra.mxu0 %v1102
      %1108 = vmatprep.subr.bf16.mxu0 0
      %1109 = vmatpush1.bf16.msra.mxu0 %v1103
      %1110 = vmatprep.subr.bf16.mxu0 0
      %1111 = vmatpush1.bf16.msra.mxu0 0
      %1112 = vmatprep.subr.bf16.mxu0 0
      %1113 = vmatpush1.bf16.msra.mxu0 0
      %1114 = vmatprep.subr.bf16.mxu0 0
      %1115 = vmatpush1.bf16.msra.mxu0 0
      %1116 = vmatprep.subr.bf16.mxu0 0
      %1117 = vmatpush1.bf16.msra.mxu0 0
      %1118 = vmatprep.subr.bf16.mxu0 0
      %1119 = vmatpush1.bf16.msra.mxu0 0
      %1120 = vmatprep.subr.bf16.mxu0 0
      %1121 = vmatpush1.bf16.msra.mxu0 0
      %1122 = vmatprep.subr.bf16.mxu0 0
      %1123 = vmatpush1.bf16.msra.mxu0 0
      %1124 = vmatprep.subr.bf16.mxu0 0
      %1125 = vmatpush1.bf16.msra.mxu0 0
      %1126 = vmatprep.subr.bf16.mxu0 0
      %1127 = vmatpush1.bf16.msra.mxu0 0
      %1128 = vmatprep.subr.bf16.mxu0 0
      %1129 = vmatpush1.bf16.msra.mxu0 0
      %1130 = vmatprep.subr.bf16.mxu0 0
      %1131 = vmatpush1.bf16.msra.mxu0 0
      %1132 = vmatprep.subr.bf16.mxu0 0
      %1133 = vmatpush1.bf16.msra.mxu0 0
      %1134 = vmatprep.subr.bf16.mxu0 0
      %1135 = vmatpush1.bf16.msra.mxu0 0
      %1136 = vmatprep.subr.bf16.mxu0 0
      %1137 = vmatpush1.bf16.msra.mxu0 0
      %1138 = vmatprep.mubr.bf16.mxu0 0
      %1139 = vmatmul.mubr.bf16.gmra.mrb[0].mxu0 %v1052
      %v1140 = vpop.f32.mrb[0].mxu0
      %v1141 = vadd.f32 %v1025, %v1140
      %v1142 = vpop.f32.mrb[0].mxu0
      %v1143 = vpop.f32.mrb[0].mxu0
      %v1144 = vpop.f32.mrb[0].mxu0
      %1145 = vdwg.mxu0
      %v1150 = vunpack.c.l.b16 %v955
      %v1151 = vunpack.c.l.b16 %v956
      %v1152 = vunpack.c.l.b16 %v957
      %v1153 = vunpack.c.l.b16 %v958
      %v1154 = vpack.c.b16 %v1151, %v1150
      %v1155 = vpack.c.b16 %v1153, %v1152
      %1158 = vmatprep.subr.bf16.mxu0 0
      %1159 = vmatpush1.bf16.msra.mxu0 %v1154
      %1160 = vmatprep.subr.bf16.mxu0 0
      %1161 = vmatpush1.bf16.msra.mxu0 %v1155
      %1162 = vmatprep.subr.bf16.mxu0 0
      %1163 = vmatpush1.bf16.msra.mxu0 0
      %1164 = vmatprep.subr.bf16.mxu0 0
      %1165 = vmatpush1.bf16.msra.mxu0 0
      %1166 = vmatprep.subr.bf16.mxu0 0
      %1167 = vmatpush1.bf16.msra.mxu0 0
      %1168 = vmatprep.subr.bf16.mxu0 0
      %1169 = vmatpush1.bf16.msra.mxu0 0
      %1170 = vmatprep.subr.bf16.mxu0 0
      %1171 = vmatpush1.bf16.msra.mxu0 0
      %1172 = vmatprep.subr.bf16.mxu0 0
      %1173 = vmatpush1.bf16.msra.mxu0 0
      %1174 = vmatprep.subr.bf16.mxu0 0
      %1175 = vmatpush1.bf16.msra.mxu0 0
      %1176 = vmatprep.subr.bf16.mxu0 0
      %1177 = vmatpush1.bf16.msra.mxu0 0
      %1178 = vmatprep.subr.bf16.mxu0 0
      %1179 = vmatpush1.bf16.msra.mxu0 0
      %1180 = vmatprep.subr.bf16.mxu0 0
      %1181 = vmatpush1.bf16.msra.mxu0 0
      %1182 = vmatprep.subr.bf16.mxu0 0
      %1183 = vmatpush1.bf16.msra.mxu0 0
      %1184 = vmatprep.subr.bf16.mxu0 0
      %1185 = vmatpush1.bf16.msra.mxu0 0
      %1186 = vmatprep.subr.bf16.mxu0 0
      %1187 = vmatpush1.bf16.msra.mxu0 0
      %1188 = vmatprep.subr.bf16.mxu0 0
      %1189 = vmatpush1.bf16.msra.mxu0 0
      %1190 = vmatprep.mubr.bf16.mxu0 0
      %1191 = vmatmul.mubr.bf16.gmra.mrb[0].mxu0 %v1052
      %v1192 = vpop.f32.mrb[0].mxu0
      %v1193 = vadd.f32 %v1029, %v1192
      %v1194 = vpop.f32.mrb[0].mxu0
      %v1195 = vpop.f32.mrb[0].mxu0
      %v1196 = vpop.f32.mrb[0].mxu0
      %1197 = vdwg.mxu0
      %v1202 = vunpack.c.l.b16 %v959
      %v1203 = vunpack.c.l.b16 %v960
      %v1204 = vunpack.c.l.b16 %v961
      %v1205 = vunpack.c.l.b16 %v962
      %v1206 = vpack.c.b16 %v1203, %v1202
      %v1207 = vpack.c.b16 %v1205, %v1204
      %1210 = vmatprep.subr.bf16.mxu0 0
      %1211 = vmatpush1.bf16.msra.mxu0 %v1206
      %1212 = vmatprep.subr.bf16.mxu0 0
      %1213 = vmatpush1.bf16.msra.mxu0 %v1207
      %1214 = vmatprep.subr.bf16.mxu0 0
      %1215 = vmatpush1.bf16.msra.mxu0 0
      %1216 = vmatprep.subr.bf16.mxu0 0
      %1217 = vmatpush1.bf16.msra.mxu0 0
      %1218 = vmatprep.subr.bf16.mxu0 0
      %1219 = vmatpush1.bf16.msra.mxu0 0
      %1220 = vmatprep.subr.bf16.mxu0 0
      %1221 = vmatpush1.bf16.msra.mxu0 0
      %1222 = vmatprep.subr.bf16.mxu0 0
      %1223 = vmatpush1.bf16.msra.mxu0 0
      %1224 = vmatprep.subr.bf16.mxu0 0
      %1225 = vmatpush1.bf16.msra.mxu0 0
      %1226 = vmatprep.subr.bf16.mxu0 0
      %1227 = vmatpush1.bf16.msra.mxu0 0
      %1228 = vmatprep.subr.bf16.mxu0 0
      %1229 = vmatpush1.bf16.msra.mxu0 0
      %1230 = vmatprep.subr.bf16.mxu0 0
      %1231 = vmatpush1.bf16.msra.mxu0 0
      %1232 = vmatprep.subr.bf16.mxu0 0
      %1233 = vmatpush1.bf16.msra.mxu0 0
      %1234 = vmatprep.subr.bf16.mxu0 0
      %1235 = vmatpush1.bf16.msra.mxu0 0
      %1236 = vmatprep.subr.bf16.mxu0 0
      %1237 = vmatpush1.bf16.msra.mxu0 0
      %1238 = vmatprep.subr.bf16.mxu0 0
      %1239 = vmatpush1.bf16.msra.mxu0 0
      %1240 = vmatprep.subr.bf16.mxu0 0
      %1241 = vmatpush1.bf16.msra.mxu0 0
      %1242 = vmatprep.mubr.bf16.mxu0 0
      %1243 = vmatmul.mubr.bf16.gmra.mrb[0].mxu0 %v1052
      %v1244 = vpop.f32.mrb[0].mxu0
      %v1245 = vadd.f32 %v1033, %v1244
      %v1246 = vpop.f32.mrb[0].mxu0
      %v1247 = vpop.f32.mrb[0].mxu0
      %v1248 = vpop.f32.mrb[0].mxu0
      %1249 = vdwg.mxu0
      %v1254 = vlaneseq
      %v1255 = vshrl.u32 %v1254, 7
      %v1256 = vsub.s32 0, %v1255
      %v1257 = vrot.slane %v983, %v1256
      %v1258 = vlaneseq
      %v1259 = vshrl.u32 %v1258, 7
      %v1260 = vsub.s32 0, %v1259
      %v1261 = vrot.slane %v984, %v1260
      %v1262 = vlaneseq
      %v1263 = vshrl.u32 %v1262, 7
      %v1264 = vsub.s32 0, %v1263
      %v1265 = vrot.slane %v985, %v1264
      %v1266 = vlaneseq
      %v1267 = vshrl.u32 %v1266, 7
      %v1268 = vsub.s32 0, %v1267
      %v1269 = vrot.slane %v986, %v1268
      %v1278 = vunpack.c.l.b16 %v967
      %v1279 = vunpack.c.l.b16 %v968
      %v1280 = vunpack.c.l.b16 %v969
      %v1281 = vunpack.c.l.b16 %v970
      %v1282 = vpack.c.b16 %v1279, %v1278
      %v1283 = vpack.c.b16 %v1281, %v1280
      %1286 = vmatprep.subr.bf16.mxu0 0
      %1287 = vmatpush1.bf16.msra.mxu0 %v1282
      %1288 = vmatprep.subr.bf16.mxu0 0
      %1289 = vmatpush1.bf16.msra.mxu0 %v1283
      %1290 = vmatprep.subr.bf16.mxu0 0
      %1291 = vmatpush1.bf16.msra.mxu0 0
      %1292 = vmatprep.subr.bf16.mxu0 0
      %1293 = vmatpush1.bf16.msra.mxu0 0
      %1294 = vmatprep.subr.bf16.mxu0 0
      %1295 = vmatpush1.bf16.msra.mxu0 0
      %1296 = vmatprep.subr.bf16.mxu0 0
      %1297 = vmatpush1.bf16.msra.mxu0 0
      %1298 = vmatprep.subr.bf16.mxu0 0
      %1299 = vmatpush1.bf16.msra.mxu0 0
      %1300 = vmatprep.subr.bf16.mxu0 0
      %1301 = vmatpush1.bf16.msra.mxu0 0
      %1302 = vmatprep.subr.bf16.mxu0 0
      %1303 = vmatpush1.bf16.msra.mxu0 0
      %1304 = vmatprep.subr.bf16.mxu0 0
      %1305 = vmatpush1.bf16.msra.mxu0 0
      %1306 = vmatprep.subr.bf16.mxu0 0
      %1307 = vmatpush1.bf16.msra.mxu0 0
      %1308 = vmatprep.subr.bf16.mxu0 0
      %1309 = vmatpush1.bf16.msra.mxu0 0
      %1310 = vmatprep.subr.bf16.mxu0 0
      %1311 = vmatpush1.bf16.msra.mxu0 0
      %1312 = vmatprep.subr.bf16.mxu0 0
      %1313 = vmatpush1.bf16.msra.mxu0 0
      %1314 = vmatprep.subr.bf16.mxu0 0
      %1315 = vmatpush1.bf16.msra.mxu0 0
      %1316 = vmatprep.subr.bf16.mxu0 0
      %1317 = vmatpush1.bf16.msra.mxu0 0
      %1318 = vmatprep.mubr.bf16.mxu0 0
      %1319 = vmatmul.mubr.bf16.gmra.mrb[0].mxu0 %v1052
      %v1320 = vpop.f32.mrb[0].mxu0
      %v1321 = vadd.f32 %v1257, %v1320
      %v1322 = vpop.f32.mrb[0].mxu0
      %v1323 = vpop.f32.mrb[0].mxu0
      %v1324 = vpop.f32.mrb[0].mxu0
      %1325 = vdwg.mxu0
      %v1330 = vunpack.c.l.b16 %v971
      %v1331 = vunpack.c.l.b16 %v972
      %v1332 = vunpack.c.l.b16 %v973
      %v1333 = vunpack.c.l.b16 %v974
      %v1334 = vpack.c.b16 %v1331, %v1330
      %v1335 = vpack.c.b16 %v1333, %v1332
      %1338 = vmatprep.subr.bf16.mxu0 0
      %1339 = vmatpush1.bf16.msra.mxu0 %v1334
      %1340 = vmatprep.subr.bf16.mxu0 0
      %1341 = vmatpush1.bf16.msra.mxu0 %v1335
      %1342 = vmatprep.subr.bf16.mxu0 0
      %1343 = vmatpush1.bf16.msra.mxu0 0
      %1344 = vmatprep.subr.bf16.mxu0 0
      %1345 = vmatpush1.bf16.msra.mxu0 0
      %1346 = vmatprep.subr.bf16.mxu0 0
      %1347 = vmatpush1.bf16.msra.mxu0 0
      %1348 = vmatprep.subr.bf16.mxu0 0
      %1349 = vmatpush1.bf16.msra.mxu0 0
      %1350 = vmatprep.subr.bf16.mxu0 0
      %1351 = vmatpush1.bf16.msra.mxu0 0
      %1352 = vmatprep.subr.bf16.mxu0 0
      %1353 = vmatpush1.bf16.msra.mxu0 0
      %1354 = vmatprep.subr.bf16.mxu0 0
      %1355 = vmatpush1.bf16.msra.mxu0 0
      %1356 = vmatprep.subr.bf16.mxu0 0
      %1357 = vmatpush1.bf16.msra.mxu0 0
      %1358 = vmatprep.subr.bf16.mxu0 0
      %1359 = vmatpush1.bf16.msra.mxu0 0
      %1360 = vmatprep.subr.bf16.mxu0 0
      %1361 = vmatpush1.bf16.msra.mxu0 0
      %1362 = vmatprep.subr.bf16.mxu0 0
      %1363 = vmatpush1.bf16.msra.mxu0 0
      %1364 = vmatprep.subr.bf16.mxu0 0
      %1365 = vmatpush1.bf16.msra.mxu0 0
      %1366 = vmatprep.subr.bf16.mxu0 0
      %1367 = vmatpush1.bf16.msra.mxu0 0
      %1368 = vmatprep.subr.bf16.mxu0 0
      %1369 = vmatpush1.bf16.msra.mxu0 0
      %1370 = vmatprep.mubr.bf16.mxu0 0
      %1371 = vmatmul.mubr.bf16.gmra.mrb[0].mxu0 %v1052
      %v1372 = vpop.f32.mrb[0].mxu0
      %v1373 = vadd.f32 %v1261, %v1372
      %v1374 = vpop.f32.mrb[0].mxu0
      %v1375 = vpop.f32.mrb[0].mxu0
      %v1376 = vpop.f32.mrb[0].mxu0
      %1377 = vdwg.mxu0
      %v1382 = vunpack.c.l.b16 %v975
      %v1383 = vunpack.c.l.b16 %v976
      %v1384 = vunpack.c.l.b16 %v977
      %v1385 = vunpack.c.l.b16 %v978
      %v1386 = vpack.c.b16 %v1383, %v1382
      %v1387 = vpack.c.b16 %v1385, %v1384
      %1390 = vmatprep.subr.bf16.mxu0 0
      %1391 = vmatpush1.bf16.msra.mxu0 %v1386
      %1392 = vmatprep.subr.bf16.mxu0 0
      %1393 = vmatpush1.bf16.msra.mxu0 %v1387
      %1394 = vmatprep.subr.bf16.mxu0 0
      %1395 = vmatpush1.bf16.msra.mxu0 0
      %1396 = vmatprep.subr.bf16.mxu0 0
      %1397 = vmatpush1.bf16.msra.mxu0 0
      %1398 = vmatprep.subr.bf16.mxu0 0
      %1399 = vmatpush1.bf16.msra.mxu0 0
      %1400 = vmatprep.subr.bf16.mxu0 0
      %1401 = vmatpush1.bf16.msra.mxu0 0
      %1402 = vmatprep.subr.bf16.mxu0 0
      %1403 = vmatpush1.bf16.msra.mxu0 0
      %1404 = vmatprep.subr.bf16.mxu0 0
      %1405 = vmatpush1.bf16.msra.mxu0 0
      %1406 = vmatprep.subr.bf16.mxu0 0
      %1407 = vmatpush1.bf16.msra.mxu0 0
      %1408 = vmatprep.subr.bf16.mxu0 0
      %1409 = vmatpush1.bf16.msra.mxu0 0
      %1410 = vmatprep.subr.bf16.mxu0 0
      %1411 = vmatpush1.bf16.msra.mxu0 0
      %1412 = vmatprep.subr.bf16.mxu0 0
      %1413 = vmatpush1.bf16.msra.mxu0 0
      %1414 = vmatprep.subr.bf16.mxu0 0
      %1415 = vmatpush1.bf16.msra.mxu0 0
      %1416 = vmatprep.subr.bf16.mxu0 0
      %1417 = vmatpush1.bf16.msra.mxu0 0
      %1418 = vmatprep.subr.bf16.mxu0 0
      %1419 = vmatpush1.bf16.msra.mxu0 0
      %1420 = vmatprep.subr.bf16.mxu0 0
      %1421 = vmatpush1.bf16.msra.mxu0 0
      %1422 = vmatprep.mubr.bf16.mxu0 0
      %1423 = vmatmul.mubr.bf16.gmra.mrb[0].mxu0 %v1052
      %v1424 = vpop.f32.mrb[0].mxu0
      %v1425 = vadd.f32 %v1265, %v1424
      %v1426 = vpop.f32.mrb[0].mxu0
      %v1427 = vpop.f32.mrb[0].mxu0
      %v1428 = vpop.f32.mrb[0].mxu0
      %1429 = vdwg.mxu0
      %v1434 = vunpack.c.l.b16 %v979
      %v1435 = vunpack.c.l.b16 %v980
      %v1436 = vunpack.c.l.b16 %v981
      %v1437 = vunpack.c.l.b16 %v982
      %v1438 = vpack.c.b16 %v1435, %v1434
      %v1439 = vpack.c.b16 %v1437, %v1436
      %1442 = vmatprep.subr.bf16.mxu0 0
      %1443 = vmatpush1.bf16.msra.mxu0 %v1438
      %1444 = vmatprep.subr.bf16.mxu0 0
      %1445 = vmatpush1.bf16.msra.mxu0 %v1439
      %1446 = vmatprep.subr.bf16.mxu0 0
      %1447 = vmatpush1.bf16.msra.mxu0 0
      %1448 = vmatprep.subr.bf16.mxu0 0
      %1449 = vmatpush1.bf16.msra.mxu0 0
      %1450 = vmatprep.subr.bf16.mxu0 0
      %1451 = vmatpush1.bf16.msra.mxu0 0
      %1452 = vmatprep.subr.bf16.mxu0 0
      %1453 = vmatpush1.bf16.msra.mxu0 0
      %1454 = vmatprep.subr.bf16.mxu0 0
      %1455 = vmatpush1.bf16.msra.mxu0 0
      %1456 = vmatprep.subr.bf16.mxu0 0
      %1457 = vmatpush1.bf16.msra.mxu0 0
      %1458 = vmatprep.subr.bf16.mxu0 0
      %1459 = vmatpush1.bf16.msra.mxu0 0
      %1460 = vmatprep.subr.bf16.mxu0 0
      %1461 = vmatpush1.bf16.msra.mxu0 0
      %1462 = vmatprep.subr.bf16.mxu0 0
      %1463 = vmatpush1.bf16.msra.mxu0 0
      %1464 = vmatprep.subr.bf16.mxu0 0
      %1465 = vmatpush1.bf16.msra.mxu0 0
      %1466 = vmatprep.subr.bf16.mxu0 0
      %1467 = vmatpush1.bf16.msra.mxu0 0
      %1468 = vmatprep.subr.bf16.mxu0 0
      %1469 = vmatpush1.bf16.msra.mxu0 0
      %1470 = vmatprep.subr.bf16.mxu0 0
      %1471 = vmatpush1.bf16.msra.mxu0 0
      %1472 = vmatprep.subr.bf16.mxu0 0
      %1473 = vmatpush1.bf16.msra.mxu0 0
      %1474 = vmatprep.mubr.bf16.mxu0 0
      %1475 = vmatmul.mubr.bf16.gmra.mrb[0].mxu0 %v1052
      %v1476 = vpop.f32.mrb[0].mxu0
      %v1477 = vadd.f32 %v1269, %v1476
      %v1478 = vpop.f32.mrb[0].mxu0
      %v1479 = vpop.f32.mrb[0].mxu0
      %v1480 = vpop.f32.mrb[0].mxu0
      %1481 = vdwg.mxu0
      %v1486 = vlaneseq
      %v1487 = vshrl.u32 %v1486, 7
      %v1488 = vsub.s32 0, %v1487
      %v1489 = vrot.slane %v1003, %v1488
      %v1490 = vlaneseq
      %v1491 = vshrl.u32 %v1490, 7
      %v1492 = vsub.s32 0, %v1491
      %v1493 = vrot.slane %v1004, %v1492
      %v1494 = vlaneseq
      %v1495 = vshrl.u32 %v1494, 7
      %v1496 = vsub.s32 0, %v1495
      %v1497 = vrot.slane %v1005, %v1496
      %v1498 = vlaneseq
      %v1499 = vshrl.u32 %v1498, 7
      %v1500 = vsub.s32 0, %v1499
      %v1501 = vrot.slane %v1006, %v1500
      %v1510 = vunpack.c.l.b16 %v987
      %v1511 = vunpack.c.l.b16 %v988
      %v1512 = vunpack.c.l.b16 %v989
      %v1513 = vunpack.c.l.b16 %v990
      %v1514 = vpack.c.b16 %v1511, %v1510
      %v1515 = vpack.c.b16 %v1513, %v1512
      %1518 = vmatprep.subr.bf16.mxu0 0
      %1519 = vmatpush1.bf16.msra.mxu0 %v1514
      %1520 = vmatprep.subr.bf16.mxu0 0
      %1521 = vmatpush1.bf16.msra.mxu0 %v1515
      %1522 = vmatprep.subr.bf16.mxu0 0
      %1523 = vmatpush1.bf16.msra.mxu0 0
      %1524 = vmatprep.subr.bf16.mxu0 0
      %1525 = vmatpush1.bf16.msra.mxu0 0
      %1526 = vmatprep.subr.bf16.mxu0 0
      %1527 = vmatpush1.bf16.msra.mxu0 0
      %1528 = vmatprep.subr.bf16.mxu0 0
      %1529 = vmatpush1.bf16.msra.mxu0 0
      %1530 = vmatprep.subr.bf16.mxu0 0
      %1531 = vmatpush1.bf16.msra.mxu0 0
      %1532 = vmatprep.subr.bf16.mxu0 0
      %1533 = vmatpush1.bf16.msra.mxu0 0
      %1534 = vmatprep.subr.bf16.mxu0 0
      %1535 = vmatpush1.bf16.msra.mxu0 0
      %1536 = vmatprep.subr.bf16.mxu0 0
      %1537 = vmatpush1.bf16.msra.mxu0 0
      %1538 = vmatprep.subr.bf16.mxu0 0
      %1539 = vmatpush1.bf16.msra.mxu0 0
      %1540 = vmatprep.subr.bf16.mxu0 0
      %1541 = vmatpush1.bf16.msra.mxu0 0
      %1542 = vmatprep.subr.bf16.mxu0 0
      %1543 = vmatpush1.bf16.msra.mxu0 0
      %1544 = vmatprep.subr.bf16.mxu0 0
      %1545 = vmatpush1.bf16.msra.mxu0 0
      %1546 = vmatprep.subr.bf16.mxu0 0
      %1547 = vmatpush1.bf16.msra.mxu0 0
      %1548 = vmatprep.subr.bf16.mxu0 0
      %1549 = vmatpush1.bf16.msra.mxu0 0
      %1550 = vmatprep.mubr.bf16.mxu0 0
      %1551 = vmatmul.mubr.bf16.gmra.mrb[0].mxu0 %v1052
      %v1552 = vpop.f32.mrb[0].mxu0
      %v1553 = vadd.f32 %v1489, %v1552
      %v1554 = vpop.f32.mrb[0].mxu0
      %v1555 = vpop.f32.mrb[0].mxu0
      %v1556 = vpop.f32.mrb[0].mxu0
      %1557 = vdwg.mxu0
      %v1562 = vunpack.c.l.b16 %v991
      %v1563 = vunpack.c.l.b16 %v992
      %v1564 = vunpack.c.l.b16 %v993
      %v1565 = vunpack.c.l.b16 %v994
      %v1566 = vpack.c.b16 %v1563, %v1562
      %v1567 = vpack.c.b16 %v1565, %v1564
      %1570 = vmatprep.subr.bf16.mxu0 0
      %1571 = vmatpush1.bf16.msra.mxu0 %v1566
      %1572 = vmatprep.subr.bf16.mxu0 0
      %1573 = vmatpush1.bf16.msra.mxu0 %v1567
      %1574 = vmatprep.subr.bf16.mxu0 0
      %1575 = vmatpush1.bf16.msra.mxu0 0
      %1576 = vmatprep.subr.bf16.mxu0 0
      %1577 = vmatpush1.bf16.msra.mxu0 0
      %1578 = vmatprep.subr.bf16.mxu0 0
      %1579 = vmatpush1.bf16.msra.mxu0 0
      %1580 = vmatprep.subr.bf16.mxu0 0
      %1581 = vmatpush1.bf16.msra.mxu0 0
      %1582 = vmatprep.subr.bf16.mxu0 0
      %1583 = vmatpush1.bf16.msra.mxu0 0
      %1584 = vmatprep.subr.bf16.mxu0 0
      %1585 = vmatpush1.bf16.msra.mxu0 0
      %1586 = vmatprep.subr.bf16.mxu0 0
      %1587 = vmatpush1.bf16.msra.mxu0 0
      %1588 = vmatprep.subr.bf16.mxu0 0
      %1589 = vmatpush1.bf16.msra.mxu0 0
      %1590 = vmatprep.subr.bf16.mxu0 0
      %1591 = vmatpush1.bf16.msra.mxu0 0
      %1592 = vmatprep.subr.bf16.mxu0 0
      %1593 = vmatpush1.bf16.msra.mxu0 0
      %1594 = vmatprep.subr.bf16.mxu0 0
      %1595 = vmatpush1.bf16.msra.mxu0 0
      %1596 = vmatprep.subr.bf16.mxu0 0
      %1597 = vmatpush1.bf16.msra.mxu0 0
      %1598 = vmatprep.subr.bf16.mxu0 0
      %1599 = vmatpush1.bf16.msra.mxu0 0
      %1600 = vmatprep.subr.bf16.mxu0 0
      %1601 = vmatpush1.bf16.msra.mxu0 0
      %1602 = vmatprep.mubr.bf16.mxu0 0
      %1603 = vmatmul.mubr.bf16.gmra.mrb[0].mxu0 %v1052
      %v1604 = vpop.f32.mrb[0].mxu0
      %v1605 = vadd.f32 %v1493, %v1604
      %v1606 = vpop.f32.mrb[0].mxu0
      %v1607 = vpop.f32.mrb[0].mxu0
      %v1608 = vpop.f32.mrb[0].mxu0
      %1609 = vdwg.mxu0
      %v1614 = vunpack.c.l.b16 %v995
      %v1615 = vunpack.c.l.b16 %v996
      %v1616 = vunpack.c.l.b16 %v997
      %v1617 = vunpack.c.l.b16 %v998
      %v1618 = vpack.c.b16 %v1615, %v1614
      %v1619 = vpack.c.b16 %v1617, %v1616
      %1622 = vmatprep.subr.bf16.mxu0 0
      %1623 = vmatpush1.bf16.msra.mxu0 %v1618
      %1624 = vmatprep.subr.bf16.mxu0 0
      %1625 = vmatpush1.bf16.msra.mxu0 %v1619
      %1626 = vmatprep.subr.bf16.mxu0 0
      %1627 = vmatpush1.bf16.msra.mxu0 0
      %1628 = vmatprep.subr.bf16.mxu0 0
      %1629 = vmatpush1.bf16.msra.mxu0 0
      %1630 = vmatprep.subr.bf16.mxu0 0
      %1631 = vmatpush1.bf16.msra.mxu0 0
      %1632 = vmatprep.subr.bf16.mxu0 0
      %1633 = vmatpush1.bf16.msra.mxu0 0
      %1634 = vmatprep.subr.bf16.mxu0 0
      %1635 = vmatpush1.bf16.msra.mxu0 0
      %1636 = vmatprep.subr.bf16.mxu0 0
      %1637 = vmatpush1.bf16.msra.mxu0 0
      %1638 = vmatprep.subr.bf16.mxu0 0
      %1639 = vmatpush1.bf16.msra.mxu0 0
      %1640 = vmatprep.subr.bf16.mxu0 0
      %1641 = vmatpush1.bf16.msra.mxu0 0
      %1642 = vmatprep.subr.bf16.mxu0 0
      %1643 = vmatpush1.bf16.msra.mxu0 0
      %1644 = vmatprep.subr.bf16.mxu0 0
      %1645 = vmatpush1.bf16.msra.mxu0 0
      %1646 = vmatprep.subr.bf16.mxu0 0
      %1647 = vmatpush1.bf16.msra.mxu0 0
      %1648 = vmatprep.subr.bf16.mxu0 0
      %1649 = vmatpush1.bf16.msra.mxu0 0
      %1650 = vmatprep.subr.bf16.mxu0 0
      %1651 = vmatpush1.bf16.msra.mxu0 0
      %1652 = vmatprep.subr.bf16.mxu0 0
      %1653 = vmatpush1.bf16.msra.mxu0 0
      %1654 = vmatprep.mubr.bf16.mxu0 0
      %1655 = vmatmul.mubr.bf16.gmra.mrb[0].mxu0 %v1052
      %v1656 = vpop.f32.mrb[0].mxu0
      %v1657 = vadd.f32 %v1497, %v1656
      %v1658 = vpop.f32.mrb[0].mxu0
      %v1659 = vpop.f32.mrb[0].mxu0
      %v1660 = vpop.f32.mrb[0].mxu0
      %1661 = vdwg.mxu0
      %v1666 = vunpack.c.l.b16 %v999
      %v1667 = vunpack.c.l.b16 %v1000
      %v1668 = vunpack.c.l.b16 %v1001
      %v1669 = vunpack.c.l.b16 %v1002
      %v1670 = vpack.c.b16 %v1667, %v1666
      %v1671 = vpack.c.b16 %v1669, %v1668
      %1674 = vmatprep.subr.bf16.mxu0 0
      %1675 = vmatpush1.bf16.msra.mxu0 %v1670
      %1676 = vmatprep.subr.bf16.mxu0 0
      %1677 = vmatpush1.bf16.msra.mxu0 %v1671
      %1678 = vmatprep.subr.bf16.mxu0 0
      %1679 = vmatpush1.bf16.msra.mxu0 0
      %1680 = vmatprep.subr.bf16.mxu0 0
      %1681 = vmatpush1.bf16.msra.mxu0 0
      %1682 = vmatprep.subr.bf16.mxu0 0
      %1683 = vmatpush1.bf16.msra.mxu0 0
      %1684 = vmatprep.subr.bf16.mxu0 0
      %1685 = vmatpush1.bf16.msra.mxu0 0
      %1686 = vmatprep.subr.bf16.mxu0 0
      %1687 = vmatpush1.bf16.msra.mxu0 0
      %1688 = vmatprep.subr.bf16.mxu0 0
      %1689 = vmatpush1.bf16.msra.mxu0 0
      %1690 = vmatprep.subr.bf16.mxu0 0
      %1691 = vmatpush1.bf16.msra.mxu0 0
      %1692 = vmatprep.subr.bf16.mxu0 0
      %1693 = vmatpush1.bf16.msra.mxu0 0
      %1694 = vmatprep.subr.bf16.mxu0 0
      %1695 = vmatpush1.bf16.msra.mxu0 0
      %1696 = vmatprep.subr.bf16.mxu0 0
      %1697 = vmatpush1.bf16.msra.mxu0 0
      %1698 = vmatprep.subr.bf16.mxu0 0
      %1699 = vmatpush1.bf16.msra.mxu0 0
      %1700 = vmatprep.subr.bf16.mxu0 0
      %1701 = vmatpush1.bf16.msra.mxu0 0
      %1702 = vmatprep.subr.bf16.mxu0 0
      %1703 = vmatpush1.bf16.msra.mxu0 0
      %1704 = vmatprep.subr.bf16.mxu0 0
      %1705 = vmatpush1.bf16.msra.mxu0 0
      %1706 = vmatprep.mubr.bf16.mxu0 0
      %1707 = vmatmul.mubr.bf16.gmra.mrb[0].mxu0 %v1052
      %v1708 = vpop.f32.mrb[0].mxu0
      %v1709 = vadd.f32 %v1501, %v1708
      %v1710 = vpop.f32.mrb[0].mxu0
      %v1711 = vpop.f32.mrb[0].mxu0
      %v1712 = vpop.f32.mrb[0].mxu0
      %1713 = vdwg.mxu0
      %v1714 = vpack.c.bf16 %v1089, %v1089
      %v1715 = vpack.c.bf16 %v1141, %v1141
      %v1716 = vpack.c.bf16 %v1193, %v1193
      %v1717 = vpack.c.bf16 %v1245, %v1245
      %v1718 = vpack.c.bf16 %v1321, %v1321
      %v1719 = vpack.c.bf16 %v1373, %v1373
      %v1720 = vpack.c.bf16 %v1425, %v1425
      %v1721 = vpack.c.bf16 %v1477, %v1477
      %vm1722 = vcmask 64512
      %v1724 = vsel %vm1722, %v1714, 0
      %v1727 = vsel %vm1722, %v1718, 0
      %1729 = vmatprep.subr.bf16.mxu0 0
      %1730 = vmatpush1.bf16.xpose.msra.mxu0 %v1727
      %1731 = vmatprep.subr.bf16.mxu0 0
      %1732 = vmatpush1.bf16.xpose.msra.mxu0 0
      %1733 = vmatprep.subr.bf16.mxu0 0
      %1734 = vmatpush1.bf16.xpose.msra.mxu0 0
      %1735 = vmatprep.subr.bf16.mxu0 0
      %1736 = vmatpush1.bf16.xpose.msra.mxu0 0
      %1737 = vmatprep.subr.bf16.mxu0 0
      %1738 = vmatpush1.bf16.xpose.msra.mxu0 0
      %1739 = vmatprep.subr.bf16.mxu0 0
      %1740 = vmatpush1.bf16.xpose.msra.mxu0 0
      %1741 = vmatprep.subr.bf16.mxu0 0
      %1742 = vmatpush1.bf16.xpose.msra.mxu0 0
      %1743 = vmatprep.subr.bf16.mxu0 0
      %1744 = vmatpush1.bf16.xpose.msra.mxu0 0
      %1745 = vmatprep.subr.bf16.mxu0 0
      %1746 = vmatpush1.bf16.xpose.msra.mxu0 0
      %1747 = vmatprep.subr.bf16.mxu0 0
      %1748 = vmatpush1.bf16.xpose.msra.mxu0 0
      %1749 = vmatprep.subr.bf16.mxu0 0
      %1750 = vmatpush1.bf16.xpose.msra.mxu0 0
      %1751 = vmatprep.subr.bf16.mxu0 0
      %1752 = vmatpush1.bf16.xpose.msra.mxu0 0
      %1753 = vmatprep.subr.bf16.mxu0 0
      %1754 = vmatpush1.bf16.xpose.msra.mxu0 0
      %1755 = vmatprep.subr.bf16.mxu0 0
      %1756 = vmatpush1.bf16.xpose.msra.mxu0 0
      %1757 = vmatprep.subr.bf16.mxu0 0
      %1758 = vmatpush1.bf16.xpose.msra.mxu0 0
      %1759 = vmatprep.subr.bf16.mxu0 0
      %1760 = vmatpush1.bf16.xpose.msra.mxu0 0
      %1761 = vmatprep.mubr.bf16.mxu0 0
      %1762 = vmatmul.mubr.bf16.gmra.mrb[0].mxu0 %v1724
      %v1763 = vpop.f32.mrb[0].mxu0
      %v1764 = vadd.f32 0.0, %v1763
      %v1765 = vpop.f32.mrb[0].mxu0
      %v1766 = vpop.f32.mrb[0].mxu0
      %v1767 = vpop.f32.mrb[0].mxu0
      %1768 = vdwg.mxu0
      %v1770 = vsel %vm1722, %v1715, 0
      %v1773 = vsel %vm1722, %v1719, 0
      %1775 = vmatprep.subr.bf16.mxu0 0
      %1776 = vmatpush1.bf16.xpose.msra.mxu0 %v1773
      %1777 = vmatprep.subr.bf16.mxu0 0
      %1778 = vmatpush1.bf16.xpose.msra.mxu0 0
      %1779 = vmatprep.subr.bf16.mxu0 0
      %1780 = vmatpush1.bf16.xpose.msra.mxu0 0
      %1781 = vmatprep.subr.bf16.mxu0 0
      %1782 = vmatpush1.bf16.xpose.msra.mxu0 0
      %1783 = vmatprep.subr.bf16.mxu0 0
      %1784 = vmatpush1.bf16.xpose.msra.mxu0 0
      %1785 = vmatprep.subr.bf16.mxu0 0
      %1786 = vmatpush1.bf16.xpose.msra.mxu0 0
      %1787 = vmatprep.subr.bf16.mxu0 0
      %1788 = vmatpush1.bf16.xpose.msra.mxu0 0
      %1789 = vmatprep.subr.bf16.mxu0 0
      %1790 = vmatpush1.bf16.xpose.msra.mxu0 0
      %1791 = vmatprep.subr.bf16.mxu0 0
      %1792 = vmatpush1.bf16.xpose.msra.mxu0 0
      %1793 = vmatprep.subr.bf16.mxu0 0
      %1794 = vmatpush1.bf16.xpose.msra.mxu0 0
      %1795 = vmatprep.subr.bf16.mxu0 0
      %1796 = vmatpush1.bf16.xpose.msra.mxu0 0
      %1797 = vmatprep.subr.bf16.mxu0 0
      %1798 = vmatpush1.bf16.xpose.msra.mxu0 0
      %1799 = vmatprep.subr.bf16.mxu0 0
      %1800 = vmatpush1.bf16.xpose.msra.mxu0 0
      %1801 = vmatprep.subr.bf16.mxu0 0
      %1802 = vmatpush1.bf16.xpose.msra.mxu0 0
      %1803 = vmatprep.subr.bf16.mxu0 0
      %1804 = vmatpush1.bf16.xpose.msra.mxu0 0
      %1805 = vmatprep.subr.bf16.mxu0 0
      %1806 = vmatpush1.bf16.xpose.msra.mxu0 0
      %1807 = vmatprep.mubr.bf16.mxu0 0
      %1808 = vmatmul.mubr.bf16.gmra.mrb[0].mxu0 %v1770
      %v1809 = vpop.f32.mrb[0].mxu0
      %v1810 = vadd.f32 0.0, %v1809
      %v1811 = vpop.f32.mrb[0].mxu0
      %v1812 = vpop.f32.mrb[0].mxu0
      %v1813 = vpop.f32.mrb[0].mxu0
      %1814 = vdwg.mxu0
      %v1816 = vsel %vm1722, %v1716, 0
      %v1819 = vsel %vm1722, %v1720, 0
      %1821 = vmatprep.subr.bf16.mxu0 0
      %1822 = vmatpush1.bf16.xpose.msra.mxu0 %v1819
      %1823 = vmatprep.subr.bf16.mxu0 0
      %1824 = vmatpush1.bf16.xpose.msra.mxu0 0
      %1825 = vmatprep.subr.bf16.mxu0 0
      %1826 = vmatpush1.bf16.xpose.msra.mxu0 0
      %1827 = vmatprep.subr.bf16.mxu0 0
      %1828 = vmatpush1.bf16.xpose.msra.mxu0 0
      %1829 = vmatprep.subr.bf16.mxu0 0
      %1830 = vmatpush1.bf16.xpose.msra.mxu0 0
      %1831 = vmatprep.subr.bf16.mxu0 0
      %1832 = vmatpush1.bf16.xpose.msra.mxu0 0
      %1833 = vmatprep.subr.bf16.mxu0 0
      %1834 = vmatpush1.bf16.xpose.msra.mxu0 0
      %1835 = vmatprep.subr.bf16.mxu0 0
      %1836 = vmatpush1.bf16.xpose.msra.mxu0 0
      %1837 = vmatprep.subr.bf16.mxu0 0
      %1838 = vmatpush1.bf16.xpose.msra.mxu0 0
      %1839 = vmatprep.subr.bf16.mxu0 0
      %1840 = vmatpush1.bf16.xpose.msra.mxu0 0
      %1841 = vmatprep.subr.bf16.mxu0 0
      %1842 = vmatpush1.bf16.xpose.msra.mxu0 0
      %1843 = vmatprep.subr.bf16.mxu0 0
      %1844 = vmatpush1.bf16.xpose.msra.mxu0 0
      %1845 = vmatprep.subr.bf16.mxu0 0
      %1846 = vmatpush1.bf16.xpose.msra.mxu0 0
      %1847 = vmatprep.subr.bf16.mxu0 0
      %1848 = vmatpush1.bf16.xpose.msra.mxu0 0
      %1849 = vmatprep.subr.bf16.mxu0 0
      %1850 = vmatpush1.bf16.xpose.msra.mxu0 0
      %1851 = vmatprep.subr.bf16.mxu0 0
      %1852 = vmatpush1.bf16.xpose.msra.mxu0 0
      %1853 = vmatprep.mubr.bf16.mxu0 0
      %1854 = vmatmul.mubr.bf16.gmra.mrb[0].mxu0 %v1816
      %v1855 = vpop.f32.mrb[0].mxu0
      %v1856 = vadd.f32 0.0, %v1855
      %v1857 = vpop.f32.mrb[0].mxu0
      %v1858 = vpop.f32.mrb[0].mxu0
      %v1859 = vpop.f32.mrb[0].mxu0
      %1860 = vdwg.mxu0
      %v1862 = vsel %vm1722, %v1717, 0
      %v1865 = vsel %vm1722, %v1721, 0
      %1867 = vmatprep.subr.bf16.mxu0 0
      %1868 = vmatpush1.bf16.xpose.msra.mxu0 %v1865
      %1869 = vmatprep.subr.bf16.mxu0 0
      %1870 = vmatpush1.bf16.xpose.msra.mxu0 0
      %1871 = vmatprep.subr.bf16.mxu0 0
      %1872 = vmatpush1.bf16.xpose.msra.mxu0 0
      %1873 = vmatprep.subr.bf16.mxu0 0
      %1874 = vmatpush1.bf16.xpose.msra.mxu0 0
      %1875 = vmatprep.subr.bf16.mxu0 0
      %1876 = vmatpush1.bf16.xpose.msra.mxu0 0
      %1877 = vmatprep.subr.bf16.mxu0 0
      %1878 = vmatpush1.bf16.xpose.msra.mxu0 0
      %1879 = vmatprep.subr.bf16.mxu0 0
      %1880 = vmatpush1.bf16.xpose.msra.mxu0 0
      %1881 = vmatprep.subr.bf16.mxu0 0
      %1882 = vmatpush1.bf16.xpose.msra.mxu0 0
      %1883 = vmatprep.subr.bf16.mxu0 0
      %1884 = vmatpush1.bf16.xpose.msra.mxu0 0
      %1885 = vmatprep.subr.bf16.mxu0 0
      %1886 = vmatpush1.bf16.xpose.msra.mxu0 0
      %1887 = vmatprep.subr.bf16.mxu0 0
      %1888 = vmatpush1.bf16.xpose.msra.mxu0 0
      %1889 = vmatprep.subr.bf16.mxu0 0
      %1890 = vmatpush1.bf16.xpose.msra.mxu0 0
      %1891 = vmatprep.subr.bf16.mxu0 0
      %1892 = vmatpush1.bf16.xpose.msra.mxu0 0
      %1893 = vmatprep.subr.bf16.mxu0 0
      %1894 = vmatpush1.bf16.xpose.msra.mxu0 0
      %1895 = vmatprep.subr.bf16.mxu0 0
      %1896 = vmatpush1.bf16.xpose.msra.mxu0 0
      %1897 = vmatprep.subr.bf16.mxu0 0
      %1898 = vmatpush1.bf16.xpose.msra.mxu0 0
      %1899 = vmatprep.mubr.bf16.mxu0 0
      %1900 = vmatmul.mubr.bf16.gmra.mrb[0].mxu0 %v1862
      %v1901 = vpop.f32.mrb[0].mxu0
      %v1902 = vadd.f32 0.0, %v1901
      %v1903 = vpop.f32.mrb[0].mxu0
      %v1904 = vpop.f32.mrb[0].mxu0
      %v1905 = vpop.f32.mrb[0].mxu0
      %1906 = vdwg.mxu0
      %v1907 = vmul.f32 %v1764, 0.35355338
      %v1908 = vmul.f32 %v1810, 0.35355338
      %v1909 = vmul.f32 %v1856, 0.35355338
      %v1910 = vmul.f32 %v1902, 0.35355338
      %v1911 = vadd.f32 %v1907, %v946
      %v1912 = vadd.f32 %v1908, %v946
      %v1913 = vadd.f32 %v1909, %v946
      %v1914 = vadd.f32 %v1910, %v946
      %v1915 = vsel %vm1722, %v1911, -inf
      %1916 = vmax.xlane.f32.xlu0 %v1915
      %v1917 = vpop.xlane.xlu0 %1916
      %v1918 = vsel %vm1722, %v1912, -inf
      %1919 = vmax.xlane.f32.xlu0 %v1918
      %v1920 = vpop.xlane.xlu0 %1919
      %v1921 = vsel %vm1722, %v1913, -inf
      %1922 = vmax.xlane.f32.xlu0 %v1921
      %v1923 = vpop.xlane.xlu0 %1922
      %v1924 = vsel %vm1722, %v1914, -inf
      %1925 = vmax.xlane.f32.xlu0 %v1924
      %v1926 = vpop.xlane.xlu0 %1925
      %v1927 = vsub.f32 %v1911, %v1917
      %v1928 = vsub.f32 %v1912, %v1920
      %v1929 = vsub.f32 %v1913, %v1923
      %v1930 = vsub.f32 %v1914, %v1926
      %v1931 = vmul.f32 %v1927, 1.442695
      %v1932 = vpow.pop %v1931
      %v1933 = vmul.f32 %v1928, 1.442695
      %v1934 = vpow.pop %v1933
      %v1935 = vmul.f32 %v1929, 1.442695
      %v1936 = vpow.pop %v1935
      %v1937 = vmul.f32 %v1930, 1.442695
      %v1938 = vpow.pop %v1937
      %v1939 = vsel %vm1722, %v1932, 0.0
      %1940 = vadd.xlane.f32.xlu0 %v1939
      %v1941 = vpop.xlane.xlu0 %1940
      %v1942 = vsel %vm1722, %v1934, 0.0
      %1943 = vadd.xlane.f32.xlu0 %v1942
      %v1944 = vpop.xlane.xlu0 %1943
      %v1945 = vsel %vm1722, %v1936, 0.0
      %1946 = vadd.xlane.f32.xlu0 %v1945
      %v1947 = vpop.xlane.xlu0 %1946
      %v1948 = vsel %vm1722, %v1938, 0.0
      %1949 = vadd.xlane.f32.xlu0 %v1948
      %v1950 = vpop.xlane.xlu0 %1949
      %v1951 = vrcp.pop %v1941
      %v1952 = vmul.f32 %v1932, %v1951
      %v1953 = vrcp.pop %v1944
      %v1954 = vmul.f32 %v1934, %v1953
      %v1955 = vrcp.pop %v1947
      %v1956 = vmul.f32 %v1936, %v1955
      %v1957 = vrcp.pop %v1950
      %v1958 = vmul.f32 %v1938, %v1957
      %v1959 = vpack.c.bf16 %v1952, %v1952
      %v1960 = vpack.c.bf16 %v1954, %v1954
      %v1961 = vpack.c.bf16 %v1956, %v1956
      %v1962 = vpack.c.bf16 %v1958, %v1958
      %v1963 = vpack.c.bf16 %v1553, %v1553
      %v1964 = vpack.c.bf16 %v1605, %v1605
      %v1965 = vpack.c.bf16 %v1657, %v1657
      %v1966 = vpack.c.bf16 %v1709, %v1709
      %v1968 = vsel %vm1722, %v1959, 0
      %vm1970 = vcmask 1043456
      %v1972 = vsel %vm1970, %v1963, 0
      %1974 = vmatprep.subr.bf16.mxu0 0
      %1975 = vmatpush1.bf16.msra.mxu0 %v1972
      %1976 = vmatprep.subr.bf16.mxu0 0
      %1977 = vmatpush1.bf16.msra.mxu0 0
      %1978 = vmatprep.subr.bf16.mxu0 0
      %1979 = vmatpush1.bf16.msra.mxu0 0
      %1980 = vmatprep.subr.bf16.mxu0 0
      %1981 = vmatpush1.bf16.msra.mxu0 0
      %1982 = vmatprep.subr.bf16.mxu0 0
      %1983 = vmatpush1.bf16.msra.mxu0 0
      %1984 = vmatprep.subr.bf16.mxu0 0
      %1985 = vmatpush1.bf16.msra.mxu0 0
      %1986 = vmatprep.subr.bf16.mxu0 0
      %1987 = vmatpush1.bf16.msra.mxu0 0
      %1988 = vmatprep.subr.bf16.mxu0 0
      %1989 = vmatpush1.bf16.msra.mxu0 0
      %1990 = vmatprep.subr.bf16.mxu0 0
      %1991 = vmatpush1.bf16.msra.mxu0 0
      %1992 = vmatprep.subr.bf16.mxu0 0
      %1993 = vmatpush1.bf16.msra.mxu0 0
      %1994 = vmatprep.subr.bf16.mxu0 0
      %1995 = vmatpush1.bf16.msra.mxu0 0
      %1996 = vmatprep.subr.bf16.mxu0 0
      %1997 = vmatpush1.bf16.msra.mxu0 0
      %1998 = vmatprep.subr.bf16.mxu0 0
      %1999 = vmatpush1.bf16.msra.mxu0 0
      %2000 = vmatprep.subr.bf16.mxu0 0
      %2001 = vmatpush1.bf16.msra.mxu0 0
      %2002 = vmatprep.subr.bf16.mxu0 0
      %2003 = vmatpush1.bf16.msra.mxu0 0
      %2004 = vmatprep.subr.bf16.mxu0 0
      %2005 = vmatpush1.bf16.msra.mxu0 0
      %2006 = vmatprep.mubr.bf16.mxu0 0
      %2007 = vmatmul.mubr.bf16.gmra.mrb[0].mxu0 %v1968
      %v2008 = vpop.f32.mrb[0].mxu0
      %v2009 = vadd.f32 0.0, %v2008
      %v2010 = vpop.f32.mrb[0].mxu0
      %v2011 = vpop.f32.mrb[0].mxu0
      %v2012 = vpop.f32.mrb[0].mxu0
      %2013 = vdwg.mxu0
      %v2015 = vsel %vm1722, %v1960, 0
      %v2018 = vsel %vm1970, %v1964, 0
      %2020 = vmatprep.subr.bf16.mxu0 0
      %2021 = vmatpush1.bf16.msra.mxu0 %v2018
      %2022 = vmatprep.subr.bf16.mxu0 0
      %2023 = vmatpush1.bf16.msra.mxu0 0
      %2024 = vmatprep.subr.bf16.mxu0 0
      %2025 = vmatpush1.bf16.msra.mxu0 0
      %2026 = vmatprep.subr.bf16.mxu0 0
      %2027 = vmatpush1.bf16.msra.mxu0 0
      %2028 = vmatprep.subr.bf16.mxu0 0
      %2029 = vmatpush1.bf16.msra.mxu0 0
      %2030 = vmatprep.subr.bf16.mxu0 0
      %2031 = vmatpush1.bf16.msra.mxu0 0
      %2032 = vmatprep.subr.bf16.mxu0 0
      %2033 = vmatpush1.bf16.msra.mxu0 0
      %2034 = vmatprep.subr.bf16.mxu0 0
      %2035 = vmatpush1.bf16.msra.mxu0 0
      %2036 = vmatprep.subr.bf16.mxu0 0
      %2037 = vmatpush1.bf16.msra.mxu0 0
      %2038 = vmatprep.subr.bf16.mxu0 0
      %2039 = vmatpush1.bf16.msra.mxu0 0
      %2040 = vmatprep.subr.bf16.mxu0 0
      %2041 = vmatpush1.bf16.msra.mxu0 0
      %2042 = vmatprep.subr.bf16.mxu0 0
      %2043 = vmatpush1.bf16.msra.mxu0 0
      %2044 = vmatprep.subr.bf16.mxu0 0
      %2045 = vmatpush1.bf16.msra.mxu0 0
      %2046 = vmatprep.subr.bf16.mxu0 0
      %2047 = vmatpush1.bf16.msra.mxu0 0
      %2048 = vmatprep.subr.bf16.mxu0 0
      %2049 = vmatpush1.bf16.msra.mxu0 0
      %2050 = vmatprep.subr.bf16.mxu0 0
      %2051 = vmatpush1.bf16.msra.mxu0 0
      %2052 = vmatprep.mubr.bf16.mxu0 0
      %2053 = vmatmul.mubr.bf16.gmra.mrb[0].mxu0 %v2015
      %v2054 = vpop.f32.mrb[0].mxu0
      %v2055 = vadd.f32 0.0, %v2054
      %v2056 = vpop.f32.mrb[0].mxu0
      %v2057 = vpop.f32.mrb[0].mxu0
      %v2058 = vpop.f32.mrb[0].mxu0
      %2059 = vdwg.mxu0
      %v2061 = vsel %vm1722, %v1961, 0
      %v2064 = vsel %vm1970, %v1965, 0
      %2066 = vmatprep.subr.bf16.mxu0 0
      %2067 = vmatpush1.bf16.msra.mxu0 %v2064
      %2068 = vmatprep.subr.bf16.mxu0 0
      %2069 = vmatpush1.bf16.msra.mxu0 0
      %2070 = vmatprep.subr.bf16.mxu0 0
      %2071 = vmatpush1.bf16.msra.mxu0 0
      %2072 = vmatprep.subr.bf16.mxu0 0
      %2073 = vmatpush1.bf16.msra.mxu0 0
      %2074 = vmatprep.subr.bf16.mxu0 0
      %2075 = vmatpush1.bf16.msra.mxu0 0
      %2076 = vmatprep.subr.bf16.mxu0 0
      %2077 = vmatpush1.bf16.msra.mxu0 0
      %2078 = vmatprep.subr.bf16.mxu0 0
      %2079 = vmatpush1.bf16.msra.mxu0 0
      %2080 = vmatprep.subr.bf16.mxu0 0
      %2081 = vmatpush1.bf16.msra.mxu0 0
      %2082 = vmatprep.subr.bf16.mxu0 0
      %2083 = vmatpush1.bf16.msra.mxu0 0
      %2084 = vmatprep.subr.bf16.mxu0 0
      %2085 = vmatpush1.bf16.msra.mxu0 0
      %2086 = vmatprep.subr.bf16.mxu0 0
      %2087 = vmatpush1.bf16.msra.mxu0 0
      %2088 = vmatprep.subr.bf16.mxu0 0
      %2089 = vmatpush1.bf16.msra.mxu0 0
      %2090 = vmatprep.subr.bf16.mxu0 0
      %2091 = vmatpush1.bf16.msra.mxu0 0
      %2092 = vmatprep.subr.bf16.mxu0 0
      %2093 = vmatpush1.bf16.msra.mxu0 0
      %2094 = vmatprep.subr.bf16.mxu0 0
      %2095 = vmatpush1.bf16.msra.mxu0 0
      %2096 = vmatprep.subr.bf16.mxu0 0
      %2097 = vmatpush1.bf16.msra.mxu0 0
      %2098 = vmatprep.mubr.bf16.mxu0 0
      %2099 = vmatmul.mubr.bf16.gmra.mrb[0].mxu0 %v2061
      %v2100 = vpop.f32.mrb[0].mxu0
      %v2101 = vadd.f32 0.0, %v2100
      %v2102 = vpop.f32.mrb[0].mxu0
      %v2103 = vpop.f32.mrb[0].mxu0
      %v2104 = vpop.f32.mrb[0].mxu0
      %2105 = vdwg.mxu0
      %v2107 = vsel %vm1722, %v1962, 0
      %v2110 = vsel %vm1970, %v1966, 0
      %2112 = vmatprep.subr.bf16.mxu0 0
      %2113 = vmatpush1.bf16.msra.mxu0 %v2110
      %2114 = vmatprep.subr.bf16.mxu0 0
      %2115 = vmatpush1.bf16.msra.mxu0 0
      %2116 = vmatprep.subr.bf16.mxu0 0
      %2117 = vmatpush1.bf16.msra.mxu0 0
      %2118 = vmatprep.subr.bf16.mxu0 0
      %2119 = vmatpush1.bf16.msra.mxu0 0
      %2120 = vmatprep.subr.bf16.mxu0 0
      %2121 = vmatpush1.bf16.msra.mxu0 0
      %2122 = vmatprep.subr.bf16.mxu0 0
      %2123 = vmatpush1.bf16.msra.mxu0 0
      %2124 = vmatprep.subr.bf16.mxu0 0
      %2125 = vmatpush1.bf16.msra.mxu0 0
      %2126 = vmatprep.subr.bf16.mxu0 0
      %2127 = vmatpush1.bf16.msra.mxu0 0
      %2128 = vmatprep.subr.bf16.mxu0 0
      %2129 = vmatpush1.bf16.msra.mxu0 0
      %2130 = vmatprep.subr.bf16.mxu0 0
      %2131 = vmatpush1.bf16.msra.mxu0 0
      %2132 = vmatprep.subr.bf16.mxu0 0
      %2133 = vmatpush1.bf16.msra.mxu0 0
      %2134 = vmatprep.subr.bf16.mxu0 0
      %2135 = vmatpush1.bf16.msra.mxu0 0
      %2136 = vmatprep.subr.bf16.mxu0 0
      %2137 = vmatpush1.bf16.msra.mxu0 0
      %2138 = vmatprep.subr.bf16.mxu0 0
      %2139 = vmatpush1.bf16.msra.mxu0 0
      %2140 = vmatprep.subr.bf16.mxu0 0
      %2141 = vmatpush1.bf16.msra.mxu0 0
      %2142 = vmatprep.subr.bf16.mxu0 0
      %2143 = vmatpush1.bf16.msra.mxu0 0
      %2144 = vmatprep.mubr.bf16.mxu0 0
      %2145 = vmatmul.mubr.bf16.gmra.mrb[0].mxu0 %v2107
      %v2146 = vpop.f32.mrb[0].mxu0
      %v2147 = vadd.f32 0.0, %v2146
      %v2148 = vpop.f32.mrb[0].mxu0
      %v2149 = vpop.f32.mrb[0].mxu0
      %v2150 = vpop.f32.mrb[0].mxu0
      %2151 = vdwg.mxu0
      %v2152 = vpack.c.bf16 %v2009, %v2009
      %v2153 = vpack.c.bf16 %v2055, %v2055
      %v2154 = vpack.c.bf16 %v2101, %v2101
      %v2155 = vpack.c.bf16 %v2147, %v2147
      %v2157 = vsel %vm1722, %v2152, 0
      %v2160 = vsel %vm1970, %v1007, 0
      %2162 = vmatprep.subr.bf16.mxu0 0
      %2163 = vmatpush1.bf16.msra.mxu0 %v2160
      %2164 = vmatprep.subr.bf16.mxu0 0
      %2165 = vmatpush1.bf16.msra.mxu0 0
      %2166 = vmatprep.subr.bf16.mxu0 0
      %2167 = vmatpush1.bf16.msra.mxu0 0
      %2168 = vmatprep.subr.bf16.mxu0 0
      %2169 = vmatpush1.bf16.msra.mxu0 0
      %2170 = vmatprep.subr.bf16.mxu0 0
      %2171 = vmatpush1.bf16.msra.mxu0 0
      %2172 = vmatprep.subr.bf16.mxu0 0
      %2173 = vmatpush1.bf16.msra.mxu0 0
      %2174 = vmatprep.subr.bf16.mxu0 0
      %2175 = vmatpush1.bf16.msra.mxu0 0
      %2176 = vmatprep.subr.bf16.mxu0 0
      %2177 = vmatpush1.bf16.msra.mxu0 0
      %2178 = vmatprep.subr.bf16.mxu0 0
      %2179 = vmatpush1.bf16.msra.mxu0 0
      %2180 = vmatprep.subr.bf16.mxu0 0
      %2181 = vmatpush1.bf16.msra.mxu0 0
      %2182 = vmatprep.subr.bf16.mxu0 0
      %2183 = vmatpush1.bf16.msra.mxu0 0
      %2184 = vmatprep.subr.bf16.mxu0 0
      %2185 = vmatpush1.bf16.msra.mxu0 0
      %2186 = vmatprep.subr.bf16.mxu0 0
      %2187 = vmatpush1.bf16.msra.mxu0 0
      %2188 = vmatprep.subr.bf16.mxu0 0
      %2189 = vmatpush1.bf16.msra.mxu0 0
      %2190 = vmatprep.subr.bf16.mxu0 0
      %2191 = vmatpush1.bf16.msra.mxu0 0
      %2192 = vmatprep.subr.bf16.mxu0 0
      %2193 = vmatpush1.bf16.msra.mxu0 0
      %2194 = vmatprep.mubr.bf16.mxu0 0
      %2195 = vmatmul.mubr.bf16.gmra.mrb[0].mxu0 %v2157
      %v2196 = vpop.f32.mrb[0].mxu0
      %v2197 = vadd.f32 0.0, %v2196
      %v2198 = vpop.f32.mrb[0].mxu0
      %v2199 = vpop.f32.mrb[0].mxu0
      %v2200 = vpop.f32.mrb[0].mxu0
      %2201 = vdwg.mxu0
      %v2203 = vsel %vm1722, %v2153, 0
      %v2206 = vsel %vm1970, %v1008, 0
      %2208 = vmatprep.subr.bf16.mxu0 0
      %2209 = vmatpush1.bf16.msra.mxu0 %v2206
      %2210 = vmatprep.subr.bf16.mxu0 0
      %2211 = vmatpush1.bf16.msra.mxu0 0
      %2212 = vmatprep.subr.bf16.mxu0 0
      %2213 = vmatpush1.bf16.msra.mxu0 0
      %2214 = vmatprep.subr.bf16.mxu0 0
      %2215 = vmatpush1.bf16.msra.mxu0 0
      %2216 = vmatprep.subr.bf16.mxu0 0
      %2217 = vmatpush1.bf16.msra.mxu0 0
      %2218 = vmatprep.subr.bf16.mxu0 0
      %2219 = vmatpush1.bf16.msra.mxu0 0
      %2220 = vmatprep.subr.bf16.mxu0 0
      %2221 = vmatpush1.bf16.msra.mxu0 0
      %2222 = vmatprep.subr.bf16.mxu0 0
      %2223 = vmatpush1.bf16.msra.mxu0 0
      %2224 = vmatprep.subr.bf16.mxu0 0
      %2225 = vmatpush1.bf16.msra.mxu0 0
      %2226 = vmatprep.subr.bf16.mxu0 0
      %2227 = vmatpush1.bf16.msra.mxu0 0
      %2228 = vmatprep.subr.bf16.mxu0 0
      %2229 = vmatpush1.bf16.msra.mxu0 0
      %2230 = vmatprep.subr.bf16.mxu0 0
      %2231 = vmatpush1.bf16.msra.mxu0 0
      %2232 = vmatprep.subr.bf16.mxu0 0
      %2233 = vmatpush1.bf16.msra.mxu0 0
      %2234 = vmatprep.subr.bf16.mxu0 0
      %2235 = vmatpush1.bf16.msra.mxu0 0
      %2236 = vmatprep.subr.bf16.mxu0 0
      %2237 = vmatpush1.bf16.msra.mxu0 0
      %2238 = vmatprep.subr.bf16.mxu0 0
      %2239 = vmatpush1.bf16.msra.mxu0 0
      %2240 = vmatprep.mubr.bf16.mxu0 0
      %2241 = vmatmul.mubr.bf16.gmra.mrb[0].mxu0 %v2203
      %v2242 = vpop.f32.mrb[0].mxu0
      %v2243 = vadd.f32 0.0, %v2242
      %v2244 = vpop.f32.mrb[0].mxu0
      %v2245 = vpop.f32.mrb[0].mxu0
      %v2246 = vpop.f32.mrb[0].mxu0
      %2247 = vdwg.mxu0
      %v2249 = vsel %vm1722, %v2154, 0
      %v2252 = vsel %vm1970, %v1009, 0
      %2254 = vmatprep.subr.bf16.mxu0 0
      %2255 = vmatpush1.bf16.msra.mxu0 %v2252
      %2256 = vmatprep.subr.bf16.mxu0 0
      %2257 = vmatpush1.bf16.msra.mxu0 0
      %2258 = vmatprep.subr.bf16.mxu0 0
      %2259 = vmatpush1.bf16.msra.mxu0 0
      %2260 = vmatprep.subr.bf16.mxu0 0
      %2261 = vmatpush1.bf16.msra.mxu0 0
      %2262 = vmatprep.subr.bf16.mxu0 0
      %2263 = vmatpush1.bf16.msra.mxu0 0
      %2264 = vmatprep.subr.bf16.mxu0 0
      %2265 = vmatpush1.bf16.msra.mxu0 0
      %2266 = vmatprep.subr.bf16.mxu0 0
      %2267 = vmatpush1.bf16.msra.mxu0 0
      %2268 = vmatprep.subr.bf16.mxu0 0
      %2269 = vmatpush1.bf16.msra.mxu0 0
      %2270 = vmatprep.subr.bf16.mxu0 0
      %2271 = vmatpush1.bf16.msra.mxu0 0
      %2272 = vmatprep.subr.bf16.mxu0 0
      %2273 = vmatpush1.bf16.msra.mxu0 0
      %2274 = vmatprep.subr.bf16.mxu0 0
      %2275 = vmatpush1.bf16.msra.mxu0 0
      %2276 = vmatprep.subr.bf16.mxu0 0
      %2277 = vmatpush1.bf16.msra.mxu0 0
      %2278 = vmatprep.subr.bf16.mxu0 0
      %2279 = vmatpush1.bf16.msra.mxu0 0
      %2280 = vmatprep.subr.bf16.mxu0 0
      %2281 = vmatpush1.bf16.msra.mxu0 0
      %2282 = vmatprep.subr.bf16.mxu0 0
      %2283 = vmatpush1.bf16.msra.mxu0 0
      %2284 = vmatprep.subr.bf16.mxu0 0
      %2285 = vmatpush1.bf16.msra.mxu0 0
      %2286 = vmatprep.mubr.bf16.mxu0 0
      %2287 = vmatmul.mubr.bf16.gmra.mrb[0].mxu0 %v2249
      %v2288 = vpop.f32.mrb[0].mxu0
      %v2289 = vadd.f32 0.0, %v2288
      %v2290 = vpop.f32.mrb[0].mxu0
      %v2291 = vpop.f32.mrb[0].mxu0
      %v2292 = vpop.f32.mrb[0].mxu0
      %2293 = vdwg.mxu0
      %v2295 = vsel %vm1722, %v2155, 0
      %v2298 = vsel %vm1970, %v1010, 0
      %2300 = vmatprep.subr.bf16.mxu0 0
      %2301 = vmatpush1.bf16.msra.mxu0 %v2298
      %2302 = vmatprep.subr.bf16.mxu0 0
      %2303 = vmatpush1.bf16.msra.mxu0 0
      %2304 = vmatprep.subr.bf16.mxu0 0
      %2305 = vmatpush1.bf16.msra.mxu0 0
      %2306 = vmatprep.subr.bf16.mxu0 0
      %2307 = vmatpush1.bf16.msra.mxu0 0
      %2308 = vmatprep.subr.bf16.mxu0 0
      %2309 = vmatpush1.bf16.msra.mxu0 0
      %2310 = vmatprep.subr.bf16.mxu0 0
      %2311 = vmatpush1.bf16.msra.mxu0 0
      %2312 = vmatprep.subr.bf16.mxu0 0
      %2313 = vmatpush1.bf16.msra.mxu0 0
      %2314 = vmatprep.subr.bf16.mxu0 0
      %2315 = vmatpush1.bf16.msra.mxu0 0
      %2316 = vmatprep.subr.bf16.mxu0 0
      %2317 = vmatpush1.bf16.msra.mxu0 0
      %2318 = vmatprep.subr.bf16.mxu0 0
      %2319 = vmatpush1.bf16.msra.mxu0 0
      %2320 = vmatprep.subr.bf16.mxu0 0
      %2321 = vmatpush1.bf16.msra.mxu0 0
      %2322 = vmatprep.subr.bf16.mxu0 0
      %2323 = vmatpush1.bf16.msra.mxu0 0
      %2324 = vmatprep.subr.bf16.mxu0 0
      %2325 = vmatpush1.bf16.msra.mxu0 0
      %2326 = vmatprep.subr.bf16.mxu0 0
      %2327 = vmatpush1.bf16.msra.mxu0 0
      %2328 = vmatprep.subr.bf16.mxu0 0
      %2329 = vmatpush1.bf16.msra.mxu0 0
      %2330 = vmatprep.subr.bf16.mxu0 0
      %2331 = vmatpush1.bf16.msra.mxu0 0
      %2332 = vmatprep.mubr.bf16.mxu0 0
      %2333 = vmatmul.mubr.bf16.gmra.mrb[0].mxu0 %v2295
      %v2334 = vpop.f32.mrb[0].mxu0
      %v2335 = vadd.f32 0.0, %v2334
      %v2336 = vpop.f32.mrb[0].mxu0
      %v2337 = vpop.f32.mrb[0].mxu0
      %v2338 = vpop.f32.mrb[0].mxu0
      %2339 = vdwg.mxu0
      %v2340 = vsel %vm1050, %v2197, 0.0
      %v2341 = vsel %vm1050, %v2243, 0.0
      %v2342 = vadd.f32 %v2340, %v2341
      %v2343 = vsel %vm1050, %v2289, 0.0
      %v2344 = vadd.f32 %v2342, %v2343
      %v2345 = vsel %vm1050, %v2335, 0.0
      %v2346 = vadd.f32 %v2344, %v2345
      %v2348 = vlaneseq
      %v2349 = vshrl.u32 %v2348, 7
      %v2350 = vsub.s32 0, %v2349
      %v2351 = vrot.slane %v1011, %v2350
      %v2353 = vadd.f32 %v2346, %v2351
      %v2354 = vadd.f32 %v2353, %v931
      %v2355 = vsel %vm1050, %v2354, 0.0
      %2356 = vadd.xlane.f32.xlu0 %v2355
      %v2357 = vpop.xlane.xlu0 %2356
      %v2358 = vrcp.pop 32.0
      %v2359 = vmul.f32 %v2357, %v2358
      %v2360 = vsub.f32 %v2354, %v2359
      %v2361 = vmul.f32 %v2360, %v2360
      %v2362 = vsel %vm1050, %v2361, 0.0
      %2363 = vadd.xlane.f32.xlu0 %v2362
      %v2364 = vpop.xlane.xlu0 %2363
      %v2365 = vmul.f32 %v2364, %v2358
      %v2366 = vadd.f32 %v2365, 1e-05
      %v2367 = vrsqrt.pop %v2366
      %v2368 = vmul.f32 %v2360, %v2367
      %v2370 = vlaneseq
      %v2371 = vshrl.u32 %v2370, 7
      %v2372 = vsub.s32 0, %v2371
      %v2373 = vrot.slane %v1012, %v2372
      %v2375 = vmul.f32 %v2368, %v2373
      %v2377 = vlaneseq
      %v2378 = vshrl.u32 %v2377, 7
      %v2379 = vsub.s32 0, %v2378
      %v2380 = vrot.slane %v1013, %v2379
      %v2382 = vadd.f32 %v2375, %v2380
      %v2383 = vld [vmem:[%s27] sm:$0xf]
      %v2384 = vld [vmem:[%s27 + $0x4] sm:$0xf]
      %v2385 = vld [vmem:[%s27 + $0x8] sm:$0xf]
      %v2386 = vld [vmem:[%s27 + $0xc] sm:$0xf]
      %v2387 = vld [vmem:[%s27 + $0x10] sm:$0xf]
      %v2388 = vld [vmem:[%s27 + $0x14] sm:$0xf]
      %v2389 = vld [vmem:[%s27 + $0x18] sm:$0xf]
      %v2390 = vld [vmem:[%s27 + $0x1c] sm:$0xf]
      %v2391 = vld [vmem:[%s27 + $0x20] sm:$0xf]
      %v2392 = vld [vmem:[%s27 + $0x24] sm:$0xf]
      %v2393 = vld [vmem:[%s27 + $0x28] sm:$0xf]
      %v2394 = vld [vmem:[%s27 + $0x2c] sm:$0xf]
      %v2395 = vld [vmem:[%s27 + $0x30] sm:$0xf]
      %v2396 = vld [vmem:[%s27 + $0x34] sm:$0xf]
      %v2397 = vld [vmem:[%s27 + $0x38] sm:$0xf]
      %v2398 = vld [vmem:[%s27 + $0x3c] sm:$0xf]
      %v2399 = vld [vmem:[%s29] sm:$0x1]
      %v2400 = vld [vmem:[%s29 + $0x1] sm:$0x1]
      %v2401 = vld [vmem:[%s29 + $0x2] sm:$0x1]
      %v2402 = vld [vmem:[%s29 + $0x3] sm:$0x1]
      %v2403 = vld [vmem:[%s31] sm:$0xf]
      %v2404 = vld [vmem:[%s31 + $0x4] sm:$0xf]
      %v2405 = vld [vmem:[%s31 + $0x8] sm:$0xf]
      %v2406 = vld [vmem:[%s31 + $0xc] sm:$0xf]
      %v2407 = vld [vmem:[%s31 + $0x10] sm:$0xf]
      %v2408 = vld [vmem:[%s31 + $0x14] sm:$0xf]
      %v2409 = vld [vmem:[%s31 + $0x18] sm:$0xf]
      %v2410 = vld [vmem:[%s31 + $0x1c] sm:$0xf]
      %v2411 = vld [vmem:[%s31 + $0x20] sm:$0xf]
      %v2412 = vld [vmem:[%s31 + $0x24] sm:$0xf]
      %v2413 = vld [vmem:[%s31 + $0x28] sm:$0xf]
      %v2414 = vld [vmem:[%s31 + $0x2c] sm:$0xf]
      %v2415 = vld [vmem:[%s31 + $0x30] sm:$0xf]
      %v2416 = vld [vmem:[%s31 + $0x34] sm:$0xf]
      %v2417 = vld [vmem:[%s31 + $0x38] sm:$0xf]
      %v2418 = vld [vmem:[%s31 + $0x3c] sm:$0xf]
      %v2419 = vld [vmem:[%s33] sm:$0x1]
      %v2420 = vld [vmem:[%s33 + $0x1] sm:$0x1]
      %v2421 = vld [vmem:[%s33 + $0x2] sm:$0x1]
      %v2422 = vld [vmem:[%s33 + $0x3] sm:$0x1]
      %v2423 = vld [vmem:[%s35] sm:$0xf]
      %v2424 = vld [vmem:[%s35 + $0x4] sm:$0xf]
      %v2425 = vld [vmem:[%s35 + $0x8] sm:$0xf]
      %v2426 = vld [vmem:[%s35 + $0xc] sm:$0xf]
      %v2427 = vld [vmem:[%s35 + $0x10] sm:$0xf]
      %v2428 = vld [vmem:[%s35 + $0x14] sm:$0xf]
      %v2429 = vld [vmem:[%s35 + $0x18] sm:$0xf]
      %v2430 = vld [vmem:[%s35 + $0x1c] sm:$0xf]
      %v2431 = vld [vmem:[%s35 + $0x20] sm:$0xf]
      %v2432 = vld [vmem:[%s35 + $0x24] sm:$0xf]
      %v2433 = vld [vmem:[%s35 + $0x28] sm:$0xf]
      %v2434 = vld [vmem:[%s35 + $0x2c] sm:$0xf]
      %v2435 = vld [vmem:[%s35 + $0x30] sm:$0xf]
      %v2436 = vld [vmem:[%s35 + $0x34] sm:$0xf]
      %v2437 = vld [vmem:[%s35 + $0x38] sm:$0xf]
      %v2438 = vld [vmem:[%s35 + $0x3c] sm:$0xf]
      %v2439 = vld [vmem:[%s37] sm:$0x1]
      %v2440 = vld [vmem:[%s37 + $0x1] sm:$0x1]
      %v2441 = vld [vmem:[%s37 + $0x2] sm:$0x1]
      %v2442 = vld [vmem:[%s37 + $0x3] sm:$0x1]
      %v2443 = vld [vmem:[%s39] sm:$0xf]
      %v2444 = vld [vmem:[%s39 + $0x4] sm:$0xf]
      %v2445 = vld [vmem:[%s39 + $0x8] sm:$0xf]
      %v2446 = vld [vmem:[%s39 + $0xc] sm:$0xf]
      %v2447 = vld [vmem:[%s41] sm:$0x1]
      %v2448 = vld [vmem:[%s43] sm:$0x1]
      %v2449 = vld [vmem:[%s45] sm:$0x1]
      %v2450 = vpack.c.bf16 %v2382, %v2382
      %v2455 = vlaneseq
      %v2456 = vshrl.u32 %v2455, 7
      %v2457 = vsub.s32 0, %v2456
      %v2458 = vrot.slane %v2399, %v2457
      %v2459 = vlaneseq
      %v2460 = vshrl.u32 %v2459, 7
      %v2461 = vsub.s32 0, %v2460
      %v2462 = vrot.slane %v2400, %v2461
      %v2463 = vlaneseq
      %v2464 = vshrl.u32 %v2463, 7
      %v2465 = vsub.s32 0, %v2464
      %v2466 = vrot.slane %v2401, %v2465
      %v2467 = vlaneseq
      %v2468 = vshrl.u32 %v2467, 7
      %v2469 = vsub.s32 0, %v2468
      %v2470 = vrot.slane %v2402, %v2469
      %v2479 = vunpack.c.l.b16 %v2383
      %v2480 = vunpack.c.l.b16 %v2384
      %v2481 = vunpack.c.l.b16 %v2385
      %v2482 = vunpack.c.l.b16 %v2386
      %v2483 = vpack.c.b16 %v2480, %v2479
      %v2484 = vpack.c.b16 %v2482, %v2481
      %v2488 = vsel %vm1050, %v2450, 0
      %2490 = vmatprep.subr.bf16.mxu0 0
      %2491 = vmatpush1.bf16.msra.mxu0 %v2483
      %2492 = vmatprep.subr.bf16.mxu0 0
      %2493 = vmatpush1.bf16.msra.mxu0 %v2484
      %2494 = vmatprep.subr.bf16.mxu0 0
      %2495 = vmatpush1.bf16.msra.mxu0 0
      %2496 = vmatprep.subr.bf16.mxu0 0
      %2497 = vmatpush1.bf16.msra.mxu0 0
      %2498 = vmatprep.subr.bf16.mxu0 0
      %2499 = vmatpush1.bf16.msra.mxu0 0
      %2500 = vmatprep.subr.bf16.mxu0 0
      %2501 = vmatpush1.bf16.msra.mxu0 0
      %2502 = vmatprep.subr.bf16.mxu0 0
      %2503 = vmatpush1.bf16.msra.mxu0 0
      %2504 = vmatprep.subr.bf16.mxu0 0
      %2505 = vmatpush1.bf16.msra.mxu0 0
      %2506 = vmatprep.subr.bf16.mxu0 0
      %2507 = vmatpush1.bf16.msra.mxu0 0
      %2508 = vmatprep.subr.bf16.mxu0 0
      %2509 = vmatpush1.bf16.msra.mxu0 0
      %2510 = vmatprep.subr.bf16.mxu0 0
      %2511 = vmatpush1.bf16.msra.mxu0 0
      %2512 = vmatprep.subr.bf16.mxu0 0
      %2513 = vmatpush1.bf16.msra.mxu0 0
      %2514 = vmatprep.subr.bf16.mxu0 0
      %2515 = vmatpush1.bf16.msra.mxu0 0
      %2516 = vmatprep.subr.bf16.mxu0 0
      %2517 = vmatpush1.bf16.msra.mxu0 0
      %2518 = vmatprep.subr.bf16.mxu0 0
      %2519 = vmatpush1.bf16.msra.mxu0 0
      %2520 = vmatprep.subr.bf16.mxu0 0
      %2521 = vmatpush1.bf16.msra.mxu0 0
      %2522 = vmatprep.mubr.bf16.mxu0 0
      %2523 = vmatmul.mubr.bf16.gmra.mrb[0].mxu0 %v2488
      %v2524 = vpop.f32.mrb[0].mxu0
      %v2525 = vadd.f32 %v2458, %v2524
      %v2526 = vpop.f32.mrb[0].mxu0
      %v2527 = vpop.f32.mrb[0].mxu0
      %v2528 = vpop.f32.mrb[0].mxu0
      %2529 = vdwg.mxu0
      %v2534 = vunpack.c.l.b16 %v2387
      %v2535 = vunpack.c.l.b16 %v2388
      %v2536 = vunpack.c.l.b16 %v2389
      %v2537 = vunpack.c.l.b16 %v2390
      %v2538 = vpack.c.b16 %v2535, %v2534
      %v2539 = vpack.c.b16 %v2537, %v2536
      %2542 = vmatprep.subr.bf16.mxu0 0
      %2543 = vmatpush1.bf16.msra.mxu0 %v2538
      %2544 = vmatprep.subr.bf16.mxu0 0
      %2545 = vmatpush1.bf16.msra.mxu0 %v2539
      %2546 = vmatprep.subr.bf16.mxu0 0
      %2547 = vmatpush1.bf16.msra.mxu0 0
      %2548 = vmatprep.subr.bf16.mxu0 0
      %2549 = vmatpush1.bf16.msra.mxu0 0
      %2550 = vmatprep.subr.bf16.mxu0 0
      %2551 = vmatpush1.bf16.msra.mxu0 0
      %2552 = vmatprep.subr.bf16.mxu0 0
      %2553 = vmatpush1.bf16.msra.mxu0 0
      %2554 = vmatprep.subr.bf16.mxu0 0
      %2555 = vmatpush1.bf16.msra.mxu0 0
      %2556 = vmatprep.subr.bf16.mxu0 0
      %2557 = vmatpush1.bf16.msra.mxu0 0
      %2558 = vmatprep.subr.bf16.mxu0 0
      %2559 = vmatpush1.bf16.msra.mxu0 0
      %2560 = vmatprep.subr.bf16.mxu0 0
      %2561 = vmatpush1.bf16.msra.mxu0 0
      %2562 = vmatprep.subr.bf16.mxu0 0
      %2563 = vmatpush1.bf16.msra.mxu0 0
      %2564 = vmatprep.subr.bf16.mxu0 0
      %2565 = vmatpush1.bf16.msra.mxu0 0
      %2566 = vmatprep.subr.bf16.mxu0 0
      %2567 = vmatpush1.bf16.msra.mxu0 0
      %2568 = vmatprep.subr.bf16.mxu0 0
      %2569 = vmatpush1.bf16.msra.mxu0 0
      %2570 = vmatprep.subr.bf16.mxu0 0
      %2571 = vmatpush1.bf16.msra.mxu0 0
      %2572 = vmatprep.subr.bf16.mxu0 0
      %2573 = vmatpush1.bf16.msra.mxu0 0
      %2574 = vmatprep.mubr.bf16.mxu0 0
      %2575 = vmatmul.mubr.bf16.gmra.mrb[0].mxu0 %v2488
      %v2576 = vpop.f32.mrb[0].mxu0
      %v2577 = vadd.f32 %v2462, %v2576
      %v2578 = vpop.f32.mrb[0].mxu0
      %v2579 = vpop.f32.mrb[0].mxu0
      %v2580 = vpop.f32.mrb[0].mxu0
      %2581 = vdwg.mxu0
      %v2586 = vunpack.c.l.b16 %v2391
      %v2587 = vunpack.c.l.b16 %v2392
      %v2588 = vunpack.c.l.b16 %v2393
      %v2589 = vunpack.c.l.b16 %v2394
      %v2590 = vpack.c.b16 %v2587, %v2586
      %v2591 = vpack.c.b16 %v2589, %v2588
      %2594 = vmatprep.subr.bf16.mxu0 0
      %2595 = vmatpush1.bf16.msra.mxu0 %v2590
      %2596 = vmatprep.subr.bf16.mxu0 0
      %2597 = vmatpush1.bf16.msra.mxu0 %v2591
      %2598 = vmatprep.subr.bf16.mxu0 0
      %2599 = vmatpush1.bf16.msra.mxu0 0
      %2600 = vmatprep.subr.bf16.mxu0 0
      %2601 = vmatpush1.bf16.msra.mxu0 0
      %2602 = vmatprep.subr.bf16.mxu0 0
      %2603 = vmatpush1.bf16.msra.mxu0 0
      %2604 = vmatprep.subr.bf16.mxu0 0
      %2605 = vmatpush1.bf16.msra.mxu0 0
      %2606 = vmatprep.subr.bf16.mxu0 0
      %2607 = vmatpush1.bf16.msra.mxu0 0
      %2608 = vmatprep.subr.bf16.mxu0 0
      %2609 = vmatpush1.bf16.msra.mxu0 0
      %2610 = vmatprep.subr.bf16.mxu0 0
      %2611 = vmatpush1.bf16.msra.mxu0 0
      %2612 = vmatprep.subr.bf16.mxu0 0
      %2613 = vmatpush1.bf16.msra.mxu0 0
      %2614 = vmatprep.subr.bf16.mxu0 0
      %2615 = vmatpush1.bf16.msra.mxu0 0
      %2616 = vmatprep.subr.bf16.mxu0 0
      %2617 = vmatpush1.bf16.msra.mxu0 0
      %2618 = vmatprep.subr.bf16.mxu0 0
      %2619 = vmatpush1.bf16.msra.mxu0 0
      %2620 = vmatprep.subr.bf16.mxu0 0
      %2621 = vmatpush1.bf16.msra.mxu0 0
      %2622 = vmatprep.subr.bf16.mxu0 0
      %2623 = vmatpush1.bf16.msra.mxu0 0
      %2624 = vmatprep.subr.bf16.mxu0 0
      %2625 = vmatpush1.bf16.msra.mxu0 0
      %2626 = vmatprep.mubr.bf16.mxu0 0
      %2627 = vmatmul.mubr.bf16.gmra.mrb[0].mxu0 %v2488
      %v2628 = vpop.f32.mrb[0].mxu0
      %v2629 = vadd.f32 %v2466, %v2628
      %v2630 = vpop.f32.mrb[0].mxu0
      %v2631 = vpop.f32.mrb[0].mxu0
      %v2632 = vpop.f32.mrb[0].mxu0
      %2633 = vdwg.mxu0
      %v2638 = vunpack.c.l.b16 %v2395
      %v2639 = vunpack.c.l.b16 %v2396
      %v2640 = vunpack.c.l.b16 %v2397
      %v2641 = vunpack.c.l.b16 %v2398
      %v2642 = vpack.c.b16 %v2639, %v2638
      %v2643 = vpack.c.b16 %v2641, %v2640
      %2646 = vmatprep.subr.bf16.mxu0 0
      %2647 = vmatpush1.bf16.msra.mxu0 %v2642
      %2648 = vmatprep.subr.bf16.mxu0 0
      %2649 = vmatpush1.bf16.msra.mxu0 %v2643
      %2650 = vmatprep.subr.bf16.mxu0 0
      %2651 = vmatpush1.bf16.msra.mxu0 0
      %2652 = vmatprep.subr.bf16.mxu0 0
      %2653 = vmatpush1.bf16.msra.mxu0 0
      %2654 = vmatprep.subr.bf16.mxu0 0
      %2655 = vmatpush1.bf16.msra.mxu0 0
      %2656 = vmatprep.subr.bf16.mxu0 0
      %2657 = vmatpush1.bf16.msra.mxu0 0
      %2658 = vmatprep.subr.bf16.mxu0 0
      %2659 = vmatpush1.bf16.msra.mxu0 0
      %2660 = vmatprep.subr.bf16.mxu0 0
      %2661 = vmatpush1.bf16.msra.mxu0 0
      %2662 = vmatprep.subr.bf16.mxu0 0
      %2663 = vmatpush1.bf16.msra.mxu0 0
      %2664 = vmatprep.subr.bf16.mxu0 0
      %2665 = vmatpush1.bf16.msra.mxu0 0
      %2666 = vmatprep.subr.bf16.mxu0 0
      %2667 = vmatpush1.bf16.msra.mxu0 0
      %2668 = vmatprep.subr.bf16.mxu0 0
      %2669 = vmatpush1.bf16.msra.mxu0 0
      %2670 = vmatprep.subr.bf16.mxu0 0
      %2671 = vmatpush1.bf16.msra.mxu0 0
      %2672 = vmatprep.subr.bf16.mxu0 0
      %2673 = vmatpush1.bf16.msra.mxu0 0
      %2674 = vmatprep.subr.bf16.mxu0 0
      %2675 = vmatpush1.bf16.msra.mxu0 0
      %2676 = vmatprep.subr.bf16.mxu0 0
      %2677 = vmatpush1.bf16.msra.mxu0 0
      %2678 = vmatprep.mubr.bf16.mxu0 0
      %2679 = vmatmul.mubr.bf16.gmra.mrb[0].mxu0 %v2488
      %v2680 = vpop.f32.mrb[0].mxu0
      %v2681 = vadd.f32 %v2470, %v2680
      %v2682 = vpop.f32.mrb[0].mxu0
      %v2683 = vpop.f32.mrb[0].mxu0
      %v2684 = vpop.f32.mrb[0].mxu0
      %2685 = vdwg.mxu0
      %v2690 = vlaneseq
      %v2691 = vshrl.u32 %v2690, 7
      %v2692 = vsub.s32 0, %v2691
      %v2693 = vrot.slane %v2419, %v2692
      %v2694 = vlaneseq
      %v2695 = vshrl.u32 %v2694, 7
      %v2696 = vsub.s32 0, %v2695
      %v2697 = vrot.slane %v2420, %v2696
      %v2698 = vlaneseq
      %v2699 = vshrl.u32 %v2698, 7
      %v2700 = vsub.s32 0, %v2699
      %v2701 = vrot.slane %v2421, %v2700
      %v2702 = vlaneseq
      %v2703 = vshrl.u32 %v2702, 7
      %v2704 = vsub.s32 0, %v2703
      %v2705 = vrot.slane %v2422, %v2704
      %v2714 = vunpack.c.l.b16 %v2403
      %v2715 = vunpack.c.l.b16 %v2404
      %v2716 = vunpack.c.l.b16 %v2405
      %v2717 = vunpack.c.l.b16 %v2406
      %v2718 = vpack.c.b16 %v2715, %v2714
      %v2719 = vpack.c.b16 %v2717, %v2716
      %v2723 = vsel %vm1050, %v932, 0
      %2725 = vmatprep.subr.bf16.mxu0 0
      %2726 = vmatpush1.bf16.msra.mxu0 %v2718
      %2727 = vmatprep.subr.bf16.mxu0 0
      %2728 = vmatpush1.bf16.msra.mxu0 %v2719
      %2729 = vmatprep.subr.bf16.mxu0 0
      %2730 = vmatpush1.bf16.msra.mxu0 0
      %2731 = vmatprep.subr.bf16.mxu0 0
      %2732 = vmatpush1.bf16.msra.mxu0 0
      %2733 = vmatprep.subr.bf16.mxu0 0
      %2734 = vmatpush1.bf16.msra.mxu0 0
      %2735 = vmatprep.subr.bf16.mxu0 0
      %2736 = vmatpush1.bf16.msra.mxu0 0
      %2737 = vmatprep.subr.bf16.mxu0 0
      %2738 = vmatpush1.bf16.msra.mxu0 0
      %2739 = vmatprep.subr.bf16.mxu0 0
      %2740 = vmatpush1.bf16.msra.mxu0 0
      %2741 = vmatprep.subr.bf16.mxu0 0
      %2742 = vmatpush1.bf16.msra.mxu0 0
      %2743 = vmatprep.subr.bf16.mxu0 0
      %2744 = vmatpush1.bf16.msra.mxu0 0
      %2745 = vmatprep.subr.bf16.mxu0 0
      %2746 = vmatpush1.bf16.msra.mxu0 0
      %2747 = vmatprep.subr.bf16.mxu0 0
      %2748 = vmatpush1.bf16.msra.mxu0 0
      %2749 = vmatprep.subr.bf16.mxu0 0
      %2750 = vmatpush1.bf16.msra.mxu0 0
      %2751 = vmatprep.subr.bf16.mxu0 0
      %2752 = vmatpush1.bf16.msra.mxu0 0
      %2753 = vmatprep.subr.bf16.mxu0 0
      %2754 = vmatpush1.bf16.msra.mxu0 0
      %2755 = vmatprep.subr.bf16.mxu0 0
      %2756 = vmatpush1.bf16.msra.mxu0 0
      %2757 = vmatprep.mubr.bf16.mxu0 0
      %2758 = vmatmul.mubr.bf16.gmra.mrb[0].mxu0 %v2723
      %v2759 = vpop.f32.mrb[0].mxu0
      %v2760 = vadd.f32 %v2693, %v2759
      %v2761 = vpop.f32.mrb[0].mxu0
      %v2762 = vpop.f32.mrb[0].mxu0
      %v2763 = vpop.f32.mrb[0].mxu0
      %2764 = vdwg.mxu0
      %v2769 = vunpack.c.l.b16 %v2407
      %v2770 = vunpack.c.l.b16 %v2408
      %v2771 = vunpack.c.l.b16 %v2409
      %v2772 = vunpack.c.l.b16 %v2410
      %v2773 = vpack.c.b16 %v2770, %v2769
      %v2774 = vpack.c.b16 %v2772, %v2771
      %2777 = vmatprep.subr.bf16.mxu0 0
      %2778 = vmatpush1.bf16.msra.mxu0 %v2773
      %2779 = vmatprep.subr.bf16.mxu0 0
      %2780 = vmatpush1.bf16.msra.mxu0 %v2774
      %2781 = vmatprep.subr.bf16.mxu0 0
      %2782 = vmatpush1.bf16.msra.mxu0 0
      %2783 = vmatprep.subr.bf16.mxu0 0
      %2784 = vmatpush1.bf16.msra.mxu0 0
      %2785 = vmatprep.subr.bf16.mxu0 0
      %2786 = vmatpush1.bf16.msra.mxu0 0
      %2787 = vmatprep.subr.bf16.mxu0 0
      %2788 = vmatpush1.bf16.msra.mxu0 0
      %2789 = vmatprep.subr.bf16.mxu0 0
      %2790 = vmatpush1.bf16.msra.mxu0 0
      %2791 = vmatprep.subr.bf16.mxu0 0
      %2792 = vmatpush1.bf16.msra.mxu0 0
      %2793 = vmatprep.subr.bf16.mxu0 0
      %2794 = vmatpush1.bf16.msra.mxu0 0
      %2795 = vmatprep.subr.bf16.mxu0 0
      %2796 = vmatpush1.bf16.msra.mxu0 0
      %2797 = vmatprep.subr.bf16.mxu0 0
      %2798 = vmatpush1.bf16.msra.mxu0 0
      %2799 = vmatprep.subr.bf16.mxu0 0
      %2800 = vmatpush1.bf16.msra.mxu0 0
      %2801 = vmatprep.subr.bf16.mxu0 0
      %2802 = vmatpush1.bf16.msra.mxu0 0
      %2803 = vmatprep.subr.bf16.mxu0 0
      %2804 = vmatpush1.bf16.msra.mxu0 0
      %2805 = vmatprep.subr.bf16.mxu0 0
      %2806 = vmatpush1.bf16.msra.mxu0 0
      %2807 = vmatprep.subr.bf16.mxu0 0
      %2808 = vmatpush1.bf16.msra.mxu0 0
      %2809 = vmatprep.mubr.bf16.mxu0 0
      %2810 = vmatmul.mubr.bf16.gmra.mrb[0].mxu0 %v2723
      %v2811 = vpop.f32.mrb[0].mxu0
      %v2812 = vadd.f32 %v2697, %v2811
      %v2813 = vpop.f32.mrb[0].mxu0
      %v2814 = vpop.f32.mrb[0].mxu0
      %v2815 = vpop.f32.mrb[0].mxu0
      %2816 = vdwg.mxu0
      %v2821 = vunpack.c.l.b16 %v2411
      %v2822 = vunpack.c.l.b16 %v2412
      %v2823 = vunpack.c.l.b16 %v2413
      %v2824 = vunpack.c.l.b16 %v2414
      %v2825 = vpack.c.b16 %v2822, %v2821
      %v2826 = vpack.c.b16 %v2824, %v2823
      %2829 = vmatprep.subr.bf16.mxu0 0
      %2830 = vmatpush1.bf16.msra.mxu0 %v2825
      %2831 = vmatprep.subr.bf16.mxu0 0
      %2832 = vmatpush1.bf16.msra.mxu0 %v2826
      %2833 = vmatprep.subr.bf16.mxu0 0
      %2834 = vmatpush1.bf16.msra.mxu0 0
      %2835 = vmatprep.subr.bf16.mxu0 0
      %2836 = vmatpush1.bf16.msra.mxu0 0
      %2837 = vmatprep.subr.bf16.mxu0 0
      %2838 = vmatpush1.bf16.msra.mxu0 0
      %2839 = vmatprep.subr.bf16.mxu0 0
      %2840 = vmatpush1.bf16.msra.mxu0 0
      %2841 = vmatprep.subr.bf16.mxu0 0
      %2842 = vmatpush1.bf16.msra.mxu0 0
      %2843 = vmatprep.subr.bf16.mxu0 0
      %2844 = vmatpush1.bf16.msra.mxu0 0
      %2845 = vmatprep.subr.bf16.mxu0 0
      %2846 = vmatpush1.bf16.msra.mxu0 0
      %2847 = vmatprep.subr.bf16.mxu0 0
      %2848 = vmatpush1.bf16.msra.mxu0 0
      %2849 = vmatprep.subr.bf16.mxu0 0
      %2850 = vmatpush1.bf16.msra.mxu0 0
      %2851 = vmatprep.subr.bf16.mxu0 0
      %2852 = vmatpush1.bf16.msra.mxu0 0
      %2853 = vmatprep.subr.bf16.mxu0 0
      %2854 = vmatpush1.bf16.msra.mxu0 0
      %2855 = vmatprep.subr.bf16.mxu0 0
      %2856 = vmatpush1.bf16.msra.mxu0 0
      %2857 = vmatprep.subr.bf16.mxu0 0
      %2858 = vmatpush1.bf16.msra.mxu0 0
      %2859 = vmatprep.subr.bf16.mxu0 0
      %2860 = vmatpush1.bf16.msra.mxu0 0
      %2861 = vmatprep.mubr.bf16.mxu0 0
      %2862 = vmatmul.mubr.bf16.gmra.mrb[0].mxu0 %v2723
      %v2863 = vpop.f32.mrb[0].mxu0
      %v2864 = vadd.f32 %v2701, %v2863
      %v2865 = vpop.f32.mrb[0].mxu0
      %v2866 = vpop.f32.mrb[0].mxu0
      %v2867 = vpop.f32.mrb[0].mxu0
      %2868 = vdwg.mxu0
      %v2873 = vunpack.c.l.b16 %v2415
      %v2874 = vunpack.c.l.b16 %v2416
      %v2875 = vunpack.c.l.b16 %v2417
      %v2876 = vunpack.c.l.b16 %v2418
      %v2877 = vpack.c.b16 %v2874, %v2873
      %v2878 = vpack.c.b16 %v2876, %v2875
      %2881 = vmatprep.subr.bf16.mxu0 0
      %2882 = vmatpush1.bf16.msra.mxu0 %v2877
      %2883 = vmatprep.subr.bf16.mxu0 0
      %2884 = vmatpush1.bf16.msra.mxu0 %v2878
      %2885 = vmatprep.subr.bf16.mxu0 0
      %2886 = vmatpush1.bf16.msra.mxu0 0
      %2887 = vmatprep.subr.bf16.mxu0 0
      %2888 = vmatpush1.bf16.msra.mxu0 0
      %2889 = vmatprep.subr.bf16.mxu0 0
      %2890 = vmatpush1.bf16.msra.mxu0 0
      %2891 = vmatprep.subr.bf16.mxu0 0
      %2892 = vmatpush1.bf16.msra.mxu0 0
      %2893 = vmatprep.subr.bf16.mxu0 0
      %2894 = vmatpush1.bf16.msra.mxu0 0
      %2895 = vmatprep.subr.bf16.mxu0 0
      %2896 = vmatpush1.bf16.msra.mxu0 0
      %2897 = vmatprep.subr.bf16.mxu0 0
      %2898 = vmatpush1.bf16.msra.mxu0 0
      %2899 = vmatprep.subr.bf16.mxu0 0
      %2900 = vmatpush1.bf16.msra.mxu0 0
      %2901 = vmatprep.subr.bf16.mxu0 0
      %2902 = vmatpush1.bf16.msra.mxu0 0
      %2903 = vmatprep.subr.bf16.mxu0 0
      %2904 = vmatpush1.bf16.msra.mxu0 0
      %2905 = vmatprep.subr.bf16.mxu0 0
      %2906 = vmatpush1.bf16.msra.mxu0 0
      %2907 = vmatprep.subr.bf16.mxu0 0
      %2908 = vmatpush1.bf16.msra.mxu0 0
      %2909 = vmatprep.subr.bf16.mxu0 0
      %2910 = vmatpush1.bf16.msra.mxu0 0
      %2911 = vmatprep.subr.bf16.mxu0 0
      %2912 = vmatpush1.bf16.msra.mxu0 0
      %2913 = vmatprep.mubr.bf16.mxu0 0
      %2914 = vmatmul.mubr.bf16.gmra.mrb[0].mxu0 %v2723
      %v2915 = vpop.f32.mrb[0].mxu0
      %v2916 = vadd.f32 %v2705, %v2915
      %v2917 = vpop.f32.mrb[0].mxu0
      %v2918 = vpop.f32.mrb[0].mxu0
      %v2919 = vpop.f32.mrb[0].mxu0
      %2920 = vdwg.mxu0
      %v2925 = vlaneseq
      %v2926 = vshrl.u32 %v2925, 7
      %v2927 = vsub.s32 0, %v2926
      %v2928 = vrot.slane %v2439, %v2927
      %v2929 = vlaneseq
      %v2930 = vshrl.u32 %v2929, 7
      %v2931 = vsub.s32 0, %v2930
      %v2932 = vrot.slane %v2440, %v2931
      %v2933 = vlaneseq
      %v2934 = vshrl.u32 %v2933, 7
      %v2935 = vsub.s32 0, %v2934
      %v2936 = vrot.slane %v2441, %v2935
      %v2937 = vlaneseq
      %v2938 = vshrl.u32 %v2937, 7
      %v2939 = vsub.s32 0, %v2938
      %v2940 = vrot.slane %v2442, %v2939
      %v2949 = vunpack.c.l.b16 %v2423
      %v2950 = vunpack.c.l.b16 %v2424
      %v2951 = vunpack.c.l.b16 %v2425
      %v2952 = vunpack.c.l.b16 %v2426
      %v2953 = vpack.c.b16 %v2950, %v2949
      %v2954 = vpack.c.b16 %v2952, %v2951
      %2957 = vmatprep.subr.bf16.mxu0 0
      %2958 = vmatpush1.bf16.msra.mxu0 %v2953
      %2959 = vmatprep.subr.bf16.mxu0 0
      %2960 = vmatpush1.bf16.msra.mxu0 %v2954
      %2961 = vmatprep.subr.bf16.mxu0 0
      %2962 = vmatpush1.bf16.msra.mxu0 0
      %2963 = vmatprep.subr.bf16.mxu0 0
      %2964 = vmatpush1.bf16.msra.mxu0 0
      %2965 = vmatprep.subr.bf16.mxu0 0
      %2966 = vmatpush1.bf16.msra.mxu0 0
      %2967 = vmatprep.subr.bf16.mxu0 0
      %2968 = vmatpush1.bf16.msra.mxu0 0
      %2969 = vmatprep.subr.bf16.mxu0 0
      %2970 = vmatpush1.bf16.msra.mxu0 0
      %2971 = vmatprep.subr.bf16.mxu0 0
      %2972 = vmatpush1.bf16.msra.mxu0 0
      %2973 = vmatprep.subr.bf16.mxu0 0
      %2974 = vmatpush1.bf16.msra.mxu0 0
      %2975 = vmatprep.subr.bf16.mxu0 0
      %2976 = vmatpush1.bf16.msra.mxu0 0
      %2977 = vmatprep.subr.bf16.mxu0 0
      %2978 = vmatpush1.bf16.msra.mxu0 0
      %2979 = vmatprep.subr.bf16.mxu0 0
      %2980 = vmatpush1.bf16.msra.mxu0 0
      %2981 = vmatprep.subr.bf16.mxu0 0
      %2982 = vmatpush1.bf16.msra.mxu0 0
      %2983 = vmatprep.subr.bf16.mxu0 0
      %2984 = vmatpush1.bf16.msra.mxu0 0
      %2985 = vmatprep.subr.bf16.mxu0 0
      %2986 = vmatpush1.bf16.msra.mxu0 0
      %2987 = vmatprep.subr.bf16.mxu0 0
      %2988 = vmatpush1.bf16.msra.mxu0 0
      %2989 = vmatprep.mubr.bf16.mxu0 0
      %2990 = vmatmul.mubr.bf16.gmra.mrb[0].mxu0 %v2723
      %v2991 = vpop.f32.mrb[0].mxu0
      %v2992 = vadd.f32 %v2928, %v2991
      %v2993 = vpop.f32.mrb[0].mxu0
      %v2994 = vpop.f32.mrb[0].mxu0
      %v2995 = vpop.f32.mrb[0].mxu0
      %2996 = vdwg.mxu0
      %v3001 = vunpack.c.l.b16 %v2427
      %v3002 = vunpack.c.l.b16 %v2428
      %v3003 = vunpack.c.l.b16 %v2429
      %v3004 = vunpack.c.l.b16 %v2430
      %v3005 = vpack.c.b16 %v3002, %v3001
      %v3006 = vpack.c.b16 %v3004, %v3003
      %3009 = vmatprep.subr.bf16.mxu0 0
      %3010 = vmatpush1.bf16.msra.mxu0 %v3005
      %3011 = vmatprep.subr.bf16.mxu0 0
      %3012 = vmatpush1.bf16.msra.mxu0 %v3006
      %3013 = vmatprep.subr.bf16.mxu0 0
      %3014 = vmatpush1.bf16.msra.mxu0 0
      %3015 = vmatprep.subr.bf16.mxu0 0
      %3016 = vmatpush1.bf16.msra.mxu0 0
      %3017 = vmatprep.subr.bf16.mxu0 0
      %3018 = vmatpush1.bf16.msra.mxu0 0
      %3019 = vmatprep.subr.bf16.mxu0 0
      %3020 = vmatpush1.bf16.msra.mxu0 0
      %3021 = vmatprep.subr.bf16.mxu0 0
      %3022 = vmatpush1.bf16.msra.mxu0 0
      %3023 = vmatprep.subr.bf16.mxu0 0
      %3024 = vmatpush1.bf16.msra.mxu0 0
      %3025 = vmatprep.subr.bf16.mxu0 0
      %3026 = vmatpush1.bf16.msra.mxu0 0
      %3027 = vmatprep.subr.bf16.mxu0 0
      %3028 = vmatpush1.bf16.msra.mxu0 0
      %3029 = vmatprep.subr.bf16.mxu0 0
      %3030 = vmatpush1.bf16.msra.mxu0 0
      %3031 = vmatprep.subr.bf16.mxu0 0
      %3032 = vmatpush1.bf16.msra.mxu0 0
      %3033 = vmatprep.subr.bf16.mxu0 0
      %3034 = vmatpush1.bf16.msra.mxu0 0
      %3035 = vmatprep.subr.bf16.mxu0 0
      %3036 = vmatpush1.bf16.msra.mxu0 0
      %3037 = vmatprep.subr.bf16.mxu0 0
      %3038 = vmatpush1.bf16.msra.mxu0 0
      %3039 = vmatprep.subr.bf16.mxu0 0
      %3040 = vmatpush1.bf16.msra.mxu0 0
      %3041 = vmatprep.mubr.bf16.mxu0 0
      %3042 = vmatmul.mubr.bf16.gmra.mrb[0].mxu0 %v2723
      %v3043 = vpop.f32.mrb[0].mxu0
      %v3044 = vadd.f32 %v2932, %v3043
      %v3045 = vpop.f32.mrb[0].mxu0
      %v3046 = vpop.f32.mrb[0].mxu0
      %v3047 = vpop.f32.mrb[0].mxu0
      %3048 = vdwg.mxu0
      %v3053 = vunpack.c.l.b16 %v2431
      %v3054 = vunpack.c.l.b16 %v2432
      %v3055 = vunpack.c.l.b16 %v2433
      %v3056 = vunpack.c.l.b16 %v2434
      %v3057 = vpack.c.b16 %v3054, %v3053
      %v3058 = vpack.c.b16 %v3056, %v3055
      %3061 = vmatprep.subr.bf16.mxu0 0
      %3062 = vmatpush1.bf16.msra.mxu0 %v3057
      %3063 = vmatprep.subr.bf16.mxu0 0
      %3064 = vmatpush1.bf16.msra.mxu0 %v3058
      %3065 = vmatprep.subr.bf16.mxu0 0
      %3066 = vmatpush1.bf16.msra.mxu0 0
      %3067 = vmatprep.subr.bf16.mxu0 0
      %3068 = vmatpush1.bf16.msra.mxu0 0
      %3069 = vmatprep.subr.bf16.mxu0 0
      %3070 = vmatpush1.bf16.msra.mxu0 0
      %3071 = vmatprep.subr.bf16.mxu0 0
      %3072 = vmatpush1.bf16.msra.mxu0 0
      %3073 = vmatprep.subr.bf16.mxu0 0
      %3074 = vmatpush1.bf16.msra.mxu0 0
      %3075 = vmatprep.subr.bf16.mxu0 0
      %3076 = vmatpush1.bf16.msra.mxu0 0
      %3077 = vmatprep.subr.bf16.mxu0 0
      %3078 = vmatpush1.bf16.msra.mxu0 0
      %3079 = vmatprep.subr.bf16.mxu0 0
      %3080 = vmatpush1.bf16.msra.mxu0 0
      %3081 = vmatprep.subr.bf16.mxu0 0
      %3082 = vmatpush1.bf16.msra.mxu0 0
      %3083 = vmatprep.subr.bf16.mxu0 0
      %3084 = vmatpush1.bf16.msra.mxu0 0
      %3085 = vmatprep.subr.bf16.mxu0 0
      %3086 = vmatpush1.bf16.msra.mxu0 0
      %3087 = vmatprep.subr.bf16.mxu0 0
      %3088 = vmatpush1.bf16.msra.mxu0 0
      %3089 = vmatprep.subr.bf16.mxu0 0
      %3090 = vmatpush1.bf16.msra.mxu0 0
      %3091 = vmatprep.subr.bf16.mxu0 0
      %3092 = vmatpush1.bf16.msra.mxu0 0
      %3093 = vmatprep.mubr.bf16.mxu0 0
      %3094 = vmatmul.mubr.bf16.gmra.mrb[0].mxu0 %v2723
      %v3095 = vpop.f32.mrb[0].mxu0
      %v3096 = vadd.f32 %v2936, %v3095
      %v3097 = vpop.f32.mrb[0].mxu0
      %v3098 = vpop.f32.mrb[0].mxu0
      %v3099 = vpop.f32.mrb[0].mxu0
      %3100 = vdwg.mxu0
      %v3105 = vunpack.c.l.b16 %v2435
      %v3106 = vunpack.c.l.b16 %v2436
      %v3107 = vunpack.c.l.b16 %v2437
      %v3108 = vunpack.c.l.b16 %v2438
      %v3109 = vpack.c.b16 %v3106, %v3105
      %v3110 = vpack.c.b16 %v3108, %v3107
      %3113 = vmatprep.subr.bf16.mxu0 0
      %3114 = vmatpush1.bf16.msra.mxu0 %v3109
      %3115 = vmatprep.subr.bf16.mxu0 0
      %3116 = vmatpush1.bf16.msra.mxu0 %v3110
      %3117 = vmatprep.subr.bf16.mxu0 0
      %3118 = vmatpush1.bf16.msra.mxu0 0
      %3119 = vmatprep.subr.bf16.mxu0 0
      %3120 = vmatpush1.bf16.msra.mxu0 0
      %3121 = vmatprep.subr.bf16.mxu0 0
      %3122 = vmatpush1.bf16.msra.mxu0 0
      %3123 = vmatprep.subr.bf16.mxu0 0
      %3124 = vmatpush1.bf16.msra.mxu0 0
      %3125 = vmatprep.subr.bf16.mxu0 0
      %3126 = vmatpush1.bf16.msra.mxu0 0
      %3127 = vmatprep.subr.bf16.mxu0 0
      %3128 = vmatpush1.bf16.msra.mxu0 0
      %3129 = vmatprep.subr.bf16.mxu0 0
      %3130 = vmatpush1.bf16.msra.mxu0 0
      %3131 = vmatprep.subr.bf16.mxu0 0
      %3132 = vmatpush1.bf16.msra.mxu0 0
      %3133 = vmatprep.subr.bf16.mxu0 0
      %3134 = vmatpush1.bf16.msra.mxu0 0
      %3135 = vmatprep.subr.bf16.mxu0 0
      %3136 = vmatpush1.bf16.msra.mxu0 0
      %3137 = vmatprep.subr.bf16.mxu0 0
      %3138 = vmatpush1.bf16.msra.mxu0 0
      %3139 = vmatprep.subr.bf16.mxu0 0
      %3140 = vmatpush1.bf16.msra.mxu0 0
      %3141 = vmatprep.subr.bf16.mxu0 0
      %3142 = vmatpush1.bf16.msra.mxu0 0
      %3143 = vmatprep.subr.bf16.mxu0 0
      %3144 = vmatpush1.bf16.msra.mxu0 0
      %3145 = vmatprep.mubr.bf16.mxu0 0
      %3146 = vmatmul.mubr.bf16.gmra.mrb[0].mxu0 %v2723
      %v3147 = vpop.f32.mrb[0].mxu0
      %v3148 = vadd.f32 %v2940, %v3147
      %v3149 = vpop.f32.mrb[0].mxu0
      %v3150 = vpop.f32.mrb[0].mxu0
      %v3151 = vpop.f32.mrb[0].mxu0
      %3152 = vdwg.mxu0
      %v3153 = vpack.c.bf16 %v2525, %v2525
      %v3154 = vpack.c.bf16 %v2577, %v2577
      %v3155 = vpack.c.bf16 %v2629, %v2629
      %v3156 = vpack.c.bf16 %v2681, %v2681
      %v3157 = vpack.c.bf16 %v2760, %v2760
      %v3158 = vpack.c.bf16 %v2812, %v2812
      %v3159 = vpack.c.bf16 %v2864, %v2864
      %v3160 = vpack.c.bf16 %v2916, %v2916
      %v3162 = vsel %vm1722, %v3153, 0
      %v3165 = vsel %vm1722, %v3157, 0
      %3167 = vmatprep.subr.bf16.mxu0 0
      %3168 = vmatpush1.bf16.xpose.msra.mxu0 %v3165
      %3169 = vmatprep.subr.bf16.mxu0 0
      %3170 = vmatpush1.bf16.xpose.msra.mxu0 0
      %3171 = vmatprep.subr.bf16.mxu0 0
      %3172 = vmatpush1.bf16.xpose.msra.mxu0 0
      %3173 = vmatprep.subr.bf16.mxu0 0
      %3174 = vmatpush1.bf16.xpose.msra.mxu0 0
      %3175 = vmatprep.subr.bf16.mxu0 0
      %3176 = vmatpush1.bf16.xpose.msra.mxu0 0
      %3177 = vmatprep.subr.bf16.mxu0 0
      %3178 = vmatpush1.bf16.xpose.msra.mxu0 0
      %3179 = vmatprep.subr.bf16.mxu0 0
      %3180 = vmatpush1.bf16.xpose.msra.mxu0 0
      %3181 = vmatprep.subr.bf16.mxu0 0
      %3182 = vmatpush1.bf16.xpose.msra.mxu0 0
      %3183 = vmatprep.subr.bf16.mxu0 0
      %3184 = vmatpush1.bf16.xpose.msra.mxu0 0
      %3185 = vmatprep.subr.bf16.mxu0 0
      %3186 = vmatpush1.bf16.xpose.msra.mxu0 0
      %3187 = vmatprep.subr.bf16.mxu0 0
      %3188 = vmatpush1.bf16.xpose.msra.mxu0 0
      %3189 = vmatprep.subr.bf16.mxu0 0
      %3190 = vmatpush1.bf16.xpose.msra.mxu0 0
      %3191 = vmatprep.subr.bf16.mxu0 0
      %3192 = vmatpush1.bf16.xpose.msra.mxu0 0
      %3193 = vmatprep.subr.bf16.mxu0 0
      %3194 = vmatpush1.bf16.xpose.msra.mxu0 0
      %3195 = vmatprep.subr.bf16.mxu0 0
      %3196 = vmatpush1.bf16.xpose.msra.mxu0 0
      %3197 = vmatprep.subr.bf16.mxu0 0
      %3198 = vmatpush1.bf16.xpose.msra.mxu0 0
      %3199 = vmatprep.mubr.bf16.mxu0 0
      %3200 = vmatmul.mubr.bf16.gmra.mrb[0].mxu0 %v3162
      %v3201 = vpop.f32.mrb[0].mxu0
      %v3202 = vadd.f32 0.0, %v3201
      %v3203 = vpop.f32.mrb[0].mxu0
      %v3204 = vpop.f32.mrb[0].mxu0
      %v3205 = vpop.f32.mrb[0].mxu0
      %3206 = vdwg.mxu0
      %v3208 = vsel %vm1722, %v3154, 0
      %v3211 = vsel %vm1722, %v3158, 0
      %3213 = vmatprep.subr.bf16.mxu0 0
      %3214 = vmatpush1.bf16.xpose.msra.mxu0 %v3211
      %3215 = vmatprep.subr.bf16.mxu0 0
      %3216 = vmatpush1.bf16.xpose.msra.mxu0 0
      %3217 = vmatprep.subr.bf16.mxu0 0
      %3218 = vmatpush1.bf16.xpose.msra.mxu0 0
      %3219 = vmatprep.subr.bf16.mxu0 0
      %3220 = vmatpush1.bf16.xpose.msra.mxu0 0
      %3221 = vmatprep.subr.bf16.mxu0 0
      %3222 = vmatpush1.bf16.xpose.msra.mxu0 0
      %3223 = vmatprep.subr.bf16.mxu0 0
      %3224 = vmatpush1.bf16.xpose.msra.mxu0 0
      %3225 = vmatprep.subr.bf16.mxu0 0
      %3226 = vmatpush1.bf16.xpose.msra.mxu0 0
      %3227 = vmatprep.subr.bf16.mxu0 0
      %3228 = vmatpush1.bf16.xpose.msra.mxu0 0
      %3229 = vmatprep.subr.bf16.mxu0 0
      %3230 = vmatpush1.bf16.xpose.msra.mxu0 0
      %3231 = vmatprep.subr.bf16.mxu0 0
      %3232 = vmatpush1.bf16.xpose.msra.mxu0 0
      %3233 = vmatprep.subr.bf16.mxu0 0
      %3234 = vmatpush1.bf16.xpose.msra.mxu0 0
      %3235 = vmatprep.subr.bf16.mxu0 0
      %3236 = vmatpush1.bf16.xpose.msra.mxu0 0
      %3237 = vmatprep.subr.bf16.mxu0 0
      %3238 = vmatpush1.bf16.xpose.msra.mxu0 0
      %3239 = vmatprep.subr.bf16.mxu0 0
      %3240 = vmatpush1.bf16.xpose.msra.mxu0 0
      %3241 = vmatprep.subr.bf16.mxu0 0
      %3242 = vmatpush1.bf16.xpose.msra.mxu0 0
      %3243 = vmatprep.subr.bf16.mxu0 0
      %3244 = vmatpush1.bf16.xpose.msra.mxu0 0
      %3245 = vmatprep.mubr.bf16.mxu0 0
      %3246 = vmatmul.mubr.bf16.gmra.mrb[0].mxu0 %v3208
      %v3247 = vpop.f32.mrb[0].mxu0
      %v3248 = vadd.f32 0.0, %v3247
      %v3249 = vpop.f32.mrb[0].mxu0
      %v3250 = vpop.f32.mrb[0].mxu0
      %v3251 = vpop.f32.mrb[0].mxu0
      %3252 = vdwg.mxu0
      %v3254 = vsel %vm1722, %v3155, 0
      %v3257 = vsel %vm1722, %v3159, 0
      %3259 = vmatprep.subr.bf16.mxu0 0
      %3260 = vmatpush1.bf16.xpose.msra.mxu0 %v3257
      %3261 = vmatprep.subr.bf16.mxu0 0
      %3262 = vmatpush1.bf16.xpose.msra.mxu0 0
      %3263 = vmatprep.subr.bf16.mxu0 0
      %3264 = vmatpush1.bf16.xpose.msra.mxu0 0
      %3265 = vmatprep.subr.bf16.mxu0 0
      %3266 = vmatpush1.bf16.xpose.msra.mxu0 0
      %3267 = vmatprep.subr.bf16.mxu0 0
      %3268 = vmatpush1.bf16.xpose.msra.mxu0 0
      %3269 = vmatprep.subr.bf16.mxu0 0
      %3270 = vmatpush1.bf16.xpose.msra.mxu0 0
      %3271 = vmatprep.subr.bf16.mxu0 0
      %3272 = vmatpush1.bf16.xpose.msra.mxu0 0
      %3273 = vmatprep.subr.bf16.mxu0 0
      %3274 = vmatpush1.bf16.xpose.msra.mxu0 0
      %3275 = vmatprep.subr.bf16.mxu0 0
      %3276 = vmatpush1.bf16.xpose.msra.mxu0 0
      %3277 = vmatprep.subr.bf16.mxu0 0
      %3278 = vmatpush1.bf16.xpose.msra.mxu0 0
      %3279 = vmatprep.subr.bf16.mxu0 0
      %3280 = vmatpush1.bf16.xpose.msra.mxu0 0
      %3281 = vmatprep.subr.bf16.mxu0 0
      %3282 = vmatpush1.bf16.xpose.msra.mxu0 0
      %3283 = vmatprep.subr.bf16.mxu0 0
      %3284 = vmatpush1.bf16.xpose.msra.mxu0 0
      %3285 = vmatprep.subr.bf16.mxu0 0
      %3286 = vmatpush1.bf16.xpose.msra.mxu0 0
      %3287 = vmatprep.subr.bf16.mxu0 0
      %3288 = vmatpush1.bf16.xpose.msra.mxu0 0
      %3289 = vmatprep.subr.bf16.mxu0 0
      %3290 = vmatpush1.bf16.xpose.msra.mxu0 0
      %3291 = vmatprep.mubr.bf16.mxu0 0
      %3292 = vmatmul.mubr.bf16.gmra.mrb[0].mxu0 %v3254
      %v3293 = vpop.f32.mrb[0].mxu0
      %v3294 = vadd.f32 0.0, %v3293
      %v3295 = vpop.f32.mrb[0].mxu0
      %v3296 = vpop.f32.mrb[0].mxu0
      %v3297 = vpop.f32.mrb[0].mxu0
      %3298 = vdwg.mxu0
      %v3300 = vsel %vm1722, %v3156, 0
      %v3303 = vsel %vm1722, %v3160, 0
      %3305 = vmatprep.subr.bf16.mxu0 0
      %3306 = vmatpush1.bf16.xpose.msra.mxu0 %v3303
      %3307 = vmatprep.subr.bf16.mxu0 0
      %3308 = vmatpush1.bf16.xpose.msra.mxu0 0
      %3309 = vmatprep.subr.bf16.mxu0 0
      %3310 = vmatpush1.bf16.xpose.msra.mxu0 0
      %3311 = vmatprep.subr.bf16.mxu0 0
      %3312 = vmatpush1.bf16.xpose.msra.mxu0 0
      %3313 = vmatprep.subr.bf16.mxu0 0
      %3314 = vmatpush1.bf16.xpose.msra.mxu0 0
      %3315 = vmatprep.subr.bf16.mxu0 0
      %3316 = vmatpush1.bf16.xpose.msra.mxu0 0
      %3317 = vmatprep.subr.bf16.mxu0 0
      %3318 = vmatpush1.bf16.xpose.msra.mxu0 0
      %3319 = vmatprep.subr.bf16.mxu0 0
      %3320 = vmatpush1.bf16.xpose.msra.mxu0 0
      %3321 = vmatprep.subr.bf16.mxu0 0
      %3322 = vmatpush1.bf16.xpose.msra.mxu0 0
      %3323 = vmatprep.subr.bf16.mxu0 0
      %3324 = vmatpush1.bf16.xpose.msra.mxu0 0
      %3325 = vmatprep.subr.bf16.mxu0 0
      %3326 = vmatpush1.bf16.xpose.msra.mxu0 0
      %3327 = vmatprep.subr.bf16.mxu0 0
      %3328 = vmatpush1.bf16.xpose.msra.mxu0 0
      %3329 = vmatprep.subr.bf16.mxu0 0
      %3330 = vmatpush1.bf16.xpose.msra.mxu0 0
      %3331 = vmatprep.subr.bf16.mxu0 0
      %3332 = vmatpush1.bf16.xpose.msra.mxu0 0
      %3333 = vmatprep.subr.bf16.mxu0 0
      %3334 = vmatpush1.bf16.xpose.msra.mxu0 0
      %3335 = vmatprep.subr.bf16.mxu0 0
      %3336 = vmatpush1.bf16.xpose.msra.mxu0 0
      %3337 = vmatprep.mubr.bf16.mxu0 0
      %3338 = vmatmul.mubr.bf16.gmra.mrb[0].mxu0 %v3300
      %v3339 = vpop.f32.mrb[0].mxu0
      %v3340 = vadd.f32 0.0, %v3339
      %v3341 = vpop.f32.mrb[0].mxu0
      %v3342 = vpop.f32.mrb[0].mxu0
      %v3343 = vpop.f32.mrb[0].mxu0
      %3344 = vdwg.mxu0
      %v3345 = vmul.f32 %v3202, 0.35355338
      %v3346 = vmul.f32 %v3248, 0.35355338
      %v3347 = vmul.f32 %v3294, 0.35355338
      %v3348 = vmul.f32 %v3340, 0.35355338
      %v3349 = vsel %vm1722, %v3345, -inf
      %3350 = vmax.xlane.f32.xlu0 %v3349
      %v3351 = vpop.xlane.xlu0 %3350
      %v3352 = vsel %vm1722, %v3346, -inf
      %3353 = vmax.xlane.f32.xlu0 %v3352
      %v3354 = vpop.xlane.xlu0 %3353
      %v3355 = vsel %vm1722, %v3347, -inf
      %3356 = vmax.xlane.f32.xlu0 %v3355
      %v3357 = vpop.xlane.xlu0 %3356
      %v3358 = vsel %vm1722, %v3348, -inf
      %3359 = vmax.xlane.f32.xlu0 %v3358
      %v3360 = vpop.xlane.xlu0 %3359
      %v3361 = vsub.f32 %v3345, %v3351
      %v3362 = vsub.f32 %v3346, %v3354
      %v3363 = vsub.f32 %v3347, %v3357
      %v3364 = vsub.f32 %v3348, %v3360
      %v3365 = vmul.f32 %v3361, 1.442695
      %v3366 = vpow.pop %v3365
      %v3367 = vmul.f32 %v3362, 1.442695
      %v3368 = vpow.pop %v3367
      %v3369 = vmul.f32 %v3363, 1.442695
      %v3370 = vpow.pop %v3369
      %v3371 = vmul.f32 %v3364, 1.442695
      %v3372 = vpow.pop %v3371
      %v3373 = vsel %vm1722, %v3366, 0.0
      %3374 = vadd.xlane.f32.xlu0 %v3373
      %v3375 = vpop.xlane.xlu0 %3374
      %v3376 = vsel %vm1722, %v3368, 0.0
      %3377 = vadd.xlane.f32.xlu0 %v3376
      %v3378 = vpop.xlane.xlu0 %3377
      %v3379 = vsel %vm1722, %v3370, 0.0
      %3380 = vadd.xlane.f32.xlu0 %v3379
      %v3381 = vpop.xlane.xlu0 %3380
      %v3382 = vsel %vm1722, %v3372, 0.0
      %3383 = vadd.xlane.f32.xlu0 %v3382
      %v3384 = vpop.xlane.xlu0 %3383
      %v3385 = vrcp.pop %v3375
      %v3386 = vmul.f32 %v3366, %v3385
      %v3387 = vrcp.pop %v3378
      %v3388 = vmul.f32 %v3368, %v3387
      %v3389 = vrcp.pop %v3381
      %v3390 = vmul.f32 %v3370, %v3389
      %v3391 = vrcp.pop %v3384
      %v3392 = vmul.f32 %v3372, %v3391
      %v3393 = vpack.c.bf16 %v3386, %v3386
      %v3394 = vpack.c.bf16 %v3388, %v3388
      %v3395 = vpack.c.bf16 %v3390, %v3390
      %v3396 = vpack.c.bf16 %v3392, %v3392
      %v3397 = vpack.c.bf16 %v2992, %v2992
      %v3398 = vpack.c.bf16 %v3044, %v3044
      %v3399 = vpack.c.bf16 %v3096, %v3096
      %v3400 = vpack.c.bf16 %v3148, %v3148
      %v3402 = vsel %vm1722, %v3393, 0
      %v3405 = vsel %vm1970, %v3397, 0
      %3407 = vmatprep.subr.bf16.mxu0 0
      %3408 = vmatpush1.bf16.msra.mxu0 %v3405
      %3409 = vmatprep.subr.bf16.mxu0 0
      %3410 = vmatpush1.bf16.msra.mxu0 0
      %3411 = vmatprep.subr.bf16.mxu0 0
      %3412 = vmatpush1.bf16.msra.mxu0 0
      %3413 = vmatprep.subr.bf16.mxu0 0
      %3414 = vmatpush1.bf16.msra.mxu0 0
      %3415 = vmatprep.subr.bf16.mxu0 0
      %3416 = vmatpush1.bf16.msra.mxu0 0
      %3417 = vmatprep.subr.bf16.mxu0 0
      %3418 = vmatpush1.bf16.msra.mxu0 0
      %3419 = vmatprep.subr.bf16.mxu0 0
      %3420 = vmatpush1.bf16.msra.mxu0 0
      %3421 = vmatprep.subr.bf16.mxu0 0
      %3422 = vmatpush1.bf16.msra.mxu0 0
      %3423 = vmatprep.subr.bf16.mxu0 0
      %3424 = vmatpush1.bf16.msra.mxu0 0
      %3425 = vmatprep.subr.bf16.mxu0 0
      %3426 = vmatpush1.bf16.msra.mxu0 0
      %3427 = vmatprep.subr.bf16.mxu0 0
      %3428 = vmatpush1.bf16.msra.mxu0 0
      %3429 = vmatprep.subr.bf16.mxu0 0
      %3430 = vmatpush1.bf16.msra.mxu0 0
      %3431 = vmatprep.subr.bf16.mxu0 0
      %3432 = vmatpush1.bf16.msra.mxu0 0
      %3433 = vmatprep.subr.bf16.mxu0 0
      %3434 = vmatpush1.bf16.msra.mxu0 0
      %3435 = vmatprep.subr.bf16.mxu0 0
      %3436 = vmatpush1.bf16.msra.mxu0 0
      %3437 = vmatprep.subr.bf16.mxu0 0
      %3438 = vmatpush1.bf16.msra.mxu0 0
      %3439 = vmatprep.mubr.bf16.mxu0 0
      %3440 = vmatmul.mubr.bf16.gmra.mrb[0].mxu0 %v3402
      %v3441 = vpop.f32.mrb[0].mxu0
      %v3442 = vadd.f32 0.0, %v3441
      %v3443 = vpop.f32.mrb[0].mxu0
      %v3444 = vpop.f32.mrb[0].mxu0
      %v3445 = vpop.f32.mrb[0].mxu0
      %3446 = vdwg.mxu0
      %v3448 = vsel %vm1722, %v3394, 0
      %v3451 = vsel %vm1970, %v3398, 0
      %3453 = vmatprep.subr.bf16.mxu0 0
      %3454 = vmatpush1.bf16.msra.mxu0 %v3451
      %3455 = vmatprep.subr.bf16.mxu0 0
      %3456 = vmatpush1.bf16.msra.mxu0 0
      %3457 = vmatprep.subr.bf16.mxu0 0
      %3458 = vmatpush1.bf16.msra.mxu0 0
      %3459 = vmatprep.subr.bf16.mxu0 0
      %3460 = vmatpush1.bf16.msra.mxu0 0
      %3461 = vmatprep.subr.bf16.mxu0 0
      %3462 = vmatpush1.bf16.msra.mxu0 0
      %3463 = vmatprep.subr.bf16.mxu0 0
      %3464 = vmatpush1.bf16.msra.mxu0 0
      %3465 = vmatprep.subr.bf16.mxu0 0
      %3466 = vmatpush1.bf16.msra.mxu0 0
      %3467 = vmatprep.subr.bf16.mxu0 0
      %3468 = vmatpush1.bf16.msra.mxu0 0
      %3469 = vmatprep.subr.bf16.mxu0 0
      %3470 = vmatpush1.bf16.msra.mxu0 0
      %3471 = vmatprep.subr.bf16.mxu0 0
      %3472 = vmatpush1.bf16.msra.mxu0 0
      %3473 = vmatprep.subr.bf16.mxu0 0
      %3474 = vmatpush1.bf16.msra.mxu0 0
      %3475 = vmatprep.subr.bf16.mxu0 0
      %3476 = vmatpush1.bf16.msra.mxu0 0
      %3477 = vmatprep.subr.bf16.mxu0 0
      %3478 = vmatpush1.bf16.msra.mxu0 0
      %3479 = vmatprep.subr.bf16.mxu0 0
      %3480 = vmatpush1.bf16.msra.mxu0 0
      %3481 = vmatprep.subr.bf16.mxu0 0
      %3482 = vmatpush1.bf16.msra.mxu0 0
      %3483 = vmatprep.subr.bf16.mxu0 0
      %3484 = vmatpush1.bf16.msra.mxu0 0
      %3485 = vmatprep.mubr.bf16.mxu0 0
      %3486 = vmatmul.mubr.bf16.gmra.mrb[0].mxu0 %v3448
      %v3487 = vpop.f32.mrb[0].mxu0
      %v3488 = vadd.f32 0.0, %v3487
      %v3489 = vpop.f32.mrb[0].mxu0
      %v3490 = vpop.f32.mrb[0].mxu0
      %v3491 = vpop.f32.mrb[0].mxu0
      %3492 = vdwg.mxu0
      %v3494 = vsel %vm1722, %v3395, 0
      %v3497 = vsel %vm1970, %v3399, 0
      %3499 = vmatprep.subr.bf16.mxu0 0
      %3500 = vmatpush1.bf16.msra.mxu0 %v3497
      %3501 = vmatprep.subr.bf16.mxu0 0
      %3502 = vmatpush1.bf16.msra.mxu0 0
      %3503 = vmatprep.subr.bf16.mxu0 0
      %3504 = vmatpush1.bf16.msra.mxu0 0
      %3505 = vmatprep.subr.bf16.mxu0 0
      %3506 = vmatpush1.bf16.msra.mxu0 0
      %3507 = vmatprep.subr.bf16.mxu0 0
      %3508 = vmatpush1.bf16.msra.mxu0 0
      %3509 = vmatprep.subr.bf16.mxu0 0
      %3510 = vmatpush1.bf16.msra.mxu0 0
      %3511 = vmatprep.subr.bf16.mxu0 0
      %3512 = vmatpush1.bf16.msra.mxu0 0
      %3513 = vmatprep.subr.bf16.mxu0 0
      %3514 = vmatpush1.bf16.msra.mxu0 0
      %3515 = vmatprep.subr.bf16.mxu0 0
      %3516 = vmatpush1.bf16.msra.mxu0 0
      %3517 = vmatprep.subr.bf16.mxu0 0
      %3518 = vmatpush1.bf16.msra.mxu0 0
      %3519 = vmatprep.subr.bf16.mxu0 0
      %3520 = vmatpush1.bf16.msra.mxu0 0
      %3521 = vmatprep.subr.bf16.mxu0 0
      %3522 = vmatpush1.bf16.msra.mxu0 0
      %3523 = vmatprep.subr.bf16.mxu0 0
      %3524 = vmatpush1.bf16.msra.mxu0 0
      %3525 = vmatprep.subr.bf16.mxu0 0
      %3526 = vmatpush1.bf16.msra.mxu0 0
      %3527 = vmatprep.subr.bf16.mxu0 0
      %3528 = vmatpush1.bf16.msra.mxu0 0
      %3529 = vmatprep.subr.bf16.mxu0 0
      %3530 = vmatpush1.bf16.msra.mxu0 0
      %3531 = vmatprep.mubr.bf16.mxu0 0
      %3532 = vmatmul.mubr.bf16.gmra.mrb[0].mxu0 %v3494
      %v3533 = vpop.f32.mrb[0].mxu0
      %v3534 = vadd.f32 0.0, %v3533
      %v3535 = vpop.f32.mrb[0].mxu0
      %v3536 = vpop.f32.mrb[0].mxu0
      %v3537 = vpop.f32.mrb[0].mxu0
      %3538 = vdwg.mxu0
      %v3540 = vsel %vm1722, %v3396, 0
      %v3543 = vsel %vm1970, %v3400, 0
      %3545 = vmatprep.subr.bf16.mxu0 0
      %3546 = vmatpush1.bf16.msra.mxu0 %v3543
      %3547 = vmatprep.subr.bf16.mxu0 0
      %3548 = vmatpush1.bf16.msra.mxu0 0
      %3549 = vmatprep.subr.bf16.mxu0 0
      %3550 = vmatpush1.bf16.msra.mxu0 0
      %3551 = vmatprep.subr.bf16.mxu0 0
      %3552 = vmatpush1.bf16.msra.mxu0 0
      %3553 = vmatprep.subr.bf16.mxu0 0
      %3554 = vmatpush1.bf16.msra.mxu0 0
      %3555 = vmatprep.subr.bf16.mxu0 0
      %3556 = vmatpush1.bf16.msra.mxu0 0
      %3557 = vmatprep.subr.bf16.mxu0 0
      %3558 = vmatpush1.bf16.msra.mxu0 0
      %3559 = vmatprep.subr.bf16.mxu0 0
      %3560 = vmatpush1.bf16.msra.mxu0 0
      %3561 = vmatprep.subr.bf16.mxu0 0
      %3562 = vmatpush1.bf16.msra.mxu0 0
      %3563 = vmatprep.subr.bf16.mxu0 0
      %3564 = vmatpush1.bf16.msra.mxu0 0
      %3565 = vmatprep.subr.bf16.mxu0 0
      %3566 = vmatpush1.bf16.msra.mxu0 0
      %3567 = vmatprep.subr.bf16.mxu0 0
      %3568 = vmatpush1.bf16.msra.mxu0 0
      %3569 = vmatprep.subr.bf16.mxu0 0
      %3570 = vmatpush1.bf16.msra.mxu0 0
      %3571 = vmatprep.subr.bf16.mxu0 0
      %3572 = vmatpush1.bf16.msra.mxu0 0
      %3573 = vmatprep.subr.bf16.mxu0 0
      %3574 = vmatpush1.bf16.msra.mxu0 0
      %3575 = vmatprep.subr.bf16.mxu0 0
      %3576 = vmatpush1.bf16.msra.mxu0 0
      %3577 = vmatprep.mubr.bf16.mxu0 0
      %3578 = vmatmul.mubr.bf16.gmra.mrb[0].mxu0 %v3540
      %v3579 = vpop.f32.mrb[0].mxu0
      %v3580 = vadd.f32 0.0, %v3579
      %v3581 = vpop.f32.mrb[0].mxu0
      %v3582 = vpop.f32.mrb[0].mxu0
      %v3583 = vpop.f32.mrb[0].mxu0
      %3584 = vdwg.mxu0
      %v3585 = vpack.c.bf16 %v3442, %v3442
      %v3586 = vpack.c.bf16 %v3488, %v3488
      %v3587 = vpack.c.bf16 %v3534, %v3534
      %v3588 = vpack.c.bf16 %v3580, %v3580
      %v3590 = vsel %vm1722, %v3585, 0
      %v3593 = vsel %vm1970, %v2443, 0
      %3595 = vmatprep.subr.bf16.mxu0 0
      %3596 = vmatpush1.bf16.msra.mxu0 %v3593
      %3597 = vmatprep.subr.bf16.mxu0 0
      %3598 = vmatpush1.bf16.msra.mxu0 0
      %3599 = vmatprep.subr.bf16.mxu0 0
      %3600 = vmatpush1.bf16.msra.mxu0 0
      %3601 = vmatprep.subr.bf16.mxu0 0
      %3602 = vmatpush1.bf16.msra.mxu0 0
      %3603 = vmatprep.subr.bf16.mxu0 0
      %3604 = vmatpush1.bf16.msra.mxu0 0
      %3605 = vmatprep.subr.bf16.mxu0 0
      %3606 = vmatpush1.bf16.msra.mxu0 0
      %3607 = vmatprep.subr.bf16.mxu0 0
      %3608 = vmatpush1.bf16.msra.mxu0 0
      %3609 = vmatprep.subr.bf16.mxu0 0
      %3610 = vmatpush1.bf16.msra.mxu0 0
      %3611 = vmatprep.subr.bf16.mxu0 0
      %3612 = vmatpush1.bf16.msra.mxu0 0
      %3613 = vmatprep.subr.bf16.mxu0 0
      %3614 = vmatpush1.bf16.msra.mxu0 0
      %3615 = vmatprep.subr.bf16.mxu0 0
      %3616 = vmatpush1.bf16.msra.mxu0 0
      %3617 = vmatprep.subr.bf16.mxu0 0
      %3618 = vmatpush1.bf16.msra.mxu0 0
      %3619 = vmatprep.subr.bf16.mxu0 0
      %3620 = vmatpush1.bf16.msra.mxu0 0
      %3621 = vmatprep.subr.bf16.mxu0 0
      %3622 = vmatpush1.bf16.msra.mxu0 0
      %3623 = vmatprep.subr.bf16.mxu0 0
      %3624 = vmatpush1.bf16.msra.mxu0 0
      %3625 = vmatprep.subr.bf16.mxu0 0
      %3626 = vmatpush1.bf16.msra.mxu0 0
      %3627 = vmatprep.mubr.bf16.mxu0 0
      %3628 = vmatmul.mubr.bf16.gmra.mrb[0].mxu0 %v3590
      %v3629 = vpop.f32.mrb[0].mxu0
      %v3630 = vadd.f32 0.0, %v3629
      %v3631 = vpop.f32.mrb[0].mxu0
      %v3632 = vpop.f32.mrb[0].mxu0
      %v3633 = vpop.f32.mrb[0].mxu0
      %3634 = vdwg.mxu0
      %v3636 = vsel %vm1722, %v3586, 0
      %v3639 = vsel %vm1970, %v2444, 0
      %3641 = vmatprep.subr.bf16.mxu0 0
      %3642 = vmatpush1.bf16.msra.mxu0 %v3639
      %3643 = vmatprep.subr.bf16.mxu0 0
      %3644 = vmatpush1.bf16.msra.mxu0 0
      %3645 = vmatprep.subr.bf16.mxu0 0
      %3646 = vmatpush1.bf16.msra.mxu0 0
      %3647 = vmatprep.subr.bf16.mxu0 0
      %3648 = vmatpush1.bf16.msra.mxu0 0
      %3649 = vmatprep.subr.bf16.mxu0 0
      %3650 = vmatpush1.bf16.msra.mxu0 0
      %3651 = vmatprep.subr.bf16.mxu0 0
      %3652 = vmatpush1.bf16.msra.mxu0 0
      %3653 = vmatprep.subr.bf16.mxu0 0
      %3654 = vmatpush1.bf16.msra.mxu0 0
      %3655 = vmatprep.subr.bf16.mxu0 0
      %3656 = vmatpush1.bf16.msra.mxu0 0
      %3657 = vmatprep.subr.bf16.mxu0 0
      %3658 = vmatpush1.bf16.msra.mxu0 0
      %3659 = vmatprep.subr.bf16.mxu0 0
      %3660 = vmatpush1.bf16.msra.mxu0 0
      %3661 = vmatprep.subr.bf16.mxu0 0
      %3662 = vmatpush1.bf16.msra.mxu0 0
      %3663 = vmatprep.subr.bf16.mxu0 0
      %3664 = vmatpush1.bf16.msra.mxu0 0
      %3665 = vmatprep.subr.bf16.mxu0 0
      %3666 = vmatpush1.bf16.msra.mxu0 0
      %3667 = vmatprep.subr.bf16.mxu0 0
      %3668 = vmatpush1.bf16.msra.mxu0 0
      %3669 = vmatprep.subr.bf16.mxu0 0
      %3670 = vmatpush1.bf16.msra.mxu0 0
      %3671 = vmatprep.subr.bf16.mxu0 0
      %3672 = vmatpush1.bf16.msra.mxu0 0
      %3673 = vmatprep.mubr.bf16.mxu0 0
      %3674 = vmatmul.mubr.bf16.gmra.mrb[0].mxu0 %v3636
      %v3675 = vpop.f32.mrb[0].mxu0
      %v3676 = vadd.f32 0.0, %v3675
      %v3677 = vpop.f32.mrb[0].mxu0
      %v3678 = vpop.f32.mrb[0].mxu0
      %v3679 = vpop.f32.mrb[0].mxu0
      %3680 = vdwg.mxu0
      %v3682 = vsel %vm1722, %v3587, 0
      %v3685 = vsel %vm1970, %v2445, 0
      %3687 = vmatprep.subr.bf16.mxu0 0
      %3688 = vmatpush1.bf16.msra.mxu0 %v3685
      %3689 = vmatprep.subr.bf16.mxu0 0
      %3690 = vmatpush1.bf16.msra.mxu0 0
      %3691 = vmatprep.subr.bf16.mxu0 0
      %3692 = vmatpush1.bf16.msra.mxu0 0
      %3693 = vmatprep.subr.bf16.mxu0 0
      %3694 = vmatpush1.bf16.msra.mxu0 0
      %3695 = vmatprep.subr.bf16.mxu0 0
      %3696 = vmatpush1.bf16.msra.mxu0 0
      %3697 = vmatprep.subr.bf16.mxu0 0
      %3698 = vmatpush1.bf16.msra.mxu0 0
      %3699 = vmatprep.subr.bf16.mxu0 0
      %3700 = vmatpush1.bf16.msra.mxu0 0
      %3701 = vmatprep.subr.bf16.mxu0 0
      %3702 = vmatpush1.bf16.msra.mxu0 0
      %3703 = vmatprep.subr.bf16.mxu0 0
      %3704 = vmatpush1.bf16.msra.mxu0 0
      %3705 = vmatprep.subr.bf16.mxu0 0
      %3706 = vmatpush1.bf16.msra.mxu0 0
      %3707 = vmatprep.subr.bf16.mxu0 0
      %3708 = vmatpush1.bf16.msra.mxu0 0
      %3709 = vmatprep.subr.bf16.mxu0 0
      %3710 = vmatpush1.bf16.msra.mxu0 0
      %3711 = vmatprep.subr.bf16.mxu0 0
      %3712 = vmatpush1.bf16.msra.mxu0 0
      %3713 = vmatprep.subr.bf16.mxu0 0
      %3714 = vmatpush1.bf16.msra.mxu0 0
      %3715 = vmatprep.subr.bf16.mxu0 0
      %3716 = vmatpush1.bf16.msra.mxu0 0
      %3717 = vmatprep.subr.bf16.mxu0 0
      %3718 = vmatpush1.bf16.msra.mxu0 0
      %3719 = vmatprep.mubr.bf16.mxu0 0
      %3720 = vmatmul.mubr.bf16.gmra.mrb[0].mxu0 %v3682
      %v3721 = vpop.f32.mrb[0].mxu0
      %v3722 = vadd.f32 0.0, %v3721
      %v3723 = vpop.f32.mrb[0].mxu0
      %v3724 = vpop.f32.mrb[0].mxu0
      %v3725 = vpop.f32.mrb[0].mxu0
      %3726 = vdwg.mxu0
      %v3728 = vsel %vm1722, %v3588, 0
      %v3731 = vsel %vm1970, %v2446, 0
      %3733 = vmatprep.subr.bf16.mxu0 0
      %3734 = vmatpush1.bf16.msra.mxu0 %v3731
      %3735 = vmatprep.subr.bf16.mxu0 0
      %3736 = vmatpush1.bf16.msra.mxu0 0
      %3737 = vmatprep.subr.bf16.mxu0 0
      %3738 = vmatpush1.bf16.msra.mxu0 0
      %3739 = vmatprep.subr.bf16.mxu0 0
      %3740 = vmatpush1.bf16.msra.mxu0 0
      %3741 = vmatprep.subr.bf16.mxu0 0
      %3742 = vmatpush1.bf16.msra.mxu0 0
      %3743 = vmatprep.subr.bf16.mxu0 0
      %3744 = vmatpush1.bf16.msra.mxu0 0
      %3745 = vmatprep.subr.bf16.mxu0 0
      %3746 = vmatpush1.bf16.msra.mxu0 0
      %3747 = vmatprep.subr.bf16.mxu0 0
      %3748 = vmatpush1.bf16.msra.mxu0 0
      %3749 = vmatprep.subr.bf16.mxu0 0
      %3750 = vmatpush1.bf16.msra.mxu0 0
      %3751 = vmatprep.subr.bf16.mxu0 0
      %3752 = vmatpush1.bf16.msra.mxu0 0
      %3753 = vmatprep.subr.bf16.mxu0 0
      %3754 = vmatpush1.bf16.msra.mxu0 0
      %3755 = vmatprep.subr.bf16.mxu0 0
      %3756 = vmatpush1.bf16.msra.mxu0 0
      %3757 = vmatprep.subr.bf16.mxu0 0
      %3758 = vmatpush1.bf16.msra.mxu0 0
      %3759 = vmatprep.subr.bf16.mxu0 0
      %3760 = vmatpush1.bf16.msra.mxu0 0
      %3761 = vmatprep.subr.bf16.mxu0 0
      %3762 = vmatpush1.bf16.msra.mxu0 0
      %3763 = vmatprep.subr.bf16.mxu0 0
      %3764 = vmatpush1.bf16.msra.mxu0 0
      %3765 = vmatprep.mubr.bf16.mxu0 0
      %3766 = vmatmul.mubr.bf16.gmra.mrb[0].mxu0 %v3728
      %v3767 = vpop.f32.mrb[0].mxu0
      %v3768 = vadd.f32 0.0, %v3767
      %v3769 = vpop.f32.mrb[0].mxu0
      %v3770 = vpop.f32.mrb[0].mxu0
      %v3771 = vpop.f32.mrb[0].mxu0
      %3772 = vdwg.mxu0
      %v3773 = vsel %vm1050, %v3630, 0.0
      %v3774 = vsel %vm1050, %v3676, 0.0
      %v3775 = vadd.f32 %v3773, %v3774
      %v3776 = vsel %vm1050, %v3722, 0.0
      %v3777 = vadd.f32 %v3775, %v3776
      %v3778 = vsel %vm1050, %v3768, 0.0
      %v3779 = vadd.f32 %v3777, %v3778
      %v3781 = vlaneseq
      %v3782 = vshrl.u32 %v3781, 7
      %v3783 = vsub.s32 0, %v3782
      %v3784 = vrot.slane %v2447, %v3783
      %v3786 = vadd.f32 %v3779, %v3784
      %v3787 = vadd.f32 %v3786, %v2382
      %v3788 = vsel %vm1050, %v3787, 0.0
      %3789 = vadd.xlane.f32.xlu0 %v3788
      %v3790 = vpop.xlane.xlu0 %3789
      %v3791 = vmul.f32 %v3790, %v2358
      %v3792 = vsub.f32 %v3787, %v3791
      %v3793 = vmul.f32 %v3792, %v3792
      %v3794 = vsel %vm1050, %v3793, 0.0
      %3795 = vadd.xlane.f32.xlu0 %v3794
      %v3796 = vpop.xlane.xlu0 %3795
      %v3797 = vmul.f32 %v3796, %v2358
      %v3798 = vadd.f32 %v3797, 1e-05
      %v3799 = vrsqrt.pop %v3798
      %v3800 = vmul.f32 %v3792, %v3799
      %v3802 = vlaneseq
      %v3803 = vshrl.u32 %v3802, 7
      %v3804 = vsub.s32 0, %v3803
      %v3805 = vrot.slane %v2448, %v3804
      %v3807 = vmul.f32 %v3800, %v3805
      %v3809 = vlaneseq
      %v3810 = vshrl.u32 %v3809, 7
      %v3811 = vsub.s32 0, %v3810
      %v3812 = vrot.slane %v2449, %v3811
      %v3814 = vadd.f32 %v3807, %v3812
      %v3815 = vld [vmem:[%s47] sm:$0xf]
      %v3816 = vld [vmem:[%s47 + $0x4] sm:$0xf]
      %v3817 = vld [vmem:[%s47 + $0x8] sm:$0xf]
      %v3818 = vld [vmem:[%s47 + $0xc] sm:$0xf]
      %v3819 = vld [vmem:[%s49] sm:$0x1]
      %v3820 = vld [vmem:[%s51] sm:$0xf]
      %v3821 = vld [vmem:[%s51 + $0x4] sm:$0xf]
      %v3822 = vld [vmem:[%s51 + $0x8] sm:$0xf]
      %v3823 = vld [vmem:[%s51 + $0xc] sm:$0xf]
      %v3824 = vld [vmem:[%s51 + $0x10] sm:$0xf]
      %v3825 = vld [vmem:[%s51 + $0x14] sm:$0xf]
      %v3826 = vld [vmem:[%s51 + $0x18] sm:$0xf]
      %v3827 = vld [vmem:[%s51 + $0x1c] sm:$0xf]
      %v3828 = vld [vmem:[%s53] sm:$0x1]
      %v3829 = vld [vmem:[%s55] sm:$0x1]
      %v3830 = vld [vmem:[%s57] sm:$0x1]
      %v3831 = vpack.c.bf16 %v3814, %v3814
      %v3833 = vlaneseq
      %v3834 = vshrl.u32 %v3833, 7
      %v3835 = vsub.s32 0, %v3834
      %v3836 = vrot.slane %v3819, %v3835
      %v3842 = vunpack.c.l.b16 %v3815
      %v3843 = vunpack.c.l.b16 %v3816
      %v3844 = vunpack.c.l.b16 %v3817
      %v3845 = vunpack.c.l.b16 %v3818
      %v3846 = vpack.c.b16 %v3843, %v3842
      %v3847 = vpack.c.b16 %v3845, %v3844
      %v3851 = vsel %vm1050, %v3831, 0
      %3853 = vmatprep.subr.bf16.mxu0 0
      %3854 = vmatpush1.bf16.msra.mxu0 %v3846
      %3855 = vmatprep.subr.bf16.mxu0 0
      %3856 = vmatpush1.bf16.msra.mxu0 %v3847
      %3857 = vmatprep.subr.bf16.mxu0 0
      %3858 = vmatpush1.bf16.msra.mxu0 0
      %3859 = vmatprep.subr.bf16.mxu0 0
      %3860 = vmatpush1.bf16.msra.mxu0 0
      %3861 = vmatprep.subr.bf16.mxu0 0
      %3862 = vmatpush1.bf16.msra.mxu0 0
      %3863 = vmatprep.subr.bf16.mxu0 0
      %3864 = vmatpush1.bf16.msra.mxu0 0
      %3865 = vmatprep.subr.bf16.mxu0 0
      %3866 = vmatpush1.bf16.msra.mxu0 0
      %3867 = vmatprep.subr.bf16.mxu0 0
      %3868 = vmatpush1.bf16.msra.mxu0 0
      %3869 = vmatprep.subr.bf16.mxu0 0
      %3870 = vmatpush1.bf16.msra.mxu0 0
      %3871 = vmatprep.subr.bf16.mxu0 0
      %3872 = vmatpush1.bf16.msra.mxu0 0
      %3873 = vmatprep.subr.bf16.mxu0 0
      %3874 = vmatpush1.bf16.msra.mxu0 0
      %3875 = vmatprep.subr.bf16.mxu0 0
      %3876 = vmatpush1.bf16.msra.mxu0 0
      %3877 = vmatprep.subr.bf16.mxu0 0
      %3878 = vmatpush1.bf16.msra.mxu0 0
      %3879 = vmatprep.subr.bf16.mxu0 0
      %3880 = vmatpush1.bf16.msra.mxu0 0
      %3881 = vmatprep.subr.bf16.mxu0 0
      %3882 = vmatpush1.bf16.msra.mxu0 0
      %3883 = vmatprep.subr.bf16.mxu0 0
      %3884 = vmatpush1.bf16.msra.mxu0 0
      %3885 = vmatprep.mubr.bf16.mxu0 0
      %3886 = vmatmul.mubr.bf16.gmra.mrb[0].mxu0 %v3851
      %v3887 = vpop.f32.mrb[0].mxu0
      %v3888 = vadd.f32 %v3836, %v3887
      %v3889 = vpop.f32.mrb[0].mxu0
      %v3890 = vpop.f32.mrb[0].mxu0
      %v3891 = vpop.f32.mrb[0].mxu0
      %3892 = vdwg.mxu0
      %v3893 = vmax.f32 %v3888, 0.0
      %v3894 = vpack.c.bf16 %v3893, %v3893
      %v3896 = vlaneseq
      %v3897 = vshrl.u32 %v3896, 7
      %v3898 = vsub.s32 0, %v3897
      %v3899 = vrot.slane %v3828, %v3898
      %v3909 = vunpack.c.l.b16 %v3820
      %v3910 = vunpack.c.l.b16 %v3821
      %v3911 = vunpack.c.l.b16 %v3822
      %v3912 = vunpack.c.l.b16 %v3823
      %v3913 = vunpack.c.l.b16 %v3824
      %v3914 = vunpack.c.l.b16 %v3825
      %v3915 = vunpack.c.l.b16 %v3826
      %v3916 = vunpack.c.l.b16 %v3827
      %v3917 = vpack.c.b16 %v3910, %v3909
      %v3918 = vpack.c.b16 %v3912, %v3911
      %v3919 = vpack.c.b16 %v3914, %v3913
      %v3920 = vpack.c.b16 %v3916, %v3915
      %vm3925 = vcmask 523264
      %v3927 = vsel %vm3925, %v3894, 0
      %3929 = vmatprep.subr.bf16.mxu0 0
      %3930 = vmatpush1.bf16.msra.mxu0 %v3917
      %3931 = vmatprep.subr.bf16.mxu0 0
      %3932 = vmatpush1.bf16.msra.mxu0 %v3918
      %3933 = vmatprep.subr.bf16.mxu0 0
      %3934 = vmatpush1.bf16.msra.mxu0 %v3919
      %3935 = vmatprep.subr.bf16.mxu0 0
      %3936 = vmatpush1.bf16.msra.mxu0 %v3920
      %3937 = vmatprep.subr.bf16.mxu0 0
      %3938 = vmatpush1.bf16.msra.mxu0 0
      %3939 = vmatprep.subr.bf16.mxu0 0
      %3940 = vmatpush1.bf16.msra.mxu0 0
      %3941 = vmatprep.subr.bf16.mxu0 0
      %3942 = vmatpush1.bf16.msra.mxu0 0
      %3943 = vmatprep.subr.bf16.mxu0 0
      %3944 = vmatpush1.bf16.msra.mxu0 0
      %3945 = vmatprep.subr.bf16.mxu0 0
      %3946 = vmatpush1.bf16.msra.mxu0 0
      %3947 = vmatprep.subr.bf16.mxu0 0
      %3948 = vmatpush1.bf16.msra.mxu0 0
      %3949 = vmatprep.subr.bf16.mxu0 0
      %3950 = vmatpush1.bf16.msra.mxu0 0
      %3951 = vmatprep.subr.bf16.mxu0 0
      %3952 = vmatpush1.bf16.msra.mxu0 0
      %3953 = vmatprep.subr.bf16.mxu0 0
      %3954 = vmatpush1.bf16.msra.mxu0 0
      %3955 = vmatprep.subr.bf16.mxu0 0
      %3956 = vmatpush1.bf16.msra.mxu0 0
      %3957 = vmatprep.subr.bf16.mxu0 0
      %3958 = vmatpush1.bf16.msra.mxu0 0
      %3959 = vmatprep.subr.bf16.mxu0 0
      %3960 = vmatpush1.bf16.msra.mxu0 0
      %3961 = vmatprep.mubr.bf16.mxu0 0
      %3962 = vmatmul.mubr.bf16.gmra.mrb[0].mxu0 %v3927
      %v3963 = vpop.f32.mrb[0].mxu0
      %v3964 = vadd.f32 %v3899, %v3963
      %v3965 = vpop.f32.mrb[0].mxu0
      %v3966 = vpop.f32.mrb[0].mxu0
      %v3967 = vpop.f32.mrb[0].mxu0
      %3968 = vdwg.mxu0
      %v3969 = vadd.f32 %v3964, %v3814
      %v3970 = vsel %vm1050, %v3969, 0.0
      %3971 = vadd.xlane.f32.xlu0 %v3970
      %v3972 = vpop.xlane.xlu0 %3971
      %v3973 = vmul.f32 %v3972, %v2358
      %v3974 = vsub.f32 %v3969, %v3973
      %v3975 = vmul.f32 %v3974, %v3974
      %v3976 = vsel %vm1050, %v3975, 0.0
      %3977 = vadd.xlane.f32.xlu0 %v3976
      %v3978 = vpop.xlane.xlu0 %3977
      %v3979 = vmul.f32 %v3978, %v2358
      %v3980 = vadd.f32 %v3979, 1e-05
      %v3981 = vrsqrt.pop %v3980
      %v3982 = vmul.f32 %v3974, %v3981
      %v3984 = vlaneseq
      %v3985 = vshrl.u32 %v3984, 7
      %v3986 = vsub.s32 0, %v3985
      %v3987 = vrot.slane %v3829, %v3986
      %v3989 = vmul.f32 %v3982, %v3987
      %v3991 = vlaneseq
      %v3992 = vshrl.u32 %v3991, 7
      %v3993 = vsub.s32 0, %v3992
      %v3994 = vrot.slane %v3830, %v3993
      %v3996 = vadd.f32 %v3989, %v3994
      %v3997 = vpack.c.bf16 %v3996, %v3996
      %vm3998 = vcmask 257024
      %3999 = vst.msk [vmem:[%s928] sm:$0xf] %vm3998, %v3997
      %p4000 = scmp.lt.s32.totalorder %s70, 1
      %s4001 = scalar_select %p4000, %s70, 1
      %s4002 = smul.addr %s4001, 4
      %s4003 = scalar_lea.vmem %s59, %s4002
      // Predicated region
      $region137: #{transformer_chatbot_forward.10} parent=135 // pred_check
        %p4004 = pneg %p712
      $region138: #{transformer_chatbot_forward.10} parent=135 // pred_check_branch
        %4006 = sbr.rel (%p4004) target = $region140
      $region139: #{transformer_chatbot_forward.10} parent=135 // pred_region
        _
      $region140: #{transformer_chatbot_forward.10} parent=135 // pred_fallthru
        _
    $region136: #{transformer_chatbot_forward.10} parent=5 // pred_fallthru
      _
    %p4007 = scmp.le.s32.totalorder 2, %s65
    // Predicated region
    $region141: #{transformer_chatbot_forward.10} parent=5 // pred_check
      %p4008 = pneg %p4007
    $region142: #{transformer_chatbot_forward.10} parent=5 // pred_check_branch
      %4010 = sbr.rel (%p4008) target = $region144
    $region143: #{transformer_chatbot_forward.10} parent=5 // pred_region
      %s4011 = ssub.s32 %s65, 2
      // Predicated region
      $region145: #{transformer_chatbot_forward.10} parent=143 // pred_check
        %p4012 = pneg %p718
      $region146: #{transformer_chatbot_forward.10} parent=143 // pred_check_branch
        %4014 = sbr.rel (%p4012) target = $region148
      $region147: #{transformer_chatbot_forward.10} parent=143 // pred_region
        %p4015 = scmp.lt.s32.totalorder %s71, 1
        %s4016 = scalar_select %p4015, %s71, 1
        %s4017 = smul.addr %s4016, 4
        %s4018 = scalar_lea.vmem %s59, %s4017
      $region148: #{transformer_chatbot_forward.10} parent=143 // pred_fallthru
        _
    $region144: #{transformer_chatbot_forward.10} parent=5 // pred_fallthru
      _
  $region6: #{transformer_chatbot_forward.10} parent=0 // loop_footer
    %s69 = sadd.s32 1, %s65
  $region7: #{transformer_chatbot_forward.10} parent=0 // loop_footer_branch
    %64 = sbr.rel target = $region3
  $region8: #{transformer_chatbot_forward.10} parent=0 // loop_exit
    _

</llo_original>
